<compile_context>
chip_gen: v5e
topology: v5e:2x2
jax: 0.10.0
libtpu: 0.0.40
codegen_flags: <defaults>
</compile_context>

<pallas_src>
import functools
import numpy as np
import jax
import jax.numpy as jnp
from jax.experimental import pallas as pl
from jax.experimental.pallas import tpu as pltpu


# ----------------------------------------------------------------------------- config
CFG = dict(
    in_channels=256,      # PCFE output feature dim
    out_channels=64,      # embedding dim D
    arch=(1, 1, 2),       # (#embed convs, #stem blocks, #branch blocks) -- small demo
    kernel_size=3,
    n_head=4,
    scale_factor=2,
    use_abs_pe=True,
    max_seq_len=64,
)

_LN_EPS = 1e-5


# ----------------------------------------------------------------------------- sinusoid PE
def get_sinusoid_encoding(n_position, d_hid):
    """Sinusoid position encoding table -> (1, d_hid, n_position) like the PyTorch code."""
    def get_position_angle_vec(position):
        return [position / np.power(10000, 2 * (hid_j // 2) / d_hid) for hid_j in range(d_hid)]
    table = np.array([get_position_angle_vec(p) for p in range(n_position)], dtype=np.float64)
    table[:, 0::2] = np.sin(table[:, 0::2])
    table[:, 1::2] = np.cos(table[:, 1::2])
    return table[None].transpose(0, 2, 1).astype(np.float32)


# ----------------------------------------------------------------------------- PCFE kernels
def _pcfe_mlp_kernel(x_ref, w1_ref, b1_ref, w2_ref, b2_ref, w3_ref, b3_ref, o_ref):
    """Fused per-point MLP 3 -> 64 -> 128 -> 256 (bf16 MXU operands, f32 accumulation)."""
    x = x_ref[...].astype(jnp.bfloat16)
    h = jnp.dot(x, w1_ref[...].astype(jnp.bfloat16),
                preferred_element_type=jnp.float32) + b1_ref[...]
    h = jnp.maximum(h, 0.0)
    h = jnp.dot(h.astype(jnp.bfloat16), w2_ref[...].astype(jnp.bfloat16),
                preferred_element_type=jnp.float32) + b2_ref[...]
    h = jnp.maximum(h, 0.0)
    h = jnp.dot(h.astype(jnp.bfloat16), w3_ref[...].astype(jnp.bfloat16),
                preferred_element_type=jnp.float32) + b3_ref[...]
    o_ref[...] = h.astype(o_ref.dtype)


def _pcfe_pool_kernel(h_ref, m_ref, o_ref):
    """Max over points + mask padded frames.  h:(TBT, N, 256), m:(TBT, 1)."""
    feat = jnp.max(h_ref[...], axis=1)
    o_ref[...] = (feat * m_ref[...]).astype(o_ref.dtype)


def pcfe_forward(x_pts, mask_bt, p):
    """x_pts: (B*T, N, 3) channel-last points, mask_bt: (B*T, 1) float -> (B*T, 256)."""
    BT, N, C = x_pts.shape
    d1, d2, d3 = p["w1"].shape[1], p["w2"].shape[1], p["w3"].shape[1]
    M = BT * N
    flat = x_pts.reshape(M, C)
    # TODO(synk): pad/mask the last tile for ragged M at production sizes.
    TM = 128 if M % 128 == 0 else M
    h = pl.pallas_call(
        _pcfe_mlp_kernel,
        out_shape=jax.ShapeDtypeStruct((M, d3), x_pts.dtype),
        grid=(M // TM,),
        in_specs=[
            pl.BlockSpec((TM, C), lambda i: (i, 0)),
            pl.BlockSpec((C, d1), lambda i: (0, 0)),
            pl.BlockSpec((1, d1), lambda i: (0, 0)),
            pl.BlockSpec((d1, d2), lambda i: (0, 0)),
            pl.BlockSpec((1, d2), lambda i: (0, 0)),
            pl.BlockSpec((d2, d3), lambda i: (0, 0)),
            pl.BlockSpec((1, d3), lambda i: (0, 0)),
        ],
        out_specs=pl.BlockSpec((TM, d3), lambda i: (i, 0)),
        compiler_params=pltpu.CompilerParams(dimension_semantics=("parallel",)),
    )(flat, p["w1"], p["b1"], p["w2"], p["b2"], p["w3"], p["b3"])

    h3 = h.reshape(BT, N, d3)
    TBT = 8 if BT % 8 == 0 else BT
    feat = pl.pallas_call(
        _pcfe_pool_kernel,
        out_shape=jax.ShapeDtypeStruct((BT, d3), x_pts.dtype),
        grid=(BT // TBT,),
        in_specs=[
            pl.BlockSpec((TBT, N, d3), lambda i: (i, 0, 0)),
            pl.BlockSpec((TBT, 1), lambda i: (i, 0)),
        ],
        out_specs=pl.BlockSpec((TBT, d3), lambda i: (i, 0)),
        compiler_params=pltpu.CompilerParams(dimension_semantics=("parallel",)),
    )(h3, mask_bt)
    return feat


# ----------------------------------------------------------------------------- embed kernel
def _embed_kernel(xp_ref, m_ref, w_ref, b_ref, g_ref, beta_ref, pe_ref, o_ref,
                  *, add_pe, eps=_LN_EPS):
    """Fused MaskedConv1D(k, same) + mask + LayerNorm(C) + ReLU (+ masked abs-PE add).

    xp_ref: (1, T + K - 1, Cin) time-padded channel-last input
    w_ref : (K, Cin, D) conv taps  -> y[t] = sum_k x[t + k - pad] @ w[k]
    """
    K = w_ref.shape[0]
    T = o_ref.shape[1]
    D = o_ref.shape[2]
    x = xp_ref[0].astype(jnp.bfloat16)                       # (T+K-1, Cin)
    acc = jnp.zeros((T, D), jnp.float32)
    for k in range(K):                                       # static unroll, sublane-shifted views
        acc = acc + jnp.dot(x[k:k + T, :], w_ref[k].astype(jnp.bfloat16),
                            preferred_element_type=jnp.float32)
    m = m_ref[0]                                             # (T, 1)
    y = (acc + b_ref[...]) * m                               # MaskedConv1D
    mu = jnp.mean(y, axis=-1, keepdims=True)
    var = jnp.mean(jnp.square(y - mu), axis=-1, keepdims=True)
    y = (y - mu) * jax.lax.rsqrt(var + eps) * g_ref[...] + beta_ref[...]
    y = jnp.maximum(y, 0.0)                                  # ReLU
    if add_pe:
        y = y + pe_ref[...] * m                              # abs positional encoding, masked
    o_ref[0] = y.astype(o_ref.dtype)


def embed_forward(x_cl, mask_col, p, pe, add_pe):
    """x_cl: (B, T, Cin) channel-last, mask_col: (B, T, 1) float -> (B, T, D)."""
    B, T, Cin = x_cl.shape
    K = p["w"].shape[0]
    D = p["w"].shape[2]
    pad = K // 2
    xp = jnp.pad(x_cl, ((0, 0), (pad, pad), (0, 0)))
    return pl.pallas_call(
        functools.partial(_embed_kernel, add_pe=add_pe),
        out_shape=jax.ShapeDtypeStruct((B, T, D), x_cl.dtype),
        grid=(B,),
        in_specs=[
            pl.BlockSpec((1, T + 2 * pad, Cin), lambda b: (b, 0, 0)),
            pl.BlockSpec((1, T, 1), lambda b: (b, 0, 0)),
            pl.BlockSpec((K, Cin, D), lambda b: (0, 0, 0)),
            pl.BlockSpec((1, D), lambda b: (0, 0)),
            pl.BlockSpec((1, D), lambda b: (0, 0)),
            pl.BlockSpec((1, D), lambda b: (0, 0)),
            pl.BlockSpec((T, D), lambda b: (0, 0)),
        ],
        out_specs=pl.BlockSpec((1, T, D), lambda b: (b, 0, 0)),
        compiler_params=pltpu.CompilerParams(dimension_semantics=("parallel",)),
    )(xp, mask_col, p["w"], p["b"], p["ln_g"], p["ln_b"], pe)


# ----------------------------------------------------------------------------- transformer block kernel
def _block_kernel(xp_ref, mcol_ref, mrow_ref, ln_ref, dw_ref, wqkv_ref, bqkv_ref,
                  wo_ref, bo_ref, w1_ref, b1_ref, w2_ref, b2_ref, o_ref,
                  *, stride, n_head, eps=_LN_EPS):
    """One full ActionFormer TransformerBlock for one batch element (channel-last).

    xp_ref: (1, T+2, D) time-zero-padded input (pad rows are zeros)
    ln_ref: (10, D) packed [ln1_g, ln1_b, qn_g, qn_b, kn_g, kn_b, vn_g, vn_b, ln2_g, ln2_b]
    dw_ref: (3, 3, D) depthwise-conv taps for q/k/v
    """
    Tp = xp_ref.shape[1]
    T = Tp - 2
    D = xp_ref.shape[2]
    To = o_ref.shape[1]
    Dh = D // n_head

    ln = ln_ref[...]

    def layer_norm(v, gi, bi):
        mu = jnp.mean(v, axis=-1, keepdims=True)
        var = jnp.mean(jnp.square(v - mu), axis=-1, keepdims=True)
        return (v - mu) * jax.lax.rsqrt(var + eps) * ln[gi:gi + 1, :] + ln[bi:bi + 1, :]

    x_pad = xp_ref[0].astype(jnp.float32)                    # (T+2, D)
    x = x_pad[1:T + 1, :]                                    # (T, D)
    mcol = mcol_ref[0]                                       # (To, 1)
    mrow = mrow_ref[0]                                       # (1, To)

    row = jax.lax.broadcasted_iota(jnp.int32, (Tp, 1), 0)
    interior = jnp.logical_and(row >= 1, row <= T)           # valid (non-pad) rows

    # --- LN1 then zero the pad rows so the depthwise conv sees zero padding -----------
    xn_pad = jnp.where(interior, layer_norm(x_pad, 0, 1), 0.0)
    xn_prev = xn_pad[0:T, :]                                 # xn[t-1]
    xn_cur = xn_pad[1:T + 1, :]                              # xn[t]
    xn_next = xn_pad[2:T + 2, :]                             # xn[t+1]

    if stride > 1:
        # one-hot selection matrix picking every `stride`-th time step (MXU row gather)
        r = jax.lax.broadcasted_iota(jnp.int32, (To, T), 0)
        c = jax.lax.broadcasted_iota(jnp.int32, (To, T), 1)
        sel = (c == stride * r).astype(jnp.float32)
    else:
        sel = None

    def dwconv(i):
        # depthwise conv k=3 as a VPU shift-and-multiply, optional stride, masked output
        w = dw_ref[i]                                        # (3, D)
        full = xn_prev * w[0:1, :] + xn_cur * w[1:2, :] + xn_next * w[2:3, :]
        if stride > 1:
            full = jnp.dot(sel, full, preferred_element_type=jnp.float32)
        return full * mcol

    bqkv = bqkv_ref[...]                                     # (3, D)

    def proj(t, i):
        return jnp.dot(t.astype(jnp.bfloat16), wqkv_ref[i].astype(jnp.bfloat16),
                       preferred_element_type=jnp.float32) + bqkv[i:i + 1, :]

    q = proj(layer_norm(dwconv(0), 2, 3), 0)                 # (To, D)
    k = proj(layer_norm(dwconv(1), 4, 5), 1)
    v = proj(layer_norm(dwconv(2), 6, 7), 2)

    # --- multi-head attention (all heads in one kernel, static unroll over heads) -----
    scale = 1.0 / (float(Dh) ** 0.5)
    heads = []
    for hidx in range(n_head):
        lo = hidx * Dh
        qh = (q[:, lo:lo + Dh] * scale).astype(jnp.bfloat16)
        kh = k[:, lo:lo + Dh].astype(jnp.bfloat16)
        vh = v[:, lo:lo + Dh].astype(jnp.bfloat16)
        s = jax.lax.dot_general(qh, kh, (((1,), (1,)), ((), ())),
                                preferred_element_type=jnp.float32)   # (To, To)
        s = jnp.where(mrow > 0.0, s, -1e30)
        s = s - jnp.max(s, axis=-1, keepdims=True)
        pexp = jnp.exp(s)
        pexp = pexp * pl.reciprocal(jnp.sum(pexp, axis=-1, keepdims=True), approx=True)
        heads.append(jnp.dot(pexp.astype(jnp.bfloat16), vh,
                             preferred_element_type=jnp.float32))     # (To, Dh)
    o = jnp.concatenate(heads, axis=-1)                                # (To, D)

    attn = (jnp.dot(o.astype(jnp.bfloat16), wo_ref[...].astype(jnp.bfloat16),
                    preferred_element_type=jnp.float32) + bo_ref[...]) * mcol

    # --- residual / downsampling skip path -------------------------------------------
    if stride > 1:
        # MaxPool1d(kernel=3, stride=2, padding=1) on x
        x_mp = jnp.where(interior, x_pad, -1e30)
        mp = jnp.maximum(jnp.maximum(x_mp[0:T, :], x_mp[1:T + 1, :]), x_mp[2:T + 2, :])
        skip = jnp.dot(sel, mp, preferred_element_type=jnp.float32)
    else:
        skip = x
    out1 = skip * mcol + attn

    # --- FFN: LN2 -> W1 -> GELU -> W2 -> masked residual ------------------------------
    on = layer_norm(out1, 8, 9)
    ff = jnp.dot(on.astype(jnp.bfloat16), w1_ref[...].astype(jnp.bfloat16),
                 preferred_element_type=jnp.float32) + b1_ref[...]
    # TODO(synk): nn.GELU exact (erf) replaced with the tanh approximation
    ff = 0.5 * ff * (1.0 + jnp.tanh(0.7978845608028654 * (ff + 0.044715 * ff * ff * ff)))
    ff = jnp.dot(ff.astype(jnp.bfloat16), w2_ref[...].astype(jnp.bfloat16),
                 preferred_element_type=jnp.float32) + b2_ref[...]
    out = out1 + ff * mcol
    o_ref[0] = out.astype(o_ref.dtype)


def transformer_block_forward(x_cl, mask, p, stride, n_head):
    """x_cl: (B, T, D) channel-last, mask: (B, T) bool -> ((B, T//stride, D), new mask)."""
    B, T, D = x_cl.shape
    out_mask = mask[:, ::stride] if stride > 1 else mask      # nearest-neighbor mask downsample
    To = out_mask.shape[1]
    mf = out_mask.astype(x_cl.dtype)
    mcol = mf[:, :, None]                                     # (B, To, 1)
    mrow = mf[:, None, :]                                     # (B, 1, To)
    xp = jnp.pad(x_cl, ((0, 0), (1, 1), (0, 0)))              # zero-pad time for k=3 depthwise conv

    out = pl.pallas_call(
        functools.partial(_block_kernel, stride=stride, n_head=n_head),
        out_shape=jax.ShapeDtypeStruct((B, To, D), x_cl.dtype),
        grid=(B,),
        in_specs=[
            pl.BlockSpec((1, T + 2, D), lambda b: (b, 0, 0)),
            pl.BlockSpec((1, To, 1), lambda b: (b, 0, 0)),
            pl.BlockSpec((1, 1, To), lambda b: (b, 0, 0)),
            pl.BlockSpec((10, D), lambda b: (0, 0)),
            pl.BlockSpec((3, 3, D), lambda b: (0, 0, 0)),
            pl.BlockSpec((3, D, D), lambda b: (0, 0, 0)),
            pl.BlockSpec((3, D), lambda b: (0, 0)),
            pl.BlockSpec((D, D), lambda b: (0, 0)),
            pl.BlockSpec((1, D), lambda b: (0, 0)),
            pl.BlockSpec((D, 4 * D), lambda b: (0, 0)),
            pl.BlockSpec((1, 4 * D), lambda b: (0, 0)),
            pl.BlockSpec((4 * D, D), lambda b: (0, 0)),
            pl.BlockSpec((1, D), lambda b: (0, 0)),
        ],
        out_specs=pl.BlockSpec((1, To, D), lambda b: (b, 0, 0)),
        compiler_params=pltpu.CompilerParams(dimension_semantics=("parallel",)),
    )(xp, mcol, mrow, p["ln"], p["dw"], p["wqkv"], p["bqkv"], p["wo"], p["bo"],
      p["w1"], p["b1"], p["w2"], p["b2"])
    return out, out_mask


# ----------------------------------------------------------------------------- full forward
def pc_transformer_proj_forward(params, x, mask):
    """x: (B, N_points, C_coord, T), mask: (B, T) bool -> (tuple of (B, D, T') feats, tuple of masks)."""
    B, N, C, T = x.shape
    mask_f = mask.astype(x.dtype)

    # x.permute(0, 3, 2, 1).reshape(B*T, C, N) in the PyTorch code; channel-last points here.
    x_pts = x.transpose(0, 3, 1, 2).reshape(B * T, N, C)                 # (B*T, N, C)
    feat = pcfe_forward(x_pts, mask_f.reshape(B * T, 1), params["pcfe"])  # (B*T, 256), padded frames zeroed
    h = feat.reshape(B, T, -1)                                            # channel-last (B, T, 256)
    m = mask

    # eval path: T < max_seq_len, slice the precomputed table (channel-last)
    pe = params["pos_embed_cl"][:T, :]
    mcol = mask_f[:, :, None]
    n_embed = len(params["embed"])
    for i, p in enumerate(params["embed"]):
        add_pe = CFG["use_abs_pe"] and (i == n_embed - 1)                 # PE fused into last embed layer
        h = embed_forward(h, mcol, p, pe, add_pe)

    for p in params["stem"]:
        h, m = transformer_block_forward(h, m, p, stride=1, n_head=CFG["n_head"])

    out_feats = (h.transpose(0, 2, 1),)                                   # return channel-first like PyTorch
    out_masks = (m,)
    for p in params["branch"]:
        h, m = transformer_block_forward(h, m, p, stride=CFG["scale_factor"], n_head=CFG["n_head"])
        out_feats += (h.transpose(0, 2, 1),)
        out_masks += (m,)
    return out_feats, out_masks


# ----------------------------------------------------------------------------- parameter init
def init_params(key, cfg):
    D, Cin, K = cfg["out_channels"], cfg["in_channels"], cfg["kernel_size"]
    H4 = 4 * D
    keys = iter(jax.random.split(key, 256))

    def nrm(shape, scale=0.02):
        return scale * jax.random.normal(next(keys), shape, jnp.float32)

    pcfe = dict(w1=nrm((3, 64)), b1=jnp.zeros((1, 64), jnp.float32),
                w2=nrm((64, 128)), b2=jnp.zeros((1, 128), jnp.float32),
                w3=nrm((128, 256)), b3=jnp.zeros((1, 256), jnp.float32))

    embed = []
    for i in range(cfg["arch"][0]):
        cin = Cin if i == 0 else D
        embed.append(dict(w=nrm((K, cin, D)),                 # (tap, Cin, D)
                          b=jnp.zeros((1, D), jnp.float32),
                          ln_g=jnp.ones((1, D), jnp.float32),
                          ln_b=jnp.zeros((1, D), jnp.float32)))

    def block():
        # packed LN params: [ln1_g, ln1_b, qn_g, qn_b, kn_g, kn_b, vn_g, vn_b, ln2_g, ln2_b]
        ln = jnp.concatenate([jnp.ones((1, D), jnp.float32),
                              jnp.zeros((1, D), jnp.float32)] * 5, axis=0)
        return dict(
            ln=ln,
            dw=nrm((3, 3, D)),                                # [q/k/v][tap][channel]
            wqkv=nrm((3, D, D)), bqkv=jnp.zeros((3, D), jnp.float32),
            wo=nrm((D, D)), bo=jnp.zeros((1, D), jnp.float32),
            w1=nrm((D, H4)), b1=jnp.zeros((1, H4), jnp.float32),
            w2=nrm((H4, D)), b2=jnp.zeros((1, D), jnp.float32))

    stem = [block() for _ in range(cfg["arch"][1])]
    branch = [block() for _ in range(cfg["arch"][2])]

    pos = get_sinusoid_encoding(cfg["max_seq_len"], D) / np.sqrt(D)       # (1, D, maxT)
    pos_cl = jnp.asarray(pos[0].T, jnp.float32)                           # (maxT, D) channel-last
    return dict(pcfe=pcfe, embed=embed, stem=stem, branch=branch, pos_embed_cl=pos_cl)


# ----------------------------------------------------------------------------- main
if __name__ == "__main__":
    key = jax.random.PRNGKey(0)
    kx, kp = jax.random.split(key)

    B, N, C, T = 2, 16, 3, 16                 # batch, points, point-coords, time steps
    x = jax.random.normal(kx, (B, N, C, T), jnp.float32)
    lengths = jnp.array([T, T - 4])
    mask = jnp.arange(T)[None, :] < lengths[:, None]   # (B, T) bool

    params = init_params(kp, CFG)

    fwd = jax.jit(pc_transformer_proj_forward)
    out_feats, out_masks = fwd(params, x, mask)

    for f in out_feats:
        jax.block_until_ready(f)
    for mm in out_masks:
        jax.block_until_ready(mm)

    print("KERNEL_OK")
</pallas_src>

<mosaic_0001>
module attributes {stable_mosaic.version = 11 : i64} {
  func.func @_pcfe_mlp_kernel(%arg0: i32, %arg1: memref<128x3xf32, #tpu.memory_space<vmem>>, %arg2: memref<3x64xf32, #tpu.memory_space<vmem>>, %arg3: memref<1x64xf32, #tpu.memory_space<vmem>>, %arg4: memref<64x128xf32, #tpu.memory_space<vmem>>, %arg5: memref<1x128xf32, #tpu.memory_space<vmem>>, %arg6: memref<128x256xf32, #tpu.memory_space<vmem>>, %arg7: memref<1x256xf32, #tpu.memory_space<vmem>>, %arg8: memref<128x256xf32, #tpu.memory_space<vmem>>) attributes {dimension_semantics = [#tpu.dimension_semantics<parallel>], iteration_bounds = array<i64: 4>, scalar_prefetch = 0 : i64, scratch_operands = 0 : i64, tpu.core_type = #tpu.core_type<tc>, window_params = [{transform_indices = @transform_0, window_bounds = array<i64: 128, 3>}, {pipeline_mode = #tpu.pipeline_mode<synchronous>, transform_indices = @transform_1, window_bounds = array<i64: 3, 64>}, {pipeline_mode = #tpu.pipeline_mode<synchronous>, transform_indices = @transform_2, window_bounds = array<i64: 1, 64>}, {pipeline_mode = #tpu.pipeline_mode<synchronous>, transform_indices = @transform_3, window_bounds = array<i64: 64, 128>}, {pipeline_mode = #tpu.pipeline_mode<synchronous>, transform_indices = @transform_4, window_bounds = array<i64: 1, 128>}, {pipeline_mode = #tpu.pipeline_mode<synchronous>, transform_indices = @transform_5, window_bounds = array<i64: 128, 256>}, {pipeline_mode = #tpu.pipeline_mode<synchronous>, transform_indices = @transform_6, window_bounds = array<i64: 1, 256>}, {transform_indices = @transform_7, window_bounds = array<i64: 128, 256>}]} {
    %c0 = arith.constant 0 : index
    %c0_0 = arith.constant 0 : index
    %0 = vector.load %arg1[%c0, %c0_0] : memref<128x3xf32, #tpu.memory_space<vmem>>, vector<128x3xf32>
    %1 = arith.truncf %0 : vector<128x3xf32> to vector<128x3xbf16>
    %c0_1 = arith.constant 0 : index
    %c0_2 = arith.constant 0 : index
    %2 = vector.load %arg2[%c0_1, %c0_2] : memref<3x64xf32, #tpu.memory_space<vmem>>, vector<3x64xf32>
    %3 = arith.truncf %2 : vector<3x64xf32> to vector<3x64xbf16>
    %cst = arith.constant dense<0.000000e+00> : vector<128x64xf32>
    %4 = tpu.matmul %1, %3, %cst {dimension_numbers = #tpu.dot_dimension_numbers<[1], [0], [0], [1], [0, 0, 1, 1], [], []>} : vector<128x3xbf16>, vector<3x64xbf16>, vector<128x64xf32> -> vector<128x64xf32>
    %c0_3 = arith.constant 0 : index
    %c0_4 = arith.constant 0 : index
    %5 = vector.load %arg3[%c0_3, %c0_4] : memref<1x64xf32, #tpu.memory_space<vmem>>, vector<1x64xf32>
    %6 = vector.broadcast %5 : vector<1x64xf32> to vector<128x64xf32>
    %7 = arith.addf %4, %6 : vector<128x64xf32>
    %cst_5 = arith.constant 0.000000e+00 : f32
    %8 = vector.broadcast %cst_5 : f32 to vector<128x64xf32>
    %9 = arith.maximumf %7, %8 : vector<128x64xf32>
    %10 = arith.truncf %9 : vector<128x64xf32> to vector<128x64xbf16>
    %c0_6 = arith.constant 0 : index
    %c0_7 = arith.constant 0 : index
    %11 = vector.load %arg4[%c0_6, %c0_7] : memref<64x128xf32, #tpu.memory_space<vmem>>, vector<64x128xf32>
    %12 = arith.truncf %11 : vector<64x128xf32> to vector<64x128xbf16>
    %cst_8 = arith.constant dense<0.000000e+00> : vector<128x128xf32>
    %13 = tpu.matmul %10, %12, %cst_8 {dimension_numbers = #tpu.dot_dimension_numbers<[1], [0], [0], [1], [0, 0, 1, 1], [], []>} : vector<128x64xbf16>, vector<64x128xbf16>, vector<128x128xf32> -> vector<128x128xf32>
    %c0_9 = arith.constant 0 : index
    %c0_10 = arith.constant 0 : index
    %14 = vector.load %arg5[%c0_9, %c0_10] : memref<1x128xf32, #tpu.memory_space<vmem>>, vector<1x128xf32>
    %15 = vector.broadcast %14 : vector<1x128xf32> to vector<128x128xf32>
    %16 = arith.addf %13, %15 : vector<128x128xf32>
    %cst_11 = arith.constant 0.000000e+00 : f32
    %17 = vector.broadcast %cst_11 : f32 to vector<128x128xf32>
    %18 = arith.maximumf %16, %17 : vector<128x128xf32>
    %19 = arith.truncf %18 : vector<128x128xf32> to vector<128x128xbf16>
    %c0_12 = arith.constant 0 : index
    %c0_13 = arith.constant 0 : index
    %20 = vector.load %arg6[%c0_12, %c0_13] : memref<128x256xf32, #tpu.memory_space<vmem>>, vector<128x256xf32>
    %21 = arith.truncf %20 : vector<128x256xf32> to vector<128x256xbf16>
    %cst_14 = arith.constant dense<0.000000e+00> : vector<128x256xf32>
    %22 = tpu.matmul %19, %21, %cst_14 {dimension_numbers = #tpu.dot_dimension_numbers<[1], [0], [0], [1], [0, 0, 1, 1], [], []>} : vector<128x128xbf16>, vector<128x256xbf16>, vector<128x256xf32> -> vector<128x256xf32>
    %c0_15 = arith.constant 0 : index
    %c0_16 = arith.constant 0 : index
    %23 = vector.load %arg7[%c0_15, %c0_16] : memref<1x256xf32, #tpu.memory_space<vmem>>, vector<1x256xf32>
    %24 = vector.broadcast %23 : vector<1x256xf32> to vector<128x256xf32>
    %25 = arith.addf %22, %24 : vector<128x256xf32>
    %c0_17 = arith.constant 0 : index
    %c0_18 = arith.constant 0 : index
    %26 = vector.load %arg8[%c0_17, %c0_18] : memref<128x256xf32, #tpu.memory_space<vmem>>, vector<128x256xf32>
    tpu.vector_store %arg8[%c0_17, %c0_18], %25 {strides = array<i32>} : memref<128x256xf32, #tpu.memory_space<vmem>>, vector<128x256xf32>,
    return
  }
  func.func @transform_0(%arg0: i32) -> (i32, i32) {
    %c0_i32 = arith.constant 0 : i32
    %c0_i32_0 = arith.constant 0 : i32
    return %arg0, %c0_i32 : i32, i32
  }
  func.func @transform_1(%arg0: i32) -> (i32, i32) {
    %c0_i32 = arith.constant 0 : i32
    %c0_i32_0 = arith.constant 0 : i32
    %c0_i32_1 = arith.constant 0 : i32
    return %c0_i32, %c0_i32_0 : i32, i32
  }
  func.func @transform_2(%arg0: i32) -> (i32, i32) {
    %c0_i32 = arith.constant 0 : i32
    %c0_i32_0 = arith.constant 0 : i32
    %c0_i32_1 = arith.constant 0 : i32
    return %c0_i32, %c0_i32_0 : i32, i32
  }
  func.func @transform_3(%arg0: i32) -> (i32, i32) {
    %c0_i32 = arith.constant 0 : i32
    %c0_i32_0 = arith.constant 0 : i32
    %c0_i32_1 = arith.constant 0 : i32
    return %c0_i32, %c0_i32_0 : i32, i32
  }
  func.func @transform_4(%arg0: i32) -> (i32, i32) {
    %c0_i32 = arith.constant 0 : i32
    %c0_i32_0 = arith.constant 0 : i32
    %c0_i32_1 = arith.constant 0 : i32
    return %c0_i32, %c0_i32_0 : i32, i32
  }
  func.func @transform_5(%arg0: i32) -> (i32, i32) {
    %c0_i32 = arith.constant 0 : i32
    %c0_i32_0 = arith.constant 0 : i32
    %c0_i32_1 = arith.constant 0 : i32
    return %c0_i32, %c0_i32_0 : i32, i32
  }
  func.func @transform_6(%arg0: i32) -> (i32, i32) {
    %c0_i32 = arith.constant 0 : i32
    %c0_i32_0 = arith.constant 0 : i32
    %c0_i32_1 = arith.constant 0 : i32
    return %c0_i32, %c0_i32_0 : i32, i32
  }
  func.func @transform_7(%arg0: i32) -> (i32, i32) {
    %c0_i32 = arith.constant 0 : i32
    %c0_i32_0 = arith.constant 0 : i32
    return %arg0, %c0_i32 : i32, i32
  }
}

module attributes {stable_mosaic.version = 11 : i64} {
  func.func @_pcfe_pool_kernel(%arg0: i32, %arg1: memref<8x16x256xf32, #tpu.memory_space<vmem>>, %arg2: memref<8x1xf32, #tpu.memory_space<vmem>>, %arg3: memref<8x256xf32, #tpu.memory_space<vmem>>) attributes {dimension_semantics = [#tpu.dimension_semantics<parallel>], iteration_bounds = array<i64: 4>, scalar_prefetch = 0 : i64, scratch_operands = 0 : i64, tpu.core_type = #tpu.core_type<tc>, window_params = [{transform_indices = @transform_0, window_bounds = array<i64: 8, 16, 256>}, {transform_indices = @transform_1, window_bounds = array<i64: 8, 1>}, {transform_indices = @transform_2, window_bounds = array<i64: 8, 256>}]} {
    %c0 = arith.constant 0 : index
    %c0_0 = arith.constant 0 : index
    %c0_1 = arith.constant 0 : index
    %0 = vector.load %arg1[%c0, %c0_0, %c0_1] : memref<8x16x256xf32, #tpu.memory_space<vmem>>, vector<8x16x256xf32>
    %cst = arith.constant dense<0xFF800000> : vector<8x256xf32>
    %1 = vector.multi_reduction <maximumf>, %0, %cst [1] : vector<8x16x256xf32> to vector<8x256xf32>
    %c0_2 = arith.constant 0 : index
    %c0_3 = arith.constant 0 : index
    %2 = vector.load %arg2[%c0_2, %c0_3] : memref<8x1xf32, #tpu.memory_space<vmem>>, vector<8x1xf32>
    %3 = vector.broadcast %2 : vector<8x1xf32> to vector<8x256xf32>
    %4 = arith.mulf %1, %3 : vector<8x256xf32>
    %c0_4 = arith.constant 0 : index
    %c0_5 = arith.constant 0 : index
    %5 = vector.load %arg3[%c0_4, %c0_5] : memref<8x256xf32, #tpu.memory_space<vmem>>, vector<8x256xf32>
    tpu.vector_store %arg3[%c0_4, %c0_5], %4 {strides = array<i32>} : memref<8x256xf32, #tpu.memory_space<vmem>>, vector<8x256xf32>,
    return
  }
  func.func @transform_0(%arg0: i32) -> (i32, i32, i32) {
    %c0_i32 = arith.constant 0 : i32
    %c0_i32_0 = arith.constant 0 : i32
    %c0_i32_1 = arith.constant 0 : i32
    return %arg0, %c0_i32, %c0_i32_0 : i32, i32, i32
  }
  func.func @transform_1(%arg0: i32) -> (i32, i32) {
    %c0_i32 = arith.constant 0 : i32
    %c0_i32_0 = arith.constant 0 : i32
    return %arg0, %c0_i32 : i32, i32
  }
  func.func @transform_2(%arg0: i32) -> (i32, i32) {
    %c0_i32 = arith.constant 0 : i32
    %c0_i32_0 = arith.constant 0 : i32
    return %arg0, %c0_i32 : i32, i32
  }
}

module attributes {stable_mosaic.version = 11 : i64} {
  func.func @_embed_kernel(%arg0: i32, %arg1: memref<1x18x256xf32, #tpu.memory_space<vmem>>, %arg2: memref<1x16x1xf32, #tpu.memory_space<vmem>>, %arg3: memref<3x256x64xf32, #tpu.memory_space<vmem>>, %arg4: memref<1x64xf32, #tpu.memory_space<vmem>>, %arg5: memref<1x64xf32, #tpu.memory_space<vmem>>, %arg6: memref<1x64xf32, #tpu.memory_space<vmem>>, %arg7: memref<16x64xf32, #tpu.memory_space<vmem>>, %arg8: memref<1x16x64xf32, #tpu.memory_space<vmem>>) attributes {dimension_semantics = [#tpu.dimension_semantics<parallel>], iteration_bounds = array<i64: 2>, scalar_prefetch = 0 : i64, scratch_operands = 0 : i64, tpu.core_type = #tpu.core_type<tc>, window_params = [{transform_indices = @transform_0, window_bounds = array<i64: 1, 18, 256>}, {transform_indices = @transform_1, window_bounds = array<i64: 1, 16, 1>}, {pipeline_mode = #tpu.pipeline_mode<synchronous>, transform_indices = @transform_2, window_bounds = array<i64: 3, 256, 64>}, {pipeline_mode = #tpu.pipeline_mode<synchronous>, transform_indices = @transform_3, window_bounds = array<i64: 1, 64>}, {pipeline_mode = #tpu.pipeline_mode<synchronous>, transform_indices = @transform_4, window_bounds = array<i64: 1, 64>}, {pipeline_mode = #tpu.pipeline_mode<synchronous>, transform_indices = @transform_5, window_bounds = array<i64: 1, 64>}, {pipeline_mode = #tpu.pipeline_mode<synchronous>, transform_indices = @transform_6, window_bounds = array<i64: 16, 64>}, {transform_indices = @transform_7, window_bounds = array<i64: 1, 16, 64>}]} {
    %c0 = arith.constant 0 : index
    %c0_0 = arith.constant 0 : index
    %c0_1 = arith.constant 0 : index
    %0 = vector.load %arg1[%c0, %c0_0, %c0_1] : memref<1x18x256xf32, #tpu.memory_space<vmem>>, vector<1x18x256xf32>
    %1 = vector.shape_cast %0 : vector<1x18x256xf32> to vector<18x256xf32>
    %2 = arith.truncf %1 : vector<18x256xf32> to vector<18x256xbf16>
    %cst = arith.constant 0.000000e+00 : f32
    %3 = vector.broadcast %cst : f32 to vector<16x64xf32>
    %4 = vector.extract_strided_slice %2 {offsets = [0, 0], sizes = [16, 256], strides = [1, 1]} : vector<18x256xbf16> to vector<16x256xbf16>
    %c0_2 = arith.constant 0 : index
    %c0_3 = arith.constant 0 : index
    %c0_4 = arith.constant 0 : index
    %5 = vector.load %arg3[%c0_2, %c0_3, %c0_4] : memref<3x256x64xf32, #tpu.memory_space<vmem>>, vector<1x256x64xf32>
    %6 = vector.shape_cast %5 : vector<1x256x64xf32> to vector<256x64xf32>
    %7 = arith.truncf %6 : vector<256x64xf32> to vector<256x64xbf16>
    %cst_5 = arith.constant dense<0.000000e+00> : vector<16x64xf32>
    %8 = tpu.matmul %4, %7, %cst_5 {dimension_numbers = #tpu.dot_dimension_numbers<[1], [0], [0], [1], [0, 0, 1, 1], [], []>} : vector<16x256xbf16>, vector<256x64xbf16>, vector<16x64xf32> -> vector<16x64xf32>
    %9 = arith.addf %3, %8 : vector<16x64xf32>
    %10 = vector.extract_strided_slice %2 {offsets = [1, 0], sizes = [16, 256], strides = [1, 1]} : vector<18x256xbf16> to vector<16x256xbf16>
    %c1 = arith.constant 1 : index
    %c0_6 = arith.constant 0 : index
    %c0_7 = arith.constant 0 : index
    %11 = vector.load %arg3[%c1, %c0_6, %c0_7] : memref<3x256x64xf32, #tpu.memory_space<vmem>>, vector<1x256x64xf32>
    %12 = vector.shape_cast %11 : vector<1x256x64xf32> to vector<256x64xf32>
    %13 = arith.truncf %12 : vector<256x64xf32> to vector<256x64xbf16>
    %cst_8 = arith.constant dense<0.000000e+00> : vector<16x64xf32>
    %14 = tpu.matmul %10, %13, %cst_8 {dimension_numbers = #tpu.dot_dimension_numbers<[1], [0], [0], [1], [0, 0, 1, 1], [], []>} : vector<16x256xbf16>, vector<256x64xbf16>, vector<16x64xf32> -> vector<16x64xf32>
    %15 = arith.addf %9, %14 : vector<16x64xf32>
    %16 = vector.extract_strided_slice %2 {offsets = [2, 0], sizes = [16, 256], strides = [1, 1]} : vector<18x256xbf16> to vector<16x256xbf16>
    %c2 = arith.constant 2 : index
    %c0_9 = arith.constant 0 : index
    %c0_10 = arith.constant 0 : index
    %17 = vector.load %arg3[%c2, %c0_9, %c0_10] : memref<3x256x64xf32, #tpu.memory_space<vmem>>, vector<1x256x64xf32>
    %18 = vector.shape_cast %17 : vector<1x256x64xf32> to vector<256x64xf32>
    %19 = arith.truncf %18 : vector<256x64xf32> to vector<256x64xbf16>
    %cst_11 = arith.constant dense<0.000000e+00> : vector<16x64xf32>
    %20 = tpu.matmul %16, %19, %cst_11 {dimension_numbers = #tpu.dot_dimension_numbers<[1], [0], [0], [1], [0, 0, 1, 1], [], []>} : vector<16x256xbf16>, vector<256x64xbf16>, vector<16x64xf32> -> vector<16x64xf32>
    %21 = arith.addf %15, %20 : vector<16x64xf32>
    %c0_12 = arith.constant 0 : index
    %c0_13 = arith.constant 0 : index
    %c0_14 = arith.constant 0 : index
    %22 = vector.load %arg2[%c0_12, %c0_13, %c0_14] : memref<1x16x1xf32, #tpu.memory_space<vmem>>, vector<1x16x1xf32>
    %23 = vector.shape_cast %22 : vector<1x16x1xf32> to vector<16x1xf32>
    %c0_15 = arith.constant 0 : index
    %c0_16 = arith.constant 0 : index
    %24 = vector.load %arg4[%c0_15, %c0_16] : memref<1x64xf32, #tpu.memory_space<vmem>>, vector<1x64xf32>
    %25 = vector.broadcast %24 : vector<1x64xf32> to vector<16x64xf32>
    %26 = arith.addf %21, %25 : vector<16x64xf32>
    %27 = vector.broadcast %23 : vector<16x1xf32> to vector<16x64xf32>
    %28 = arith.mulf %26, %27 : vector<16x64xf32>
    %cst_17 = arith.constant dense<0.000000e+00> : vector<16xf32>
    %29 = vector.multi_reduction <add>, %28, %cst_17 [1] : vector<16x64xf32> to vector<16xf32>
    %30 = vector.shape_cast %29 : vector<16xf32> to vector<16x1xf32>
    %cst_18 = arith.constant 6.400000e+01 : f32
    %31 = vector.broadcast %cst_18 : f32 to vector<16x1xf32>
    %32 = arith.divf %30, %31 : vector<16x1xf32>
    %33 = vector.broadcast %32 : vector<16x1xf32> to vector<16x64xf32>
    %34 = arith.subf %28, %33 : vector<16x64xf32>
    %35 = arith.mulf %34, %34 : vector<16x64xf32>
    %cst_19 = arith.constant dense<0.000000e+00> : vector<16xf32>
    %36 = vector.multi_reduction <add>, %35, %cst_19 [1] : vector<16x64xf32> to vector<16xf32>
    %37 = vector.shape_cast %36 : vector<16xf32> to vector<16x1xf32>
    %cst_20 = arith.constant 6.400000e+01 : f32
    %38 = vector.broadcast %cst_20 : f32 to vector<16x1xf32>
    %39 = arith.divf %37, %38 : vector<16x1xf32>
    %40 = vector.broadcast %32 : vector<16x1xf32> to vector<16x64xf32>
    %41 = arith.subf %28, %40 : vector<16x64xf32>
    %cst_21 = arith.constant 9.99999974E-6 : f32
    %42 = vector.broadcast %cst_21 : f32 to vector<16x1xf32>
    %43 = arith.addf %39, %42 : vector<16x1xf32>
    %44 = math.rsqrt %43 : vector<16x1xf32>
    %45 = vector.broadcast %44 : vector<16x1xf32> to vector<16x64xf32>
    %46 = arith.mulf %41, %45 : vector<16x64xf32>
    %c0_22 = arith.constant 0 : index
    %c0_23 = arith.constant 0 : index
    %47 = vector.load %arg5[%c0_22, %c0_23] : memref<1x64xf32, #tpu.memory_space<vmem>>, vector<1x64xf32>
    %48 = vector.broadcast %47 : vector<1x64xf32> to vector<16x64xf32>
    %49 = arith.mulf %46, %48 : vector<16x64xf32>
    %c0_24 = arith.constant 0 : index
    %c0_25 = arith.constant 0 : index
    %50 = vector.load %arg6[%c0_24, %c0_25] : memref<1x64xf32, #tpu.memory_space<vmem>>, vector<1x64xf32>
    %51 = vector.broadcast %50 : vector<1x64xf32> to vector<16x64xf32>
    %52 = arith.addf %49, %51 : vector<16x64xf32>
    %cst_26 = arith.constant 0.000000e+00 : f32
    %53 = vector.broadcast %cst_26 : f32 to vector<16x64xf32>
    %54 = arith.maximumf %52, %53 : vector<16x64xf32>
    %c0_27 = arith.constant 0 : index
    %c0_28 = arith.constant 0 : index
    %55 = vector.load %arg7[%c0_27, %c0_28] : memref<16x64xf32, #tpu.memory_space<vmem>>, vector<16x64xf32>
    %56 = vector.broadcast %23 : vector<16x1xf32> to vector<16x64xf32>
    %57 = arith.mulf %55, %56 : vector<16x64xf32>
    %58 = arith.addf %54, %57 : vector<16x64xf32>
    %c0_29 = arith.constant 0 : index
    %c0_30 = arith.constant 0 : index
    %c0_31 = arith.constant 0 : index
    %59 = vector.load %arg8[%c0_29, %c0_30, %c0_31] : memref<1x16x64xf32, #tpu.memory_space<vmem>>, vector<1x16x64xf32>
    %60 = vector.shape_cast %59 : vector<1x16x64xf32> to vector<16x64xf32>
    %61 = vector.shape_cast %58 : vector<16x64xf32> to vector<1x16x64xf32>
    tpu.vector_store %arg8[%c0_29, %c0_30, %c0_31], %61 {strides = array<i32>} : memref<1x16x64xf32, #tpu.memory_space<vmem>>, vector<1x16x64xf32>,
    return
  }
  func.func @transform_0(%arg0: i32) -> (i32, i32, i32) {
    %c0_i32 = arith.constant 0 : i32
    %c0_i32_0 = arith.constant 0 : i32
    %c0_i32_1 = arith.constant 0 : i32
    return %arg0, %c0_i32, %c0_i32_0 : i32, i32, i32
  }
  func.func @transform_1(%arg0: i32) -> (i32, i32, i32) {
    %c0_i32 = arith.constant 0 : i32
    %c0_i32_0 = arith.constant 0 : i32
    %c0_i32_1 = arith.constant 0 : i32
    return %arg0, %c0_i32, %c0_i32_0 : i32, i32, i32
  }
  func.func @transform_2(%arg0: i32) -> (i32, i32, i32) {
    %c0_i32 = arith.constant 0 : i32
    %c0_i32_0 = arith.constant 0 : i32
    %c0_i32_1 = arith.constant 0 : i32
    %c0_i32_2 = arith.constant 0 : i32
    return %c0_i32, %c0_i32_0, %c0_i32_1 : i32, i32, i32
  }
  func.func @transform_3(%arg0: i32) -> (i32, i32) {
    %c0_i32 = arith.constant 0 : i32
    %c0_i32_0 = arith.constant 0 : i32
    %c0_i32_1 = arith.constant 0 : i32
    return %c0_i32, %c0_i32_0 : i32, i32
  }
  func.func @transform_4(%arg0: i32) -> (i32, i32) {
    %c0_i32 = arith.constant 0 : i32
    %c0_i32_0 = arith.constant 0 : i32
    %c0_i32_1 = arith.constant 0 : i32
    return %c0_i32, %c0_i32_0 : i32, i32
  }
  func.func @transform_5(%arg0: i32) -> (i32, i32) {
    %c0_i32 = arith.constant 0 : i32
    %c0_i32_0 = arith.constant 0 : i32
    %c0_i32_1 = arith.constant 0 : i32
    return %c0_i32, %c0_i32_0 : i32, i32
  }
  func.func @transform_6(%arg0: i32) -> (i32, i32) {
    %c0_i32 = arith.constant 0 : i32
    %c0_i32_0 = arith.constant 0 : i32
    %c0_i32_1 = arith.constant 0 : i32
    return %c0_i32, %c0_i32_0 : i32, i32
  }
  func.func @transform_7(%arg0: i32) -> (i32, i32, i32) {
    %c0_i32 = arith.constant 0 : i32
    %c0_i32_0 = arith.constant 0 : i32
    %c0_i32_1 = arith.constant 0 : i32
    return %arg0, %c0_i32, %c0_i32_0 : i32, i32, i32
  }
}

module attributes {stable_mosaic.version = 11 : i64} {
  func.func @_block_kernel(%arg0: i32, %arg1: memref<1x18x64xf32, #tpu.memory_space<vmem>>, %arg2: memref<1x16x1xf32, #tpu.memory_space<vmem>>, %arg3: memref<1x1x16xf32, #tpu.memory_space<vmem>>, %arg4: memref<10x64xf32, #tpu.memory_space<vmem>>, %arg5: memref<3x3x64xf32, #tpu.memory_space<vmem>>, %arg6: memref<3x64x64xf32, #tpu.memory_space<vmem>>, %arg7: memref<3x64xf32, #tpu.memory_space<vmem>>, %arg8: memref<64x64xf32, #tpu.memory_space<vmem>>, %arg9: memref<1x64xf32, #tpu.memory_space<vmem>>, %arg10: memref<64x256xf32, #tpu.memory_space<vmem>>, %arg11: memref<1x256xf32, #tpu.memory_space<vmem>>, %arg12: memref<256x64xf32, #tpu.memory_space<vmem>>, %arg13: memref<1x64xf32, #tpu.memory_space<vmem>>, %arg14: memref<1x16x64xf32, #tpu.memory_space<vmem>>) attributes {dimension_semantics = [#tpu.dimension_semantics<parallel>], iteration_bounds = array<i64: 2>, scalar_prefetch = 0 : i64, scratch_operands = 0 : i64, tpu.core_type = #tpu.core_type<tc>, window_params = [{transform_indices = @transform_0, window_bounds = array<i64: 1, 18, 64>}, {transform_indices = @transform_1, window_bounds = array<i64: 1, 16, 1>}, {transform_indices = @transform_2, window_bounds = array<i64: 1, 1, 16>}, {pipeline_mode = #tpu.pipeline_mode<synchronous>, transform_indices = @transform_3, window_bounds = array<i64: 10, 64>}, {pipeline_mode = #tpu.pipeline_mode<synchronous>, transform_indices = @transform_4, window_bounds = array<i64: 3, 3, 64>}, {pipeline_mode = #tpu.pipeline_mode<synchronous>, transform_indices = @transform_5, window_bounds = array<i64: 3, 64, 64>}, {pipeline_mode = #tpu.pipeline_mode<synchronous>, transform_indices = @transform_6, window_bounds = array<i64: 3, 64>}, {pipeline_mode = #tpu.pipeline_mode<synchronous>, transform_indices = @transform_7, window_bounds = array<i64: 64, 64>}, {pipeline_mode = #tpu.pipeline_mode<synchronous>, transform_indices = @transform_8, window_bounds = array<i64: 1, 64>}, {pipeline_mode = #tpu.pipeline_mode<synchronous>, transform_indices = @transform_9, window_bounds = array<i64: 64, 256>}, {pipeline_mode = #tpu.pipeline_mode<synchronous>, transform_indices = @transform_10, window_bounds = array<i64: 1, 256>}, {pipeline_mode = #tpu.pipeline_mode<synchronous>, transform_indices = @transform_11, window_bounds = array<i64: 256, 64>}, {pipeline_mode = #tpu.pipeline_mode<synchronous>, transform_indices = @transform_12, window_bounds = array<i64: 1, 64>}, {transform_indices = @transform_13, window_bounds = array<i64: 1, 16, 64>}]} {
    %c0 = arith.constant 0 : index
    %c0_0 = arith.constant 0 : index
    %0 = vector.load %arg4[%c0, %c0_0] : memref<10x64xf32, #tpu.memory_space<vmem>>, vector<10x64xf32>
    %c0_1 = arith.constant 0 : index
    %c0_2 = arith.constant 0 : index
    %c0_3 = arith.constant 0 : index
    %1 = vector.load %arg1[%c0_1, %c0_2, %c0_3] : memref<1x18x64xf32, #tpu.memory_space<vmem>>, vector<1x18x64xf32>
    %2 = vector.shape_cast %1 : vector<1x18x64xf32> to vector<18x64xf32>
    %3 = vector.extract_strided_slice %2 {offsets = [1, 0], sizes = [16, 64], strides = [1, 1]} : vector<18x64xf32> to vector<16x64xf32>
    %c0_4 = arith.constant 0 : index
    %c0_5 = arith.constant 0 : index
    %c0_6 = arith.constant 0 : index
    %4 = vector.load %arg2[%c0_4, %c0_5, %c0_6] : memref<1x16x1xf32, #tpu.memory_space<vmem>>, vector<1x16x1xf32>
    %5 = vector.shape_cast %4 : vector<1x16x1xf32> to vector<16x1xf32>
    %c0_7 = arith.constant 0 : index
    %c0_8 = arith.constant 0 : index
    %c0_9 = arith.constant 0 : index
    %6 = vector.load %arg3[%c0_7, %c0_8, %c0_9] : memref<1x1x16xf32, #tpu.memory_space<vmem>>, vector<1x1x16xf32>
    %7 = vector.shape_cast %6 : vector<1x1x16xf32> to vector<1x16xf32>
    %8 = tpu.iota {dimensions = array<i32: 0>} : vector<18x1xi32>
    %c1_i32 = arith.constant 1 : i32
    %9 = vector.broadcast %c1_i32 : i32 to vector<18x1xi32>
    %10 = arith.cmpi sge, %8, %9 : vector<18x1xi32>
    %c16_i32 = arith.constant 16 : i32
    %11 = vector.broadcast %c16_i32 : i32 to vector<18x1xi32>
    %12 = arith.cmpi sle, %8, %11 : vector<18x1xi32>
    %13 = arith.andi %10, %12 : vector<18x1xi1>
    %cst = arith.constant dense<0.000000e+00> : vector<18xf32>
    %14 = vector.multi_reduction <add>, %2, %cst [1] : vector<18x64xf32> to vector<18xf32>
    %15 = vector.shape_cast %14 : vector<18xf32> to vector<18x1xf32>
    %cst_10 = arith.constant 6.400000e+01 : f32
    %16 = vector.broadcast %cst_10 : f32 to vector<18x1xf32>
    %17 = arith.divf %15, %16 : vector<18x1xf32>
    %18 = vector.broadcast %17 : vector<18x1xf32> to vector<18x64xf32>
    %19 = arith.subf %2, %18 : vector<18x64xf32>
    %20 = arith.mulf %19, %19 : vector<18x64xf32>
    %cst_11 = arith.constant dense<0.000000e+00> : vector<18xf32>
    %21 = vector.multi_reduction <add>, %20, %cst_11 [1] : vector<18x64xf32> to vector<18xf32>
    %22 = vector.shape_cast %21 : vector<18xf32> to vector<18x1xf32>
    %cst_12 = arith.constant 6.400000e+01 : f32
    %23 = vector.broadcast %cst_12 : f32 to vector<18x1xf32>
    %24 = arith.divf %22, %23 : vector<18x1xf32>
    %25 = vector.broadcast %17 : vector<18x1xf32> to vector<18x64xf32>
    %26 = arith.subf %2, %25 : vector<18x64xf32>
    %cst_13 = arith.constant 9.99999974E-6 : f32
    %27 = vector.broadcast %cst_13 : f32 to vector<18x1xf32>
    %28 = arith.addf %24, %27 : vector<18x1xf32>
    %29 = math.rsqrt %28 : vector<18x1xf32>
    %30 = vector.broadcast %29 : vector<18x1xf32> to vector<18x64xf32>
    %31 = arith.mulf %26, %30 : vector<18x64xf32>
    %32 = vector.extract_strided_slice %0 {offsets = [0, 0], sizes = [1, 64], strides = [1, 1]} : vector<10x64xf32> to vector<1x64xf32>
    %33 = vector.broadcast %32 : vector<1x64xf32> to vector<18x64xf32>
    %34 = arith.mulf %31, %33 : vector<18x64xf32>
    %35 = vector.extract_strided_slice %0 {offsets = [1, 0], sizes = [1, 64], strides = [1, 1]} : vector<10x64xf32> to vector<1x64xf32>
    %36 = vector.broadcast %35 : vector<1x64xf32> to vector<18x64xf32>
    %37 = arith.addf %34, %36 : vector<18x64xf32>
    %cst_14 = arith.constant 0.000000e+00 : f32
    %38 = vector.shape_cast %13 : vector<18x1xi1> to vector<18x1xi1>
    %39 = vector.broadcast %38 : vector<18x1xi1> to vector<18x64xi1>
    %40 = vector.broadcast %cst_14 : f32 to vector<18x64xf32>
    %41 = arith.select %39, %37, %40 : vector<18x64xi1>, vector<18x64xf32>
    %42 = vector.extract_strided_slice %41 {offsets = [0, 0], sizes = [16, 64], strides = [1, 1]} : vector<18x64xf32> to vector<16x64xf32>
    %43 = vector.extract_strided_slice %41 {offsets = [1, 0], sizes = [16, 64], strides = [1, 1]} : vector<18x64xf32> to vector<16x64xf32>
    %44 = vector.extract_strided_slice %41 {offsets = [2, 0], sizes = [16, 64], strides = [1, 1]} : vector<18x64xf32> to vector<16x64xf32>
    %c0_15 = arith.constant 0 : index
    %c0_16 = arith.constant 0 : index
    %45 = vector.load %arg7[%c0_15, %c0_16] : memref<3x64xf32, #tpu.memory_space<vmem>>, vector<3x64xf32>
    %c0_17 = arith.constant 0 : index
    %c0_18 = arith.constant 0 : index
    %c0_19 = arith.constant 0 : index
    %46 = vector.load %arg5[%c0_17, %c0_18, %c0_19] : memref<3x3x64xf32, #tpu.memory_space<vmem>>, vector<1x3x64xf32>
    %47 = vector.shape_cast %46 : vector<1x3x64xf32> to vector<3x64xf32>
    %48 = vector.extract_strided_slice %47 {offsets = [0, 0], sizes = [1, 64], strides = [1, 1]} : vector<3x64xf32> to vector<1x64xf32>
    %49 = vector.broadcast %48 : vector<1x64xf32> to vector<16x64xf32>
    %50 = arith.mulf %42, %49 : vector<16x64xf32>
    %51 = vector.extract_strided_slice %47 {offsets = [1, 0], sizes = [1, 64], strides = [1, 1]} : vector<3x64xf32> to vector<1x64xf32>
    %52 = vector.broadcast %51 : vector<1x64xf32> to vector<16x64xf32>
    %53 = arith.mulf %43, %52 : vector<16x64xf32>
    %54 = arith.addf %50, %53 : vector<16x64xf32>
    %55 = vector.extract_strided_slice %47 {offsets = [2, 0], sizes = [1, 64], strides = [1, 1]} : vector<3x64xf32> to vector<1x64xf32>
    %56 = vector.broadcast %55 : vector<1x64xf32> to vector<16x64xf32>
    %57 = arith.mulf %44, %56 : vector<16x64xf32>
    %58 = arith.addf %54, %57 : vector<16x64xf32>
    %59 = vector.broadcast %5 : vector<16x1xf32> to vector<16x64xf32>
    %60 = arith.mulf %58, %59 : vector<16x64xf32>
    %cst_20 = arith.constant dense<0.000000e+00> : vector<16xf32>
    %61 = vector.multi_reduction <add>, %60, %cst_20 [1] : vector<16x64xf32> to vector<16xf32>
    %62 = vector.shape_cast %61 : vector<16xf32> to vector<16x1xf32>
    %cst_21 = arith.constant 6.400000e+01 : f32
    %63 = vector.broadcast %cst_21 : f32 to vector<16x1xf32>
    %64 = arith.divf %62, %63 : vector<16x1xf32>
    %65 = vector.broadcast %64 : vector<16x1xf32> to vector<16x64xf32>
    %66 = arith.subf %60, %65 : vector<16x64xf32>
    %67 = arith.mulf %66, %66 : vector<16x64xf32>
    %cst_22 = arith.constant dense<0.000000e+00> : vector<16xf32>
    %68 = vector.multi_reduction <add>, %67, %cst_22 [1] : vector<16x64xf32> to vector<16xf32>
    %69 = vector.shape_cast %68 : vector<16xf32> to vector<16x1xf32>
    %cst_23 = arith.constant 6.400000e+01 : f32
    %70 = vector.broadcast %cst_23 : f32 to vector<16x1xf32>
    %71 = arith.divf %69, %70 : vector<16x1xf32>
    %72 = vector.broadcast %64 : vector<16x1xf32> to vector<16x64xf32>
    %73 = arith.subf %60, %72 : vector<16x64xf32>
    %cst_24 = arith.constant 9.99999974E-6 : f32
    %74 = vector.broadcast %cst_24 : f32 to vector<16x1xf32>
    %75 = arith.addf %71, %74 : vector<16x1xf32>
    %76 = math.rsqrt %75 : vector<16x1xf32>
    %77 = vector.broadcast %76 : vector<16x1xf32> to vector<16x64xf32>
    %78 = arith.mulf %73, %77 : vector<16x64xf32>
    %79 = vector.extract_strided_slice %0 {offsets = [2, 0], sizes = [1, 64], strides = [1, 1]} : vector<10x64xf32> to vector<1x64xf32>
    %80 = vector.broadcast %79 : vector<1x64xf32> to vector<16x64xf32>
    %81 = arith.mulf %78, %80 : vector<16x64xf32>
    %82 = vector.extract_strided_slice %0 {offsets = [3, 0], sizes = [1, 64], strides = [1, 1]} : vector<10x64xf32> to vector<1x64xf32>
    %83 = vector.broadcast %82 : vector<1x64xf32> to vector<16x64xf32>
    %84 = arith.addf %81, %83 : vector<16x64xf32>
    %85 = arith.truncf %84 : vector<16x64xf32> to vector<16x64xbf16>
    %c0_25 = arith.constant 0 : index
    %c0_26 = arith.constant 0 : index
    %c0_27 = arith.constant 0 : index
    %86 = vector.load %arg6[%c0_25, %c0_26, %c0_27] : memref<3x64x64xf32, #tpu.memory_space<vmem>>, vector<1x64x64xf32>
    %87 = vector.shape_cast %86 : vector<1x64x64xf32> to vector<64x64xf32>
    %88 = arith.truncf %87 : vector<64x64xf32> to vector<64x64xbf16>
    %cst_28 = arith.constant dense<0.000000e+00> : vector<16x64xf32>
    %89 = tpu.matmul %85, %88, %cst_28 {dimension_numbers = #tpu.dot_dimension_numbers<[1], [0], [0], [1], [0, 0, 1, 1], [], []>} : vector<16x64xbf16>, vector<64x64xbf16>, vector<16x64xf32> -> vector<16x64xf32>
    %90 = vector.extract_strided_slice %45 {offsets = [0, 0], sizes = [1, 64], strides = [1, 1]} : vector<3x64xf32> to vector<1x64xf32>
    %91 = vector.broadcast %90 : vector<1x64xf32> to vector<16x64xf32>
    %92 = arith.addf %89, %91 : vector<16x64xf32>
    %c1 = arith.constant 1 : index
    %c0_29 = arith.constant 0 : index
    %c0_30 = arith.constant 0 : index
    %93 = vector.load %arg5[%c1, %c0_29, %c0_30] : memref<3x3x64xf32, #tpu.memory_space<vmem>>, vector<1x3x64xf32>
    %94 = vector.shape_cast %93 : vector<1x3x64xf32> to vector<3x64xf32>
    %95 = vector.extract_strided_slice %94 {offsets = [0, 0], sizes = [1, 64], strides = [1, 1]} : vector<3x64xf32> to vector<1x64xf32>
    %96 = vector.broadcast %95 : vector<1x64xf32> to vector<16x64xf32>
    %97 = arith.mulf %42, %96 : vector<16x64xf32>
    %98 = vector.extract_strided_slice %94 {offsets = [1, 0], sizes = [1, 64], strides = [1, 1]} : vector<3x64xf32> to vector<1x64xf32>
    %99 = vector.broadcast %98 : vector<1x64xf32> to vector<16x64xf32>
    %100 = arith.mulf %43, %99 : vector<16x64xf32>
    %101 = arith.addf %97, %100 : vector<16x64xf32>
    %102 = vector.extract_strided_slice %94 {offsets = [2, 0], sizes = [1, 64], strides = [1, 1]} : vector<3x64xf32> to vector<1x64xf32>
    %103 = vector.broadcast %102 : vector<1x64xf32> to vector<16x64xf32>
    %104 = arith.mulf %44, %103 : vector<16x64xf32>
    %105 = arith.addf %101, %104 : vector<16x64xf32>
    %106 = vector.broadcast %5 : vector<16x1xf32> to vector<16x64xf32>
    %107 = arith.mulf %105, %106 : vector<16x64xf32>
    %cst_31 = arith.constant dense<0.000000e+00> : vector<16xf32>
    %108 = vector.multi_reduction <add>, %107, %cst_31 [1] : vector<16x64xf32> to vector<16xf32>
    %109 = vector.shape_cast %108 : vector<16xf32> to vector<16x1xf32>
    %cst_32 = arith.constant 6.400000e+01 : f32
    %110 = vector.broadcast %cst_32 : f32 to vector<16x1xf32>
    %111 = arith.divf %109, %110 : vector<16x1xf32>
    %112 = vector.broadcast %111 : vector<16x1xf32> to vector<16x64xf32>
    %113 = arith.subf %107, %112 : vector<16x64xf32>
    %114 = arith.mulf %113, %113 : vector<16x64xf32>
    %cst_33 = arith.constant dense<0.000000e+00> : vector<16xf32>
    %115 = vector.multi_reduction <add>, %114, %cst_33 [1] : vector<16x64xf32> to vector<16xf32>
    %116 = vector.shape_cast %115 : vector<16xf32> to vector<16x1xf32>
    %cst_34 = arith.constant 6.400000e+01 : f32
    %117 = vector.broadcast %cst_34 : f32 to vector<16x1xf32>
    %118 = arith.divf %116, %117 : vector<16x1xf32>
    %119 = vector.broadcast %111 : vector<16x1xf32> to vector<16x64xf32>
    %120 = arith.subf %107, %119 : vector<16x64xf32>
    %cst_35 = arith.constant 9.99999974E-6 : f32
    %121 = vector.broadcast %cst_35 : f32 to vector<16x1xf32>
    %122 = arith.addf %118, %121 : vector<16x1xf32>
    %123 = math.rsqrt %122 : vector<16x1xf32>
    %124 = vector.broadcast %123 : vector<16x1xf32> to vector<16x64xf32>
    %125 = arith.mulf %120, %124 : vector<16x64xf32>
    %126 = vector.extract_strided_slice %0 {offsets = [4, 0], sizes = [1, 64], strides = [1, 1]} : vector<10x64xf32> to vector<1x64xf32>
    %127 = vector.broadcast %126 : vector<1x64xf32> to vector<16x64xf32>
    %128 = arith.mulf %125, %127 : vector<16x64xf32>
    %129 = vector.extract_strided_slice %0 {offsets = [5, 0], sizes = [1, 64], strides = [1, 1]} : vector<10x64xf32> to vector<1x64xf32>
    %130 = vector.broadcast %129 : vector<1x64xf32> to vector<16x64xf32>
    %131 = arith.addf %128, %130 : vector<16x64xf32>
    %132 = arith.truncf %131 : vector<16x64xf32> to vector<16x64xbf16>
    %c1_36 = arith.constant 1 : index
    %c0_37 = arith.constant 0 : index
    %c0_38 = arith.constant 0 : index
    %133 = vector.load %arg6[%c1_36, %c0_37, %c0_38] : memref<3x64x64xf32, #tpu.memory_space<vmem>>, vector<1x64x64xf32>
    %134 = vector.shape_cast %133 : vector<1x64x64xf32> to vector<64x64xf32>
    %135 = arith.truncf %134 : vector<64x64xf32> to vector<64x64xbf16>
    %cst_39 = arith.constant dense<0.000000e+00> : vector<16x64xf32>
    %136 = tpu.matmul %132, %135, %cst_39 {dimension_numbers = #tpu.dot_dimension_numbers<[1], [0], [0], [1], [0, 0, 1, 1], [], []>} : vector<16x64xbf16>, vector<64x64xbf16>, vector<16x64xf32> -> vector<16x64xf32>
    %137 = vector.extract_strided_slice %45 {offsets = [1, 0], sizes = [1, 64], strides = [1, 1]} : vector<3x64xf32> to vector<1x64xf32>
    %138 = vector.broadcast %137 : vector<1x64xf32> to vector<16x64xf32>
    %139 = arith.addf %136, %138 : vector<16x64xf32>
    %c2 = arith.constant 2 : index
    %c0_40 = arith.constant 0 : index
    %c0_41 = arith.constant 0 : index
    %140 = vector.load %arg5[%c2, %c0_40, %c0_41] : memref<3x3x64xf32, #tpu.memory_space<vmem>>, vector<1x3x64xf32>
    %141 = vector.shape_cast %140 : vector<1x3x64xf32> to vector<3x64xf32>
    %142 = vector.extract_strided_slice %141 {offsets = [0, 0], sizes = [1, 64], strides = [1, 1]} : vector<3x64xf32> to vector<1x64xf32>
    %143 = vector.broadcast %142 : vector<1x64xf32> to vector<16x64xf32>
    %144 = arith.mulf %42, %143 : vector<16x64xf32>
    %145 = vector.extract_strided_slice %141 {offsets = [1, 0], sizes = [1, 64], strides = [1, 1]} : vector<3x64xf32> to vector<1x64xf32>
    %146 = vector.broadcast %145 : vector<1x64xf32> to vector<16x64xf32>
    %147 = arith.mulf %43, %146 : vector<16x64xf32>
    %148 = arith.addf %144, %147 : vector<16x64xf32>
    %149 = vector.extract_strided_slice %141 {offsets = [2, 0], sizes = [1, 64], strides = [1, 1]} : vector<3x64xf32> to vector<1x64xf32>
    %150 = vector.broadcast %149 : vector<1x64xf32> to vector<16x64xf32>
    %151 = arith.mulf %44, %150 : vector<16x64xf32>
    %152 = arith.addf %148, %151 : vector<16x64xf32>
    %153 = vector.broadcast %5 : vector<16x1xf32> to vector<16x64xf32>
    %154 = arith.mulf %152, %153 : vector<16x64xf32>
    %cst_42 = arith.constant dense<0.000000e+00> : vector<16xf32>
    %155 = vector.multi_reduction <add>, %154, %cst_42 [1] : vector<16x64xf32> to vector<16xf32>
    %156 = vector.shape_cast %155 : vector<16xf32> to vector<16x1xf32>
    %cst_43 = arith.constant 6.400000e+01 : f32
    %157 = vector.broadcast %cst_43 : f32 to vector<16x1xf32>
    %158 = arith.divf %156, %157 : vector<16x1xf32>
    %159 = vector.broadcast %158 : vector<16x1xf32> to vector<16x64xf32>
    %160 = arith.subf %154, %159 : vector<16x64xf32>
    %161 = arith.mulf %160, %160 : vector<16x64xf32>
    %cst_44 = arith.constant dense<0.000000e+00> : vector<16xf32>
    %162 = vector.multi_reduction <add>, %161, %cst_44 [1] : vector<16x64xf32> to vector<16xf32>
    %163 = vector.shape_cast %162 : vector<16xf32> to vector<16x1xf32>
    %cst_45 = arith.constant 6.400000e+01 : f32
    %164 = vector.broadcast %cst_45 : f32 to vector<16x1xf32>
    %165 = arith.divf %163, %164 : vector<16x1xf32>
    %166 = vector.broadcast %158 : vector<16x1xf32> to vector<16x64xf32>
    %167 = arith.subf %154, %166 : vector<16x64xf32>
    %cst_46 = arith.constant 9.99999974E-6 : f32
    %168 = vector.broadcast %cst_46 : f32 to vector<16x1xf32>
    %169 = arith.addf %165, %168 : vector<16x1xf32>
    %170 = math.rsqrt %169 : vector<16x1xf32>
    %171 = vector.broadcast %170 : vector<16x1xf32> to vector<16x64xf32>
    %172 = arith.mulf %167, %171 : vector<16x64xf32>
    %173 = vector.extract_strided_slice %0 {offsets = [6, 0], sizes = [1, 64], strides = [1, 1]} : vector<10x64xf32> to vector<1x64xf32>
    %174 = vector.broadcast %173 : vector<1x64xf32> to vector<16x64xf32>
    %175 = arith.mulf %172, %174 : vector<16x64xf32>
    %176 = vector.extract_strided_slice %0 {offsets = [7, 0], sizes = [1, 64], strides = [1, 1]} : vector<10x64xf32> to vector<1x64xf32>
    %177 = vector.broadcast %176 : vector<1x64xf32> to vector<16x64xf32>
    %178 = arith.addf %175, %177 : vector<16x64xf32>
    %179 = arith.truncf %178 : vector<16x64xf32> to vector<16x64xbf16>
    %c2_47 = arith.constant 2 : index
    %c0_48 = arith.constant 0 : index
    %c0_49 = arith.constant 0 : index
    %180 = vector.load %arg6[%c2_47, %c0_48, %c0_49] : memref<3x64x64xf32, #tpu.memory_space<vmem>>, vector<1x64x64xf32>
    %181 = vector.shape_cast %180 : vector<1x64x64xf32> to vector<64x64xf32>
    %182 = arith.truncf %181 : vector<64x64xf32> to vector<64x64xbf16>
    %cst_50 = arith.constant dense<0.000000e+00> : vector<16x64xf32>
    %183 = tpu.matmul %179, %182, %cst_50 {dimension_numbers = #tpu.dot_dimension_numbers<[1], [0], [0], [1], [0, 0, 1, 1], [], []>} : vector<16x64xbf16>, vector<64x64xbf16>, vector<16x64xf32> -> vector<16x64xf32>
    %184 = vector.extract_strided_slice %45 {offsets = [2, 0], sizes = [1, 64], strides = [1, 1]} : vector<3x64xf32> to vector<1x64xf32>
    %185 = vector.broadcast %184 : vector<1x64xf32> to vector<16x64xf32>
    %186 = arith.addf %183, %185 : vector<16x64xf32>
    %187 = vector.extract_strided_slice %92 {offsets = [0, 0], sizes = [16, 16], strides = [1, 1]} : vector<16x64xf32> to vector<16x16xf32>
    %cst_51 = arith.constant 2.500000e-01 : f32
    %188 = vector.broadcast %cst_51 : f32 to vector<16x16xf32>
    %189 = arith.mulf %187, %188 : vector<16x16xf32>
    %190 = arith.truncf %189 : vector<16x16xf32> to vector<16x16xbf16>
    %191 = vector.extract_strided_slice %139 {offsets = [0, 0], sizes = [16, 16], strides = [1, 1]} : vector<16x64xf32> to vector<16x16xf32>
    %192 = arith.truncf %191 : vector<16x16xf32> to vector<16x16xbf16>
    %193 = vector.extract_strided_slice %186 {offsets = [0, 0], sizes = [16, 16], strides = [1, 1]} : vector<16x64xf32> to vector<16x16xf32>
    %194 = arith.truncf %193 : vector<16x16xf32> to vector<16x16xbf16>
    %cst_52 = arith.constant dense<0.000000e+00> : vector<16x16xf32>
    %195 = tpu.matmul %190, %192, %cst_52 {dimension_numbers = #tpu.dot_dimension_numbers<[1], [1], [0], [0], [0, 0, 1, 0], [], []>} : vector<16x16xbf16>, vector<16x16xbf16>, vector<16x16xf32> -> vector<16x16xf32>
    %cst_53 = arith.constant 0.000000e+00 : f32
    %196 = vector.broadcast %cst_53 : f32 to vector<1x16xf32>
    %197 = arith.cmpf ogt, %7, %196 : vector<1x16xf32>
    %cst_54 = arith.constant -1.000000e+30 : f32
    %198 = vector.shape_cast %197 : vector<1x16xi1> to vector<1x16xi1>
    %199 = vector.broadcast %198 : vector<1x16xi1> to vector<16x16xi1>
    %200 = vector.broadcast %cst_54 : f32 to vector<16x16xf32>
    %201 = arith.select %199, %195, %200 : vector<16x16xi1>, vector<16x16xf32>
    %cst_55 = arith.constant dense<0xFF800000> : vector<16xf32>
    %202 = vector.multi_reduction <maximumf>, %201, %cst_55 [1] : vector<16x16xf32> to vector<16xf32>
    %203 = vector.shape_cast %202 : vector<16xf32> to vector<16x1xf32>
    %204 = vector.broadcast %203 : vector<16x1xf32> to vector<16x16xf32>
    %205 = arith.subf %201, %204 : vector<16x16xf32>
    %206 = math.exp %205 : vector<16x16xf32>
    %cst_56 = arith.constant dense<0.000000e+00> : vector<16xf32>
    %207 = vector.multi_reduction <add>, %206, %cst_56 [1] : vector<16x16xf32> to vector<16xf32>
    %208 = vector.shape_cast %207 : vector<16xf32> to vector<16x1xf32>
    %209 = tpu.reciprocal %208 {approx = true} : vector<16x1xf32> -> vector<16x1xf32>
    %210 = vector.broadcast %209 : vector<16x1xf32> to vector<16x16xf32>
    %211 = arith.mulf %206, %210 : vector<16x16xf32>
    %212 = arith.truncf %211 : vector<16x16xf32> to vector<16x16xbf16>
    %cst_57 = arith.constant dense<0.000000e+00> : vector<16x16xf32>
    %213 = tpu.matmul %212, %194, %cst_57 {dimension_numbers = #tpu.dot_dimension_numbers<[1], [0], [0], [1], [0, 0, 1, 1], [], []>} : vector<16x16xbf16>, vector<16x16xbf16>, vector<16x16xf32> -> vector<16x16xf32>
    %214 = vector.extract_strided_slice %92 {offsets = [0, 16], sizes = [16, 16], strides = [1, 1]} : vector<16x64xf32> to vector<16x16xf32>
    %cst_58 = arith.constant 2.500000e-01 : f32
    %215 = vector.broadcast %cst_58 : f32 to vector<16x16xf32>
    %216 = arith.mulf %214, %215 : vector<16x16xf32>
    %217 = arith.truncf %216 : vector<16x16xf32> to vector<16x16xbf16>
    %218 = vector.extract_strided_slice %139 {offsets = [0, 16], sizes = [16, 16], strides = [1, 1]} : vector<16x64xf32> to vector<16x16xf32>
    %219 = arith.truncf %218 : vector<16x16xf32> to vector<16x16xbf16>
    %220 = vector.extract_strided_slice %186 {offsets = [0, 16], sizes = [16, 16], strides = [1, 1]} : vector<16x64xf32> to vector<16x16xf32>
    %221 = arith.truncf %220 : vector<16x16xf32> to vector<16x16xbf16>
    %cst_59 = arith.constant dense<0.000000e+00> : vector<16x16xf32>
    %222 = tpu.matmul %217, %219, %cst_59 {dimension_numbers = #tpu.dot_dimension_numbers<[1], [1], [0], [0], [0, 0, 1, 0], [], []>} : vector<16x16xbf16>, vector<16x16xbf16>, vector<16x16xf32> -> vector<16x16xf32>
    %cst_60 = arith.constant 0.000000e+00 : f32
    %223 = vector.broadcast %cst_60 : f32 to vector<1x16xf32>
    %224 = arith.cmpf ogt, %7, %223 : vector<1x16xf32>
    %cst_61 = arith.constant -1.000000e+30 : f32
    %225 = vector.shape_cast %224 : vector<1x16xi1> to vector<1x16xi1>
    %226 = vector.broadcast %225 : vector<1x16xi1> to vector<16x16xi1>
    %227 = vector.broadcast %cst_61 : f32 to vector<16x16xf32>
    %228 = arith.select %226, %222, %227 : vector<16x16xi1>, vector<16x16xf32>
    %cst_62 = arith.constant dense<0xFF800000> : vector<16xf32>
    %229 = vector.multi_reduction <maximumf>, %228, %cst_62 [1] : vector<16x16xf32> to vector<16xf32>
    %230 = vector.shape_cast %229 : vector<16xf32> to vector<16x1xf32>
    %231 = vector.broadcast %230 : vector<16x1xf32> to vector<16x16xf32>
    %232 = arith.subf %228, %231 : vector<16x16xf32>
    %233 = math.exp %232 : vector<16x16xf32>
    %cst_63 = arith.constant dense<0.000000e+00> : vector<16xf32>
    %234 = vector.multi_reduction <add>, %233, %cst_63 [1] : vector<16x16xf32> to vector<16xf32>
    %235 = vector.shape_cast %234 : vector<16xf32> to vector<16x1xf32>
    %236 = tpu.reciprocal %235 {approx = true} : vector<16x1xf32> -> vector<16x1xf32>
    %237 = vector.broadcast %236 : vector<16x1xf32> to vector<16x16xf32>
    %238 = arith.mulf %233, %237 : vector<16x16xf32>
    %239 = arith.truncf %238 : vector<16x16xf32> to vector<16x16xbf16>
    %cst_64 = arith.constant dense<0.000000e+00> : vector<16x16xf32>
    %240 = tpu.matmul %239, %221, %cst_64 {dimension_numbers = #tpu.dot_dimension_numbers<[1], [0], [0], [1], [0, 0, 1, 1], [], []>} : vector<16x16xbf16>, vector<16x16xbf16>, vector<16x16xf32> -> vector<16x16xf32>
    %241 = vector.extract_strided_slice %92 {offsets = [0, 32], sizes = [16, 16], strides = [1, 1]} : vector<16x64xf32> to vector<16x16xf32>
    %cst_65 = arith.constant 2.500000e-01 : f32
    %242 = vector.broadcast %cst_65 : f32 to vector<16x16xf32>
    %243 = arith.mulf %241, %242 : vector<16x16xf32>
    %244 = arith.truncf %243 : vector<16x16xf32> to vector<16x16xbf16>
    %245 = vector.extract_strided_slice %139 {offsets = [0, 32], sizes = [16, 16], strides = [1, 1]} : vector<16x64xf32> to vector<16x16xf32>
    %246 = arith.truncf %245 : vector<16x16xf32> to vector<16x16xbf16>
    %247 = vector.extract_strided_slice %186 {offsets = [0, 32], sizes = [16, 16], strides = [1, 1]} : vector<16x64xf32> to vector<16x16xf32>
    %248 = arith.truncf %247 : vector<16x16xf32> to vector<16x16xbf16>
    %cst_66 = arith.constant dense<0.000000e+00> : vector<16x16xf32>
    %249 = tpu.matmul %244, %246, %cst_66 {dimension_numbers = #tpu.dot_dimension_numbers<[1], [1], [0], [0], [0, 0, 1, 0], [], []>} : vector<16x16xbf16>, vector<16x16xbf16>, vector<16x16xf32> -> vector<16x16xf32>
    %cst_67 = arith.constant 0.000000e+00 : f32
    %250 = vector.broadcast %cst_67 : f32 to vector<1x16xf32>
    %251 = arith.cmpf ogt, %7, %250 : vector<1x16xf32>
    %cst_68 = arith.constant -1.000000e+30 : f32
    %252 = vector.shape_cast %251 : vector<1x16xi1> to vector<1x16xi1>
    %253 = vector.broadcast %252 : vector<1x16xi1> to vector<16x16xi1>
    %254 = vector.broadcast %cst_68 : f32 to vector<16x16xf32>
    %255 = arith.select %253, %249, %254 : vector<16x16xi1>, vector<16x16xf32>
    %cst_69 = arith.constant dense<0xFF800000> : vector<16xf32>
    %256 = vector.multi_reduction <maximumf>, %255, %cst_69 [1] : vector<16x16xf32> to vector<16xf32>
    %257 = vector.shape_cast %256 : vector<16xf32> to vector<16x1xf32>
    %258 = vector.broadcast %257 : vector<16x1xf32> to vector<16x16xf32>
    %259 = arith.subf %255, %258 : vector<16x16xf32>
    %260 = math.exp %259 : vector<16x16xf32>
    %cst_70 = arith.constant dense<0.000000e+00> : vector<16xf32>
    %261 = vector.multi_reduction <add>, %260, %cst_70 [1] : vector<16x16xf32> to vector<16xf32>
    %262 = vector.shape_cast %261 : vector<16xf32> to vector<16x1xf32>
    %263 = tpu.reciprocal %262 {approx = true} : vector<16x1xf32> -> vector<16x1xf32>
    %264 = vector.broadcast %263 : vector<16x1xf32> to vector<16x16xf32>
    %265 = arith.mulf %260, %264 : vector<16x16xf32>
    %266 = arith.truncf %265 : vector<16x16xf32> to vector<16x16xbf16>
    %cst_71 = arith.constant dense<0.000000e+00> : vector<16x16xf32>
    %267 = tpu.matmul %266, %248, %cst_71 {dimension_numbers = #tpu.dot_dimension_numbers<[1], [0], [0], [1], [0, 0, 1, 1], [], []>} : vector<16x16xbf16>, vector<16x16xbf16>, vector<16x16xf32> -> vector<16x16xf32>
    %268 = vector.extract_strided_slice %92 {offsets = [0, 48], sizes = [16, 16], strides = [1, 1]} : vector<16x64xf32> to vector<16x16xf32>
    %cst_72 = arith.constant 2.500000e-01 : f32
    %269 = vector.broadcast %cst_72 : f32 to vector<16x16xf32>
    %270 = arith.mulf %268, %269 : vector<16x16xf32>
    %271 = arith.truncf %270 : vector<16x16xf32> to vector<16x16xbf16>
    %272 = vector.extract_strided_slice %139 {offsets = [0, 48], sizes = [16, 16], strides = [1, 1]} : vector<16x64xf32> to vector<16x16xf32>
    %273 = arith.truncf %272 : vector<16x16xf32> to vector<16x16xbf16>
    %274 = vector.extract_strided_slice %186 {offsets = [0, 48], sizes = [16, 16], strides = [1, 1]} : vector<16x64xf32> to vector<16x16xf32>
    %275 = arith.truncf %274 : vector<16x16xf32> to vector<16x16xbf16>
    %cst_73 = arith.constant dense<0.000000e+00> : vector<16x16xf32>
    %276 = tpu.matmul %271, %273, %cst_73 {dimension_numbers = #tpu.dot_dimension_numbers<[1], [1], [0], [0], [0, 0, 1, 0], [], []>} : vector<16x16xbf16>, vector<16x16xbf16>, vector<16x16xf32> -> vector<16x16xf32>
    %cst_74 = arith.constant 0.000000e+00 : f32
    %277 = vector.broadcast %cst_74 : f32 to vector<1x16xf32>
    %278 = arith.cmpf ogt, %7, %277 : vector<1x16xf32>
    %cst_75 = arith.constant -1.000000e+30 : f32
    %279 = vector.shape_cast %278 : vector<1x16xi1> to vector<1x16xi1>
    %280 = vector.broadcast %279 : vector<1x16xi1> to vector<16x16xi1>
    %281 = vector.broadcast %cst_75 : f32 to vector<16x16xf32>
    %282 = arith.select %280, %276, %281 : vector<16x16xi1>, vector<16x16xf32>
    %cst_76 = arith.constant dense<0xFF800000> : vector<16xf32>
    %283 = vector.multi_reduction <maximumf>, %282, %cst_76 [1] : vector<16x16xf32> to vector<16xf32>
    %284 = vector.shape_cast %283 : vector<16xf32> to vector<16x1xf32>
    %285 = vector.broadcast %284 : vector<16x1xf32> to vector<16x16xf32>
    %286 = arith.subf %282, %285 : vector<16x16xf32>
    %287 = math.exp %286 : vector<16x16xf32>
    %cst_77 = arith.constant dense<0.000000e+00> : vector<16xf32>
    %288 = vector.multi_reduction <add>, %287, %cst_77 [1] : vector<16x16xf32> to vector<16xf32>
    %289 = vector.shape_cast %288 : vector<16xf32> to vector<16x1xf32>
    %290 = tpu.reciprocal %289 {approx = true} : vector<16x1xf32> -> vector<16x1xf32>
    %291 = vector.broadcast %290 : vector<16x1xf32> to vector<16x16xf32>
    %292 = arith.mulf %287, %291 : vector<16x16xf32>
    %293 = arith.truncf %292 : vector<16x16xf32> to vector<16x16xbf16>
    %cst_78 = arith.constant dense<0.000000e+00> : vector<16x16xf32>
    %294 = tpu.matmul %293, %275, %cst_78 {dimension_numbers = #tpu.dot_dimension_numbers<[1], [0], [0], [1], [0, 0, 1, 1], [], []>} : vector<16x16xbf16>, vector<16x16xbf16>, vector<16x16xf32> -> vector<16x16xf32>
    %295 = tpu.concatenate %213, %240, %267, %294 in 1 : vector<16x16xf32>, vector<16x16xf32>, vector<16x16xf32>, vector<16x16xf32> -> vector<16x64xf32>
    %296 = arith.truncf %295 : vector<16x64xf32> to vector<16x64xbf16>
    %c0_79 = arith.constant 0 : index
    %c0_80 = arith.constant 0 : index
    %297 = vector.load %arg8[%c0_79, %c0_80] : memref<64x64xf32, #tpu.memory_space<vmem>>, vector<64x64xf32>
    %298 = arith.truncf %297 : vector<64x64xf32> to vector<64x64xbf16>
    %cst_81 = arith.constant dense<0.000000e+00> : vector<16x64xf32>
    %299 = tpu.matmul %296, %298, %cst_81 {dimension_numbers = #tpu.dot_dimension_numbers<[1], [0], [0], [1], [0, 0, 1, 1], [], []>} : vector<16x64xbf16>, vector<64x64xbf16>, vector<16x64xf32> -> vector<16x64xf32>
    %c0_82 = arith.constant 0 : index
    %c0_83 = arith.constant 0 : index
    %300 = vector.load %arg9[%c0_82, %c0_83] : memref<1x64xf32, #tpu.memory_space<vmem>>, vector<1x64xf32>
    %301 = vector.broadcast %300 : vector<1x64xf32> to vector<16x64xf32>
    %302 = arith.addf %299, %301 : vector<16x64xf32>
    %303 = vector.broadcast %5 : vector<16x1xf32> to vector<16x64xf32>
    %304 = arith.mulf %302, %303 : vector<16x64xf32>
    %305 = vector.broadcast %5 : vector<16x1xf32> to vector<16x64xf32>
    %306 = arith.mulf %3, %305 : vector<16x64xf32>
    %307 = arith.addf %306, %304 : vector<16x64xf32>
    %cst_84 = arith.constant dense<0.000000e+00> : vector<16xf32>
    %308 = vector.multi_reduction <add>, %307, %cst_84 [1] : vector<16x64xf32> to vector<16xf32>
    %309 = vector.shape_cast %308 : vector<16xf32> to vector<16x1xf32>
    %cst_85 = arith.constant 6.400000e+01 : f32
    %310 = vector.broadcast %cst_85 : f32 to vector<16x1xf32>
    %311 = arith.divf %309, %310 : vector<16x1xf32>
    %312 = vector.broadcast %311 : vector<16x1xf32> to vector<16x64xf32>
    %313 = arith.subf %307, %312 : vector<16x64xf32>
    %314 = arith.mulf %313, %313 : vector<16x64xf32>
    %cst_86 = arith.constant dense<0.000000e+00> : vector<16xf32>
    %315 = vector.multi_reduction <add>, %314, %cst_86 [1] : vector<16x64xf32> to vector<16xf32>
    %316 = vector.shape_cast %315 : vector<16xf32> to vector<16x1xf32>
    %cst_87 = arith.constant 6.400000e+01 : f32
    %317 = vector.broadcast %cst_87 : f32 to vector<16x1xf32>
    %318 = arith.divf %316, %317 : vector<16x1xf32>
    %319 = vector.broadcast %311 : vector<16x1xf32> to vector<16x64xf32>
    %320 = arith.subf %307, %319 : vector<16x64xf32>
    %cst_88 = arith.constant 9.99999974E-6 : f32
    %321 = vector.broadcast %cst_88 : f32 to vector<16x1xf32>
    %322 = arith.addf %318, %321 : vector<16x1xf32>
    %323 = math.rsqrt %322 : vector<16x1xf32>
    %324 = vector.broadcast %323 : vector<16x1xf32> to vector<16x64xf32>
    %325 = arith.mulf %320, %324 : vector<16x64xf32>
    %326 = vector.extract_strided_slice %0 {offsets = [8, 0], sizes = [1, 64], strides = [1, 1]} : vector<10x64xf32> to vector<1x64xf32>
    %327 = vector.broadcast %326 : vector<1x64xf32> to vector<16x64xf32>
    %328 = arith.mulf %325, %327 : vector<16x64xf32>
    %329 = vector.extract_strided_slice %0 {offsets = [9, 0], sizes = [1, 64], strides = [1, 1]} : vector<10x64xf32> to vector<1x64xf32>
    %330 = vector.broadcast %329 : vector<1x64xf32> to vector<16x64xf32>
    %331 = arith.addf %328, %330 : vector<16x64xf32>
    %332 = arith.truncf %331 : vector<16x64xf32> to vector<16x64xbf16>
    %c0_89 = arith.constant 0 : index
    %c0_90 = arith.constant 0 : index
    %333 = vector.load %arg10[%c0_89, %c0_90] : memref<64x256xf32, #tpu.memory_space<vmem>>, vector<64x256xf32>
    %334 = arith.truncf %333 : vector<64x256xf32> to vector<64x256xbf16>
    %cst_91 = arith.constant dense<0.000000e+00> : vector<16x256xf32>
    %335 = tpu.matmul %332, %334, %cst_91 {dimension_numbers = #tpu.dot_dimension_numbers<[1], [0], [0], [1], [0, 0, 1, 1], [], []>} : vector<16x64xbf16>, vector<64x256xbf16>, vector<16x256xf32> -> vector<16x256xf32>
    %c0_92 = arith.constant 0 : index
    %c0_93 = arith.constant 0 : index
    %336 = vector.load %arg11[%c0_92, %c0_93] : memref<1x256xf32, #tpu.memory_space<vmem>>, vector<1x256xf32>
    %337 = vector.broadcast %336 : vector<1x256xf32> to vector<16x256xf32>
    %338 = arith.addf %335, %337 : vector<16x256xf32>
    %cst_94 = arith.constant 5.000000e-01 : f32
    %339 = vector.broadcast %cst_94 : f32 to vector<16x256xf32>
    %340 = arith.mulf %339, %338 : vector<16x256xf32>
    %cst_95 = arith.constant 4.471500e-02 : f32
    %341 = vector.broadcast %cst_95 : f32 to vector<16x256xf32>
    %342 = arith.mulf %341, %338 : vector<16x256xf32>
    %343 = arith.mulf %342, %338 : vector<16x256xf32>
    %344 = arith.mulf %343, %338 : vector<16x256xf32>
    %345 = arith.addf %338, %344 : vector<16x256xf32>
    %cst_96 = arith.constant 0.797884583 : f32
    %346 = vector.broadcast %cst_96 : f32 to vector<16x256xf32>
    %347 = arith.mulf %346, %345 : vector<16x256xf32>
    %348 = math.tanh %347 : vector<16x256xf32>
    %cst_97 = arith.constant 1.000000e+00 : f32
    %349 = vector.broadcast %cst_97 : f32 to vector<16x256xf32>
    %350 = arith.addf %349, %348 : vector<16x256xf32>
    %351 = arith.mulf %340, %350 : vector<16x256xf32>
    %352 = arith.truncf %351 : vector<16x256xf32> to vector<16x256xbf16>
    %c0_98 = arith.constant 0 : index
    %c0_99 = arith.constant 0 : index
    %353 = vector.load %arg12[%c0_98, %c0_99] : memref<256x64xf32, #tpu.memory_space<vmem>>, vector<256x64xf32>
    %354 = arith.truncf %353 : vector<256x64xf32> to vector<256x64xbf16>
    %cst_100 = arith.constant dense<0.000000e+00> : vector<16x64xf32>
    %355 = tpu.matmul %352, %354, %cst_100 {dimension_numbers = #tpu.dot_dimension_numbers<[1], [0], [0], [1], [0, 0, 1, 1], [], []>} : vector<16x256xbf16>, vector<256x64xbf16>, vector<16x64xf32> -> vector<16x64xf32>
    %c0_101 = arith.constant 0 : index
    %c0_102 = arith.constant 0 : index
    %356 = vector.load %arg13[%c0_101, %c0_102] : memref<1x64xf32, #tpu.memory_space<vmem>>, vector<1x64xf32>
    %357 = vector.broadcast %356 : vector<1x64xf32> to vector<16x64xf32>
    %358 = arith.addf %355, %357 : vector<16x64xf32>
    %359 = vector.broadcast %5 : vector<16x1xf32> to vector<16x64xf32>
    %360 = arith.mulf %358, %359 : vector<16x64xf32>
    %361 = arith.addf %307, %360 : vector<16x64xf32>
    %c0_103 = arith.constant 0 : index
    %c0_104 = arith.constant 0 : index
    %c0_105 = arith.constant 0 : index
    %362 = vector.load %arg14[%c0_103, %c0_104, %c0_105] : memref<1x16x64xf32, #tpu.memory_space<vmem>>, vector<1x16x64xf32>
    %363 = vector.shape_cast %362 : vector<1x16x64xf32> to vector<16x64xf32>
    %364 = vector.shape_cast %361 : vector<16x64xf32> to vector<1x16x64xf32>
    tpu.vector_store %arg14[%c0_103, %c0_104, %c0_105], %364 {strides = array<i32>} : memref<1x16x64xf32, #tpu.memory_space<vmem>>, vector<1x16x64xf32>,
    return
  }
  func.func @transform_0(%arg0: i32) -> (i32, i32, i32) {
    %c0_i32 = arith.constant 0 : i32
    %c0_i32_0 = arith.constant 0 : i32
    %c0_i32_1 = arith.constant 0 : i32
    return %arg0, %c0_i32, %c0_i32_0 : i32, i32, i32
  }
  func.func @transform_1(%arg0: i32) -> (i32, i32, i32) {
    %c0_i32 = arith.constant 0 : i32
    %c0_i32_0 = arith.constant 0 : i32
    %c0_i32_1 = arith.constant 0 : i32
    return %arg0, %c0_i32, %c0_i32_0 : i32, i32, i32
  }
  func.func @transform_2(%arg0: i32) -> (i32, i32, i32) {
    %c0_i32 = arith.constant 0 : i32
    %c0_i32_0 = arith.constant 0 : i32
    %c0_i32_1 = arith.constant 0 : i32
    return %arg0, %c0_i32, %c0_i32_0 : i32, i32, i32
  }
  func.func @transform_3(%arg0: i32) -> (i32, i32) {
    %c0_i32 = arith.constant 0 : i32
    %c0_i32_0 = arith.constant 0 : i32
    %c0_i32_1 = arith.constant 0 : i32
    return %c0_i32, %c0_i32_0 : i32, i32
  }
  func.func @transform_4(%arg0: i32) -> (i32, i32, i32) {
    %c0_i32 = arith.constant 0 : i32
    %c0_i32_0 = arith.constant 0 : i32
    %c0_i32_1 = arith.constant 0 : i32
    %c0_i32_2 = arith.constant 0 : i32
    return %c0_i32, %c0_i32_0, %c0_i32_1 : i32, i32, i32
  }
  func.func @transform_5(%arg0: i32) -> (i32, i32, i32) {
    %c0_i32 = arith.constant 0 : i32
    %c0_i32_0 = arith.constant 0 : i32
    %c0_i32_1 = arith.constant 0 : i32
    %c0_i32_2 = arith.constant 0 : i32
    return %c0_i32, %c0_i32_0, %c0_i32_1 : i32, i32, i32
  }
  func.func @transform_6(%arg0: i32) -> (i32, i32) {
    %c0_i32 = arith.constant 0 : i32
    %c0_i32_0 = arith.constant 0 : i32
    %c0_i32_1 = arith.constant 0 : i32
    return %c0_i32, %c0_i32_0 : i32, i32
  }
  func.func @transform_7(%arg0: i32) -> (i32, i32) {
    %c0_i32 = arith.constant 0 : i32
    %c0_i32_0 = arith.constant 0 : i32
    %c0_i32_1 = arith.constant 0 : i32
    return %c0_i32, %c0_i32_0 : i32, i32
  }
  func.func @transform_8(%arg0: i32) -> (i32, i32) {
    %c0_i32 = arith.constant 0 : i32
    %c0_i32_0 = arith.constant 0 : i32
    %c0_i32_1 = arith.constant 0 : i32
    return %c0_i32, %c0_i32_0 : i32, i32
  }
  func.func @transform_9(%arg0: i32) -> (i32, i32) {
    %c0_i32 = arith.constant 0 : i32
    %c0_i32_0 = arith.constant 0 : i32
    %c0_i32_1 = arith.constant 0 : i32
    return %c0_i32, %c0_i32_0 : i32, i32
  }
  func.func @transform_10(%arg0: i32) -> (i32, i32) {
    %c0_i32 = arith.constant 0 : i32
    %c0_i32_0 = arith.constant 0 : i32
    %c0_i32_1 = arith.constant 0 : i32
    return %c0_i32, %c0_i32_0 : i32, i32
  }
  func.func @transform_11(%arg0: i32) -> (i32, i32) {
    %c0_i32 = arith.constant 0 : i32
    %c0_i32_0 = arith.constant 0 : i32
    %c0_i32_1 = arith.constant 0 : i32
    return %c0_i32, %c0_i32_0 : i32, i32
  }
  func.func @transform_12(%arg0: i32) -> (i32, i32) {
    %c0_i32 = arith.constant 0 : i32
    %c0_i32_0 = arith.constant 0 : i32
    %c0_i32_1 = arith.constant 0 : i32
    return %c0_i32, %c0_i32_0 : i32, i32
  }
  func.func @transform_13(%arg0: i32) -> (i32, i32, i32) {
    %c0_i32 = arith.constant 0 : i32
    %c0_i32_0 = arith.constant 0 : i32
    %c0_i32_1 = arith.constant 0 : i32
    return %arg0, %c0_i32, %c0_i32_0 : i32, i32, i32
  }
}

module attributes {stable_mosaic.version = 11 : i64} {
  func.func @_block_kernel(%arg0: i32, %arg1: memref<1x18x64xf32, #tpu.memory_space<vmem>>, %arg2: memref<1x8x1xf32, #tpu.memory_space<vmem>>, %arg3: memref<1x1x8xf32, #tpu.memory_space<vmem>>, %arg4: memref<10x64xf32, #tpu.memory_space<vmem>>, %arg5: memref<3x3x64xf32, #tpu.memory_space<vmem>>, %arg6: memref<3x64x64xf32, #tpu.memory_space<vmem>>, %arg7: memref<3x64xf32, #tpu.memory_space<vmem>>, %arg8: memref<64x64xf32, #tpu.memory_space<vmem>>, %arg9: memref<1x64xf32, #tpu.memory_space<vmem>>, %arg10: memref<64x256xf32, #tpu.memory_space<vmem>>, %arg11: memref<1x256xf32, #tpu.memory_space<vmem>>, %arg12: memref<256x64xf32, #tpu.memory_space<vmem>>, %arg13: memref<1x64xf32, #tpu.memory_space<vmem>>, %arg14: memref<1x8x64xf32, #tpu.memory_space<vmem>>) attributes {dimension_semantics = [#tpu.dimension_semantics<parallel>], iteration_bounds = array<i64: 2>, scalar_prefetch = 0 : i64, scratch_operands = 0 : i64, tpu.core_type = #tpu.core_type<tc>, window_params = [{transform_indices = @transform_0, window_bounds = array<i64: 1, 18, 64>}, {transform_indices = @transform_1, window_bounds = array<i64: 1, 8, 1>}, {transform_indices = @transform_2, window_bounds = array<i64: 1, 1, 8>}, {pipeline_mode = #tpu.pipeline_mode<synchronous>, transform_indices = @transform_3, window_bounds = array<i64: 10, 64>}, {pipeline_mode = #tpu.pipeline_mode<synchronous>, transform_indices = @transform_4, window_bounds = array<i64: 3, 3, 64>}, {pipeline_mode = #tpu.pipeline_mode<synchronous>, transform_indices = @transform_5, window_bounds = array<i64: 3, 64, 64>}, {pipeline_mode = #tpu.pipeline_mode<synchronous>, transform_indices = @transform_6, window_bounds = array<i64: 3, 64>}, {pipeline_mode = #tpu.pipeline_mode<synchronous>, transform_indices = @transform_7, window_bounds = array<i64: 64, 64>}, {pipeline_mode = #tpu.pipeline_mode<synchronous>, transform_indices = @transform_8, window_bounds = array<i64: 1, 64>}, {pipeline_mode = #tpu.pipeline_mode<synchronous>, transform_indices = @transform_9, window_bounds = array<i64: 64, 256>}, {pipeline_mode = #tpu.pipeline_mode<synchronous>, transform_indices = @transform_10, window_bounds = array<i64: 1, 256>}, {pipeline_mode = #tpu.pipeline_mode<synchronous>, transform_indices = @transform_11, window_bounds = array<i64: 256, 64>}, {pipeline_mode = #tpu.pipeline_mode<synchronous>, transform_indices = @transform_12, window_bounds = array<i64: 1, 64>}, {transform_indices = @transform_13, window_bounds = array<i64: 1, 8, 64>}]} {
    %c0 = arith.constant 0 : index
    %c0_0 = arith.constant 0 : index
    %0 = vector.load %arg4[%c0, %c0_0] : memref<10x64xf32, #tpu.memory_space<vmem>>, vector<10x64xf32>
    %c0_1 = arith.constant 0 : index
    %c0_2 = arith.constant 0 : index
    %c0_3 = arith.constant 0 : index
    %1 = vector.load %arg1[%c0_1, %c0_2, %c0_3] : memref<1x18x64xf32, #tpu.memory_space<vmem>>, vector<1x18x64xf32>
    %2 = vector.shape_cast %1 : vector<1x18x64xf32> to vector<18x64xf32>
    %c0_4 = arith.constant 0 : index
    %c0_5 = arith.constant 0 : index
    %c0_6 = arith.constant 0 : index
    %3 = vector.load %arg2[%c0_4, %c0_5, %c0_6] : memref<1x8x1xf32, #tpu.memory_space<vmem>>, vector<1x8x1xf32>
    %4 = vector.shape_cast %3 : vector<1x8x1xf32> to vector<8x1xf32>
    %c0_7 = arith.constant 0 : index
    %c0_8 = arith.constant 0 : index
    %c0_9 = arith.constant 0 : index
    %5 = vector.load %arg3[%c0_7, %c0_8, %c0_9] : memref<1x1x8xf32, #tpu.memory_space<vmem>>, vector<1x1x8xf32>
    %6 = vector.shape_cast %5 : vector<1x1x8xf32> to vector<1x8xf32>
    %7 = tpu.iota {dimensions = array<i32: 0>} : vector<18x1xi32>
    %c1_i32 = arith.constant 1 : i32
    %8 = vector.broadcast %c1_i32 : i32 to vector<18x1xi32>
    %9 = arith.cmpi sge, %7, %8 : vector<18x1xi32>
    %c16_i32 = arith.constant 16 : i32
    %10 = vector.broadcast %c16_i32 : i32 to vector<18x1xi32>
    %11 = arith.cmpi sle, %7, %10 : vector<18x1xi32>
    %12 = arith.andi %9, %11 : vector<18x1xi1>
    %cst = arith.constant dense<0.000000e+00> : vector<18xf32>
    %13 = vector.multi_reduction <add>, %2, %cst [1] : vector<18x64xf32> to vector<18xf32>
    %14 = vector.shape_cast %13 : vector<18xf32> to vector<18x1xf32>
    %cst_10 = arith.constant 6.400000e+01 : f32
    %15 = vector.broadcast %cst_10 : f32 to vector<18x1xf32>
    %16 = arith.divf %14, %15 : vector<18x1xf32>
    %17 = vector.broadcast %16 : vector<18x1xf32> to vector<18x64xf32>
    %18 = arith.subf %2, %17 : vector<18x64xf32>
    %19 = arith.mulf %18, %18 : vector<18x64xf32>
    %cst_11 = arith.constant dense<0.000000e+00> : vector<18xf32>
    %20 = vector.multi_reduction <add>, %19, %cst_11 [1] : vector<18x64xf32> to vector<18xf32>
    %21 = vector.shape_cast %20 : vector<18xf32> to vector<18x1xf32>
    %cst_12 = arith.constant 6.400000e+01 : f32
    %22 = vector.broadcast %cst_12 : f32 to vector<18x1xf32>
    %23 = arith.divf %21, %22 : vector<18x1xf32>
    %24 = vector.broadcast %16 : vector<18x1xf32> to vector<18x64xf32>
    %25 = arith.subf %2, %24 : vector<18x64xf32>
    %cst_13 = arith.constant 9.99999974E-6 : f32
    %26 = vector.broadcast %cst_13 : f32 to vector<18x1xf32>
    %27 = arith.addf %23, %26 : vector<18x1xf32>
    %28 = math.rsqrt %27 : vector<18x1xf32>
    %29 = vector.broadcast %28 : vector<18x1xf32> to vector<18x64xf32>
    %30 = arith.mulf %25, %29 : vector<18x64xf32>
    %31 = vector.extract_strided_slice %0 {offsets = [0, 0], sizes = [1, 64], strides = [1, 1]} : vector<10x64xf32> to vector<1x64xf32>
    %32 = vector.broadcast %31 : vector<1x64xf32> to vector<18x64xf32>
    %33 = arith.mulf %30, %32 : vector<18x64xf32>
    %34 = vector.extract_strided_slice %0 {offsets = [1, 0], sizes = [1, 64], strides = [1, 1]} : vector<10x64xf32> to vector<1x64xf32>
    %35 = vector.broadcast %34 : vector<1x64xf32> to vector<18x64xf32>
    %36 = arith.addf %33, %35 : vector<18x64xf32>
    %cst_14 = arith.constant 0.000000e+00 : f32
    %37 = vector.shape_cast %12 : vector<18x1xi1> to vector<18x1xi1>
    %38 = vector.broadcast %37 : vector<18x1xi1> to vector<18x64xi1>
    %39 = vector.broadcast %cst_14 : f32 to vector<18x64xf32>
    %40 = arith.select %38, %36, %39 : vector<18x64xi1>, vector<18x64xf32>
    %41 = vector.extract_strided_slice %40 {offsets = [0, 0], sizes = [16, 64], strides = [1, 1]} : vector<18x64xf32> to vector<16x64xf32>
    %42 = vector.extract_strided_slice %40 {offsets = [1, 0], sizes = [16, 64], strides = [1, 1]} : vector<18x64xf32> to vector<16x64xf32>
    %43 = vector.extract_strided_slice %40 {offsets = [2, 0], sizes = [16, 64], strides = [1, 1]} : vector<18x64xf32> to vector<16x64xf32>
    %44 = tpu.iota {dimensions = array<i32: 0>} : vector<8x16xi32>
    %45 = tpu.iota {dimensions = array<i32: 1>} : vector<8x16xi32>
    %c2_i32 = arith.constant 2 : i32
    %46 = vector.broadcast %c2_i32 : i32 to vector<8x16xi32>
    %47 = arith.muli %46, %44 : vector<8x16xi32>
    %48 = arith.cmpi eq, %45, %47 : vector<8x16xi32>
    %49 = arith.extui %48 : vector<8x16xi1> to vector<8x16xi32>
    %50 = arith.sitofp %49 : vector<8x16xi32> to vector<8x16xf32>
    %c0_15 = arith.constant 0 : index
    %c0_16 = arith.constant 0 : index
    %51 = vector.load %arg7[%c0_15, %c0_16] : memref<3x64xf32, #tpu.memory_space<vmem>>, vector<3x64xf32>
    %c0_17 = arith.constant 0 : index
    %c0_18 = arith.constant 0 : index
    %c0_19 = arith.constant 0 : index
    %52 = vector.load %arg5[%c0_17, %c0_18, %c0_19] : memref<3x3x64xf32, #tpu.memory_space<vmem>>, vector<1x3x64xf32>
    %53 = vector.shape_cast %52 : vector<1x3x64xf32> to vector<3x64xf32>
    %54 = vector.extract_strided_slice %53 {offsets = [0, 0], sizes = [1, 64], strides = [1, 1]} : vector<3x64xf32> to vector<1x64xf32>
    %55 = vector.broadcast %54 : vector<1x64xf32> to vector<16x64xf32>
    %56 = arith.mulf %41, %55 : vector<16x64xf32>
    %57 = vector.extract_strided_slice %53 {offsets = [1, 0], sizes = [1, 64], strides = [1, 1]} : vector<3x64xf32> to vector<1x64xf32>
    %58 = vector.broadcast %57 : vector<1x64xf32> to vector<16x64xf32>
    %59 = arith.mulf %42, %58 : vector<16x64xf32>
    %60 = arith.addf %56, %59 : vector<16x64xf32>
    %61 = vector.extract_strided_slice %53 {offsets = [2, 0], sizes = [1, 64], strides = [1, 1]} : vector<3x64xf32> to vector<1x64xf32>
    %62 = vector.broadcast %61 : vector<1x64xf32> to vector<16x64xf32>
    %63 = arith.mulf %43, %62 : vector<16x64xf32>
    %64 = arith.addf %60, %63 : vector<16x64xf32>
    %cst_20 = arith.constant dense<0.000000e+00> : vector<8x64xf32>
    %65 = tpu.matmul %50, %64, %cst_20 {dimension_numbers = #tpu.dot_dimension_numbers<[1], [0], [0], [1], [0, 0, 1, 1], [], []>} : vector<8x16xf32>, vector<16x64xf32>, vector<8x64xf32> -> vector<8x64xf32>
    %66 = vector.broadcast %4 : vector<8x1xf32> to vector<8x64xf32>
    %67 = arith.mulf %65, %66 : vector<8x64xf32>
    %cst_21 = arith.constant dense<0.000000e+00> : vector<8xf32>
    %68 = vector.multi_reduction <add>, %67, %cst_21 [1] : vector<8x64xf32> to vector<8xf32>
    %69 = vector.shape_cast %68 : vector<8xf32> to vector<8x1xf32>
    %cst_22 = arith.constant 6.400000e+01 : f32
    %70 = vector.broadcast %cst_22 : f32 to vector<8x1xf32>
    %71 = arith.divf %69, %70 : vector<8x1xf32>
    %72 = vector.broadcast %71 : vector<8x1xf32> to vector<8x64xf32>
    %73 = arith.subf %67, %72 : vector<8x64xf32>
    %74 = arith.mulf %73, %73 : vector<8x64xf32>
    %cst_23 = arith.constant dense<0.000000e+00> : vector<8xf32>
    %75 = vector.multi_reduction <add>, %74, %cst_23 [1] : vector<8x64xf32> to vector<8xf32>
    %76 = vector.shape_cast %75 : vector<8xf32> to vector<8x1xf32>
    %cst_24 = arith.constant 6.400000e+01 : f32
    %77 = vector.broadcast %cst_24 : f32 to vector<8x1xf32>
    %78 = arith.divf %76, %77 : vector<8x1xf32>
    %79 = vector.broadcast %71 : vector<8x1xf32> to vector<8x64xf32>
    %80 = arith.subf %67, %79 : vector<8x64xf32>
    %cst_25 = arith.constant 9.99999974E-6 : f32
    %81 = vector.broadcast %cst_25 : f32 to vector<8x1xf32>
    %82 = arith.addf %78, %81 : vector<8x1xf32>
    %83 = math.rsqrt %82 : vector<8x1xf32>
    %84 = vector.broadcast %83 : vector<8x1xf32> to vector<8x64xf32>
    %85 = arith.mulf %80, %84 : vector<8x64xf32>
    %86 = vector.extract_strided_slice %0 {offsets = [2, 0], sizes = [1, 64], strides = [1, 1]} : vector<10x64xf32> to vector<1x64xf32>
    %87 = vector.broadcast %86 : vector<1x64xf32> to vector<8x64xf32>
    %88 = arith.mulf %85, %87 : vector<8x64xf32>
    %89 = vector.extract_strided_slice %0 {offsets = [3, 0], sizes = [1, 64], strides = [1, 1]} : vector<10x64xf32> to vector<1x64xf32>
    %90 = vector.broadcast %89 : vector<1x64xf32> to vector<8x64xf32>
    %91 = arith.addf %88, %90 : vector<8x64xf32>
    %92 = arith.truncf %91 : vector<8x64xf32> to vector<8x64xbf16>
    %c0_26 = arith.constant 0 : index
    %c0_27 = arith.constant 0 : index
    %c0_28 = arith.constant 0 : index
    %93 = vector.load %arg6[%c0_26, %c0_27, %c0_28] : memref<3x64x64xf32, #tpu.memory_space<vmem>>, vector<1x64x64xf32>
    %94 = vector.shape_cast %93 : vector<1x64x64xf32> to vector<64x64xf32>
    %95 = arith.truncf %94 : vector<64x64xf32> to vector<64x64xbf16>
    %cst_29 = arith.constant dense<0.000000e+00> : vector<8x64xf32>
    %96 = tpu.matmul %92, %95, %cst_29 {dimension_numbers = #tpu.dot_dimension_numbers<[1], [0], [0], [1], [0, 0, 1, 1], [], []>} : vector<8x64xbf16>, vector<64x64xbf16>, vector<8x64xf32> -> vector<8x64xf32>
    %97 = vector.extract_strided_slice %51 {offsets = [0, 0], sizes = [1, 64], strides = [1, 1]} : vector<3x64xf32> to vector<1x64xf32>
    %98 = vector.broadcast %97 : vector<1x64xf32> to vector<8x64xf32>
    %99 = arith.addf %96, %98 : vector<8x64xf32>
    %c1 = arith.constant 1 : index
    %c0_30 = arith.constant 0 : index
    %c0_31 = arith.constant 0 : index
    %100 = vector.load %arg5[%c1, %c0_30, %c0_31] : memref<3x3x64xf32, #tpu.memory_space<vmem>>, vector<1x3x64xf32>
    %101 = vector.shape_cast %100 : vector<1x3x64xf32> to vector<3x64xf32>
    %102 = vector.extract_strided_slice %101 {offsets = [0, 0], sizes = [1, 64], strides = [1, 1]} : vector<3x64xf32> to vector<1x64xf32>
    %103 = vector.broadcast %102 : vector<1x64xf32> to vector<16x64xf32>
    %104 = arith.mulf %41, %103 : vector<16x64xf32>
    %105 = vector.extract_strided_slice %101 {offsets = [1, 0], sizes = [1, 64], strides = [1, 1]} : vector<3x64xf32> to vector<1x64xf32>
    %106 = vector.broadcast %105 : vector<1x64xf32> to vector<16x64xf32>
    %107 = arith.mulf %42, %106 : vector<16x64xf32>
    %108 = arith.addf %104, %107 : vector<16x64xf32>
    %109 = vector.extract_strided_slice %101 {offsets = [2, 0], sizes = [1, 64], strides = [1, 1]} : vector<3x64xf32> to vector<1x64xf32>
    %110 = vector.broadcast %109 : vector<1x64xf32> to vector<16x64xf32>
    %111 = arith.mulf %43, %110 : vector<16x64xf32>
    %112 = arith.addf %108, %111 : vector<16x64xf32>
    %cst_32 = arith.constant dense<0.000000e+00> : vector<8x64xf32>
    %113 = tpu.matmul %50, %112, %cst_32 {dimension_numbers = #tpu.dot_dimension_numbers<[1], [0], [0], [1], [0, 0, 1, 1], [], []>} : vector<8x16xf32>, vector<16x64xf32>, vector<8x64xf32> -> vector<8x64xf32>
    %114 = vector.broadcast %4 : vector<8x1xf32> to vector<8x64xf32>
    %115 = arith.mulf %113, %114 : vector<8x64xf32>
    %cst_33 = arith.constant dense<0.000000e+00> : vector<8xf32>
    %116 = vector.multi_reduction <add>, %115, %cst_33 [1] : vector<8x64xf32> to vector<8xf32>
    %117 = vector.shape_cast %116 : vector<8xf32> to vector<8x1xf32>
    %cst_34 = arith.constant 6.400000e+01 : f32
    %118 = vector.broadcast %cst_34 : f32 to vector<8x1xf32>
    %119 = arith.divf %117, %118 : vector<8x1xf32>
    %120 = vector.broadcast %119 : vector<8x1xf32> to vector<8x64xf32>
    %121 = arith.subf %115, %120 : vector<8x64xf32>
    %122 = arith.mulf %121, %121 : vector<8x64xf32>
    %cst_35 = arith.constant dense<0.000000e+00> : vector<8xf32>
    %123 = vector.multi_reduction <add>, %122, %cst_35 [1] : vector<8x64xf32> to vector<8xf32>
    %124 = vector.shape_cast %123 : vector<8xf32> to vector<8x1xf32>
    %cst_36 = arith.constant 6.400000e+01 : f32
    %125 = vector.broadcast %cst_36 : f32 to vector<8x1xf32>
    %126 = arith.divf %124, %125 : vector<8x1xf32>
    %127 = vector.broadcast %119 : vector<8x1xf32> to vector<8x64xf32>
    %128 = arith.subf %115, %127 : vector<8x64xf32>
    %cst_37 = arith.constant 9.99999974E-6 : f32
    %129 = vector.broadcast %cst_37 : f32 to vector<8x1xf32>
    %130 = arith.addf %126, %129 : vector<8x1xf32>
    %131 = math.rsqrt %130 : vector<8x1xf32>
    %132 = vector.broadcast %131 : vector<8x1xf32> to vector<8x64xf32>
    %133 = arith.mulf %128, %132 : vector<8x64xf32>
    %134 = vector.extract_strided_slice %0 {offsets = [4, 0], sizes = [1, 64], strides = [1, 1]} : vector<10x64xf32> to vector<1x64xf32>
    %135 = vector.broadcast %134 : vector<1x64xf32> to vector<8x64xf32>
    %136 = arith.mulf %133, %135 : vector<8x64xf32>
    %137 = vector.extract_strided_slice %0 {offsets = [5, 0], sizes = [1, 64], strides = [1, 1]} : vector<10x64xf32> to vector<1x64xf32>
    %138 = vector.broadcast %137 : vector<1x64xf32> to vector<8x64xf32>
    %139 = arith.addf %136, %138 : vector<8x64xf32>
    %140 = arith.truncf %139 : vector<8x64xf32> to vector<8x64xbf16>
    %c1_38 = arith.constant 1 : index
    %c0_39 = arith.constant 0 : index
    %c0_40 = arith.constant 0 : index
    %141 = vector.load %arg6[%c1_38, %c0_39, %c0_40] : memref<3x64x64xf32, #tpu.memory_space<vmem>>, vector<1x64x64xf32>
    %142 = vector.shape_cast %141 : vector<1x64x64xf32> to vector<64x64xf32>
    %143 = arith.truncf %142 : vector<64x64xf32> to vector<64x64xbf16>
    %cst_41 = arith.constant dense<0.000000e+00> : vector<8x64xf32>
    %144 = tpu.matmul %140, %143, %cst_41 {dimension_numbers = #tpu.dot_dimension_numbers<[1], [0], [0], [1], [0, 0, 1, 1], [], []>} : vector<8x64xbf16>, vector<64x64xbf16>, vector<8x64xf32> -> vector<8x64xf32>
    %145 = vector.extract_strided_slice %51 {offsets = [1, 0], sizes = [1, 64], strides = [1, 1]} : vector<3x64xf32> to vector<1x64xf32>
    %146 = vector.broadcast %145 : vector<1x64xf32> to vector<8x64xf32>
    %147 = arith.addf %144, %146 : vector<8x64xf32>
    %c2 = arith.constant 2 : index
    %c0_42 = arith.constant 0 : index
    %c0_43 = arith.constant 0 : index
    %148 = vector.load %arg5[%c2, %c0_42, %c0_43] : memref<3x3x64xf32, #tpu.memory_space<vmem>>, vector<1x3x64xf32>
    %149 = vector.shape_cast %148 : vector<1x3x64xf32> to vector<3x64xf32>
    %150 = vector.extract_strided_slice %149 {offsets = [0, 0], sizes = [1, 64], strides = [1, 1]} : vector<3x64xf32> to vector<1x64xf32>
    %151 = vector.broadcast %150 : vector<1x64xf32> to vector<16x64xf32>
    %152 = arith.mulf %41, %151 : vector<16x64xf32>
    %153 = vector.extract_strided_slice %149 {offsets = [1, 0], sizes = [1, 64], strides = [1, 1]} : vector<3x64xf32> to vector<1x64xf32>
    %154 = vector.broadcast %153 : vector<1x64xf32> to vector<16x64xf32>
    %155 = arith.mulf %42, %154 : vector<16x64xf32>
    %156 = arith.addf %152, %155 : vector<16x64xf32>
    %157 = vector.extract_strided_slice %149 {offsets = [2, 0], sizes = [1, 64], strides = [1, 1]} : vector<3x64xf32> to vector<1x64xf32>
    %158 = vector.broadcast %157 : vector<1x64xf32> to vector<16x64xf32>
    %159 = arith.mulf %43, %158 : vector<16x64xf32>
    %160 = arith.addf %156, %159 : vector<16x64xf32>
    %cst_44 = arith.constant dense<0.000000e+00> : vector<8x64xf32>
    %161 = tpu.matmul %50, %160, %cst_44 {dimension_numbers = #tpu.dot_dimension_numbers<[1], [0], [0], [1], [0, 0, 1, 1], [], []>} : vector<8x16xf32>, vector<16x64xf32>, vector<8x64xf32> -> vector<8x64xf32>
    %162 = vector.broadcast %4 : vector<8x1xf32> to vector<8x64xf32>
    %163 = arith.mulf %161, %162 : vector<8x64xf32>
    %cst_45 = arith.constant dense<0.000000e+00> : vector<8xf32>
    %164 = vector.multi_reduction <add>, %163, %cst_45 [1] : vector<8x64xf32> to vector<8xf32>
    %165 = vector.shape_cast %164 : vector<8xf32> to vector<8x1xf32>
    %cst_46 = arith.constant 6.400000e+01 : f32
    %166 = vector.broadcast %cst_46 : f32 to vector<8x1xf32>
    %167 = arith.divf %165, %166 : vector<8x1xf32>
    %168 = vector.broadcast %167 : vector<8x1xf32> to vector<8x64xf32>
    %169 = arith.subf %163, %168 : vector<8x64xf32>
    %170 = arith.mulf %169, %169 : vector<8x64xf32>
    %cst_47 = arith.constant dense<0.000000e+00> : vector<8xf32>
    %171 = vector.multi_reduction <add>, %170, %cst_47 [1] : vector<8x64xf32> to vector<8xf32>
    %172 = vector.shape_cast %171 : vector<8xf32> to vector<8x1xf32>
    %cst_48 = arith.constant 6.400000e+01 : f32
    %173 = vector.broadcast %cst_48 : f32 to vector<8x1xf32>
    %174 = arith.divf %172, %173 : vector<8x1xf32>
    %175 = vector.broadcast %167 : vector<8x1xf32> to vector<8x64xf32>
    %176 = arith.subf %163, %175 : vector<8x64xf32>
    %cst_49 = arith.constant 9.99999974E-6 : f32
    %177 = vector.broadcast %cst_49 : f32 to vector<8x1xf32>
    %178 = arith.addf %174, %177 : vector<8x1xf32>
    %179 = math.rsqrt %178 : vector<8x1xf32>
    %180 = vector.broadcast %179 : vector<8x1xf32> to vector<8x64xf32>
    %181 = arith.mulf %176, %180 : vector<8x64xf32>
    %182 = vector.extract_strided_slice %0 {offsets = [6, 0], sizes = [1, 64], strides = [1, 1]} : vector<10x64xf32> to vector<1x64xf32>
    %183 = vector.broadcast %182 : vector<1x64xf32> to vector<8x64xf32>
    %184 = arith.mulf %181, %183 : vector<8x64xf32>
    %185 = vector.extract_strided_slice %0 {offsets = [7, 0], sizes = [1, 64], strides = [1, 1]} : vector<10x64xf32> to vector<1x64xf32>
    %186 = vector.broadcast %185 : vector<1x64xf32> to vector<8x64xf32>
    %187 = arith.addf %184, %186 : vector<8x64xf32>
    %188 = arith.truncf %187 : vector<8x64xf32> to vector<8x64xbf16>
    %c2_50 = arith.constant 2 : index
    %c0_51 = arith.constant 0 : index
    %c0_52 = arith.constant 0 : index
    %189 = vector.load %arg6[%c2_50, %c0_51, %c0_52] : memref<3x64x64xf32, #tpu.memory_space<vmem>>, vector<1x64x64xf32>
    %190 = vector.shape_cast %189 : vector<1x64x64xf32> to vector<64x64xf32>
    %191 = arith.truncf %190 : vector<64x64xf32> to vector<64x64xbf16>
    %cst_53 = arith.constant dense<0.000000e+00> : vector<8x64xf32>
    %192 = tpu.matmul %188, %191, %cst_53 {dimension_numbers = #tpu.dot_dimension_numbers<[1], [0], [0], [1], [0, 0, 1, 1], [], []>} : vector<8x64xbf16>, vector<64x64xbf16>, vector<8x64xf32> -> vector<8x64xf32>
    %193 = vector.extract_strided_slice %51 {offsets = [2, 0], sizes = [1, 64], strides = [1, 1]} : vector<3x64xf32> to vector<1x64xf32>
    %194 = vector.broadcast %193 : vector<1x64xf32> to vector<8x64xf32>
    %195 = arith.addf %192, %194 : vector<8x64xf32>
    %196 = vector.extract_strided_slice %99 {offsets = [0, 0], sizes = [8, 16], strides = [1, 1]} : vector<8x64xf32> to vector<8x16xf32>
    %cst_54 = arith.constant 2.500000e-01 : f32
    %197 = vector.broadcast %cst_54 : f32 to vector<8x16xf32>
    %198 = arith.mulf %196, %197 : vector<8x16xf32>
    %199 = arith.truncf %198 : vector<8x16xf32> to vector<8x16xbf16>
    %200 = vector.extract_strided_slice %147 {offsets = [0, 0], sizes = [8, 16], strides = [1, 1]} : vector<8x64xf32> to vector<8x16xf32>
    %201 = arith.truncf %200 : vector<8x16xf32> to vector<8x16xbf16>
    %202 = vector.extract_strided_slice %195 {offsets = [0, 0], sizes = [8, 16], strides = [1, 1]} : vector<8x64xf32> to vector<8x16xf32>
    %203 = arith.truncf %202 : vector<8x16xf32> to vector<8x16xbf16>
    %cst_55 = arith.constant dense<0.000000e+00> : vector<8x8xf32>
    %204 = tpu.matmul %199, %201, %cst_55 {dimension_numbers = #tpu.dot_dimension_numbers<[1], [1], [0], [0], [0, 0, 1, 0], [], []>} : vector<8x16xbf16>, vector<8x16xbf16>, vector<8x8xf32> -> vector<8x8xf32>
    %cst_56 = arith.constant 0.000000e+00 : f32
    %205 = vector.broadcast %cst_56 : f32 to vector<1x8xf32>
    %206 = arith.cmpf ogt, %6, %205 : vector<1x8xf32>
    %cst_57 = arith.constant -1.000000e+30 : f32
    %207 = vector.shape_cast %206 : vector<1x8xi1> to vector<1x8xi1>
    %208 = vector.broadcast %207 : vector<1x8xi1> to vector<8x8xi1>
    %209 = vector.broadcast %cst_57 : f32 to vector<8x8xf32>
    %210 = arith.select %208, %204, %209 : vector<8x8xi1>, vector<8x8xf32>
    %cst_58 = arith.constant dense<0xFF800000> : vector<8xf32>
    %211 = vector.multi_reduction <maximumf>, %210, %cst_58 [1] : vector<8x8xf32> to vector<8xf32>
    %212 = vector.shape_cast %211 : vector<8xf32> to vector<8x1xf32>
    %213 = vector.broadcast %212 : vector<8x1xf32> to vector<8x8xf32>
    %214 = arith.subf %210, %213 : vector<8x8xf32>
    %215 = math.exp %214 : vector<8x8xf32>
    %cst_59 = arith.constant dense<0.000000e+00> : vector<8xf32>
    %216 = vector.multi_reduction <add>, %215, %cst_59 [1] : vector<8x8xf32> to vector<8xf32>
    %217 = vector.shape_cast %216 : vector<8xf32> to vector<8x1xf32>
    %218 = tpu.reciprocal %217 {approx = true} : vector<8x1xf32> -> vector<8x1xf32>
    %219 = vector.broadcast %218 : vector<8x1xf32> to vector<8x8xf32>
    %220 = arith.mulf %215, %219 : vector<8x8xf32>
    %221 = arith.truncf %220 : vector<8x8xf32> to vector<8x8xbf16>
    %cst_60 = arith.constant dense<0.000000e+00> : vector<8x16xf32>
    %222 = tpu.matmul %221, %203, %cst_60 {dimension_numbers = #tpu.dot_dimension_numbers<[1], [0], [0], [1], [0, 0, 1, 1], [], []>} : vector<8x8xbf16>, vector<8x16xbf16>, vector<8x16xf32> -> vector<8x16xf32>
    %223 = vector.extract_strided_slice %99 {offsets = [0, 16], sizes = [8, 16], strides = [1, 1]} : vector<8x64xf32> to vector<8x16xf32>
    %cst_61 = arith.constant 2.500000e-01 : f32
    %224 = vector.broadcast %cst_61 : f32 to vector<8x16xf32>
    %225 = arith.mulf %223, %224 : vector<8x16xf32>
    %226 = arith.truncf %225 : vector<8x16xf32> to vector<8x16xbf16>
    %227 = vector.extract_strided_slice %147 {offsets = [0, 16], sizes = [8, 16], strides = [1, 1]} : vector<8x64xf32> to vector<8x16xf32>
    %228 = arith.truncf %227 : vector<8x16xf32> to vector<8x16xbf16>
    %229 = vector.extract_strided_slice %195 {offsets = [0, 16], sizes = [8, 16], strides = [1, 1]} : vector<8x64xf32> to vector<8x16xf32>
    %230 = arith.truncf %229 : vector<8x16xf32> to vector<8x16xbf16>
    %cst_62 = arith.constant dense<0.000000e+00> : vector<8x8xf32>
    %231 = tpu.matmul %226, %228, %cst_62 {dimension_numbers = #tpu.dot_dimension_numbers<[1], [1], [0], [0], [0, 0, 1, 0], [], []>} : vector<8x16xbf16>, vector<8x16xbf16>, vector<8x8xf32> -> vector<8x8xf32>
    %cst_63 = arith.constant 0.000000e+00 : f32
    %232 = vector.broadcast %cst_63 : f32 to vector<1x8xf32>
    %233 = arith.cmpf ogt, %6, %232 : vector<1x8xf32>
    %cst_64 = arith.constant -1.000000e+30 : f32
    %234 = vector.shape_cast %233 : vector<1x8xi1> to vector<1x8xi1>
    %235 = vector.broadcast %234 : vector<1x8xi1> to vector<8x8xi1>
    %236 = vector.broadcast %cst_64 : f32 to vector<8x8xf32>
    %237 = arith.select %235, %231, %236 : vector<8x8xi1>, vector<8x8xf32>
    %cst_65 = arith.constant dense<0xFF800000> : vector<8xf32>
    %238 = vector.multi_reduction <maximumf>, %237, %cst_65 [1] : vector<8x8xf32> to vector<8xf32>
    %239 = vector.shape_cast %238 : vector<8xf32> to vector<8x1xf32>
    %240 = vector.broadcast %239 : vector<8x1xf32> to vector<8x8xf32>
    %241 = arith.subf %237, %240 : vector<8x8xf32>
    %242 = math.exp %241 : vector<8x8xf32>
    %cst_66 = arith.constant dense<0.000000e+00> : vector<8xf32>
    %243 = vector.multi_reduction <add>, %242, %cst_66 [1] : vector<8x8xf32> to vector<8xf32>
    %244 = vector.shape_cast %243 : vector<8xf32> to vector<8x1xf32>
    %245 = tpu.reciprocal %244 {approx = true} : vector<8x1xf32> -> vector<8x1xf32>
    %246 = vector.broadcast %245 : vector<8x1xf32> to vector<8x8xf32>
    %247 = arith.mulf %242, %246 : vector<8x8xf32>
    %248 = arith.truncf %247 : vector<8x8xf32> to vector<8x8xbf16>
    %cst_67 = arith.constant dense<0.000000e+00> : vector<8x16xf32>
    %249 = tpu.matmul %248, %230, %cst_67 {dimension_numbers = #tpu.dot_dimension_numbers<[1], [0], [0], [1], [0, 0, 1, 1], [], []>} : vector<8x8xbf16>, vector<8x16xbf16>, vector<8x16xf32> -> vector<8x16xf32>
    %250 = vector.extract_strided_slice %99 {offsets = [0, 32], sizes = [8, 16], strides = [1, 1]} : vector<8x64xf32> to vector<8x16xf32>
    %cst_68 = arith.constant 2.500000e-01 : f32
    %251 = vector.broadcast %cst_68 : f32 to vector<8x16xf32>
    %252 = arith.mulf %250, %251 : vector<8x16xf32>
    %253 = arith.truncf %252 : vector<8x16xf32> to vector<8x16xbf16>
    %254 = vector.extract_strided_slice %147 {offsets = [0, 32], sizes = [8, 16], strides = [1, 1]} : vector<8x64xf32> to vector<8x16xf32>
    %255 = arith.truncf %254 : vector<8x16xf32> to vector<8x16xbf16>
    %256 = vector.extract_strided_slice %195 {offsets = [0, 32], sizes = [8, 16], strides = [1, 1]} : vector<8x64xf32> to vector<8x16xf32>
    %257 = arith.truncf %256 : vector<8x16xf32> to vector<8x16xbf16>
    %cst_69 = arith.constant dense<0.000000e+00> : vector<8x8xf32>
    %258 = tpu.matmul %253, %255, %cst_69 {dimension_numbers = #tpu.dot_dimension_numbers<[1], [1], [0], [0], [0, 0, 1, 0], [], []>} : vector<8x16xbf16>, vector<8x16xbf16>, vector<8x8xf32> -> vector<8x8xf32>
    %cst_70 = arith.constant 0.000000e+00 : f32
    %259 = vector.broadcast %cst_70 : f32 to vector<1x8xf32>
    %260 = arith.cmpf ogt, %6, %259 : vector<1x8xf32>
    %cst_71 = arith.constant -1.000000e+30 : f32
    %261 = vector.shape_cast %260 : vector<1x8xi1> to vector<1x8xi1>
    %262 = vector.broadcast %261 : vector<1x8xi1> to vector<8x8xi1>
    %263 = vector.broadcast %cst_71 : f32 to vector<8x8xf32>
    %264 = arith.select %262, %258, %263 : vector<8x8xi1>, vector<8x8xf32>
    %cst_72 = arith.constant dense<0xFF800000> : vector<8xf32>
    %265 = vector.multi_reduction <maximumf>, %264, %cst_72 [1] : vector<8x8xf32> to vector<8xf32>
    %266 = vector.shape_cast %265 : vector<8xf32> to vector<8x1xf32>
    %267 = vector.broadcast %266 : vector<8x1xf32> to vector<8x8xf32>
    %268 = arith.subf %264, %267 : vector<8x8xf32>
    %269 = math.exp %268 : vector<8x8xf32>
    %cst_73 = arith.constant dense<0.000000e+00> : vector<8xf32>
    %270 = vector.multi_reduction <add>, %269, %cst_73 [1] : vector<8x8xf32> to vector<8xf32>
    %271 = vector.shape_cast %270 : vector<8xf32> to vector<8x1xf32>
    %272 = tpu.reciprocal %271 {approx = true} : vector<8x1xf32> -> vector<8x1xf32>
    %273 = vector.broadcast %272 : vector<8x1xf32> to vector<8x8xf32>
    %274 = arith.mulf %269, %273 : vector<8x8xf32>
    %275 = arith.truncf %274 : vector<8x8xf32> to vector<8x8xbf16>
    %cst_74 = arith.constant dense<0.000000e+00> : vector<8x16xf32>
    %276 = tpu.matmul %275, %257, %cst_74 {dimension_numbers = #tpu.dot_dimension_numbers<[1], [0], [0], [1], [0, 0, 1, 1], [], []>} : vector<8x8xbf16>, vector<8x16xbf16>, vector<8x16xf32> -> vector<8x16xf32>
    %277 = vector.extract_strided_slice %99 {offsets = [0, 48], sizes = [8, 16], strides = [1, 1]} : vector<8x64xf32> to vector<8x16xf32>
    %cst_75 = arith.constant 2.500000e-01 : f32
    %278 = vector.broadcast %cst_75 : f32 to vector<8x16xf32>
    %279 = arith.mulf %277, %278 : vector<8x16xf32>
    %280 = arith.truncf %279 : vector<8x16xf32> to vector<8x16xbf16>
    %281 = vector.extract_strided_slice %147 {offsets = [0, 48], sizes = [8, 16], strides = [1, 1]} : vector<8x64xf32> to vector<8x16xf32>
    %282 = arith.truncf %281 : vector<8x16xf32> to vector<8x16xbf16>
    %283 = vector.extract_strided_slice %195 {offsets = [0, 48], sizes = [8, 16], strides = [1, 1]} : vector<8x64xf32> to vector<8x16xf32>
    %284 = arith.truncf %283 : vector<8x16xf32> to vector<8x16xbf16>
    %cst_76 = arith.constant dense<0.000000e+00> : vector<8x8xf32>
    %285 = tpu.matmul %280, %282, %cst_76 {dimension_numbers = #tpu.dot_dimension_numbers<[1], [1], [0], [0], [0, 0, 1, 0], [], []>} : vector<8x16xbf16>, vector<8x16xbf16>, vector<8x8xf32> -> vector<8x8xf32>
    %cst_77 = arith.constant 0.000000e+00 : f32
    %286 = vector.broadcast %cst_77 : f32 to vector<1x8xf32>
    %287 = arith.cmpf ogt, %6, %286 : vector<1x8xf32>
    %cst_78 = arith.constant -1.000000e+30 : f32
    %288 = vector.shape_cast %287 : vector<1x8xi1> to vector<1x8xi1>
    %289 = vector.broadcast %288 : vector<1x8xi1> to vector<8x8xi1>
    %290 = vector.broadcast %cst_78 : f32 to vector<8x8xf32>
    %291 = arith.select %289, %285, %290 : vector<8x8xi1>, vector<8x8xf32>
    %cst_79 = arith.constant dense<0xFF800000> : vector<8xf32>
    %292 = vector.multi_reduction <maximumf>, %291, %cst_79 [1] : vector<8x8xf32> to vector<8xf32>
    %293 = vector.shape_cast %292 : vector<8xf32> to vector<8x1xf32>
    %294 = vector.broadcast %293 : vector<8x1xf32> to vector<8x8xf32>
    %295 = arith.subf %291, %294 : vector<8x8xf32>
    %296 = math.exp %295 : vector<8x8xf32>
    %cst_80 = arith.constant dense<0.000000e+00> : vector<8xf32>
    %297 = vector.multi_reduction <add>, %296, %cst_80 [1] : vector<8x8xf32> to vector<8xf32>
    %298 = vector.shape_cast %297 : vector<8xf32> to vector<8x1xf32>
    %299 = tpu.reciprocal %298 {approx = true} : vector<8x1xf32> -> vector<8x1xf32>
    %300 = vector.broadcast %299 : vector<8x1xf32> to vector<8x8xf32>
    %301 = arith.mulf %296, %300 : vector<8x8xf32>
    %302 = arith.truncf %301 : vector<8x8xf32> to vector<8x8xbf16>
    %cst_81 = arith.constant dense<0.000000e+00> : vector<8x16xf32>
    %303 = tpu.matmul %302, %284, %cst_81 {dimension_numbers = #tpu.dot_dimension_numbers<[1], [0], [0], [1], [0, 0, 1, 1], [], []>} : vector<8x8xbf16>, vector<8x16xbf16>, vector<8x16xf32> -> vector<8x16xf32>
    %304 = tpu.concatenate %222, %249, %276, %303 in 1 : vector<8x16xf32>, vector<8x16xf32>, vector<8x16xf32>, vector<8x16xf32> -> vector<8x64xf32>
    %305 = arith.truncf %304 : vector<8x64xf32> to vector<8x64xbf16>
    %c0_82 = arith.constant 0 : index
    %c0_83 = arith.constant 0 : index
    %306 = vector.load %arg8[%c0_82, %c0_83] : memref<64x64xf32, #tpu.memory_space<vmem>>, vector<64x64xf32>
    %307 = arith.truncf %306 : vector<64x64xf32> to vector<64x64xbf16>
    %cst_84 = arith.constant dense<0.000000e+00> : vector<8x64xf32>
    %308 = tpu.matmul %305, %307, %cst_84 {dimension_numbers = #tpu.dot_dimension_numbers<[1], [0], [0], [1], [0, 0, 1, 1], [], []>} : vector<8x64xbf16>, vector<64x64xbf16>, vector<8x64xf32> -> vector<8x64xf32>
    %c0_85 = arith.constant 0 : index
    %c0_86 = arith.constant 0 : index
    %309 = vector.load %arg9[%c0_85, %c0_86] : memref<1x64xf32, #tpu.memory_space<vmem>>, vector<1x64xf32>
    %310 = vector.broadcast %309 : vector<1x64xf32> to vector<8x64xf32>
    %311 = arith.addf %308, %310 : vector<8x64xf32>
    %312 = vector.broadcast %4 : vector<8x1xf32> to vector<8x64xf32>
    %313 = arith.mulf %311, %312 : vector<8x64xf32>
    %cst_87 = arith.constant -1.000000e+30 : f32
    %314 = vector.shape_cast %12 : vector<18x1xi1> to vector<18x1xi1>
    %315 = vector.broadcast %314 : vector<18x1xi1> to vector<18x64xi1>
    %316 = vector.broadcast %cst_87 : f32 to vector<18x64xf32>
    %317 = arith.select %315, %2, %316 : vector<18x64xi1>, vector<18x64xf32>
    %318 = vector.extract_strided_slice %317 {offsets = [0, 0], sizes = [16, 64], strides = [1, 1]} : vector<18x64xf32> to vector<16x64xf32>
    %319 = vector.extract_strided_slice %317 {offsets = [1, 0], sizes = [16, 64], strides = [1, 1]} : vector<18x64xf32> to vector<16x64xf32>
    %320 = arith.maximumf %318, %319 : vector<16x64xf32>
    %321 = vector.extract_strided_slice %317 {offsets = [2, 0], sizes = [16, 64], strides = [1, 1]} : vector<18x64xf32> to vector<16x64xf32>
    %322 = arith.maximumf %320, %321 : vector<16x64xf32>
    %cst_88 = arith.constant dense<0.000000e+00> : vector<8x64xf32>
    %323 = tpu.matmul %50, %322, %cst_88 {dimension_numbers = #tpu.dot_dimension_numbers<[1], [0], [0], [1], [0, 0, 1, 1], [], []>} : vector<8x16xf32>, vector<16x64xf32>, vector<8x64xf32> -> vector<8x64xf32>
    %324 = vector.broadcast %4 : vector<8x1xf32> to vector<8x64xf32>
    %325 = arith.mulf %323, %324 : vector<8x64xf32>
    %326 = arith.addf %325, %313 : vector<8x64xf32>
    %cst_89 = arith.constant dense<0.000000e+00> : vector<8xf32>
    %327 = vector.multi_reduction <add>, %326, %cst_89 [1] : vector<8x64xf32> to vector<8xf32>
    %328 = vector.shape_cast %327 : vector<8xf32> to vector<8x1xf32>
    %cst_90 = arith.constant 6.400000e+01 : f32
    %329 = vector.broadcast %cst_90 : f32 to vector<8x1xf32>
    %330 = arith.divf %328, %329 : vector<8x1xf32>
    %331 = vector.broadcast %330 : vector<8x1xf32> to vector<8x64xf32>
    %332 = arith.subf %326, %331 : vector<8x64xf32>
    %333 = arith.mulf %332, %332 : vector<8x64xf32>
    %cst_91 = arith.constant dense<0.000000e+00> : vector<8xf32>
    %334 = vector.multi_reduction <add>, %333, %cst_91 [1] : vector<8x64xf32> to vector<8xf32>
    %335 = vector.shape_cast %334 : vector<8xf32> to vector<8x1xf32>
    %cst_92 = arith.constant 6.400000e+01 : f32
    %336 = vector.broadcast %cst_92 : f32 to vector<8x1xf32>
    %337 = arith.divf %335, %336 : vector<8x1xf32>
    %338 = vector.broadcast %330 : vector<8x1xf32> to vector<8x64xf32>
    %339 = arith.subf %326, %338 : vector<8x64xf32>
    %cst_93 = arith.constant 9.99999974E-6 : f32
    %340 = vector.broadcast %cst_93 : f32 to vector<8x1xf32>
    %341 = arith.addf %337, %340 : vector<8x1xf32>
    %342 = math.rsqrt %341 : vector<8x1xf32>
    %343 = vector.broadcast %342 : vector<8x1xf32> to vector<8x64xf32>
    %344 = arith.mulf %339, %343 : vector<8x64xf32>
    %345 = vector.extract_strided_slice %0 {offsets = [8, 0], sizes = [1, 64], strides = [1, 1]} : vector<10x64xf32> to vector<1x64xf32>
    %346 = vector.broadcast %345 : vector<1x64xf32> to vector<8x64xf32>
    %347 = arith.mulf %344, %346 : vector<8x64xf32>
    %348 = vector.extract_strided_slice %0 {offsets = [9, 0], sizes = [1, 64], strides = [1, 1]} : vector<10x64xf32> to vector<1x64xf32>
    %349 = vector.broadcast %348 : vector<1x64xf32> to vector<8x64xf32>
    %350 = arith.addf %347, %349 : vector<8x64xf32>
    %351 = arith.truncf %350 : vector<8x64xf32> to vector<8x64xbf16>
    %c0_94 = arith.constant 0 : index
    %c0_95 = arith.constant 0 : index
    %352 = vector.load %arg10[%c0_94, %c0_95] : memref<64x256xf32, #tpu.memory_space<vmem>>, vector<64x256xf32>
    %353 = arith.truncf %352 : vector<64x256xf32> to vector<64x256xbf16>
    %cst_96 = arith.constant dense<0.000000e+00> : vector<8x256xf32>
    %354 = tpu.matmul %351, %353, %cst_96 {dimension_numbers = #tpu.dot_dimension_numbers<[1], [0], [0], [1], [0, 0, 1, 1], [], []>} : vector<8x64xbf16>, vector<64x256xbf16>, vector<8x256xf32> -> vector<8x256xf32>
    %c0_97 = arith.constant 0 : index
    %c0_98 = arith.constant 0 : index
    %355 = vector.load %arg11[%c0_97, %c0_98] : memref<1x256xf32, #tpu.memory_space<vmem>>, vector<1x256xf32>
    %356 = vector.broadcast %355 : vector<1x256xf32> to vector<8x256xf32>
    %357 = arith.addf %354, %356 : vector<8x256xf32>
    %cst_99 = arith.constant 5.000000e-01 : f32
    %358 = vector.broadcast %cst_99 : f32 to vector<8x256xf32>
    %359 = arith.mulf %358, %357 : vector<8x256xf32>
    %cst_100 = arith.constant 4.471500e-02 : f32
    %360 = vector.broadcast %cst_100 : f32 to vector<8x256xf32>
    %361 = arith.mulf %360, %357 : vector<8x256xf32>
    %362 = arith.mulf %361, %357 : vector<8x256xf32>
    %363 = arith.mulf %362, %357 : vector<8x256xf32>
    %364 = arith.addf %357, %363 : vector<8x256xf32>
    %cst_101 = arith.constant 0.797884583 : f32
    %365 = vector.broadcast %cst_101 : f32 to vector<8x256xf32>
    %366 = arith.mulf %365, %364 : vector<8x256xf32>
    %367 = math.tanh %366 : vector<8x256xf32>
    %cst_102 = arith.constant 1.000000e+00 : f32
    %368 = vector.broadcast %cst_102 : f32 to vector<8x256xf32>
    %369 = arith.addf %368, %367 : vector<8x256xf32>
    %370 = arith.mulf %359, %369 : vector<8x256xf32>
    %371 = arith.truncf %370 : vector<8x256xf32> to vector<8x256xbf16>
    %c0_103 = arith.constant 0 : index
    %c0_104 = arith.constant 0 : index
    %372 = vector.load %arg12[%c0_103, %c0_104] : memref<256x64xf32, #tpu.memory_space<vmem>>, vector<256x64xf32>
    %373 = arith.truncf %372 : vector<256x64xf32> to vector<256x64xbf16>
    %cst_105 = arith.constant dense<0.000000e+00> : vector<8x64xf32>
    %374 = tpu.matmul %371, %373, %cst_105 {dimension_numbers = #tpu.dot_dimension_numbers<[1], [0], [0], [1], [0, 0, 1, 1], [], []>} : vector<8x256xbf16>, vector<256x64xbf16>, vector<8x64xf32> -> vector<8x64xf32>
    %c0_106 = arith.constant 0 : index
    %c0_107 = arith.constant 0 : index
    %375 = vector.load %arg13[%c0_106, %c0_107] : memref<1x64xf32, #tpu.memory_space<vmem>>, vector<1x64xf32>
    %376 = vector.broadcast %375 : vector<1x64xf32> to vector<8x64xf32>
    %377 = arith.addf %374, %376 : vector<8x64xf32>
    %378 = vector.broadcast %4 : vector<8x1xf32> to vector<8x64xf32>
    %379 = arith.mulf %377, %378 : vector<8x64xf32>
    %380 = arith.addf %326, %379 : vector<8x64xf32>
    %c0_108 = arith.constant 0 : index
    %c0_109 = arith.constant 0 : index
    %c0_110 = arith.constant 0 : index
    %381 = vector.load %arg14[%c0_108, %c0_109, %c0_110] : memref<1x8x64xf32, #tpu.memory_space<vmem>>, vector<1x8x64xf32>
    %382 = vector.shape_cast %381 : vector<1x8x64xf32> to vector<8x64xf32>
    %383 = vector.shape_cast %380 : vector<8x64xf32> to vector<1x8x64xf32>
    tpu.vector_store %arg14[%c0_108, %c0_109, %c0_110], %383 {strides = array<i32>} : memref<1x8x64xf32, #tpu.memory_space<vmem>>, vector<1x8x64xf32>,
    return
  }
  func.func @transform_0(%arg0: i32) -> (i32, i32, i32) {
    %c0_i32 = arith.constant 0 : i32
    %c0_i32_0 = arith.constant 0 : i32
    %c0_i32_1 = arith.constant 0 : i32
    return %arg0, %c0_i32, %c0_i32_0 : i32, i32, i32
  }
  func.func @transform_1(%arg0: i32) -> (i32, i32, i32) {
    %c0_i32 = arith.constant 0 : i32
    %c0_i32_0 = arith.constant 0 : i32
    %c0_i32_1 = arith.constant 0 : i32
    return %arg0, %c0_i32, %c0_i32_0 : i32, i32, i32
  }
  func.func @transform_2(%arg0: i32) -> (i32, i32, i32) {
    %c0_i32 = arith.constant 0 : i32
    %c0_i32_0 = arith.constant 0 : i32
    %c0_i32_1 = arith.constant 0 : i32
    return %arg0, %c0_i32, %c0_i32_0 : i32, i32, i32
  }
  func.func @transform_3(%arg0: i32) -> (i32, i32) {
    %c0_i32 = arith.constant 0 : i32
    %c0_i32_0 = arith.constant 0 : i32
    %c0_i32_1 = arith.constant 0 : i32
    return %c0_i32, %c0_i32_0 : i32, i32
  }
  func.func @transform_4(%arg0: i32) -> (i32, i32, i32) {
    %c0_i32 = arith.constant 0 : i32
    %c0_i32_0 = arith.constant 0 : i32
    %c0_i32_1 = arith.constant 0 : i32
    %c0_i32_2 = arith.constant 0 : i32
    return %c0_i32, %c0_i32_0, %c0_i32_1 : i32, i32, i32
  }
  func.func @transform_5(%arg0: i32) -> (i32, i32, i32) {
    %c0_i32 = arith.constant 0 : i32
    %c0_i32_0 = arith.constant 0 : i32
    %c0_i32_1 = arith.constant 0 : i32
    %c0_i32_2 = arith.constant 0 : i32
    return %c0_i32, %c0_i32_0, %c0_i32_1 : i32, i32, i32
  }
  func.func @transform_6(%arg0: i32) -> (i32, i32) {
    %c0_i32 = arith.constant 0 : i32
    %c0_i32_0 = arith.constant 0 : i32
    %c0_i32_1 = arith.constant 0 : i32
    return %c0_i32, %c0_i32_0 : i32, i32
  }
  func.func @transform_7(%arg0: i32) -> (i32, i32) {
    %c0_i32 = arith.constant 0 : i32
    %c0_i32_0 = arith.constant 0 : i32
    %c0_i32_1 = arith.constant 0 : i32
    return %c0_i32, %c0_i32_0 : i32, i32
  }
  func.func @transform_8(%arg0: i32) -> (i32, i32) {
    %c0_i32 = arith.constant 0 : i32
    %c0_i32_0 = arith.constant 0 : i32
    %c0_i32_1 = arith.constant 0 : i32
    return %c0_i32, %c0_i32_0 : i32, i32
  }
  func.func @transform_9(%arg0: i32) -> (i32, i32) {
    %c0_i32 = arith.constant 0 : i32
    %c0_i32_0 = arith.constant 0 : i32
    %c0_i32_1 = arith.constant 0 : i32
    return %c0_i32, %c0_i32_0 : i32, i32
  }
  func.func @transform_10(%arg0: i32) -> (i32, i32) {
    %c0_i32 = arith.constant 0 : i32
    %c0_i32_0 = arith.constant 0 : i32
    %c0_i32_1 = arith.constant 0 : i32
    return %c0_i32, %c0_i32_0 : i32, i32
  }
  func.func @transform_11(%arg0: i32) -> (i32, i32) {
    %c0_i32 = arith.constant 0 : i32
    %c0_i32_0 = arith.constant 0 : i32
    %c0_i32_1 = arith.constant 0 : i32
    return %c0_i32, %c0_i32_0 : i32, i32
  }
  func.func @transform_12(%arg0: i32) -> (i32, i32) {
    %c0_i32 = arith.constant 0 : i32
    %c0_i32_0 = arith.constant 0 : i32
    %c0_i32_1 = arith.constant 0 : i32
    return %c0_i32, %c0_i32_0 : i32, i32
  }
  func.func @transform_13(%arg0: i32) -> (i32, i32, i32) {
    %c0_i32 = arith.constant 0 : i32
    %c0_i32_0 = arith.constant 0 : i32
    %c0_i32_1 = arith.constant 0 : i32
    return %arg0, %c0_i32, %c0_i32_0 : i32, i32, i32
  }
}

module attributes {stable_mosaic.version = 11 : i64} {
  func.func @_block_kernel(%arg0: i32, %arg1: memref<1x10x64xf32, #tpu.memory_space<vmem>>, %arg2: memref<1x4x1xf32, #tpu.memory_space<vmem>>, %arg3: memref<1x1x4xf32, #tpu.memory_space<vmem>>, %arg4: memref<10x64xf32, #tpu.memory_space<vmem>>, %arg5: memref<3x3x64xf32, #tpu.memory_space<vmem>>, %arg6: memref<3x64x64xf32, #tpu.memory_space<vmem>>, %arg7: memref<3x64xf32, #tpu.memory_space<vmem>>, %arg8: memref<64x64xf32, #tpu.memory_space<vmem>>, %arg9: memref<1x64xf32, #tpu.memory_space<vmem>>, %arg10: memref<64x256xf32, #tpu.memory_space<vmem>>, %arg11: memref<1x256xf32, #tpu.memory_space<vmem>>, %arg12: memref<256x64xf32, #tpu.memory_space<vmem>>, %arg13: memref<1x64xf32, #tpu.memory_space<vmem>>, %arg14: memref<1x4x64xf32, #tpu.memory_space<vmem>>) attributes {dimension_semantics = [#tpu.dimension_semantics<parallel>], iteration_bounds = array<i64: 2>, scalar_prefetch = 0 : i64, scratch_operands = 0 : i64, tpu.core_type = #tpu.core_type<tc>, window_params = [{transform_indices = @transform_0, window_bounds = array<i64: 1, 10, 64>}, {transform_indices = @transform_1, window_bounds = array<i64: 1, 4, 1>}, {transform_indices = @transform_2, window_bounds = array<i64: 1, 1, 4>}, {pipeline_mode = #tpu.pipeline_mode<synchronous>, transform_indices = @transform_3, window_bounds = array<i64: 10, 64>}, {pipeline_mode = #tpu.pipeline_mode<synchronous>, transform_indices = @transform_4, window_bounds = array<i64: 3, 3, 64>}, {pipeline_mode = #tpu.pipeline_mode<synchronous>, transform_indices = @transform_5, window_bounds = array<i64: 3, 64, 64>}, {pipeline_mode = #tpu.pipeline_mode<synchronous>, transform_indices = @transform_6, window_bounds = array<i64: 3, 64>}, {pipeline_mode = #tpu.pipeline_mode<synchronous>, transform_indices = @transform_7, window_bounds = array<i64: 64, 64>}, {pipeline_mode = #tpu.pipeline_mode<synchronous>, transform_indices = @transform_8, window_bounds = array<i64: 1, 64>}, {pipeline_mode = #tpu.pipeline_mode<synchronous>, transform_indices = @transform_9, window_bounds = array<i64: 64, 256>}, {pipeline_mode = #tpu.pipeline_mode<synchronous>, transform_indices = @transform_10, window_bounds = array<i64: 1, 256>}, {pipeline_mode = #tpu.pipeline_mode<synchronous>, transform_indices = @transform_11, window_bounds = array<i64: 256, 64>}, {pipeline_mode = #tpu.pipeline_mode<synchronous>, transform_indices = @transform_12, window_bounds = array<i64: 1, 64>}, {transform_indices = @transform_13, window_bounds = array<i64: 1, 4, 64>}]} {
    %c0 = arith.constant 0 : index
    %c0_0 = arith.constant 0 : index
    %0 = vector.load %arg4[%c0, %c0_0] : memref<10x64xf32, #tpu.memory_space<vmem>>, vector<10x64xf32>
    %c0_1 = arith.constant 0 : index
    %c0_2 = arith.constant 0 : index
    %c0_3 = arith.constant 0 : index
    %1 = vector.load %arg1[%c0_1, %c0_2, %c0_3] : memref<1x10x64xf32, #tpu.memory_space<vmem>>, vector<1x10x64xf32>
    %2 = vector.shape_cast %1 : vector<1x10x64xf32> to vector<10x64xf32>
    %c0_4 = arith.constant 0 : index
    %c0_5 = arith.constant 0 : index
    %c0_6 = arith.constant 0 : index
    %3 = vector.load %arg2[%c0_4, %c0_5, %c0_6] : memref<1x4x1xf32, #tpu.memory_space<vmem>>, vector<1x4x1xf32>
    %4 = vector.shape_cast %3 : vector<1x4x1xf32> to vector<4x1xf32>
    %c0_7 = arith.constant 0 : index
    %c0_8 = arith.constant 0 : index
    %c0_9 = arith.constant 0 : index
    %5 = vector.load %arg3[%c0_7, %c0_8, %c0_9] : memref<1x1x4xf32, #tpu.memory_space<vmem>>, vector<1x1x4xf32>
    %6 = vector.shape_cast %5 : vector<1x1x4xf32> to vector<1x4xf32>
    %7 = tpu.iota {dimensions = array<i32: 0>} : vector<10x1xi32>
    %c1_i32 = arith.constant 1 : i32
    %8 = vector.broadcast %c1_i32 : i32 to vector<10x1xi32>
    %9 = arith.cmpi sge, %7, %8 : vector<10x1xi32>
    %c8_i32 = arith.constant 8 : i32
    %10 = vector.broadcast %c8_i32 : i32 to vector<10x1xi32>
    %11 = arith.cmpi sle, %7, %10 : vector<10x1xi32>
    %12 = arith.andi %9, %11 : vector<10x1xi1>
    %cst = arith.constant dense<0.000000e+00> : vector<10xf32>
    %13 = vector.multi_reduction <add>, %2, %cst [1] : vector<10x64xf32> to vector<10xf32>
    %14 = vector.shape_cast %13 : vector<10xf32> to vector<10x1xf32>
    %cst_10 = arith.constant 6.400000e+01 : f32
    %15 = vector.broadcast %cst_10 : f32 to vector<10x1xf32>
    %16 = arith.divf %14, %15 : vector<10x1xf32>
    %17 = vector.broadcast %16 : vector<10x1xf32> to vector<10x64xf32>
    %18 = arith.subf %2, %17 : vector<10x64xf32>
    %19 = arith.mulf %18, %18 : vector<10x64xf32>
    %cst_11 = arith.constant dense<0.000000e+00> : vector<10xf32>
    %20 = vector.multi_reduction <add>, %19, %cst_11 [1] : vector<10x64xf32> to vector<10xf32>
    %21 = vector.shape_cast %20 : vector<10xf32> to vector<10x1xf32>
    %cst_12 = arith.constant 6.400000e+01 : f32
    %22 = vector.broadcast %cst_12 : f32 to vector<10x1xf32>
    %23 = arith.divf %21, %22 : vector<10x1xf32>
    %24 = vector.broadcast %16 : vector<10x1xf32> to vector<10x64xf32>
    %25 = arith.subf %2, %24 : vector<10x64xf32>
    %cst_13 = arith.constant 9.99999974E-6 : f32
    %26 = vector.broadcast %cst_13 : f32 to vector<10x1xf32>
    %27 = arith.addf %23, %26 : vector<10x1xf32>
    %28 = math.rsqrt %27 : vector<10x1xf32>
    %29 = vector.broadcast %28 : vector<10x1xf32> to vector<10x64xf32>
    %30 = arith.mulf %25, %29 : vector<10x64xf32>
    %31 = vector.extract_strided_slice %0 {offsets = [0, 0], sizes = [1, 64], strides = [1, 1]} : vector<10x64xf32> to vector<1x64xf32>
    %32 = vector.broadcast %31 : vector<1x64xf32> to vector<10x64xf32>
    %33 = arith.mulf %30, %32 : vector<10x64xf32>
    %34 = vector.extract_strided_slice %0 {offsets = [1, 0], sizes = [1, 64], strides = [1, 1]} : vector<10x64xf32> to vector<1x64xf32>
    %35 = vector.broadcast %34 : vector<1x64xf32> to vector<10x64xf32>
    %36 = arith.addf %33, %35 : vector<10x64xf32>
    %cst_14 = arith.constant 0.000000e+00 : f32
    %37 = vector.shape_cast %12 : vector<10x1xi1> to vector<10x1xi1>
    %38 = vector.broadcast %37 : vector<10x1xi1> to vector<10x64xi1>
    %39 = vector.broadcast %cst_14 : f32 to vector<10x64xf32>
    %40 = arith.select %38, %36, %39 : vector<10x64xi1>, vector<10x64xf32>
    %41 = vector.extract_strided_slice %40 {offsets = [0, 0], sizes = [8, 64], strides = [1, 1]} : vector<10x64xf32> to vector<8x64xf32>
    %42 = vector.extract_strided_slice %40 {offsets = [1, 0], sizes = [8, 64], strides = [1, 1]} : vector<10x64xf32> to vector<8x64xf32>
    %43 = vector.extract_strided_slice %40 {offsets = [2, 0], sizes = [8, 64], strides = [1, 1]} : vector<10x64xf32> to vector<8x64xf32>
    %44 = tpu.iota {dimensions = array<i32: 0>} : vector<4x8xi32>
    %45 = tpu.iota {dimensions = array<i32: 1>} : vector<4x8xi32>
    %c2_i32 = arith.constant 2 : i32
    %46 = vector.broadcast %c2_i32 : i32 to vector<4x8xi32>
    %47 = arith.muli %46, %44 : vector<4x8xi32>
    %48 = arith.cmpi eq, %45, %47 : vector<4x8xi32>
    %49 = arith.extui %48 : vector<4x8xi1> to vector<4x8xi32>
    %50 = arith.sitofp %49 : vector<4x8xi32> to vector<4x8xf32>
    %c0_15 = arith.constant 0 : index
    %c0_16 = arith.constant 0 : index
    %51 = vector.load %arg7[%c0_15, %c0_16] : memref<3x64xf32, #tpu.memory_space<vmem>>, vector<3x64xf32>
    %c0_17 = arith.constant 0 : index
    %c0_18 = arith.constant 0 : index
    %c0_19 = arith.constant 0 : index
    %52 = vector.load %arg5[%c0_17, %c0_18, %c0_19] : memref<3x3x64xf32, #tpu.memory_space<vmem>>, vector<1x3x64xf32>
    %53 = vector.shape_cast %52 : vector<1x3x64xf32> to vector<3x64xf32>
    %54 = vector.extract_strided_slice %53 {offsets = [0, 0], sizes = [1, 64], strides = [1, 1]} : vector<3x64xf32> to vector<1x64xf32>
    %55 = vector.broadcast %54 : vector<1x64xf32> to vector<8x64xf32>
    %56 = arith.mulf %41, %55 : vector<8x64xf32>
    %57 = vector.extract_strided_slice %53 {offsets = [1, 0], sizes = [1, 64], strides = [1, 1]} : vector<3x64xf32> to vector<1x64xf32>
    %58 = vector.broadcast %57 : vector<1x64xf32> to vector<8x64xf32>
    %59 = arith.mulf %42, %58 : vector<8x64xf32>
    %60 = arith.addf %56, %59 : vector<8x64xf32>
    %61 = vector.extract_strided_slice %53 {offsets = [2, 0], sizes = [1, 64], strides = [1, 1]} : vector<3x64xf32> to vector<1x64xf32>
    %62 = vector.broadcast %61 : vector<1x64xf32> to vector<8x64xf32>
    %63 = arith.mulf %43, %62 : vector<8x64xf32>
    %64 = arith.addf %60, %63 : vector<8x64xf32>
    %cst_20 = arith.constant dense<0.000000e+00> : vector<4x64xf32>
    %65 = tpu.matmul %50, %64, %cst_20 {dimension_numbers = #tpu.dot_dimension_numbers<[1], [0], [0], [1], [0, 0, 1, 1], [], []>} : vector<4x8xf32>, vector<8x64xf32>, vector<4x64xf32> -> vector<4x64xf32>
    %66 = vector.broadcast %4 : vector<4x1xf32> to vector<4x64xf32>
    %67 = arith.mulf %65, %66 : vector<4x64xf32>
    %cst_21 = arith.constant dense<0.000000e+00> : vector<4xf32>
    %68 = vector.multi_reduction <add>, %67, %cst_21 [1] : vector<4x64xf32> to vector<4xf32>
    %69 = vector.shape_cast %68 : vector<4xf32> to vector<4x1xf32>
    %cst_22 = arith.constant 6.400000e+01 : f32
    %70 = vector.broadcast %cst_22 : f32 to vector<4x1xf32>
    %71 = arith.divf %69, %70 : vector<4x1xf32>
    %72 = vector.broadcast %71 : vector<4x1xf32> to vector<4x64xf32>
    %73 = arith.subf %67, %72 : vector<4x64xf32>
    %74 = arith.mulf %73, %73 : vector<4x64xf32>
    %cst_23 = arith.constant dense<0.000000e+00> : vector<4xf32>
    %75 = vector.multi_reduction <add>, %74, %cst_23 [1] : vector<4x64xf32> to vector<4xf32>
    %76 = vector.shape_cast %75 : vector<4xf32> to vector<4x1xf32>
    %cst_24 = arith.constant 6.400000e+01 : f32
    %77 = vector.broadcast %cst_24 : f32 to vector<4x1xf32>
    %78 = arith.divf %76, %77 : vector<4x1xf32>
    %79 = vector.broadcast %71 : vector<4x1xf32> to vector<4x64xf32>
    %80 = arith.subf %67, %79 : vector<4x64xf32>
    %cst_25 = arith.constant 9.99999974E-6 : f32
    %81 = vector.broadcast %cst_25 : f32 to vector<4x1xf32>
    %82 = arith.addf %78, %81 : vector<4x1xf32>
    %83 = math.rsqrt %82 : vector<4x1xf32>
    %84 = vector.broadcast %83 : vector<4x1xf32> to vector<4x64xf32>
    %85 = arith.mulf %80, %84 : vector<4x64xf32>
    %86 = vector.extract_strided_slice %0 {offsets = [2, 0], sizes = [1, 64], strides = [1, 1]} : vector<10x64xf32> to vector<1x64xf32>
    %87 = vector.broadcast %86 : vector<1x64xf32> to vector<4x64xf32>
    %88 = arith.mulf %85, %87 : vector<4x64xf32>
    %89 = vector.extract_strided_slice %0 {offsets = [3, 0], sizes = [1, 64], strides = [1, 1]} : vector<10x64xf32> to vector<1x64xf32>
    %90 = vector.broadcast %89 : vector<1x64xf32> to vector<4x64xf32>
    %91 = arith.addf %88, %90 : vector<4x64xf32>
    %92 = arith.truncf %91 : vector<4x64xf32> to vector<4x64xbf16>
    %c0_26 = arith.constant 0 : index
    %c0_27 = arith.constant 0 : index
    %c0_28 = arith.constant 0 : index
    %93 = vector.load %arg6[%c0_26, %c0_27, %c0_28] : memref<3x64x64xf32, #tpu.memory_space<vmem>>, vector<1x64x64xf32>
    %94 = vector.shape_cast %93 : vector<1x64x64xf32> to vector<64x64xf32>
    %95 = arith.truncf %94 : vector<64x64xf32> to vector<64x64xbf16>
    %cst_29 = arith.constant dense<0.000000e+00> : vector<4x64xf32>
    %96 = tpu.matmul %92, %95, %cst_29 {dimension_numbers = #tpu.dot_dimension_numbers<[1], [0], [0], [1], [0, 0, 1, 1], [], []>} : vector<4x64xbf16>, vector<64x64xbf16>, vector<4x64xf32> -> vector<4x64xf32>
    %97 = vector.extract_strided_slice %51 {offsets = [0, 0], sizes = [1, 64], strides = [1, 1]} : vector<3x64xf32> to vector<1x64xf32>
    %98 = vector.broadcast %97 : vector<1x64xf32> to vector<4x64xf32>
    %99 = arith.addf %96, %98 : vector<4x64xf32>
    %c1 = arith.constant 1 : index
    %c0_30 = arith.constant 0 : index
    %c0_31 = arith.constant 0 : index
    %100 = vector.load %arg5[%c1, %c0_30, %c0_31] : memref<3x3x64xf32, #tpu.memory_space<vmem>>, vector<1x3x64xf32>
    %101 = vector.shape_cast %100 : vector<1x3x64xf32> to vector<3x64xf32>
    %102 = vector.extract_strided_slice %101 {offsets = [0, 0], sizes = [1, 64], strides = [1, 1]} : vector<3x64xf32> to vector<1x64xf32>
    %103 = vector.broadcast %102 : vector<1x64xf32> to vector<8x64xf32>
    %104 = arith.mulf %41, %103 : vector<8x64xf32>
    %105 = vector.extract_strided_slice %101 {offsets = [1, 0], sizes = [1, 64], strides = [1, 1]} : vector<3x64xf32> to vector<1x64xf32>
    %106 = vector.broadcast %105 : vector<1x64xf32> to vector<8x64xf32>
    %107 = arith.mulf %42, %106 : vector<8x64xf32>
    %108 = arith.addf %104, %107 : vector<8x64xf32>
    %109 = vector.extract_strided_slice %101 {offsets = [2, 0], sizes = [1, 64], strides = [1, 1]} : vector<3x64xf32> to vector<1x64xf32>
    %110 = vector.broadcast %109 : vector<1x64xf32> to vector<8x64xf32>
    %111 = arith.mulf %43, %110 : vector<8x64xf32>
    %112 = arith.addf %108, %111 : vector<8x64xf32>
    %cst_32 = arith.constant dense<0.000000e+00> : vector<4x64xf32>
    %113 = tpu.matmul %50, %112, %cst_32 {dimension_numbers = #tpu.dot_dimension_numbers<[1], [0], [0], [1], [0, 0, 1, 1], [], []>} : vector<4x8xf32>, vector<8x64xf32>, vector<4x64xf32> -> vector<4x64xf32>
    %114 = vector.broadcast %4 : vector<4x1xf32> to vector<4x64xf32>
    %115 = arith.mulf %113, %114 : vector<4x64xf32>
    %cst_33 = arith.constant dense<0.000000e+00> : vector<4xf32>
    %116 = vector.multi_reduction <add>, %115, %cst_33 [1] : vector<4x64xf32> to vector<4xf32>
    %117 = vector.shape_cast %116 : vector<4xf32> to vector<4x1xf32>
    %cst_34 = arith.constant 6.400000e+01 : f32
    %118 = vector.broadcast %cst_34 : f32 to vector<4x1xf32>
    %119 = arith.divf %117, %118 : vector<4x1xf32>
    %120 = vector.broadcast %119 : vector<4x1xf32> to vector<4x64xf32>
    %121 = arith.subf %115, %120 : vector<4x64xf32>
    %122 = arith.mulf %121, %121 : vector<4x64xf32>
    %cst_35 = arith.constant dense<0.000000e+00> : vector<4xf32>
    %123 = vector.multi_reduction <add>, %122, %cst_35 [1] : vector<4x64xf32> to vector<4xf32>
    %124 = vector.shape_cast %123 : vector<4xf32> to vector<4x1xf32>
    %cst_36 = arith.constant 6.400000e+01 : f32
    %125 = vector.broadcast %cst_36 : f32 to vector<4x1xf32>
    %126 = arith.divf %124, %125 : vector<4x1xf32>
    %127 = vector.broadcast %119 : vector<4x1xf32> to vector<4x64xf32>
    %128 = arith.subf %115, %127 : vector<4x64xf32>
    %cst_37 = arith.constant 9.99999974E-6 : f32
    %129 = vector.broadcast %cst_37 : f32 to vector<4x1xf32>
    %130 = arith.addf %126, %129 : vector<4x1xf32>
    %131 = math.rsqrt %130 : vector<4x1xf32>
    %132 = vector.broadcast %131 : vector<4x1xf32> to vector<4x64xf32>
    %133 = arith.mulf %128, %132 : vector<4x64xf32>
    %134 = vector.extract_strided_slice %0 {offsets = [4, 0], sizes = [1, 64], strides = [1, 1]} : vector<10x64xf32> to vector<1x64xf32>
    %135 = vector.broadcast %134 : vector<1x64xf32> to vector<4x64xf32>
    %136 = arith.mulf %133, %135 : vector<4x64xf32>
    %137 = vector.extract_strided_slice %0 {offsets = [5, 0], sizes = [1, 64], strides = [1, 1]} : vector<10x64xf32> to vector<1x64xf32>
    %138 = vector.broadcast %137 : vector<1x64xf32> to vector<4x64xf32>
    %139 = arith.addf %136, %138 : vector<4x64xf32>
    %140 = arith.truncf %139 : vector<4x64xf32> to vector<4x64xbf16>
    %c1_38 = arith.constant 1 : index
    %c0_39 = arith.constant 0 : index
    %c0_40 = arith.constant 0 : index
    %141 = vector.load %arg6[%c1_38, %c0_39, %c0_40] : memref<3x64x64xf32, #tpu.memory_space<vmem>>, vector<1x64x64xf32>
    %142 = vector.shape_cast %141 : vector<1x64x64xf32> to vector<64x64xf32>
    %143 = arith.truncf %142 : vector<64x64xf32> to vector<64x64xbf16>
    %cst_41 = arith.constant dense<0.000000e+00> : vector<4x64xf32>
    %144 = tpu.matmul %140, %143, %cst_41 {dimension_numbers = #tpu.dot_dimension_numbers<[1], [0], [0], [1], [0, 0, 1, 1], [], []>} : vector<4x64xbf16>, vector<64x64xbf16>, vector<4x64xf32> -> vector<4x64xf32>
    %145 = vector.extract_strided_slice %51 {offsets = [1, 0], sizes = [1, 64], strides = [1, 1]} : vector<3x64xf32> to vector<1x64xf32>
    %146 = vector.broadcast %145 : vector<1x64xf32> to vector<4x64xf32>
    %147 = arith.addf %144, %146 : vector<4x64xf32>
    %c2 = arith.constant 2 : index
    %c0_42 = arith.constant 0 : index
    %c0_43 = arith.constant 0 : index
    %148 = vector.load %arg5[%c2, %c0_42, %c0_43] : memref<3x3x64xf32, #tpu.memory_space<vmem>>, vector<1x3x64xf32>
    %149 = vector.shape_cast %148 : vector<1x3x64xf32> to vector<3x64xf32>
    %150 = vector.extract_strided_slice %149 {offsets = [0, 0], sizes = [1, 64], strides = [1, 1]} : vector<3x64xf32> to vector<1x64xf32>
    %151 = vector.broadcast %150 : vector<1x64xf32> to vector<8x64xf32>
    %152 = arith.mulf %41, %151 : vector<8x64xf32>
    %153 = vector.extract_strided_slice %149 {offsets = [1, 0], sizes = [1, 64], strides = [1, 1]} : vector<3x64xf32> to vector<1x64xf32>
    %154 = vector.broadcast %153 : vector<1x64xf32> to vector<8x64xf32>
    %155 = arith.mulf %42, %154 : vector<8x64xf32>
    %156 = arith.addf %152, %155 : vector<8x64xf32>
    %157 = vector.extract_strided_slice %149 {offsets = [2, 0], sizes = [1, 64], strides = [1, 1]} : vector<3x64xf32> to vector<1x64xf32>
    %158 = vector.broadcast %157 : vector<1x64xf32> to vector<8x64xf32>
    %159 = arith.mulf %43, %158 : vector<8x64xf32>
    %160 = arith.addf %156, %159 : vector<8x64xf32>
    %cst_44 = arith.constant dense<0.000000e+00> : vector<4x64xf32>
    %161 = tpu.matmul %50, %160, %cst_44 {dimension_numbers = #tpu.dot_dimension_numbers<[1], [0], [0], [1], [0, 0, 1, 1], [], []>} : vector<4x8xf32>, vector<8x64xf32>, vector<4x64xf32> -> vector<4x64xf32>
    %162 = vector.broadcast %4 : vector<4x1xf32> to vector<4x64xf32>
    %163 = arith.mulf %161, %162 : vector<4x64xf32>
    %cst_45 = arith.constant dense<0.000000e+00> : vector<4xf32>
    %164 = vector.multi_reduction <add>, %163, %cst_45 [1] : vector<4x64xf32> to vector<4xf32>
    %165 = vector.shape_cast %164 : vector<4xf32> to vector<4x1xf32>
    %cst_46 = arith.constant 6.400000e+01 : f32
    %166 = vector.broadcast %cst_46 : f32 to vector<4x1xf32>
    %167 = arith.divf %165, %166 : vector<4x1xf32>
    %168 = vector.broadcast %167 : vector<4x1xf32> to vector<4x64xf32>
    %169 = arith.subf %163, %168 : vector<4x64xf32>
    %170 = arith.mulf %169, %169 : vector<4x64xf32>
    %cst_47 = arith.constant dense<0.000000e+00> : vector<4xf32>
    %171 = vector.multi_reduction <add>, %170, %cst_47 [1] : vector<4x64xf32> to vector<4xf32>
    %172 = vector.shape_cast %171 : vector<4xf32> to vector<4x1xf32>
    %cst_48 = arith.constant 6.400000e+01 : f32
    %173 = vector.broadcast %cst_48 : f32 to vector<4x1xf32>
    %174 = arith.divf %172, %173 : vector<4x1xf32>
    %175 = vector.broadcast %167 : vector<4x1xf32> to vector<4x64xf32>
    %176 = arith.subf %163, %175 : vector<4x64xf32>
    %cst_49 = arith.constant 9.99999974E-6 : f32
    %177 = vector.broadcast %cst_49 : f32 to vector<4x1xf32>
    %178 = arith.addf %174, %177 : vector<4x1xf32>
    %179 = math.rsqrt %178 : vector<4x1xf32>
    %180 = vector.broadcast %179 : vector<4x1xf32> to vector<4x64xf32>
    %181 = arith.mulf %176, %180 : vector<4x64xf32>
    %182 = vector.extract_strided_slice %0 {offsets = [6, 0], sizes = [1, 64], strides = [1, 1]} : vector<10x64xf32> to vector<1x64xf32>
    %183 = vector.broadcast %182 : vector<1x64xf32> to vector<4x64xf32>
    %184 = arith.mulf %181, %183 : vector<4x64xf32>
    %185 = vector.extract_strided_slice %0 {offsets = [7, 0], sizes = [1, 64], strides = [1, 1]} : vector<10x64xf32> to vector<1x64xf32>
    %186 = vector.broadcast %185 : vector<1x64xf32> to vector<4x64xf32>
    %187 = arith.addf %184, %186 : vector<4x64xf32>
    %188 = arith.truncf %187 : vector<4x64xf32> to vector<4x64xbf16>
    %c2_50 = arith.constant 2 : index
    %c0_51 = arith.constant 0 : index
    %c0_52 = arith.constant 0 : index
    %189 = vector.load %arg6[%c2_50, %c0_51, %c0_52] : memref<3x64x64xf32, #tpu.memory_space<vmem>>, vector<1x64x64xf32>
    %190 = vector.shape_cast %189 : vector<1x64x64xf32> to vector<64x64xf32>
    %191 = arith.truncf %190 : vector<64x64xf32> to vector<64x64xbf16>
    %cst_53 = arith.constant dense<0.000000e+00> : vector<4x64xf32>
    %192 = tpu.matmul %188, %191, %cst_53 {dimension_numbers = #tpu.dot_dimension_numbers<[1], [0], [0], [1], [0, 0, 1, 1], [], []>} : vector<4x64xbf16>, vector<64x64xbf16>, vector<4x64xf32> -> vector<4x64xf32>
    %193 = vector.extract_strided_slice %51 {offsets = [2, 0], sizes = [1, 64], strides = [1, 1]} : vector<3x64xf32> to vector<1x64xf32>
    %194 = vector.broadcast %193 : vector<1x64xf32> to vector<4x64xf32>
    %195 = arith.addf %192, %194 : vector<4x64xf32>
    %196 = vector.extract_strided_slice %99 {offsets = [0, 0], sizes = [4, 16], strides = [1, 1]} : vector<4x64xf32> to vector<4x16xf32>
    %cst_54 = arith.constant 2.500000e-01 : f32
    %197 = vector.broadcast %cst_54 : f32 to vector<4x16xf32>
    %198 = arith.mulf %196, %197 : vector<4x16xf32>
    %199 = arith.truncf %198 : vector<4x16xf32> to vector<4x16xbf16>
    %200 = vector.extract_strided_slice %147 {offsets = [0, 0], sizes = [4, 16], strides = [1, 1]} : vector<4x64xf32> to vector<4x16xf32>
    %201 = arith.truncf %200 : vector<4x16xf32> to vector<4x16xbf16>
    %202 = vector.extract_strided_slice %195 {offsets = [0, 0], sizes = [4, 16], strides = [1, 1]} : vector<4x64xf32> to vector<4x16xf32>
    %203 = arith.truncf %202 : vector<4x16xf32> to vector<4x16xbf16>
    %cst_55 = arith.constant dense<0.000000e+00> : vector<4x4xf32>
    %204 = tpu.matmul %199, %201, %cst_55 {dimension_numbers = #tpu.dot_dimension_numbers<[1], [1], [0], [0], [0, 0, 1, 0], [], []>} : vector<4x16xbf16>, vector<4x16xbf16>, vector<4x4xf32> -> vector<4x4xf32>
    %cst_56 = arith.constant 0.000000e+00 : f32
    %205 = vector.broadcast %cst_56 : f32 to vector<1x4xf32>
    %206 = arith.cmpf ogt, %6, %205 : vector<1x4xf32>
    %cst_57 = arith.constant -1.000000e+30 : f32
    %207 = vector.shape_cast %206 : vector<1x4xi1> to vector<1x4xi1>
    %208 = vector.broadcast %207 : vector<1x4xi1> to vector<4x4xi1>
    %209 = vector.broadcast %cst_57 : f32 to vector<4x4xf32>
    %210 = arith.select %208, %204, %209 : vector<4x4xi1>, vector<4x4xf32>
    %cst_58 = arith.constant dense<0xFF800000> : vector<4xf32>
    %211 = vector.multi_reduction <maximumf>, %210, %cst_58 [1] : vector<4x4xf32> to vector<4xf32>
    %212 = vector.shape_cast %211 : vector<4xf32> to vector<4x1xf32>
    %213 = vector.broadcast %212 : vector<4x1xf32> to vector<4x4xf32>
    %214 = arith.subf %210, %213 : vector<4x4xf32>
    %215 = math.exp %214 : vector<4x4xf32>
    %cst_59 = arith.constant dense<0.000000e+00> : vector<4xf32>
    %216 = vector.multi_reduction <add>, %215, %cst_59 [1] : vector<4x4xf32> to vector<4xf32>
    %217 = vector.shape_cast %216 : vector<4xf32> to vector<4x1xf32>
    %218 = tpu.reciprocal %217 {approx = true} : vector<4x1xf32> -> vector<4x1xf32>
    %219 = vector.broadcast %218 : vector<4x1xf32> to vector<4x4xf32>
    %220 = arith.mulf %215, %219 : vector<4x4xf32>
    %221 = arith.truncf %220 : vector<4x4xf32> to vector<4x4xbf16>
    %cst_60 = arith.constant dense<0.000000e+00> : vector<4x16xf32>
    %222 = tpu.matmul %221, %203, %cst_60 {dimension_numbers = #tpu.dot_dimension_numbers<[1], [0], [0], [1], [0, 0, 1, 1], [], []>} : vector<4x4xbf16>, vector<4x16xbf16>, vector<4x16xf32> -> vector<4x16xf32>
    %223 = vector.extract_strided_slice %99 {offsets = [0, 16], sizes = [4, 16], strides = [1, 1]} : vector<4x64xf32> to vector<4x16xf32>
    %cst_61 = arith.constant 2.500000e-01 : f32
    %224 = vector.broadcast %cst_61 : f32 to vector<4x16xf32>
    %225 = arith.mulf %223, %224 : vector<4x16xf32>
    %226 = arith.truncf %225 : vector<4x16xf32> to vector<4x16xbf16>
    %227 = vector.extract_strided_slice %147 {offsets = [0, 16], sizes = [4, 16], strides = [1, 1]} : vector<4x64xf32> to vector<4x16xf32>
    %228 = arith.truncf %227 : vector<4x16xf32> to vector<4x16xbf16>
    %229 = vector.extract_strided_slice %195 {offsets = [0, 16], sizes = [4, 16], strides = [1, 1]} : vector<4x64xf32> to vector<4x16xf32>
    %230 = arith.truncf %229 : vector<4x16xf32> to vector<4x16xbf16>
    %cst_62 = arith.constant dense<0.000000e+00> : vector<4x4xf32>
    %231 = tpu.matmul %226, %228, %cst_62 {dimension_numbers = #tpu.dot_dimension_numbers<[1], [1], [0], [0], [0, 0, 1, 0], [], []>} : vector<4x16xbf16>, vector<4x16xbf16>, vector<4x4xf32> -> vector<4x4xf32>
    %cst_63 = arith.constant 0.000000e+00 : f32
    %232 = vector.broadcast %cst_63 : f32 to vector<1x4xf32>
    %233 = arith.cmpf ogt, %6, %232 : vector<1x4xf32>
    %cst_64 = arith.constant -1.000000e+30 : f32
    %234 = vector.shape_cast %233 : vector<1x4xi1> to vector<1x4xi1>
    %235 = vector.broadcast %234 : vector<1x4xi1> to vector<4x4xi1>
    %236 = vector.broadcast %cst_64 : f32 to vector<4x4xf32>
    %237 = arith.select %235, %231, %236 : vector<4x4xi1>, vector<4x4xf32>
    %cst_65 = arith.constant dense<0xFF800000> : vector<4xf32>
    %238 = vector.multi_reduction <maximumf>, %237, %cst_65 [1] : vector<4x4xf32> to vector<4xf32>
    %239 = vector.shape_cast %238 : vector<4xf32> to vector<4x1xf32>
    %240 = vector.broadcast %239 : vector<4x1xf32> to vector<4x4xf32>
    %241 = arith.subf %237, %240 : vector<4x4xf32>
    %242 = math.exp %241 : vector<4x4xf32>
    %cst_66 = arith.constant dense<0.000000e+00> : vector<4xf32>
    %243 = vector.multi_reduction <add>, %242, %cst_66 [1] : vector<4x4xf32> to vector<4xf32>
    %244 = vector.shape_cast %243 : vector<4xf32> to vector<4x1xf32>
    %245 = tpu.reciprocal %244 {approx = true} : vector<4x1xf32> -> vector<4x1xf32>
    %246 = vector.broadcast %245 : vector<4x1xf32> to vector<4x4xf32>
    %247 = arith.mulf %242, %246 : vector<4x4xf32>
    %248 = arith.truncf %247 : vector<4x4xf32> to vector<4x4xbf16>
    %cst_67 = arith.constant dense<0.000000e+00> : vector<4x16xf32>
    %249 = tpu.matmul %248, %230, %cst_67 {dimension_numbers = #tpu.dot_dimension_numbers<[1], [0], [0], [1], [0, 0, 1, 1], [], []>} : vector<4x4xbf16>, vector<4x16xbf16>, vector<4x16xf32> -> vector<4x16xf32>
    %250 = vector.extract_strided_slice %99 {offsets = [0, 32], sizes = [4, 16], strides = [1, 1]} : vector<4x64xf32> to vector<4x16xf32>
    %cst_68 = arith.constant 2.500000e-01 : f32
    %251 = vector.broadcast %cst_68 : f32 to vector<4x16xf32>
    %252 = arith.mulf %250, %251 : vector<4x16xf32>
    %253 = arith.truncf %252 : vector<4x16xf32> to vector<4x16xbf16>
    %254 = vector.extract_strided_slice %147 {offsets = [0, 32], sizes = [4, 16], strides = [1, 1]} : vector<4x64xf32> to vector<4x16xf32>
    %255 = arith.truncf %254 : vector<4x16xf32> to vector<4x16xbf16>
    %256 = vector.extract_strided_slice %195 {offsets = [0, 32], sizes = [4, 16], strides = [1, 1]} : vector<4x64xf32> to vector<4x16xf32>
    %257 = arith.truncf %256 : vector<4x16xf32> to vector<4x16xbf16>
    %cst_69 = arith.constant dense<0.000000e+00> : vector<4x4xf32>
    %258 = tpu.matmul %253, %255, %cst_69 {dimension_numbers = #tpu.dot_dimension_numbers<[1], [1], [0], [0], [0, 0, 1, 0], [], []>} : vector<4x16xbf16>, vector<4x16xbf16>, vector<4x4xf32> -> vector<4x4xf32>
    %cst_70 = arith.constant 0.000000e+00 : f32
    %259 = vector.broadcast %cst_70 : f32 to vector<1x4xf32>
    %260 = arith.cmpf ogt, %6, %259 : vector<1x4xf32>
    %cst_71 = arith.constant -1.000000e+30 : f32
    %261 = vector.shape_cast %260 : vector<1x4xi1> to vector<1x4xi1>
    %262 = vector.broadcast %261 : vector<1x4xi1> to vector<4x4xi1>
    %263 = vector.broadcast %cst_71 : f32 to vector<4x4xf32>
    %264 = arith.select %262, %258, %263 : vector<4x4xi1>, vector<4x4xf32>
    %cst_72 = arith.constant dense<0xFF800000> : vector<4xf32>
    %265 = vector.multi_reduction <maximumf>, %264, %cst_72 [1] : vector<4x4xf32> to vector<4xf32>
    %266 = vector.shape_cast %265 : vector<4xf32> to vector<4x1xf32>
    %267 = vector.broadcast %266 : vector<4x1xf32> to vector<4x4xf32>
    %268 = arith.subf %264, %267 : vector<4x4xf32>
    %269 = math.exp %268 : vector<4x4xf32>
    %cst_73 = arith.constant dense<0.000000e+00> : vector<4xf32>
    %270 = vector.multi_reduction <add>, %269, %cst_73 [1] : vector<4x4xf32> to vector<4xf32>
    %271 = vector.shape_cast %270 : vector<4xf32> to vector<4x1xf32>
    %272 = tpu.reciprocal %271 {approx = true} : vector<4x1xf32> -> vector<4x1xf32>
    %273 = vector.broadcast %272 : vector<4x1xf32> to vector<4x4xf32>
    %274 = arith.mulf %269, %273 : vector<4x4xf32>
    %275 = arith.truncf %274 : vector<4x4xf32> to vector<4x4xbf16>
    %cst_74 = arith.constant dense<0.000000e+00> : vector<4x16xf32>
    %276 = tpu.matmul %275, %257, %cst_74 {dimension_numbers = #tpu.dot_dimension_numbers<[1], [0], [0], [1], [0, 0, 1, 1], [], []>} : vector<4x4xbf16>, vector<4x16xbf16>, vector<4x16xf32> -> vector<4x16xf32>
    %277 = vector.extract_strided_slice %99 {offsets = [0, 48], sizes = [4, 16], strides = [1, 1]} : vector<4x64xf32> to vector<4x16xf32>
    %cst_75 = arith.constant 2.500000e-01 : f32
    %278 = vector.broadcast %cst_75 : f32 to vector<4x16xf32>
    %279 = arith.mulf %277, %278 : vector<4x16xf32>
    %280 = arith.truncf %279 : vector<4x16xf32> to vector<4x16xbf16>
    %281 = vector.extract_strided_slice %147 {offsets = [0, 48], sizes = [4, 16], strides = [1, 1]} : vector<4x64xf32> to vector<4x16xf32>
    %282 = arith.truncf %281 : vector<4x16xf32> to vector<4x16xbf16>
    %283 = vector.extract_strided_slice %195 {offsets = [0, 48], sizes = [4, 16], strides = [1, 1]} : vector<4x64xf32> to vector<4x16xf32>
    %284 = arith.truncf %283 : vector<4x16xf32> to vector<4x16xbf16>
    %cst_76 = arith.constant dense<0.000000e+00> : vector<4x4xf32>
    %285 = tpu.matmul %280, %282, %cst_76 {dimension_numbers = #tpu.dot_dimension_numbers<[1], [1], [0], [0], [0, 0, 1, 0], [], []>} : vector<4x16xbf16>, vector<4x16xbf16>, vector<4x4xf32> -> vector<4x4xf32>
    %cst_77 = arith.constant 0.000000e+00 : f32
    %286 = vector.broadcast %cst_77 : f32 to vector<1x4xf32>
    %287 = arith.cmpf ogt, %6, %286 : vector<1x4xf32>
    %cst_78 = arith.constant -1.000000e+30 : f32
    %288 = vector.shape_cast %287 : vector<1x4xi1> to vector<1x4xi1>
    %289 = vector.broadcast %288 : vector<1x4xi1> to vector<4x4xi1>
    %290 = vector.broadcast %cst_78 : f32 to vector<4x4xf32>
    %291 = arith.select %289, %285, %290 : vector<4x4xi1>, vector<4x4xf32>
    %cst_79 = arith.constant dense<0xFF800000> : vector<4xf32>
    %292 = vector.multi_reduction <maximumf>, %291, %cst_79 [1] : vector<4x4xf32> to vector<4xf32>
    %293 = vector.shape_cast %292 : vector<4xf32> to vector<4x1xf32>
    %294 = vector.broadcast %293 : vector<4x1xf32> to vector<4x4xf32>
    %295 = arith.subf %291, %294 : vector<4x4xf32>
    %296 = math.exp %295 : vector<4x4xf32>
    %cst_80 = arith.constant dense<0.000000e+00> : vector<4xf32>
    %297 = vector.multi_reduction <add>, %296, %cst_80 [1] : vector<4x4xf32> to vector<4xf32>
    %298 = vector.shape_cast %297 : vector<4xf32> to vector<4x1xf32>
    %299 = tpu.reciprocal %298 {approx = true} : vector<4x1xf32> -> vector<4x1xf32>
    %300 = vector.broadcast %299 : vector<4x1xf32> to vector<4x4xf32>
    %301 = arith.mulf %296, %300 : vector<4x4xf32>
    %302 = arith.truncf %301 : vector<4x4xf32> to vector<4x4xbf16>
    %cst_81 = arith.constant dense<0.000000e+00> : vector<4x16xf32>
    %303 = tpu.matmul %302, %284, %cst_81 {dimension_numbers = #tpu.dot_dimension_numbers<[1], [0], [0], [1], [0, 0, 1, 1], [], []>} : vector<4x4xbf16>, vector<4x16xbf16>, vector<4x16xf32> -> vector<4x16xf32>
    %304 = tpu.concatenate %222, %249, %276, %303 in 1 : vector<4x16xf32>, vector<4x16xf32>, vector<4x16xf32>, vector<4x16xf32> -> vector<4x64xf32>
    %305 = arith.truncf %304 : vector<4x64xf32> to vector<4x64xbf16>
    %c0_82 = arith.constant 0 : index
    %c0_83 = arith.constant 0 : index
    %306 = vector.load %arg8[%c0_82, %c0_83] : memref<64x64xf32, #tpu.memory_space<vmem>>, vector<64x64xf32>
    %307 = arith.truncf %306 : vector<64x64xf32> to vector<64x64xbf16>
    %cst_84 = arith.constant dense<0.000000e+00> : vector<4x64xf32>
    %308 = tpu.matmul %305, %307, %cst_84 {dimension_numbers = #tpu.dot_dimension_numbers<[1], [0], [0], [1], [0, 0, 1, 1], [], []>} : vector<4x64xbf16>, vector<64x64xbf16>, vector<4x64xf32> -> vector<4x64xf32>
    %c0_85 = arith.constant 0 : index
    %c0_86 = arith.constant 0 : index
    %309 = vector.load %arg9[%c0_85, %c0_86] : memref<1x64xf32, #tpu.memory_space<vmem>>, vector<1x64xf32>
    %310 = vector.broadcast %309 : vector<1x64xf32> to vector<4x64xf32>
    %311 = arith.addf %308, %310 : vector<4x64xf32>
    %312 = vector.broadcast %4 : vector<4x1xf32> to vector<4x64xf32>
    %313 = arith.mulf %311, %312 : vector<4x64xf32>
    %cst_87 = arith.constant -1.000000e+30 : f32
    %314 = vector.shape_cast %12 : vector<10x1xi1> to vector<10x1xi1>
    %315 = vector.broadcast %314 : vector<10x1xi1> to vector<10x64xi1>
    %316 = vector.broadcast %cst_87 : f32 to vector<10x64xf32>
    %317 = arith.select %315, %2, %316 : vector<10x64xi1>, vector<10x64xf32>
    %318 = vector.extract_strided_slice %317 {offsets = [0, 0], sizes = [8, 64], strides = [1, 1]} : vector<10x64xf32> to vector<8x64xf32>
    %319 = vector.extract_strided_slice %317 {offsets = [1, 0], sizes = [8, 64], strides = [1, 1]} : vector<10x64xf32> to vector<8x64xf32>
    %320 = arith.maximumf %318, %319 : vector<8x64xf32>
    %321 = vector.extract_strided_slice %317 {offsets = [2, 0], sizes = [8, 64], strides = [1, 1]} : vector<10x64xf32> to vector<8x64xf32>
    %322 = arith.maximumf %320, %321 : vector<8x64xf32>
    %cst_88 = arith.constant dense<0.000000e+00> : vector<4x64xf32>
    %323 = tpu.matmul %50, %322, %cst_88 {dimension_numbers = #tpu.dot_dimension_numbers<[1], [0], [0], [1], [0, 0, 1, 1], [], []>} : vector<4x8xf32>, vector<8x64xf32>, vector<4x64xf32> -> vector<4x64xf32>
    %324 = vector.broadcast %4 : vector<4x1xf32> to vector<4x64xf32>
    %325 = arith.mulf %323, %324 : vector<4x64xf32>
    %326 = arith.addf %325, %313 : vector<4x64xf32>
    %cst_89 = arith.constant dense<0.000000e+00> : vector<4xf32>
    %327 = vector.multi_reduction <add>, %326, %cst_89 [1] : vector<4x64xf32> to vector<4xf32>
    %328 = vector.shape_cast %327 : vector<4xf32> to vector<4x1xf32>
    %cst_90 = arith.constant 6.400000e+01 : f32
    %329 = vector.broadcast %cst_90 : f32 to vector<4x1xf32>
    %330 = arith.divf %328, %329 : vector<4x1xf32>
    %331 = vector.broadcast %330 : vector<4x1xf32> to vector<4x64xf32>
    %332 = arith.subf %326, %331 : vector<4x64xf32>
    %333 = arith.mulf %332, %332 : vector<4x64xf32>
    %cst_91 = arith.constant dense<0.000000e+00> : vector<4xf32>
    %334 = vector.multi_reduction <add>, %333, %cst_91 [1] : vector<4x64xf32> to vector<4xf32>
    %335 = vector.shape_cast %334 : vector<4xf32> to vector<4x1xf32>
    %cst_92 = arith.constant 6.400000e+01 : f32
    %336 = vector.broadcast %cst_92 : f32 to vector<4x1xf32>
    %337 = arith.divf %335, %336 : vector<4x1xf32>
    %338 = vector.broadcast %330 : vector<4x1xf32> to vector<4x64xf32>
    %339 = arith.subf %326, %338 : vector<4x64xf32>
    %cst_93 = arith.constant 9.99999974E-6 : f32
    %340 = vector.broadcast %cst_93 : f32 to vector<4x1xf32>
    %341 = arith.addf %337, %340 : vector<4x1xf32>
    %342 = math.rsqrt %341 : vector<4x1xf32>
    %343 = vector.broadcast %342 : vector<4x1xf32> to vector<4x64xf32>
    %344 = arith.mulf %339, %343 : vector<4x64xf32>
    %345 = vector.extract_strided_slice %0 {offsets = [8, 0], sizes = [1, 64], strides = [1, 1]} : vector<10x64xf32> to vector<1x64xf32>
    %346 = vector.broadcast %345 : vector<1x64xf32> to vector<4x64xf32>
    %347 = arith.mulf %344, %346 : vector<4x64xf32>
    %348 = vector.extract_strided_slice %0 {offsets = [9, 0], sizes = [1, 64], strides = [1, 1]} : vector<10x64xf32> to vector<1x64xf32>
    %349 = vector.broadcast %348 : vector<1x64xf32> to vector<4x64xf32>
    %350 = arith.addf %347, %349 : vector<4x64xf32>
    %351 = arith.truncf %350 : vector<4x64xf32> to vector<4x64xbf16>
    %c0_94 = arith.constant 0 : index
    %c0_95 = arith.constant 0 : index
    %352 = vector.load %arg10[%c0_94, %c0_95] : memref<64x256xf32, #tpu.memory_space<vmem>>, vector<64x256xf32>
    %353 = arith.truncf %352 : vector<64x256xf32> to vector<64x256xbf16>
    %cst_96 = arith.constant dense<0.000000e+00> : vector<4x256xf32>
    %354 = tpu.matmul %351, %353, %cst_96 {dimension_numbers = #tpu.dot_dimension_numbers<[1], [0], [0], [1], [0, 0, 1, 1], [], []>} : vector<4x64xbf16>, vector<64x256xbf16>, vector<4x256xf32> -> vector<4x256xf32>
    %c0_97 = arith.constant 0 : index
    %c0_98 = arith.constant 0 : index
    %355 = vector.load %arg11[%c0_97, %c0_98] : memref<1x256xf32, #tpu.memory_space<vmem>>, vector<1x256xf32>
    %356 = vector.broadcast %355 : vector<1x256xf32> to vector<4x256xf32>
    %357 = arith.addf %354, %356 : vector<4x256xf32>
    %cst_99 = arith.constant 5.000000e-01 : f32
    %358 = vector.broadcast %cst_99 : f32 to vector<4x256xf32>
    %359 = arith.mulf %358, %357 : vector<4x256xf32>
    %cst_100 = arith.constant 4.471500e-02 : f32
    %360 = vector.broadcast %cst_100 : f32 to vector<4x256xf32>
    %361 = arith.mulf %360, %357 : vector<4x256xf32>
    %362 = arith.mulf %361, %357 : vector<4x256xf32>
    %363 = arith.mulf %362, %357 : vector<4x256xf32>
    %364 = arith.addf %357, %363 : vector<4x256xf32>
    %cst_101 = arith.constant 0.797884583 : f32
    %365 = vector.broadcast %cst_101 : f32 to vector<4x256xf32>
    %366 = arith.mulf %365, %364 : vector<4x256xf32>
    %367 = math.tanh %366 : vector<4x256xf32>
    %cst_102 = arith.constant 1.000000e+00 : f32
    %368 = vector.broadcast %cst_102 : f32 to vector<4x256xf32>
    %369 = arith.addf %368, %367 : vector<4x256xf32>
    %370 = arith.mulf %359, %369 : vector<4x256xf32>
    %371 = arith.truncf %370 : vector<4x256xf32> to vector<4x256xbf16>
    %c0_103 = arith.constant 0 : index
    %c0_104 = arith.constant 0 : index
    %372 = vector.load %arg12[%c0_103, %c0_104] : memref<256x64xf32, #tpu.memory_space<vmem>>, vector<256x64xf32>
    %373 = arith.truncf %372 : vector<256x64xf32> to vector<256x64xbf16>
    %cst_105 = arith.constant dense<0.000000e+00> : vector<4x64xf32>
    %374 = tpu.matmul %371, %373, %cst_105 {dimension_numbers = #tpu.dot_dimension_numbers<[1], [0], [0], [1], [0, 0, 1, 1], [], []>} : vector<4x256xbf16>, vector<256x64xbf16>, vector<4x64xf32> -> vector<4x64xf32>
    %c0_106 = arith.constant 0 : index
    %c0_107 = arith.constant 0 : index
    %375 = vector.load %arg13[%c0_106, %c0_107] : memref<1x64xf32, #tpu.memory_space<vmem>>, vector<1x64xf32>
    %376 = vector.broadcast %375 : vector<1x64xf32> to vector<4x64xf32>
    %377 = arith.addf %374, %376 : vector<4x64xf32>
    %378 = vector.broadcast %4 : vector<4x1xf32> to vector<4x64xf32>
    %379 = arith.mulf %377, %378 : vector<4x64xf32>
    %380 = arith.addf %326, %379 : vector<4x64xf32>
    %c0_108 = arith.constant 0 : index
    %c0_109 = arith.constant 0 : index
    %c0_110 = arith.constant 0 : index
    %381 = vector.load %arg14[%c0_108, %c0_109, %c0_110] : memref<1x4x64xf32, #tpu.memory_space<vmem>>, vector<1x4x64xf32>
    %382 = vector.shape_cast %381 : vector<1x4x64xf32> to vector<4x64xf32>
    %383 = vector.shape_cast %380 : vector<4x64xf32> to vector<1x4x64xf32>
    tpu.vector_store %arg14[%c0_108, %c0_109, %c0_110], %383 {strides = array<i32>} : memref<1x4x64xf32, #tpu.memory_space<vmem>>, vector<1x4x64xf32>,
    return
  }
  func.func @transform_0(%arg0: i32) -> (i32, i32, i32) {
    %c0_i32 = arith.constant 0 : i32
    %c0_i32_0 = arith.constant 0 : i32
    %c0_i32_1 = arith.constant 0 : i32
    return %arg0, %c0_i32, %c0_i32_0 : i32, i32, i32
  }
  func.func @transform_1(%arg0: i32) -> (i32, i32, i32) {
    %c0_i32 = arith.constant 0 : i32
    %c0_i32_0 = arith.constant 0 : i32
    %c0_i32_1 = arith.constant 0 : i32
    return %arg0, %c0_i32, %c0_i32_0 : i32, i32, i32
  }
  func.func @transform_2(%arg0: i32) -> (i32, i32, i32) {
    %c0_i32 = arith.constant 0 : i32
    %c0_i32_0 = arith.constant 0 : i32
    %c0_i32_1 = arith.constant 0 : i32
    return %arg0, %c0_i32, %c0_i32_0 : i32, i32, i32
  }
  func.func @transform_3(%arg0: i32) -> (i32, i32) {
    %c0_i32 = arith.constant 0 : i32
    %c0_i32_0 = arith.constant 0 : i32
    %c0_i32_1 = arith.constant 0 : i32
    return %c0_i32, %c0_i32_0 : i32, i32
  }
  func.func @transform_4(%arg0: i32) -> (i32, i32, i32) {
    %c0_i32 = arith.constant 0 : i32
    %c0_i32_0 = arith.constant 0 : i32
    %c0_i32_1 = arith.constant 0 : i32
    %c0_i32_2 = arith.constant 0 : i32
    return %c0_i32, %c0_i32_0, %c0_i32_1 : i32, i32, i32
  }
  func.func @transform_5(%arg0: i32) -> (i32, i32, i32) {
    %c0_i32 = arith.constant 0 : i32
    %c0_i32_0 = arith.constant 0 : i32
    %c0_i32_1 = arith.constant 0 : i32
    %c0_i32_2 = arith.constant 0 : i32
    return %c0_i32, %c0_i32_0, %c0_i32_1 : i32, i32, i32
  }
  func.func @transform_6(%arg0: i32) -> (i32, i32) {
    %c0_i32 = arith.constant 0 : i32
    %c0_i32_0 = arith.constant 0 : i32
    %c0_i32_1 = arith.constant 0 : i32
    return %c0_i32, %c0_i32_0 : i32, i32
  }
  func.func @transform_7(%arg0: i32) -> (i32, i32) {
    %c0_i32 = arith.constant 0 : i32
    %c0_i32_0 = arith.constant 0 : i32
    %c0_i32_1 = arith.constant 0 : i32
    return %c0_i32, %c0_i32_0 : i32, i32
  }
  func.func @transform_8(%arg0: i32) -> (i32, i32) {
    %c0_i32 = arith.constant 0 : i32
    %c0_i32_0 = arith.constant 0 : i32
    %c0_i32_1 = arith.constant 0 : i32
    return %c0_i32, %c0_i32_0 : i32, i32
  }
  func.func @transform_9(%arg0: i32) -> (i32, i32) {
    %c0_i32 = arith.constant 0 : i32
    %c0_i32_0 = arith.constant 0 : i32
    %c0_i32_1 = arith.constant 0 : i32
    return %c0_i32, %c0_i32_0 : i32, i32
  }
  func.func @transform_10(%arg0: i32) -> (i32, i32) {
    %c0_i32 = arith.constant 0 : i32
    %c0_i32_0 = arith.constant 0 : i32
    %c0_i32_1 = arith.constant 0 : i32
    return %c0_i32, %c0_i32_0 : i32, i32
  }
  func.func @transform_11(%arg0: i32) -> (i32, i32) {
    %c0_i32 = arith.constant 0 : i32
    %c0_i32_0 = arith.constant 0 : i32
    %c0_i32_1 = arith.constant 0 : i32
    return %c0_i32, %c0_i32_0 : i32, i32
  }
  func.func @transform_12(%arg0: i32) -> (i32, i32) {
    %c0_i32 = arith.constant 0 : i32
    %c0_i32_0 = arith.constant 0 : i32
    %c0_i32_1 = arith.constant 0 : i32
    return %c0_i32, %c0_i32_0 : i32, i32
  }
  func.func @transform_13(%arg0: i32) -> (i32, i32, i32) {
    %c0_i32 = arith.constant 0 : i32
    %c0_i32_0 = arith.constant 0 : i32
    %c0_i32_1 = arith.constant 0 : i32
    return %arg0, %c0_i32, %c0_i32_0 : i32, i32, i32
  }
}

</mosaic_0001>

<llo_original>
// kernel: pc_transformer_proj_forward.7
$region0: #{pc_transformer_proj_forward.7}
  #allocation0 [shape = 'u32[]', space=smem, size = 0x4, offset = 0x4, fixed_abs, tag = 'smem constant byte address 0x4 - core index']
  #allocation1 [shape = 'u32[72,128]{1,0:T(1,128)}', space=vmem, size = 0x9000, scoped, tag = 'internal scratch']
  %s0 = inlined_call_operand.vmem [shape: f32[32,16,256], index: 0, kind: input, shape index: {}]
  %s1 = inlined_call_operand.vmem [shape: f32[32,1], index: 1, kind: input, shape index: {}]
  %s2 = inlined_call_operand.vmem [shape: f32[32,256], index: 2, kind: output, shape index: {}]
  %s3 = sld [smem:[#allocation0]]
  $region41: #{pc_transformer_proj_forward.7} parent=0
    _
  %s5 = ssub.s32 1, %s3
  %s6 = scalar_select 0, %s5, %s3
  loop: start=0, step=1, limit=6
  $region2: #{pc_transformer_proj_forward.7} parent=0 // loop_pre_header
    _
  $region3: #{pc_transformer_proj_forward.7} parent=0 // loop_header
    %s8 = sphi 0, %s12
    %p9 = scmp.ge.s32.totalorder %s8, 6
    %s18 = sphi 0, %s20
    %s21 = sphi 0, %s18
    %s22 = sphi 0, %s21
    %s38 = sphi 0, %s22
    %s44 = sphi 0, %s46
    %s47 = sphi 0, %s44
    %s48 = sphi 0, %s47
    %s64 = sphi 0, %s48
    %s70 = sphi 0, %s72
    %s73 = sphi 0, %s70
    %s74 = sphi 0, %s73
    %s90 = sphi 0, %s74
  $region4: #{pc_transformer_proj_forward.7} parent=0 // loop_header_branch
    %11 = sbr.rel (%p9) target = $region8
  $region5: #{pc_transformer_proj_forward.7} parent=0 // loop_body
    %s13 = ssub.s32 %s8, 1
    %s14 = ssub.s32 %s8, 2
    %s15 = sadd.s32 %s8, 1
    %s16 = ssub.s32 %s8, %s15
    %p17 = scmp.eq.s32.totalorder %s16, 0
    %s19 = sadd.s32 %s18, 1
    %s20 = scalar_select %p17, %s18, %s19
    %p23 = pneg %p17
    %p24 = scmp.eq.s32.totalorder %s8, 3
    %p25 = por %p23, %p24
    %p26 = scmp.ne.s32.totalorder %s18, %s21
    %p27 = scmp.eq.s32.totalorder %s8, 0
    %p28 = por %p26, %p27
    %p29 = scmp.ne.s32.totalorder %s18, %s21
    %p30 = scmp.eq.s32.totalorder %s13, 3
    %p31 = por %p29, %p30
    %p32 = scmp.ne.s32.totalorder %s21, %s22
    %p33 = scmp.eq.s32.totalorder %s13, 0
    %p34 = por %p32, %p33
    %p35 = scmp.ne.s32.totalorder %s21, %s22
    %p36 = scmp.eq.s32.totalorder %s14, 3
    %p37 = por %p35, %p36
    %p39 = scmp.ne.s32.totalorder %s22, %s38
    %p40 = scmp.eq.s32.totalorder %s14, 0
    %p41 = por %p39, %p40
    %s42 = ssub.s32 %s8, %s15
    %p43 = scmp.eq.s32.totalorder %s42, 0
    %s45 = sadd.s32 %s44, 1
    %s46 = scalar_select %p43, %s44, %s45
    %p49 = pneg %p43
    %p50 = scmp.eq.s32.totalorder %s8, 3
    %p51 = por %p49, %p50
    %p52 = scmp.ne.s32.totalorder %s44, %s47
    %p53 = scmp.eq.s32.totalorder %s8, 0
    %p54 = por %p52, %p53
    %p55 = scmp.ne.s32.totalorder %s44, %s47
    %p56 = scmp.eq.s32.totalorder %s13, 3
    %p57 = por %p55, %p56
    %p58 = scmp.ne.s32.totalorder %s47, %s48
    %p59 = scmp.eq.s32.totalorder %s13, 0
    %p60 = por %p58, %p59
    %p61 = scmp.ne.s32.totalorder %s47, %s48
    %p62 = scmp.eq.s32.totalorder %s14, 3
    %p63 = por %p61, %p62
    %p65 = scmp.ne.s32.totalorder %s48, %s64
    %p66 = scmp.eq.s32.totalorder %s14, 0
    %p67 = por %p65, %p66
    %s68 = ssub.s32 %s8, %s15
    %p69 = scmp.eq.s32.totalorder %s68, 0
    %s71 = sadd.s32 %s70, 1
    %s72 = scalar_select %p69, %s70, %s71
    %p75 = pneg %p69
    %p76 = scmp.eq.s32.totalorder %s8, 3
    %p77 = por %p75, %p76
    %p78 = scmp.ne.s32.totalorder %s70, %s73
    %p79 = scmp.eq.s32.totalorder %s8, 0
    %p80 = por %p78, %p79
    %p81 = scmp.ne.s32.totalorder %s70, %s73
    %p82 = scmp.eq.s32.totalorder %s13, 3
    %p83 = por %p81, %p82
    %p84 = scmp.ne.s32.totalorder %s73, %s74
    %p85 = scmp.eq.s32.totalorder %s13, 0
    %p86 = por %p84, %p85
    %p87 = scmp.ne.s32.totalorder %s73, %s74
    %p88 = scmp.eq.s32.totalorder %s14, 3
    %p89 = por %p87, %p88
    %p91 = scmp.ne.s32.totalorder %s74, %s90
    %p92 = scmp.eq.s32.totalorder %s14, 0
    %p93 = por %p91, %p92
    %p94 = scmp.le.s32.totalorder 1, %s8
    %p95 = scmp.lt.s32.totalorder %s8, 5
    %p96 = pnand %p94, %p95
    %p97 = pneg %p96
    // Predicated region
    $region9: #{pc_transformer_proj_forward.7} parent=5 // pred_check
      _
    $region10: #{pc_transformer_proj_forward.7} parent=5 // pred_check_branch
      %99 = sbr.rel (%p96) target = $region12
    $region11: #{pc_transformer_proj_forward.7} parent=5 // pred_region
      %s100 = ssub.s32 %s8, 1
    $region12: #{pc_transformer_proj_forward.7} parent=5 // pred_fallthru
      _
    %p101 = scmp.lt.s32.totalorder %s8, 4
    // Predicated region
    $region13: #{pc_transformer_proj_forward.7} parent=5 // pred_check
      %p102 = pneg %p101
    $region14: #{pc_transformer_proj_forward.7} parent=5 // pred_check_branch
      %104 = sbr.rel (%p102) target = $region16
    $region15: #{pc_transformer_proj_forward.7} parent=5 // pred_region
      // Predicated region
      $region17: #{pc_transformer_proj_forward.7} parent=15 // pred_check
        %p105 = pneg %p28
      $region18: #{pc_transformer_proj_forward.7} parent=15 // pred_check_branch
        %107 = sbr.rel (%p105) target = $region20
      $region19: #{pc_transformer_proj_forward.7} parent=15 // pred_region
        %s108 = smul.u32 8, %s8
        %p109 = scmp.lt.s32.totalorder %s108, 31
        %s110 = scalar_select %p109, %s108, 31
        %s111 = smul.addr %s110, 4
        %s112 = smul.addr %s111, 8
        %s113 = scalar_lea.vmem %s0, %s112
        %s114 = smul.u32 8, %s8
      $region20: #{pc_transformer_proj_forward.7} parent=15 // pred_fallthru
        _
      // Predicated region
      $region21: #{pc_transformer_proj_forward.7} parent=15 // pred_check
        %p115 = pneg %p54
      $region22: #{pc_transformer_proj_forward.7} parent=15 // pred_check_branch
        %117 = sbr.rel (%p115) target = $region24
      $region23: #{pc_transformer_proj_forward.7} parent=15 // pred_region
        %p118 = scmp.lt.s32.totalorder %s8, 3
        %s119 = scalar_select %p118, %s8, 3
        %s120 = smul.addr %s119, 8
        %s121 = scalar_lea.vmem %s1, %s120
      $region24: #{pc_transformer_proj_forward.7} parent=15 // pred_fallthru
        _
    $region16: #{pc_transformer_proj_forward.7} parent=5 // pred_fallthru
      _
    %p122 = scmp.le.s32.totalorder 1, %s8
    %p123 = scmp.lt.s32.totalorder %s8, 5
    %p124 = pnand %p122, %p123
    %p125 = pneg %p124
    // Predicated region
    $region25: #{pc_transformer_proj_forward.7} parent=5 // pred_check
      _
    $region26: #{pc_transformer_proj_forward.7} parent=5 // pred_check_branch
      %127 = sbr.rel (%p124) target = $region28
    $region27: #{pc_transformer_proj_forward.7} parent=5 // pred_region
      %s128 = ssub.s32 %s8, 1
      %s129 = smul.u32 8, %s13
      %p130 = scmp.lt.s32.totalorder %s129, 31
      %s131 = scalar_select %p130, %s129, 31
      %s132 = smul.addr %s131, 4
      %s133 = smul.addr %s132, 8
      %s134 = scalar_lea.vmem %s0, %s133
      %p135 = pneg %p34
      %p136 = pneg %p31
      %p137 = scmp.lt.s32.totalorder %s13, 3
      %s138 = scalar_select %p137, %s13, 3
      %s139 = smul.addr %s138, 8
      %s140 = scalar_lea.vmem %s1, %s139
      %p141 = pneg %p60
      %p142 = pneg %p57
      %p143 = pneg %p86
      %p144 = pneg %p83
      %p145 = scmp.lt.s32.totalorder %s13, 3
      %s146 = scalar_select %p145, %s13, 3
      %s147 = smul.addr %s146, 2
      %s148 = smul.addr %s147, 8
      %s149 = scalar_lea.vmem %s2, %s148
      %s150 = smul.u32 8, %s13
      %p151 = scmp.lt.s32.totalorder %s150, 31
      %s152 = scalar_select %p151, %s150, 31
      %s153 = smul.addr %s152, 4
      %s154 = smul.addr %s153, 8
      %s155 = scalar_lea.vmem %s0, %s154
      %s156 = smul.u32 8, %s13
      %p157 = scmp.lt.s32.totalorder %s13, 3
      %s158 = scalar_select %p157, %s13, 3
      %s159 = smul.addr %s158, 8
      %s160 = scalar_lea.vmem %s1, %s159
      %p161 = scmp.lt.s32.totalorder %s13, 3
      %s162 = scalar_select %p161, %s13, 3
      %s163 = smul.addr %s162, 2
      %s164 = smul.addr %s163, 8
      %s165 = scalar_lea.vmem %s2, %s164
      %v166 = vld [vmem:[%s155] sm:$0xff]
      %v167 = vld [vmem:[%s155 + $0x8] sm:$0xff]
      %v168 = vld [vmem:[%s155 + $0x10] sm:$0xff]
      %v169 = vld [vmem:[%s155 + $0x18] sm:$0xff]
      %v170 = vld [vmem:[%s155 + $0x20] sm:$0xff]
      %v171 = vld [vmem:[%s155 + $0x28] sm:$0xff]
      %v172 = vld [vmem:[%s155 + $0x30] sm:$0xff]
      %v173 = vld [vmem:[%s155 + $0x38] sm:$0xff]
      %v174 = vld [vmem:[%s155 + $0x40] sm:$0xff]
      %v175 = vld [vmem:[%s155 + $0x48] sm:$0xff]
      %v176 = vld [vmem:[%s155 + $0x50] sm:$0xff]
      %v177 = vld [vmem:[%s155 + $0x58] sm:$0xff]
      %v178 = vld [vmem:[%s155 + $0x60] sm:$0xff]
      %v179 = vld [vmem:[%s155 + $0x68] sm:$0xff]
      %v180 = vld [vmem:[%s155 + $0x70] sm:$0xff]
      %v181 = vld [vmem:[%s155 + $0x78] sm:$0xff]
      %v182 = vld [vmem:[%s155 + $0x80] sm:$0xff]
      %v183 = vld [vmem:[%s155 + $0x88] sm:$0xff]
      %v184 = vld [vmem:[%s155 + $0x90] sm:$0xff]
      %v185 = vld [vmem:[%s155 + $0x98] sm:$0xff]
      %v186 = vld [vmem:[%s155 + $0xa0] sm:$0xff]
      %v187 = vld [vmem:[%s155 + $0xa8] sm:$0xff]
      %v188 = vld [vmem:[%s155 + $0xb0] sm:$0xff]
      %v189 = vld [vmem:[%s155 + $0xb8] sm:$0xff]
      %v190 = vld [vmem:[%s155 + $0xc0] sm:$0xff]
      %v191 = vld [vmem:[%s155 + $0xc8] sm:$0xff]
      %v192 = vld [vmem:[%s155 + $0xd0] sm:$0xff]
      %v193 = vld [vmem:[%s155 + $0xd8] sm:$0xff]
      %v194 = vld [vmem:[%s155 + $0xe0] sm:$0xff]
      %v195 = vld [vmem:[%s155 + $0xe8] sm:$0xff]
      %v196 = vld [vmem:[%s155 + $0xf0] sm:$0xff]
      %v197 = vld [vmem:[%s155 + $0xf8] sm:$0xff]
      %v198 = vmax.f32 %v166, %v168
      %v199 = vrot.slane %v198, 4
      %v200 = vmax.f32 %v198, %v199
      %v201 = vrot.slane %v200, 2
      %v202 = vmax.f32 %v200, %v201
      %v203 = vrot.slane %v202, 1
      %v204 = vmax.f32 %v202, %v203
      %v205 = vmax.f32 %v167, %v169
      %v206 = vrot.slane %v205, 4
      %v207 = vmax.f32 %v205, %v206
      %v208 = vrot.slane %v207, 2
      %v209 = vmax.f32 %v207, %v208
      %v210 = vrot.slane %v209, 1
      %v211 = vmax.f32 %v209, %v210
      %v212 = vmax.f32 %v170, %v172
      %v213 = vrot.slane %v212, 4
      %v214 = vmax.f32 %v212, %v213
      %v215 = vrot.slane %v214, 2
      %v216 = vmax.f32 %v214, %v215
      %v217 = vrot.slane %v216, 1
      %v218 = vmax.f32 %v216, %v217
      %v219 = vmax.f32 %v171, %v173
      %v220 = vrot.slane %v219, 4
      %v221 = vmax.f32 %v219, %v220
      %v222 = vrot.slane %v221, 2
      %v223 = vmax.f32 %v221, %v222
      %v224 = vrot.slane %v223, 1
      %v225 = vmax.f32 %v223, %v224
      %v226 = vmax.f32 %v174, %v176
      %v227 = vrot.slane %v226, 4
      %v228 = vmax.f32 %v226, %v227
      %v229 = vrot.slane %v228, 2
      %v230 = vmax.f32 %v228, %v229
      %v231 = vrot.slane %v230, 1
      %v232 = vmax.f32 %v230, %v231
      %v233 = vmax.f32 %v175, %v177
      %v234 = vrot.slane %v233, 4
      %v235 = vmax.f32 %v233, %v234
      %v236 = vrot.slane %v235, 2
      %v237 = vmax.f32 %v235, %v236
      %v238 = vrot.slane %v237, 1
      %v239 = vmax.f32 %v237, %v238
      %v240 = vmax.f32 %v178, %v180
      %v241 = vrot.slane %v240, 4
      %v242 = vmax.f32 %v240, %v241
      %v243 = vrot.slane %v242, 2
      %v244 = vmax.f32 %v242, %v243
      %v245 = vrot.slane %v244, 1
      %v246 = vmax.f32 %v244, %v245
      %v247 = vmax.f32 %v179, %v181
      %v248 = vrot.slane %v247, 4
      %v249 = vmax.f32 %v247, %v248
      %v250 = vrot.slane %v249, 2
      %v251 = vmax.f32 %v249, %v250
      %v252 = vrot.slane %v251, 1
      %v253 = vmax.f32 %v251, %v252
      %v254 = vmax.f32 %v182, %v184
      %v255 = vrot.slane %v254, 4
      %v256 = vmax.f32 %v254, %v255
      %v257 = vrot.slane %v256, 2
      %v258 = vmax.f32 %v256, %v257
      %v259 = vrot.slane %v258, 1
      %v260 = vmax.f32 %v258, %v259
      %v261 = vmax.f32 %v183, %v185
      %v262 = vrot.slane %v261, 4
      %v263 = vmax.f32 %v261, %v262
      %v264 = vrot.slane %v263, 2
      %v265 = vmax.f32 %v263, %v264
      %v266 = vrot.slane %v265, 1
      %v267 = vmax.f32 %v265, %v266
      %v268 = vmax.f32 %v186, %v188
      %v269 = vrot.slane %v268, 4
      %v270 = vmax.f32 %v268, %v269
      %v271 = vrot.slane %v270, 2
      %v272 = vmax.f32 %v270, %v271
      %v273 = vrot.slane %v272, 1
      %v274 = vmax.f32 %v272, %v273
      %v275 = vmax.f32 %v187, %v189
      %v276 = vrot.slane %v275, 4
      %v277 = vmax.f32 %v275, %v276
      %v278 = vrot.slane %v277, 2
      %v279 = vmax.f32 %v277, %v278
      %v280 = vrot.slane %v279, 1
      %v281 = vmax.f32 %v279, %v280
      %v282 = vmax.f32 %v190, %v192
      %v283 = vrot.slane %v282, 4
      %v284 = vmax.f32 %v282, %v283
      %v285 = vrot.slane %v284, 2
      %v286 = vmax.f32 %v284, %v285
      %v287 = vrot.slane %v286, 1
      %v288 = vmax.f32 %v286, %v287
      %v289 = vmax.f32 %v191, %v193
      %v290 = vrot.slane %v289, 4
      %v291 = vmax.f32 %v289, %v290
      %v292 = vrot.slane %v291, 2
      %v293 = vmax.f32 %v291, %v292
      %v294 = vrot.slane %v293, 1
      %v295 = vmax.f32 %v293, %v294
      %v296 = vmax.f32 %v194, %v196
      %v297 = vrot.slane %v296, 4
      %v298 = vmax.f32 %v296, %v297
      %v299 = vrot.slane %v298, 2
      %v300 = vmax.f32 %v298, %v299
      %v301 = vrot.slane %v300, 1
      %v302 = vmax.f32 %v300, %v301
      %v303 = vmax.f32 %v195, %v197
      %v304 = vrot.slane %v303, 4
      %v305 = vmax.f32 %v303, %v304
      %v306 = vrot.slane %v305, 2
      %v307 = vmax.f32 %v305, %v306
      %v308 = vrot.slane %v307, 1
      %v309 = vmax.f32 %v307, %v308
      %v310 = vld [vmem:[%s160] sm:$0xff]
      %312 = vset.pattern.permute.xlu0 0
      %313 = vperm.xlu0 %312, %v310
      %v314 = vpop.permute.xlu0 %313
      %v315 = vrot.slane %v314, 1
      %v316 = vrot.slane %v314, 2
      %v317 = vrot.slane %v314, 3
      %v318 = vrot.slane %v314, 4
      %v319 = vrot.slane %v314, 5
      %v320 = vrot.slane %v314, 6
      %v321 = vrot.slane %v314, 7
      %v330 = vmul.f32 %v204, %v314
      %v331 = vmul.f32 %v211, %v314
      %v332 = vmul.f32 %v218, %v315
      %v333 = vmul.f32 %v225, %v315
      %v334 = vmul.f32 %v232, %v316
      %v335 = vmul.f32 %v239, %v316
      %v336 = vmul.f32 %v246, %v317
      %v337 = vmul.f32 %v253, %v317
      %v338 = vmul.f32 %v260, %v318
      %v339 = vmul.f32 %v267, %v318
      %v340 = vmul.f32 %v274, %v319
      %v341 = vmul.f32 %v281, %v319
      %v342 = vmul.f32 %v288, %v320
      %v343 = vmul.f32 %v295, %v320
      %v344 = vmul.f32 %v302, %v321
      %v345 = vmul.f32 %v309, %v321
      %v362 = vrot.slane %v332, 7
      %vm363 = vcmask 1041409
      %v364 = vsel %vm363, %v362, %v330
      %v365 = vrot.slane %v334, 6
      %vm366 = vcmask 1042434
      %v367 = vsel %vm366, %v365, %v364
      %v368 = vrot.slane %v336, 5
      %vm369 = vcmask 1043459
      %v370 = vsel %vm369, %v368, %v367
      %v371 = vrot.slane %v338, 4
      %vm372 = vcmask 1044484
      %v373 = vsel %vm372, %v371, %v370
      %v374 = vrot.slane %v340, 3
      %vm375 = vcmask 1045509
      %v376 = vsel %vm375, %v374, %v373
      %v377 = vrot.slane %v342, 2
      %vm378 = vcmask 1046534
      %v379 = vsel %vm378, %v377, %v376
      %v380 = vrot.slane %v344, 1
      %vm381 = vcmask 1047559
      %v382 = vsel %vm381, %v380, %v379
      %v383 = vrot.slane %v333, 7
      %v384 = vsel %vm363, %v383, %v331
      %v385 = vrot.slane %v335, 6
      %v386 = vsel %vm366, %v385, %v384
      %v387 = vrot.slane %v337, 5
      %v388 = vsel %vm369, %v387, %v386
      %v389 = vrot.slane %v339, 4
      %v390 = vsel %vm372, %v389, %v388
      %v391 = vrot.slane %v341, 3
      %v392 = vsel %vm375, %v391, %v390
      %v393 = vrot.slane %v343, 2
      %v394 = vsel %vm378, %v393, %v392
      %v395 = vrot.slane %v345, 1
      %v396 = vsel %vm381, %v395, %v394
      %399 = vst [vmem:[%s165] sm:$0xff] %v382
      %400 = vst [vmem:[%s165 + $0x8] sm:$0xff] %v396
      %p401 = scmp.lt.s32.totalorder %s13, 3
      %s402 = scalar_select %p401, %s13, 3
      %s403 = smul.addr %s402, 2
      %s404 = smul.addr %s403, 8
      %s405 = scalar_lea.vmem %s2, %s404
      // Predicated region
      $region29: #{pc_transformer_proj_forward.7} parent=27 // pred_check
        %p406 = pneg %p83
      $region30: #{pc_transformer_proj_forward.7} parent=27 // pred_check_branch
        %408 = sbr.rel (%p406) target = $region32
      $region31: #{pc_transformer_proj_forward.7} parent=27 // pred_region
        _
      $region32: #{pc_transformer_proj_forward.7} parent=27 // pred_fallthru
        _
    $region28: #{pc_transformer_proj_forward.7} parent=5 // pred_fallthru
      _
    %p409 = scmp.le.s32.totalorder 2, %s8
    // Predicated region
    $region33: #{pc_transformer_proj_forward.7} parent=5 // pred_check
      %p410 = pneg %p409
    $region34: #{pc_transformer_proj_forward.7} parent=5 // pred_check_branch
      %412 = sbr.rel (%p410) target = $region36
    $region35: #{pc_transformer_proj_forward.7} parent=5 // pred_region
      %s413 = ssub.s32 %s8, 2
      // Predicated region
      $region37: #{pc_transformer_proj_forward.7} parent=35 // pred_check
        %p414 = pneg %p89
      $region38: #{pc_transformer_proj_forward.7} parent=35 // pred_check_branch
        %416 = sbr.rel (%p414) target = $region40
      $region39: #{pc_transformer_proj_forward.7} parent=35 // pred_region
        %p417 = scmp.lt.s32.totalorder %s14, 3
        %s418 = scalar_select %p417, %s14, 3
        %s419 = smul.addr %s418, 2
        %s420 = smul.addr %s419, 8
        %s421 = scalar_lea.vmem %s2, %s420
      $region40: #{pc_transformer_proj_forward.7} parent=35 // pred_fallthru
        _
    $region36: #{pc_transformer_proj_forward.7} parent=5 // pred_fallthru
      _
  $region6: #{pc_transformer_proj_forward.7} parent=0 // loop_footer
    %s12 = sadd.s32 1, %s8
  $region7: #{pc_transformer_proj_forward.7} parent=0 // loop_footer_branch
    %7 = sbr.rel target = $region3
  $region8: #{pc_transformer_proj_forward.7} parent=0 // loop_exit
    _

// kernel: pc_transformer_proj_forward.6
$region0: #{pc_transformer_proj_forward.6}
  #allocation0 [shape = 'u32[]', space=smem, size = 0x4, offset = 0x4, fixed_abs, tag = 'smem constant byte address 0x4 - core index']
  #allocation1 [shape = 'u32[72,128]{1,0:T(1,128)}', space=vmem, size = 0x9000, scoped, tag = 'internal scratch']
  %s0 = inlined_call_operand.vmem [shape: f32[512,3], index: 0, kind: input, shape index: {}]
  %s1 = inlined_call_operand.vmem [shape: f32[3,64], index: 1, kind: input, shape index: {}]
  %s2 = inlined_call_operand.hbm [shape: f32[1,64], index: 2, kind: input, shape index: {}]
  %s3 = inlined_call_operand.hbm [shape: f32[64,128], index: 3, kind: input, shape index: {}]
  %s4 = inlined_call_operand.hbm [shape: f32[1,128], index: 4, kind: input, shape index: {}]
  %s5 = inlined_call_operand.vmem [shape: f32[128,256], index: 5, kind: input, shape index: {}]
  %s6 = inlined_call_operand.vmem [shape: f32[1,256], index: 6, kind: input, shape index: {}]
  %s7 = inlined_call_operand.vmem [shape: f32[512,256], index: 7, kind: output, shape index: {}]
  %s8 = sld [smem:[#allocation0]]
  $region73: #{pc_transformer_proj_forward.6} parent=0
    _
  %s10 = ssub.s32 1, %s8
  %s11 = scalar_select 0, %s10, %s8
  $region1: #{pc_transformer_proj_forward.6} parent=0
    #allocation2 [shape = 'u8[512]{0}', space=vmem, size = 0x400, scoped, tag = 'input window, operand 2, single buffered']
    #allocation3 [shape = 's32[2]{0}', space=sflag, size = 0x8, scoped, tag = 'scoped memory for pc_transformer_proj_forward.6']
    #allocation4 [shape = 'u8[32768]{0}', space=vmem, size = 0x8000, scoped, tag = 'input window, operand 3, single buffered']
    #allocation5 [shape = 's32[1]{0}', space=sflag, size = 0x4, scoped, tag = 'scoped memory for pc_transformer_proj_forward.6']
    #allocation6 [shape = 'u8[512]{0}', space=vmem, size = 0x400, scoped, tag = 'input window, operand 4, single buffered']
    %12 = vsyncpa [#allocation3], 0
    %13 = vsyncpa [#allocation5], 0
    loop: start=0, step=1, limit=6
    $region2: #{pc_transformer_proj_forward.6} parent=1 // loop_pre_header
      _
    $region3: #{pc_transformer_proj_forward.6} parent=1 // loop_header
      %s15 = sphi 0, %s19
      %p16 = scmp.ge.s32.totalorder %s15, 6
      %s25 = sphi 0, %s27
      %s28 = sphi 0, %s25
      %s29 = sphi 0, %s28
      %s45 = sphi 0, %s29
      %s49 = sphi 0, %s49
      %s51 = sphi 0, %s49
      %s52 = sphi 0, %s51
      %s66 = sphi 0, %s52
      %s70 = sphi 0, %s70
      %s72 = sphi 0, %s70
      %s73 = sphi 0, %s72
      %s87 = sphi 0, %s73
      %s91 = sphi 0, %s91
      %s93 = sphi 0, %s91
      %s94 = sphi 0, %s93
      %s108 = sphi 0, %s94
      %s112 = sphi 0, %s112
      %s114 = sphi 0, %s112
      %s115 = sphi 0, %s114
      %s129 = sphi 0, %s115
      %s133 = sphi 0, %s133
      %s135 = sphi 0, %s133
      %s136 = sphi 0, %s135
      %s150 = sphi 0, %s136
      %s154 = sphi 0, %s154
      %s156 = sphi 0, %s154
      %s157 = sphi 0, %s156
      %s171 = sphi 0, %s157
      %s177 = sphi 0, %s179
      %s180 = sphi 0, %s177
      %s181 = sphi 0, %s180
      %s197 = sphi 0, %s181
    $region4: #{pc_transformer_proj_forward.6} parent=1 // loop_header_branch
      %18 = sbr.rel (%p16) target = $region8
    $region5: #{pc_transformer_proj_forward.6} parent=1 // loop_body
      %s20 = ssub.s32 %s15, 1
      %s21 = ssub.s32 %s15, 2
      %s22 = sadd.s32 %s15, 1
      %s23 = ssub.s32 %s15, %s22
      %p24 = scmp.eq.s32.totalorder %s23, 0
      %s26 = sadd.s32 %s25, 1
      %s27 = scalar_select %p24, %s25, %s26
      %p30 = pneg %p24
      %p31 = scmp.eq.s32.totalorder %s15, 3
      %p32 = por %p30, %p31
      %p33 = scmp.ne.s32.totalorder %s25, %s28
      %p34 = scmp.eq.s32.totalorder %s15, 0
      %p35 = por %p33, %p34
      %p36 = scmp.ne.s32.totalorder %s25, %s28
      %p37 = scmp.eq.s32.totalorder %s20, 3
      %p38 = por %p36, %p37
      %p39 = scmp.ne.s32.totalorder %s28, %s29
      %p40 = scmp.eq.s32.totalorder %s20, 0
      %p41 = por %p39, %p40
      %p42 = scmp.ne.s32.totalorder %s28, %s29
      %p43 = scmp.eq.s32.totalorder %s21, 3
      %p44 = por %p42, %p43
      %p46 = scmp.ne.s32.totalorder %s29, %s45
      %p47 = scmp.eq.s32.totalorder %s21, 0
      %p48 = por %p46, %p47
      %s50 = sadd.s32 %s49, 1
      %p53 = scmp.eq.s32.totalorder %s15, 3
      %p54 = scmp.ne.s32.totalorder %s49, %s51
      %p55 = scmp.eq.s32.totalorder %s15, 0
      %p56 = por %p54, %p55
      %p57 = scmp.ne.s32.totalorder %s49, %s51
      %p58 = scmp.eq.s32.totalorder %s20, 3
      %p59 = por %p57, %p58
      %p60 = scmp.ne.s32.totalorder %s51, %s52
      %p61 = scmp.eq.s32.totalorder %s20, 0
      %p62 = por %p60, %p61
      %p63 = scmp.ne.s32.totalorder %s51, %s52
      %p64 = scmp.eq.s32.totalorder %s21, 3
      %p65 = por %p63, %p64
      %p67 = scmp.ne.s32.totalorder %s52, %s66
      %p68 = scmp.eq.s32.totalorder %s21, 0
      %p69 = por %p67, %p68
      %s71 = sadd.s32 %s70, 1
      %p74 = scmp.eq.s32.totalorder %s15, 3
      %p75 = scmp.ne.s32.totalorder %s70, %s72
      %p76 = scmp.eq.s32.totalorder %s15, 0
      %p77 = por %p75, %p76
      %p78 = scmp.ne.s32.totalorder %s70, %s72
      %p79 = scmp.eq.s32.totalorder %s20, 3
      %p80 = por %p78, %p79
      %p81 = scmp.ne.s32.totalorder %s72, %s73
      %p82 = scmp.eq.s32.totalorder %s20, 0
      %p83 = por %p81, %p82
      %p84 = scmp.ne.s32.totalorder %s72, %s73
      %p85 = scmp.eq.s32.totalorder %s21, 3
      %p86 = por %p84, %p85
      %p88 = scmp.ne.s32.totalorder %s73, %s87
      %p89 = scmp.eq.s32.totalorder %s21, 0
      %p90 = por %p88, %p89
      %s92 = sadd.s32 %s91, 1
      %p95 = scmp.eq.s32.totalorder %s15, 3
      %p96 = scmp.ne.s32.totalorder %s91, %s93
      %p97 = scmp.eq.s32.totalorder %s15, 0
      %p98 = por %p96, %p97
      %p99 = scmp.ne.s32.totalorder %s91, %s93
      %p100 = scmp.eq.s32.totalorder %s20, 3
      %p101 = por %p99, %p100
      %p102 = scmp.ne.s32.totalorder %s93, %s94
      %p103 = scmp.eq.s32.totalorder %s20, 0
      %p104 = por %p102, %p103
      %p105 = scmp.ne.s32.totalorder %s93, %s94
      %p106 = scmp.eq.s32.totalorder %s21, 3
      %p107 = por %p105, %p106
      %p109 = scmp.ne.s32.totalorder %s94, %s108
      %p110 = scmp.eq.s32.totalorder %s21, 0
      %p111 = por %p109, %p110
      %s113 = sadd.s32 %s112, 1
      %p116 = scmp.eq.s32.totalorder %s15, 3
      %p117 = scmp.ne.s32.totalorder %s112, %s114
      %p118 = scmp.eq.s32.totalorder %s15, 0
      %p119 = por %p117, %p118
      %p120 = scmp.ne.s32.totalorder %s112, %s114
      %p121 = scmp.eq.s32.totalorder %s20, 3
      %p122 = por %p120, %p121
      %p123 = scmp.ne.s32.totalorder %s114, %s115
      %p124 = scmp.eq.s32.totalorder %s20, 0
      %p125 = por %p123, %p124
      %p126 = scmp.ne.s32.totalorder %s114, %s115
      %p127 = scmp.eq.s32.totalorder %s21, 3
      %p128 = por %p126, %p127
      %p130 = scmp.ne.s32.totalorder %s115, %s129
      %p131 = scmp.eq.s32.totalorder %s21, 0
      %p132 = por %p130, %p131
      %s134 = sadd.s32 %s133, 1
      %p137 = scmp.eq.s32.totalorder %s15, 3
      %p138 = scmp.ne.s32.totalorder %s133, %s135
      %p139 = scmp.eq.s32.totalorder %s15, 0
      %p140 = por %p138, %p139
      %p141 = scmp.ne.s32.totalorder %s133, %s135
      %p142 = scmp.eq.s32.totalorder %s20, 3
      %p143 = por %p141, %p142
      %p144 = scmp.ne.s32.totalorder %s135, %s136
      %p145 = scmp.eq.s32.totalorder %s20, 0
      %p146 = por %p144, %p145
      %p147 = scmp.ne.s32.totalorder %s135, %s136
      %p148 = scmp.eq.s32.totalorder %s21, 3
      %p149 = por %p147, %p148
      %p151 = scmp.ne.s32.totalorder %s136, %s150
      %p152 = scmp.eq.s32.totalorder %s21, 0
      %p153 = por %p151, %p152
      %s155 = sadd.s32 %s154, 1
      %p158 = scmp.eq.s32.totalorder %s15, 3
      %p159 = scmp.ne.s32.totalorder %s154, %s156
      %p160 = scmp.eq.s32.totalorder %s15, 0
      %p161 = por %p159, %p160
      %p162 = scmp.ne.s32.totalorder %s154, %s156
      %p163 = scmp.eq.s32.totalorder %s20, 3
      %p164 = por %p162, %p163
      %p165 = scmp.ne.s32.totalorder %s156, %s157
      %p166 = scmp.eq.s32.totalorder %s20, 0
      %p167 = por %p165, %p166
      %p168 = scmp.ne.s32.totalorder %s156, %s157
      %p169 = scmp.eq.s32.totalorder %s21, 3
      %p170 = por %p168, %p169
      %p172 = scmp.ne.s32.totalorder %s157, %s171
      %p173 = scmp.eq.s32.totalorder %s21, 0
      %p174 = por %p172, %p173
      %s175 = ssub.s32 %s15, %s22
      %p176 = scmp.eq.s32.totalorder %s175, 0
      %s178 = sadd.s32 %s177, 1
      %s179 = scalar_select %p176, %s177, %s178
      %p182 = pneg %p176
      %p183 = scmp.eq.s32.totalorder %s15, 3
      %p184 = por %p182, %p183
      %p185 = scmp.ne.s32.totalorder %s177, %s180
      %p186 = scmp.eq.s32.totalorder %s15, 0
      %p187 = por %p185, %p186
      %p188 = scmp.ne.s32.totalorder %s177, %s180
      %p189 = scmp.eq.s32.totalorder %s20, 3
      %p190 = por %p188, %p189
      %p191 = scmp.ne.s32.totalorder %s180, %s181
      %p192 = scmp.eq.s32.totalorder %s20, 0
      %p193 = por %p191, %p192
      %p194 = scmp.ne.s32.totalorder %s180, %s181
      %p195 = scmp.eq.s32.totalorder %s21, 3
      %p196 = por %p194, %p195
      %p198 = scmp.ne.s32.totalorder %s181, %s197
      %p199 = scmp.eq.s32.totalorder %s21, 0
      %p200 = por %p198, %p199
      %p201 = scmp.le.s32.totalorder 1, %s15
      %p202 = scmp.lt.s32.totalorder %s15, 5
      %p203 = pnand %p201, %p202
      %p204 = pneg %p203
      // Predicated region
      $region9: #{pc_transformer_proj_forward.6} parent=5 // pred_check
        _
      $region10: #{pc_transformer_proj_forward.6} parent=5 // pred_check_branch
        %206 = sbr.rel (%p203) target = $region12
      $region11: #{pc_transformer_proj_forward.6} parent=5 // pred_region
        %s207 = ssub.s32 %s15, 1
        // Predicated region
        $region13: #{pc_transformer_proj_forward.6} parent=11 // pred_check
          %p208 = pneg %p62
        $region14: #{pc_transformer_proj_forward.6} parent=11 // pred_check_branch
          %210 = sbr.rel (%p208) target = $region16
        $region15: #{pc_transformer_proj_forward.6} parent=11 // pred_region
          _
        $region16: #{pc_transformer_proj_forward.6} parent=11 // pred_fallthru
          _
        // Predicated region
        $region17: #{pc_transformer_proj_forward.6} parent=11 // pred_check
          %p211 = pneg %p83
        $region18: #{pc_transformer_proj_forward.6} parent=11 // pred_check_branch
          %213 = sbr.rel (%p211) target = $region20
        $region19: #{pc_transformer_proj_forward.6} parent=11 // pred_region
          %215 = vsyncadd [#allocation3], 0
          %s217 = sshll.u32 %s2, 4
          %s218 = int_to_ptr.hbm [resolvable:$true] %s217
          %s219 = sshll.u32 [#allocation2], 4
          %s220 = int_to_ptr.vmem [resolvable:$true] %s219
          %222 = dma.hbm_to_vmem [thread:$0]  %s218, 16, %s220, [#allocation3]
        $region20: #{pc_transformer_proj_forward.6} parent=11 // pred_fallthru
          _
        // Predicated region
        $region21: #{pc_transformer_proj_forward.6} parent=11 // pred_check
          %p223 = pneg %p104
        $region22: #{pc_transformer_proj_forward.6} parent=11 // pred_check_branch
          %225 = sbr.rel (%p223) target = $region24
        $region23: #{pc_transformer_proj_forward.6} parent=11 // pred_region
          %227 = vsyncadd [#allocation5], 0
          %s228 = sshll.u32 %s3, 4
          %s229 = int_to_ptr.hbm [resolvable:$true] %s228
          %s230 = sshll.u32 [#allocation4], 4
          %s231 = int_to_ptr.vmem [resolvable:$true] %s230
          %236 = dma.hbm_to_vmem [thread:$0]  %s229, 1024, %s231, [#allocation5], 128, 128, 8
        $region24: #{pc_transformer_proj_forward.6} parent=11 // pred_fallthru
          _
        // Predicated region
        $region25: #{pc_transformer_proj_forward.6} parent=11 // pred_check
          %p237 = pneg %p125
        $region26: #{pc_transformer_proj_forward.6} parent=11 // pred_check_branch
          %239 = sbr.rel (%p237) target = $region28
        $region27: #{pc_transformer_proj_forward.6} parent=11 // pred_region
          %241 = vsyncadd [#allocation5], 0
          %s243 = sshll.u32 %s4, 4
          %s244 = int_to_ptr.hbm [resolvable:$true] %s243
          %s245 = sshll.u32 [#allocation6], 4
          %s246 = int_to_ptr.vmem [resolvable:$true] %s245
          %248 = dma.hbm_to_vmem [thread:$0]  %s244, 16, %s246, [#allocation5]
        $region28: #{pc_transformer_proj_forward.6} parent=11 // pred_fallthru
          _
        // Predicated region
        $region29: #{pc_transformer_proj_forward.6} parent=11 // pred_check
          %p249 = pneg %p146
        $region30: #{pc_transformer_proj_forward.6} parent=11 // pred_check_branch
          %251 = sbr.rel (%p249) target = $region32
        $region31: #{pc_transformer_proj_forward.6} parent=11 // pred_region
          _
        $region32: #{pc_transformer_proj_forward.6} parent=11 // pred_fallthru
          _
        // Predicated region
        $region33: #{pc_transformer_proj_forward.6} parent=11 // pred_check
          %p252 = pneg %p167
        $region34: #{pc_transformer_proj_forward.6} parent=11 // pred_check_branch
          %254 = sbr.rel (%p252) target = $region36
        $region35: #{pc_transformer_proj_forward.6} parent=11 // pred_region
          _
        $region36: #{pc_transformer_proj_forward.6} parent=11 // pred_fallthru
          _
      $region12: #{pc_transformer_proj_forward.6} parent=5 // pred_fallthru
        _
      %p255 = scmp.lt.s32.totalorder %s15, 4
      // Predicated region
      $region37: #{pc_transformer_proj_forward.6} parent=5 // pred_check
        %p256 = pneg %p255
      $region38: #{pc_transformer_proj_forward.6} parent=5 // pred_check_branch
        %258 = sbr.rel (%p256) target = $region40
      $region39: #{pc_transformer_proj_forward.6} parent=5 // pred_region
        // Predicated region
        $region41: #{pc_transformer_proj_forward.6} parent=39 // pred_check
          %p259 = pneg %p35
        $region42: #{pc_transformer_proj_forward.6} parent=39 // pred_check_branch
          %261 = sbr.rel (%p259) target = $region44
        $region43: #{pc_transformer_proj_forward.6} parent=39 // pred_region
          %s262 = smul.u32 16, %s15
          %p263 = scmp.lt.s32.totalorder %s262, 63
          %s264 = scalar_select %p263, %s262, 63
          %s265 = smul.addr %s264, 8
          %s266 = scalar_lea.vmem %s0, %s265
          %s267 = smul.u32 16, %s15
        $region44: #{pc_transformer_proj_forward.6} parent=39 // pred_fallthru
          _
      $region40: #{pc_transformer_proj_forward.6} parent=5 // pred_fallthru
        _
      %p268 = scmp.le.s32.totalorder 1, %s15
      %p269 = scmp.lt.s32.totalorder %s15, 5
      %p270 = pnand %p268, %p269
      %p271 = pneg %p270
      // Predicated region
      $region45: #{pc_transformer_proj_forward.6} parent=5 // pred_check
        _
      $region46: #{pc_transformer_proj_forward.6} parent=5 // pred_check_branch
        %273 = sbr.rel (%p270) target = $region48
      $region47: #{pc_transformer_proj_forward.6} parent=5 // pred_region
        %s274 = ssub.s32 %s15, 1
        // Predicated region
        $region49: #{pc_transformer_proj_forward.6} parent=47 // pred_check
          %p275 = pneg %p83
        $region50: #{pc_transformer_proj_forward.6} parent=47 // pred_check_branch
          %277 = sbr.rel (%p275) target = $region52
        $region51: #{pc_transformer_proj_forward.6} parent=47 // pred_region
          %279 = dma.done [#allocation3], 16
        $region52: #{pc_transformer_proj_forward.6} parent=47 // pred_fallthru
          _
        // Predicated region
        $region53: #{pc_transformer_proj_forward.6} parent=47 // pred_check
          %p280 = pneg %p104
        $region54: #{pc_transformer_proj_forward.6} parent=47 // pred_check_branch
          %282 = sbr.rel (%p280) target = $region56
        $region55: #{pc_transformer_proj_forward.6} parent=47 // pred_region
          %284 = dma.done [#allocation5], 1024
        $region56: #{pc_transformer_proj_forward.6} parent=47 // pred_fallthru
          _
        // Predicated region
        $region57: #{pc_transformer_proj_forward.6} parent=47 // pred_check
          %p285 = pneg %p125
        $region58: #{pc_transformer_proj_forward.6} parent=47 // pred_check_branch
          %287 = sbr.rel (%p285) target = $region60
        $region59: #{pc_transformer_proj_forward.6} parent=47 // pred_region
          %289 = dma.done [#allocation5], 16
        $region60: #{pc_transformer_proj_forward.6} parent=47 // pred_fallthru
          _
        %s290 = smul.u32 16, %s20
        %p291 = scmp.lt.s32.totalorder %s290, 63
        %s292 = scalar_select %p291, %s290, 63
        %s293 = smul.addr %s292, 8
        %s294 = scalar_lea.vmem %s0, %s293
        %p295 = pneg %p41
        %p296 = pneg %p38
        %p297 = pneg %p62
        %p298 = pneg %p59
        %p299 = pneg %p83
        %p300 = pneg %p80
        %p301 = pneg %p104
        %p302 = pneg %p101
        %p303 = pneg %p125
        %p304 = pneg %p122
        %p305 = pneg %p146
        %p306 = pneg %p143
        %p307 = pneg %p167
        %p308 = pneg %p164
        %p309 = pneg %p193
        %p310 = pneg %p190
        %s311 = smul.u32 16, %s20
        %p312 = scmp.lt.s32.totalorder %s311, 63
        %s313 = scalar_select %p312, %s311, 63
        %s314 = smul.addr %s313, 2
        %s315 = smul.addr %s314, 8
        %s316 = scalar_lea.vmem %s7, %s315
        %s317 = smul.u32 16, %s20
        %p318 = scmp.lt.s32.totalorder %s317, 63
        %s319 = scalar_select %p318, %s317, 63
        %s320 = smul.addr %s319, 8
        %s321 = scalar_lea.vmem %s0, %s320
        %s322 = smul.u32 16, %s20
        %s323 = smul.u32 16, %s20
        %p324 = scmp.lt.s32.totalorder %s323, 63
        %s325 = scalar_select %p324, %s323, 63
        %s326 = smul.addr %s325, 2
        %s327 = smul.addr %s326, 8
        %s328 = scalar_lea.vmem %s7, %s327
        %s329 = smul.u32 16, %s20
        %v331 = vld [vmem:[%s321] sm:$0xff]
        %v332 = vld [vmem:[%s321 + $0x8] sm:$0xff]
        %v333 = vld [vmem:[%s321 + $0x10] sm:$0xff]
        %v334 = vld [vmem:[%s321 + $0x18] sm:$0xff]
        %v335 = vld [vmem:[%s321 + $0x20] sm:$0xff]
        %v336 = vld [vmem:[%s321 + $0x28] sm:$0xff]
        %v337 = vld [vmem:[%s321 + $0x30] sm:$0xff]
        %v338 = vld [vmem:[%s321 + $0x38] sm:$0xff]
        %v339 = vld [vmem:[%s321 + $0x40] sm:$0xff]
        %v340 = vld [vmem:[%s321 + $0x48] sm:$0xff]
        %v341 = vld [vmem:[%s321 + $0x50] sm:$0xff]
        %v342 = vld [vmem:[%s321 + $0x58] sm:$0xff]
        %v343 = vld [vmem:[%s321 + $0x60] sm:$0xff]
        %v344 = vld [vmem:[%s321 + $0x68] sm:$0xff]
        %v345 = vld [vmem:[%s321 + $0x70] sm:$0xff]
        %v346 = vld [vmem:[%s321 + $0x78] sm:$0xff]
        %v347 = vpack.c.bf16 %v332, %v331
        %v348 = vpack.c.bf16 %v334, %v333
        %v349 = vpack.c.bf16 %v336, %v335
        %v350 = vpack.c.bf16 %v338, %v337
        %v351 = vpack.c.bf16 %v340, %v339
        %v352 = vpack.c.bf16 %v342, %v341
        %v353 = vpack.c.bf16 %v344, %v343
        %v354 = vpack.c.bf16 %v346, %v345
        %v355 = vld [vmem:[%s1] sm:$0x7]
        %v356 = vpack.c.bf16 %v355, %v355
        %v357 = vld [vmem:[#allocation2] sm:$0x1]
        %v359 = vperm.slane %v357, 0
        %vm361 = vcmask 23552
        %v363 = vsel %vm361, %v347, 0
        %v366 = vsel %vm361, %v348, 0
        %v369 = vsel %vm361, %v349, 0
        %v372 = vsel %vm361, %v350, 0
        %v375 = vsel %vm361, %v351, 0
        %v378 = vsel %vm361, %v352, 0
        %v381 = vsel %vm361, %v353, 0
        %v384 = vsel %vm361, %v354, 0
        %vm386 = vcmask 1040384
        %vm387 = vcmask 1041408
        %v388 = vsel %vm386, 4294967295, 65535
        %v389 = vsel %vm387, %v388, 0
        %v391 = vand.u32 %v356, %v389
        %393 = vmatpush.bf16.msra.mxu0 0
        %394 = vmatpush.bf16.msra.mxu0 0
        %395 = vmatpush.bf16.msra.mxu0 0
        %396 = vmatpush.bf16.msra.mxu0 0
        %397 = vmatpush.bf16.msra.mxu0 0
        %398 = vmatpush.bf16.msra.mxu0 0
        %399 = vmatpush.bf16.msra.mxu0 0
        %400 = vmatpush.bf16.msra.mxu0 %v391
        %401 = vmatmul.bf16.gmra.mxu0 %v363
        %v402 = vpop.f32.mrf.mxu0
        %v403 = vadd.f32 %v359, %v402
        %v404 = vpop.f32.mrf.mxu0
        %v405 = vadd.f32 %v359, %v404
        %406 = vmatmul.bf16.gmra.mxu0 %v366
        %v407 = vpop.f32.mrf.mxu0
        %v408 = vadd.f32 %v359, %v407
        %v409 = vpop.f32.mrf.mxu0
        %v410 = vadd.f32 %v359, %v409
        %411 = vmatmul.bf16.gmra.mxu0 %v369
        %v412 = vpop.f32.mrf.mxu0
        %v413 = vadd.f32 %v359, %v412
        %v414 = vpop.f32.mrf.mxu0
        %v415 = vadd.f32 %v359, %v414
        %416 = vmatmul.bf16.gmra.mxu0 %v372
        %v417 = vpop.f32.mrf.mxu0
        %v418 = vadd.f32 %v359, %v417
        %v419 = vpop.f32.mrf.mxu0
        %v420 = vadd.f32 %v359, %v419
        %421 = vmatmul.bf16.gmra.mxu0 %v375
        %v422 = vpop.f32.mrf.mxu0
        %v423 = vadd.f32 %v359, %v422
        %v424 = vpop.f32.mrf.mxu0
        %v425 = vadd.f32 %v359, %v424
        %426 = vmatmul.bf16.gmra.mxu0 %v378
        %v427 = vpop.f32.mrf.mxu0
        %v428 = vadd.f32 %v359, %v427
        %v429 = vpop.f32.mrf.mxu0
        %v430 = vadd.f32 %v359, %v429
        %431 = vmatmul.bf16.gmra.mxu0 %v381
        %v432 = vpop.f32.mrf.mxu0
        %v433 = vadd.f32 %v359, %v432
        %v434 = vpop.f32.mrf.mxu0
        %v435 = vadd.f32 %v359, %v434
        %436 = vmatmul.bf16.gmra.mxu0 %v384
        %v437 = vpop.f32.mrf.mxu0
        %v438 = vadd.f32 %v359, %v437
        %v439 = vpop.f32.mrf.mxu0
        %v440 = vadd.f32 %v359, %v439
        %441 = vdwg.mxu0
        %v442 = vmax.f32 %v403, 0.0
        %v443 = vmax.f32 %v405, 0.0
        %v444 = vmax.f32 %v408, 0.0
        %v445 = vmax.f32 %v410, 0.0
        %v446 = vmax.f32 %v413, 0.0
        %v447 = vmax.f32 %v415, 0.0
        %v448 = vmax.f32 %v418, 0.0
        %v449 = vmax.f32 %v420, 0.0
        %v450 = vmax.f32 %v423, 0.0
        %v451 = vmax.f32 %v425, 0.0
        %v452 = vmax.f32 %v428, 0.0
        %v453 = vmax.f32 %v430, 0.0
        %v454 = vmax.f32 %v433, 0.0
        %v455 = vmax.f32 %v435, 0.0
        %v456 = vmax.f32 %v438, 0.0
        %v457 = vmax.f32 %v440, 0.0
        %v458 = vpack.c.bf16 %v443, %v442
        %v459 = vpack.c.bf16 %v445, %v444
        %v460 = vpack.c.bf16 %v447, %v446
        %v461 = vpack.c.bf16 %v449, %v448
        %v462 = vpack.c.bf16 %v451, %v450
        %v463 = vpack.c.bf16 %v453, %v452
        %v464 = vpack.c.bf16 %v455, %v454
        %v465 = vpack.c.bf16 %v457, %v456
        %v466 = vld [vmem:[#allocation4] sm:$0xff]
        %v467 = vld [vmem:[#allocation4 + $0x8] sm:$0xff]
        %v468 = vld [vmem:[#allocation4 + $0x10] sm:$0xff]
        %v469 = vld [vmem:[#allocation4 + $0x18] sm:$0xff]
        %v470 = vld [vmem:[#allocation4 + $0x20] sm:$0xff]
        %v471 = vld [vmem:[#allocation4 + $0x28] sm:$0xff]
        %v472 = vld [vmem:[#allocation4 + $0x30] sm:$0xff]
        %v473 = vld [vmem:[#allocation4 + $0x38] sm:$0xff]
        %v474 = vpack.c.bf16 %v467, %v466
        %v475 = vpack.c.bf16 %v469, %v468
        %v476 = vpack.c.bf16 %v471, %v470
        %v477 = vpack.c.bf16 %v473, %v472
        %v478 = vld [vmem:[#allocation6] sm:$0x1]
        %v480 = vperm.slane %v478, 0
        %vm482 = vcmask 523264
        %v484 = vsel %vm482, %v458, 0
        %v487 = vsel %vm482, %v459, 0
        %v490 = vsel %vm482, %v460, 0
        %v493 = vsel %vm482, %v461, 0
        %v496 = vsel %vm482, %v462, 0
        %v499 = vsel %vm482, %v463, 0
        %v502 = vsel %vm482, %v464, 0
        %v505 = vsel %vm482, %v465, 0
        %507 = vmatpush.bf16.msra.mxu0 0
        %508 = vmatpush.bf16.msra.mxu0 0
        %509 = vmatpush.bf16.msra.mxu0 0
        %510 = vmatpush.bf16.msra.mxu0 0
        %511 = vmatpush.bf16.msra.mxu0 %v477
        %512 = vmatpush.bf16.msra.mxu0 %v476
        %513 = vmatpush.bf16.msra.mxu0 %v475
        %514 = vmatpush.bf16.msra.mxu0 %v474
        %515 = vmatmul.bf16.gmra.mxu0 %v484
        %v516 = vpop.f32.mrf.mxu0
        %v517 = vadd.f32 %v480, %v516
        %v518 = vpop.f32.mrf.mxu0
        %v519 = vadd.f32 %v480, %v518
        %520 = vmatmul.bf16.gmra.mxu0 %v487
        %v521 = vpop.f32.mrf.mxu0
        %v522 = vadd.f32 %v480, %v521
        %v523 = vpop.f32.mrf.mxu0
        %v524 = vadd.f32 %v480, %v523
        %525 = vmatmul.bf16.gmra.mxu0 %v490
        %v526 = vpop.f32.mrf.mxu0
        %v527 = vadd.f32 %v480, %v526
        %v528 = vpop.f32.mrf.mxu0
        %v529 = vadd.f32 %v480, %v528
        %530 = vmatmul.bf16.gmra.mxu0 %v493
        %v531 = vpop.f32.mrf.mxu0
        %v532 = vadd.f32 %v480, %v531
        %v533 = vpop.f32.mrf.mxu0
        %v534 = vadd.f32 %v480, %v533
        %535 = vmatmul.bf16.gmra.mxu0 %v496
        %v536 = vpop.f32.mrf.mxu0
        %v537 = vadd.f32 %v480, %v536
        %v538 = vpop.f32.mrf.mxu0
        %v539 = vadd.f32 %v480, %v538
        %540 = vmatmul.bf16.gmra.mxu0 %v499
        %v541 = vpop.f32.mrf.mxu0
        %v542 = vadd.f32 %v480, %v541
        %v543 = vpop.f32.mrf.mxu0
        %v544 = vadd.f32 %v480, %v543
        %545 = vmatmul.bf16.gmra.mxu0 %v502
        %v546 = vpop.f32.mrf.mxu0
        %v547 = vadd.f32 %v480, %v546
        %v548 = vpop.f32.mrf.mxu0
        %v549 = vadd.f32 %v480, %v548
        %550 = vmatmul.bf16.gmra.mxu0 %v505
        %v551 = vpop.f32.mrf.mxu0
        %v552 = vadd.f32 %v480, %v551
        %v553 = vpop.f32.mrf.mxu0
        %v554 = vadd.f32 %v480, %v553
        %555 = vdwg.mxu0
        %v556 = vmax.f32 %v517, 0.0
        %v557 = vmax.f32 %v519, 0.0
        %v558 = vmax.f32 %v522, 0.0
        %v559 = vmax.f32 %v524, 0.0
        %v560 = vmax.f32 %v527, 0.0
        %v561 = vmax.f32 %v529, 0.0
        %v562 = vmax.f32 %v532, 0.0
        %v563 = vmax.f32 %v534, 0.0
        %v564 = vmax.f32 %v537, 0.0
        %v565 = vmax.f32 %v539, 0.0
        %v566 = vmax.f32 %v542, 0.0
        %v567 = vmax.f32 %v544, 0.0
        %v568 = vmax.f32 %v547, 0.0
        %v569 = vmax.f32 %v549, 0.0
        %v570 = vmax.f32 %v552, 0.0
        %v571 = vmax.f32 %v554, 0.0
        %v572 = vpack.c.bf16 %v557, %v556
        %v573 = vpack.c.bf16 %v559, %v558
        %v574 = vpack.c.bf16 %v561, %v560
        %v575 = vpack.c.bf16 %v563, %v562
        %v576 = vpack.c.bf16 %v565, %v564
        %v577 = vpack.c.bf16 %v567, %v566
        %v578 = vpack.c.bf16 %v569, %v568
        %v579 = vpack.c.bf16 %v571, %v570
        %v580 = vld [vmem:[%s5] sm:$0xff]
        %v581 = vld [vmem:[%s5 + $0x8] sm:$0xff]
        %v582 = vld [vmem:[%s5 + $0x10] sm:$0xff]
        %v583 = vld [vmem:[%s5 + $0x18] sm:$0xff]
        %v584 = vld [vmem:[%s5 + $0x20] sm:$0xff]
        %v585 = vld [vmem:[%s5 + $0x28] sm:$0xff]
        %v586 = vld [vmem:[%s5 + $0x30] sm:$0xff]
        %v587 = vld [vmem:[%s5 + $0x38] sm:$0xff]
        %v588 = vld [vmem:[%s5 + $0x40] sm:$0xff]
        %v589 = vld [vmem:[%s5 + $0x48] sm:$0xff]
        %v590 = vld [vmem:[%s5 + $0x50] sm:$0xff]
        %v591 = vld [vmem:[%s5 + $0x58] sm:$0xff]
        %v592 = vld [vmem:[%s5 + $0x60] sm:$0xff]
        %v593 = vld [vmem:[%s5 + $0x68] sm:$0xff]
        %v594 = vld [vmem:[%s5 + $0x70] sm:$0xff]
        %v595 = vld [vmem:[%s5 + $0x78] sm:$0xff]
        %v596 = vld [vmem:[%s5 + $0x80] sm:$0xff]
        %v597 = vld [vmem:[%s5 + $0x88] sm:$0xff]
        %v598 = vld [vmem:[%s5 + $0x90] sm:$0xff]
        %v599 = vld [vmem:[%s5 + $0x98] sm:$0xff]
        %v600 = vld [vmem:[%s5 + $0xa0] sm:$0xff]
        %v601 = vld [vmem:[%s5 + $0xa8] sm:$0xff]
        %v602 = vld [vmem:[%s5 + $0xb0] sm:$0xff]
        %v603 = vld [vmem:[%s5 + $0xb8] sm:$0xff]
        %v604 = vld [vmem:[%s5 + $0xc0] sm:$0xff]
        %v605 = vld [vmem:[%s5 + $0xc8] sm:$0xff]
        %v606 = vld [vmem:[%s5 + $0xd0] sm:$0xff]
        %v607 = vld [vmem:[%s5 + $0xd8] sm:$0xff]
        %v608 = vld [vmem:[%s5 + $0xe0] sm:$0xff]
        %v609 = vld [vmem:[%s5 + $0xe8] sm:$0xff]
        %v610 = vld [vmem:[%s5 + $0xf0] sm:$0xff]
        %v611 = vld [vmem:[%s5 + $0xf8] sm:$0xff]
        %v612 = vpack.c.bf16 %v582, %v580
        %v613 = vpack.c.bf16 %v583, %v581
        %v614 = vpack.c.bf16 %v586, %v584
        %v615 = vpack.c.bf16 %v587, %v585
        %v616 = vpack.c.bf16 %v590, %v588
        %v617 = vpack.c.bf16 %v591, %v589
        %v618 = vpack.c.bf16 %v594, %v592
        %v619 = vpack.c.bf16 %v595, %v593
        %v620 = vpack.c.bf16 %v598, %v596
        %v621 = vpack.c.bf16 %v599, %v597
        %v622 = vpack.c.bf16 %v602, %v600
        %v623 = vpack.c.bf16 %v603, %v601
        %v624 = vpack.c.bf16 %v606, %v604
        %v625 = vpack.c.bf16 %v607, %v605
        %v626 = vpack.c.bf16 %v610, %v608
        %v627 = vpack.c.bf16 %v611, %v609
        %v628 = vld [vmem:[%s6] sm:$0x3]
        %v630 = vperm.slane %v628, 0
        %v631 = vperm.slane %v628, 1
        %634 = vmatpush.bf16.msra.mxu0 %v626
        %635 = vmatpush.bf16.msra.mxu0 %v624
        %636 = vmatpush.bf16.msra.mxu0 %v622
        %637 = vmatpush.bf16.msra.mxu0 %v620
        %638 = vmatpush.bf16.msra.mxu0 %v618
        %639 = vmatpush.bf16.msra.mxu0 %v616
        %640 = vmatpush.bf16.msra.mxu0 %v614
        %641 = vmatpush.bf16.msra.mxu0 %v612
        %642 = vmatmul.bf16.gmra.mxu0 %v572
        %v643 = vpop.f32.mrf.mxu0
        %v644 = vadd.f32 %v630, %v643
        %v645 = vpop.f32.mrf.mxu0
        %v646 = vadd.f32 %v630, %v645
        %647 = vmatmul.bf16.gmra.mxu0 %v573
        %v648 = vpop.f32.mrf.mxu0
        %v649 = vadd.f32 %v630, %v648
        %v650 = vpop.f32.mrf.mxu0
        %v651 = vadd.f32 %v630, %v650
        %652 = vmatmul.bf16.gmra.mxu0 %v574
        %v653 = vpop.f32.mrf.mxu0
        %v654 = vadd.f32 %v630, %v653
        %v655 = vpop.f32.mrf.mxu0
        %v656 = vadd.f32 %v630, %v655
        %657 = vmatmul.bf16.gmra.mxu0 %v575
        %v658 = vpop.f32.mrf.mxu0
        %v659 = vadd.f32 %v630, %v658
        %v660 = vpop.f32.mrf.mxu0
        %v661 = vadd.f32 %v630, %v660
        %662 = vmatmul.bf16.gmra.mxu0 %v576
        %v663 = vpop.f32.mrf.mxu0
        %v664 = vadd.f32 %v630, %v663
        %v665 = vpop.f32.mrf.mxu0
        %v666 = vadd.f32 %v630, %v665
        %667 = vmatmul.bf16.gmra.mxu0 %v577
        %v668 = vpop.f32.mrf.mxu0
        %v669 = vadd.f32 %v630, %v668
        %v670 = vpop.f32.mrf.mxu0
        %v671 = vadd.f32 %v630, %v670
        %672 = vmatmul.bf16.gmra.mxu0 %v578
        %v673 = vpop.f32.mrf.mxu0
        %v674 = vadd.f32 %v630, %v673
        %v675 = vpop.f32.mrf.mxu0
        %v676 = vadd.f32 %v630, %v675
        %677 = vmatmul.bf16.gmra.mxu0 %v579
        %v678 = vpop.f32.mrf.mxu0
        %v679 = vadd.f32 %v630, %v678
        %v680 = vpop.f32.mrf.mxu0
        %v681 = vadd.f32 %v630, %v680
        %682 = vdwg.mxu0
        %683 = vmatpush.bf16.msra.mxu0 %v627
        %684 = vmatpush.bf16.msra.mxu0 %v625
        %685 = vmatpush.bf16.msra.mxu0 %v623
        %686 = vmatpush.bf16.msra.mxu0 %v621
        %687 = vmatpush.bf16.msra.mxu0 %v619
        %688 = vmatpush.bf16.msra.mxu0 %v617
        %689 = vmatpush.bf16.msra.mxu0 %v615
        %690 = vmatpush.bf16.msra.mxu0 %v613
        %691 = vmatmul.bf16.gmra.mxu0 %v572
        %v692 = vpop.f32.mrf.mxu0
        %v693 = vadd.f32 %v631, %v692
        %v694 = vpop.f32.mrf.mxu0
        %v695 = vadd.f32 %v631, %v694
        %696 = vmatmul.bf16.gmra.mxu0 %v573
        %v697 = vpop.f32.mrf.mxu0
        %v698 = vadd.f32 %v631, %v697
        %v699 = vpop.f32.mrf.mxu0
        %v700 = vadd.f32 %v631, %v699
        %701 = vmatmul.bf16.gmra.mxu0 %v574
        %v702 = vpop.f32.mrf.mxu0
        %v703 = vadd.f32 %v631, %v702
        %v704 = vpop.f32.mrf.mxu0
        %v705 = vadd.f32 %v631, %v704
        %706 = vmatmul.bf16.gmra.mxu0 %v575
        %v707 = vpop.f32.mrf.mxu0
        %v708 = vadd.f32 %v631, %v707
        %v709 = vpop.f32.mrf.mxu0
        %v710 = vadd.f32 %v631, %v709
        %711 = vmatmul.bf16.gmra.mxu0 %v576
        %v712 = vpop.f32.mrf.mxu0
        %v713 = vadd.f32 %v631, %v712
        %v714 = vpop.f32.mrf.mxu0
        %v715 = vadd.f32 %v631, %v714
        %716 = vmatmul.bf16.gmra.mxu0 %v577
        %v717 = vpop.f32.mrf.mxu0
        %v718 = vadd.f32 %v631, %v717
        %v719 = vpop.f32.mrf.mxu0
        %v720 = vadd.f32 %v631, %v719
        %721 = vmatmul.bf16.gmra.mxu0 %v578
        %v722 = vpop.f32.mrf.mxu0
        %v723 = vadd.f32 %v631, %v722
        %v724 = vpop.f32.mrf.mxu0
        %v725 = vadd.f32 %v631, %v724
        %726 = vmatmul.bf16.gmra.mxu0 %v579
        %v727 = vpop.f32.mrf.mxu0
        %v728 = vadd.f32 %v631, %v727
        %v729 = vpop.f32.mrf.mxu0
        %v730 = vadd.f32 %v631, %v729
        %731 = vdwg.mxu0
        %732 = vst [vmem:[%s328] sm:$0xff] %v644
        %733 = vst [vmem:[%s328 + $0x8] sm:$0xff] %v693
        %734 = vst [vmem:[%s328 + $0x10] sm:$0xff] %v646
        %735 = vst [vmem:[%s328 + $0x18] sm:$0xff] %v695
        %736 = vst [vmem:[%s328 + $0x20] sm:$0xff] %v649
        %737 = vst [vmem:[%s328 + $0x28] sm:$0xff] %v698
        %738 = vst [vmem:[%s328 + $0x30] sm:$0xff] %v651
        %739 = vst [vmem:[%s328 + $0x38] sm:$0xff] %v700
        %740 = vst [vmem:[%s328 + $0x40] sm:$0xff] %v654
        %741 = vst [vmem:[%s328 + $0x48] sm:$0xff] %v703
        %742 = vst [vmem:[%s328 + $0x50] sm:$0xff] %v656
        %743 = vst [vmem:[%s328 + $0x58] sm:$0xff] %v705
        %744 = vst [vmem:[%s328 + $0x60] sm:$0xff] %v659
        %745 = vst [vmem:[%s328 + $0x68] sm:$0xff] %v708
        %746 = vst [vmem:[%s328 + $0x70] sm:$0xff] %v661
        %747 = vst [vmem:[%s328 + $0x78] sm:$0xff] %v710
        %748 = vst [vmem:[%s328 + $0x80] sm:$0xff] %v664
        %749 = vst [vmem:[%s328 + $0x88] sm:$0xff] %v713
        %750 = vst [vmem:[%s328 + $0x90] sm:$0xff] %v666
        %751 = vst [vmem:[%s328 + $0x98] sm:$0xff] %v715
        %752 = vst [vmem:[%s328 + $0xa0] sm:$0xff] %v669
        %753 = vst [vmem:[%s328 + $0xa8] sm:$0xff] %v718
        %754 = vst [vmem:[%s328 + $0xb0] sm:$0xff] %v671
        %755 = vst [vmem:[%s328 + $0xb8] sm:$0xff] %v720
        %756 = vst [vmem:[%s328 + $0xc0] sm:$0xff] %v674
        %757 = vst [vmem:[%s328 + $0xc8] sm:$0xff] %v723
        %758 = vst [vmem:[%s328 + $0xd0] sm:$0xff] %v676
        %759 = vst [vmem:[%s328 + $0xd8] sm:$0xff] %v725
        %760 = vst [vmem:[%s328 + $0xe0] sm:$0xff] %v679
        %761 = vst [vmem:[%s328 + $0xe8] sm:$0xff] %v728
        %762 = vst [vmem:[%s328 + $0xf0] sm:$0xff] %v681
        %763 = vst [vmem:[%s328 + $0xf8] sm:$0xff] %v730
        %s764 = smul.u32 16, %s20
        %p765 = scmp.lt.s32.totalorder %s764, 63
        %s766 = scalar_select %p765, %s764, 63
        %s767 = smul.addr %s766, 2
        %s768 = smul.addr %s767, 8
        %s769 = scalar_lea.vmem %s7, %s768
        // Predicated region
        $region61: #{pc_transformer_proj_forward.6} parent=47 // pred_check
          %p770 = pneg %p190
        $region62: #{pc_transformer_proj_forward.6} parent=47 // pred_check_branch
          %772 = sbr.rel (%p770) target = $region64
        $region63: #{pc_transformer_proj_forward.6} parent=47 // pred_region
          %s773 = smul.u32 16, %s20
        $region64: #{pc_transformer_proj_forward.6} parent=47 // pred_fallthru
          _
      $region48: #{pc_transformer_proj_forward.6} parent=5 // pred_fallthru
        _
      %p774 = scmp.le.s32.totalorder 2, %s15
      // Predicated region
      $region65: #{pc_transformer_proj_forward.6} parent=5 // pred_check
        %p775 = pneg %p774
      $region66: #{pc_transformer_proj_forward.6} parent=5 // pred_check_branch
        %777 = sbr.rel (%p775) target = $region68
      $region67: #{pc_transformer_proj_forward.6} parent=5 // pred_region
        %s778 = ssub.s32 %s15, 2
        // Predicated region
        $region69: #{pc_transformer_proj_forward.6} parent=67 // pred_check
          %p779 = pneg %p196
        $region70: #{pc_transformer_proj_forward.6} parent=67 // pred_check_branch
          %781 = sbr.rel (%p779) target = $region72
        $region71: #{pc_transformer_proj_forward.6} parent=67 // pred_region
          %s782 = smul.u32 16, %s21
          %p783 = scmp.lt.s32.totalorder %s782, 63
          %s784 = scalar_select %p783, %s782, 63
          %s785 = smul.addr %s784, 2
          %s786 = smul.addr %s785, 8
          %s787 = scalar_lea.vmem %s7, %s786
        $region72: #{pc_transformer_proj_forward.6} parent=67 // pred_fallthru
          _
      $region68: #{pc_transformer_proj_forward.6} parent=5 // pred_fallthru
        _
    $region6: #{pc_transformer_proj_forward.6} parent=1 // loop_footer
      %s19 = sadd.s32 1, %s15
    $region7: #{pc_transformer_proj_forward.6} parent=1 // loop_footer_branch
      %14 = sbr.rel target = $region3
    $region8: #{pc_transformer_proj_forward.6} parent=1 // loop_exit
      _
    %788 = vsyncpa [#allocation3], 1
    %s789 = scalar_lea.sflag [#allocation3], 1
    %790 = vsyncpa %s789, 1
    %791 = vsyncpa [#allocation5], 1

// kernel: pc_transformer_proj_forward.8
$region0: #{pc_transformer_proj_forward.8}
  #allocation0 [shape = 'u32[]', space=smem, size = 0x4, offset = 0x4, fixed_abs, tag = 'smem constant byte address 0x4 - core index']
  #allocation1 [shape = 'u32[72,128]{1,0:T(1,128)}', space=vmem, size = 0x9000, scoped, tag = 'internal scratch']
  %s0 = inlined_call_operand.vmem [shape: f32[2,18,256], index: 0, kind: input, shape index: {}]
  %s1 = inlined_call_operand.vmem [shape: f32[2,16,1], index: 1, kind: input, shape index: {}]
  %s2 = inlined_call_operand.vmem [shape: f32[3,256,64], index: 2, kind: input, shape index: {}]
  %s3 = inlined_call_operand.vmem [shape: f32[1,64], index: 3, kind: input, shape index: {}]
  %s4 = inlined_call_operand.vmem [shape: f32[1,64], index: 4, kind: input, shape index: {}]
  %s5 = inlined_call_operand.vmem [shape: f32[1,64], index: 5, kind: input, shape index: {}]
  %s6 = inlined_call_operand.vmem [shape: f32[16,64], index: 6, kind: input, shape index: {}]
  %s7 = inlined_call_operand.vmem [shape: f32[2,16,64], index: 7, kind: output, shape index: {}]
  %s8 = sld [smem:[#allocation0]]
  $region61: #{pc_transformer_proj_forward.8} parent=0
    _
  %s10 = ssub.s32 1, %s8
  %s11 = scalar_select 0, %s10, %s8
  loop: start=0, step=1, limit=4
  $region2: #{pc_transformer_proj_forward.8} parent=0 // loop_pre_header
    _
  $region3: #{pc_transformer_proj_forward.8} parent=0 // loop_header
    %s13 = sphi 0, %s17
    %p14 = scmp.ge.s32.totalorder %s13, 4
    %s23 = sphi 0, %s25
    %s26 = sphi 0, %s23
    %s27 = sphi 0, %s26
    %s43 = sphi 0, %s27
    %s49 = sphi 0, %s51
    %s52 = sphi 0, %s49
    %s53 = sphi 0, %s52
    %s69 = sphi 0, %s53
    %s73 = sphi 0, %s73
    %s75 = sphi 0, %s73
    %s76 = sphi 0, %s75
    %s90 = sphi 0, %s76
    %s94 = sphi 0, %s94
    %s96 = sphi 0, %s94
    %s97 = sphi 0, %s96
    %s111 = sphi 0, %s97
    %s115 = sphi 0, %s115
    %s117 = sphi 0, %s115
    %s118 = sphi 0, %s117
    %s132 = sphi 0, %s118
    %s136 = sphi 0, %s136
    %s138 = sphi 0, %s136
    %s139 = sphi 0, %s138
    %s153 = sphi 0, %s139
    %s157 = sphi 0, %s157
    %s159 = sphi 0, %s157
    %s160 = sphi 0, %s159
    %s174 = sphi 0, %s160
    %s180 = sphi 0, %s182
    %s183 = sphi 0, %s180
    %s184 = sphi 0, %s183
    %s200 = sphi 0, %s184
  $region4: #{pc_transformer_proj_forward.8} parent=0 // loop_header_branch
    %16 = sbr.rel (%p14) target = $region8
  $region5: #{pc_transformer_proj_forward.8} parent=0 // loop_body
    %s18 = ssub.s32 %s13, 1
    %s19 = ssub.s32 %s13, 2
    %s20 = sadd.s32 %s13, 1
    %s21 = ssub.s32 %s13, %s20
    %p22 = scmp.eq.s32.totalorder %s21, 0
    %s24 = sadd.s32 %s23, 1
    %s25 = scalar_select %p22, %s23, %s24
    %p28 = pneg %p22
    %p29 = scmp.eq.s32.totalorder %s13, 1
    %p30 = por %p28, %p29
    %p31 = scmp.ne.s32.totalorder %s23, %s26
    %p32 = scmp.eq.s32.totalorder %s13, 0
    %p33 = por %p31, %p32
    %p34 = scmp.ne.s32.totalorder %s23, %s26
    %p35 = scmp.eq.s32.totalorder %s18, 1
    %p36 = por %p34, %p35
    %p37 = scmp.ne.s32.totalorder %s26, %s27
    %p38 = scmp.eq.s32.totalorder %s18, 0
    %p39 = por %p37, %p38
    %p40 = scmp.ne.s32.totalorder %s26, %s27
    %p41 = scmp.eq.s32.totalorder %s19, 1
    %p42 = por %p40, %p41
    %p44 = scmp.ne.s32.totalorder %s27, %s43
    %p45 = scmp.eq.s32.totalorder %s19, 0
    %p46 = por %p44, %p45
    %s47 = ssub.s32 %s13, %s20
    %p48 = scmp.eq.s32.totalorder %s47, 0
    %s50 = sadd.s32 %s49, 1
    %s51 = scalar_select %p48, %s49, %s50
    %p54 = pneg %p48
    %p55 = scmp.eq.s32.totalorder %s13, 1
    %p56 = por %p54, %p55
    %p57 = scmp.ne.s32.totalorder %s49, %s52
    %p58 = scmp.eq.s32.totalorder %s13, 0
    %p59 = por %p57, %p58
    %p60 = scmp.ne.s32.totalorder %s49, %s52
    %p61 = scmp.eq.s32.totalorder %s18, 1
    %p62 = por %p60, %p61
    %p63 = scmp.ne.s32.totalorder %s52, %s53
    %p64 = scmp.eq.s32.totalorder %s18, 0
    %p65 = por %p63, %p64
    %p66 = scmp.ne.s32.totalorder %s52, %s53
    %p67 = scmp.eq.s32.totalorder %s19, 1
    %p68 = por %p66, %p67
    %p70 = scmp.ne.s32.totalorder %s53, %s69
    %p71 = scmp.eq.s32.totalorder %s19, 0
    %p72 = por %p70, %p71
    %s74 = sadd.s32 %s73, 1
    %p77 = scmp.eq.s32.totalorder %s13, 1
    %p78 = scmp.ne.s32.totalorder %s73, %s75
    %p79 = scmp.eq.s32.totalorder %s13, 0
    %p80 = por %p78, %p79
    %p81 = scmp.ne.s32.totalorder %s73, %s75
    %p82 = scmp.eq.s32.totalorder %s18, 1
    %p83 = por %p81, %p82
    %p84 = scmp.ne.s32.totalorder %s75, %s76
    %p85 = scmp.eq.s32.totalorder %s18, 0
    %p86 = por %p84, %p85
    %p87 = scmp.ne.s32.totalorder %s75, %s76
    %p88 = scmp.eq.s32.totalorder %s19, 1
    %p89 = por %p87, %p88
    %p91 = scmp.ne.s32.totalorder %s76, %s90
    %p92 = scmp.eq.s32.totalorder %s19, 0
    %p93 = por %p91, %p92
    %s95 = sadd.s32 %s94, 1
    %p98 = scmp.eq.s32.totalorder %s13, 1
    %p99 = scmp.ne.s32.totalorder %s94, %s96
    %p100 = scmp.eq.s32.totalorder %s13, 0
    %p101 = por %p99, %p100
    %p102 = scmp.ne.s32.totalorder %s94, %s96
    %p103 = scmp.eq.s32.totalorder %s18, 1
    %p104 = por %p102, %p103
    %p105 = scmp.ne.s32.totalorder %s96, %s97
    %p106 = scmp.eq.s32.totalorder %s18, 0
    %p107 = por %p105, %p106
    %p108 = scmp.ne.s32.totalorder %s96, %s97
    %p109 = scmp.eq.s32.totalorder %s19, 1
    %p110 = por %p108, %p109
    %p112 = scmp.ne.s32.totalorder %s97, %s111
    %p113 = scmp.eq.s32.totalorder %s19, 0
    %p114 = por %p112, %p113
    %s116 = sadd.s32 %s115, 1
    %p119 = scmp.eq.s32.totalorder %s13, 1
    %p120 = scmp.ne.s32.totalorder %s115, %s117
    %p121 = scmp.eq.s32.totalorder %s13, 0
    %p122 = por %p120, %p121
    %p123 = scmp.ne.s32.totalorder %s115, %s117
    %p124 = scmp.eq.s32.totalorder %s18, 1
    %p125 = por %p123, %p124
    %p126 = scmp.ne.s32.totalorder %s117, %s118
    %p127 = scmp.eq.s32.totalorder %s18, 0
    %p128 = por %p126, %p127
    %p129 = scmp.ne.s32.totalorder %s117, %s118
    %p130 = scmp.eq.s32.totalorder %s19, 1
    %p131 = por %p129, %p130
    %p133 = scmp.ne.s32.totalorder %s118, %s132
    %p134 = scmp.eq.s32.totalorder %s19, 0
    %p135 = por %p133, %p134
    %s137 = sadd.s32 %s136, 1
    %p140 = scmp.eq.s32.totalorder %s13, 1
    %p141 = scmp.ne.s32.totalorder %s136, %s138
    %p142 = scmp.eq.s32.totalorder %s13, 0
    %p143 = por %p141, %p142
    %p144 = scmp.ne.s32.totalorder %s136, %s138
    %p145 = scmp.eq.s32.totalorder %s18, 1
    %p146 = por %p144, %p145
    %p147 = scmp.ne.s32.totalorder %s138, %s139
    %p148 = scmp.eq.s32.totalorder %s18, 0
    %p149 = por %p147, %p148
    %p150 = scmp.ne.s32.totalorder %s138, %s139
    %p151 = scmp.eq.s32.totalorder %s19, 1
    %p152 = por %p150, %p151
    %p154 = scmp.ne.s32.totalorder %s139, %s153
    %p155 = scmp.eq.s32.totalorder %s19, 0
    %p156 = por %p154, %p155
    %s158 = sadd.s32 %s157, 1
    %p161 = scmp.eq.s32.totalorder %s13, 1
    %p162 = scmp.ne.s32.totalorder %s157, %s159
    %p163 = scmp.eq.s32.totalorder %s13, 0
    %p164 = por %p162, %p163
    %p165 = scmp.ne.s32.totalorder %s157, %s159
    %p166 = scmp.eq.s32.totalorder %s18, 1
    %p167 = por %p165, %p166
    %p168 = scmp.ne.s32.totalorder %s159, %s160
    %p169 = scmp.eq.s32.totalorder %s18, 0
    %p170 = por %p168, %p169
    %p171 = scmp.ne.s32.totalorder %s159, %s160
    %p172 = scmp.eq.s32.totalorder %s19, 1
    %p173 = por %p171, %p172
    %p175 = scmp.ne.s32.totalorder %s160, %s174
    %p176 = scmp.eq.s32.totalorder %s19, 0
    %p177 = por %p175, %p176
    %s178 = ssub.s32 %s13, %s20
    %p179 = scmp.eq.s32.totalorder %s178, 0
    %s181 = sadd.s32 %s180, 1
    %s182 = scalar_select %p179, %s180, %s181
    %p185 = pneg %p179
    %p186 = scmp.eq.s32.totalorder %s13, 1
    %p187 = por %p185, %p186
    %p188 = scmp.ne.s32.totalorder %s180, %s183
    %p189 = scmp.eq.s32.totalorder %s13, 0
    %p190 = por %p188, %p189
    %p191 = scmp.ne.s32.totalorder %s180, %s183
    %p192 = scmp.eq.s32.totalorder %s18, 1
    %p193 = por %p191, %p192
    %p194 = scmp.ne.s32.totalorder %s183, %s184
    %p195 = scmp.eq.s32.totalorder %s18, 0
    %p196 = por %p194, %p195
    %p197 = scmp.ne.s32.totalorder %s183, %s184
    %p198 = scmp.eq.s32.totalorder %s19, 1
    %p199 = por %p197, %p198
    %p201 = scmp.ne.s32.totalorder %s184, %s200
    %p202 = scmp.eq.s32.totalorder %s19, 0
    %p203 = por %p201, %p202
    %p204 = scmp.le.s32.totalorder 1, %s13
    %p205 = scmp.lt.s32.totalorder %s13, 3
    %p206 = pnand %p204, %p205
    %p207 = pneg %p206
    // Predicated region
    $region9: #{pc_transformer_proj_forward.8} parent=5 // pred_check
      _
    $region10: #{pc_transformer_proj_forward.8} parent=5 // pred_check_branch
      %209 = sbr.rel (%p206) target = $region12
    $region11: #{pc_transformer_proj_forward.8} parent=5 // pred_region
      %s210 = ssub.s32 %s13, 1
      // Predicated region
      $region13: #{pc_transformer_proj_forward.8} parent=11 // pred_check
        %p211 = pneg %p86
      $region14: #{pc_transformer_proj_forward.8} parent=11 // pred_check_branch
        %213 = sbr.rel (%p211) target = $region16
      $region15: #{pc_transformer_proj_forward.8} parent=11 // pred_region
        _
      $region16: #{pc_transformer_proj_forward.8} parent=11 // pred_fallthru
        _
      // Predicated region
      $region17: #{pc_transformer_proj_forward.8} parent=11 // pred_check
        %p214 = pneg %p107
      $region18: #{pc_transformer_proj_forward.8} parent=11 // pred_check_branch
        %216 = sbr.rel (%p214) target = $region20
      $region19: #{pc_transformer_proj_forward.8} parent=11 // pred_region
        _
      $region20: #{pc_transformer_proj_forward.8} parent=11 // pred_fallthru
        _
      // Predicated region
      $region21: #{pc_transformer_proj_forward.8} parent=11 // pred_check
        %p217 = pneg %p128
      $region22: #{pc_transformer_proj_forward.8} parent=11 // pred_check_branch
        %219 = sbr.rel (%p217) target = $region24
      $region23: #{pc_transformer_proj_forward.8} parent=11 // pred_region
        _
      $region24: #{pc_transformer_proj_forward.8} parent=11 // pred_fallthru
        _
      // Predicated region
      $region25: #{pc_transformer_proj_forward.8} parent=11 // pred_check
        %p220 = pneg %p149
      $region26: #{pc_transformer_proj_forward.8} parent=11 // pred_check_branch
        %222 = sbr.rel (%p220) target = $region28
      $region27: #{pc_transformer_proj_forward.8} parent=11 // pred_region
        _
      $region28: #{pc_transformer_proj_forward.8} parent=11 // pred_fallthru
        _
      // Predicated region
      $region29: #{pc_transformer_proj_forward.8} parent=11 // pred_check
        %p223 = pneg %p170
      $region30: #{pc_transformer_proj_forward.8} parent=11 // pred_check_branch
        %225 = sbr.rel (%p223) target = $region32
      $region31: #{pc_transformer_proj_forward.8} parent=11 // pred_region
        _
      $region32: #{pc_transformer_proj_forward.8} parent=11 // pred_fallthru
        _
    $region12: #{pc_transformer_proj_forward.8} parent=5 // pred_fallthru
      _
    %p226 = scmp.lt.s32.totalorder %s13, 2
    // Predicated region
    $region33: #{pc_transformer_proj_forward.8} parent=5 // pred_check
      %p227 = pneg %p226
    $region34: #{pc_transformer_proj_forward.8} parent=5 // pred_check_branch
      %229 = sbr.rel (%p227) target = $region36
    $region35: #{pc_transformer_proj_forward.8} parent=5 // pred_region
      // Predicated region
      $region37: #{pc_transformer_proj_forward.8} parent=35 // pred_check
        %p230 = pneg %p33
      $region38: #{pc_transformer_proj_forward.8} parent=35 // pred_check_branch
        %232 = sbr.rel (%p230) target = $region40
      $region39: #{pc_transformer_proj_forward.8} parent=35 // pred_region
        %p233 = scmp.lt.s32.totalorder %s13, 1
        %s234 = scalar_select %p233, %s13, 1
        %s235 = smul.addr %s234, 6
        %s236 = smul.addr %s235, 8
        %s237 = scalar_lea.vmem %s0, %s236
      $region40: #{pc_transformer_proj_forward.8} parent=35 // pred_fallthru
        _
      // Predicated region
      $region41: #{pc_transformer_proj_forward.8} parent=35 // pred_check
        %p238 = pneg %p59
      $region42: #{pc_transformer_proj_forward.8} parent=35 // pred_check_branch
        %240 = sbr.rel (%p238) target = $region44
      $region43: #{pc_transformer_proj_forward.8} parent=35 // pred_region
        %p241 = scmp.lt.s32.totalorder %s13, 1
        %s242 = scalar_select %p241, %s13, 1
        %s243 = smul.addr %s242, 2
        %s244 = smul.addr %s243, 8
        %s245 = scalar_lea.vmem %s1, %s244
      $region44: #{pc_transformer_proj_forward.8} parent=35 // pred_fallthru
        _
    $region36: #{pc_transformer_proj_forward.8} parent=5 // pred_fallthru
      _
    %p246 = scmp.le.s32.totalorder 1, %s13
    %p247 = scmp.lt.s32.totalorder %s13, 3
    %p248 = pnand %p246, %p247
    %p249 = pneg %p248
    // Predicated region
    $region45: #{pc_transformer_proj_forward.8} parent=5 // pred_check
      _
    $region46: #{pc_transformer_proj_forward.8} parent=5 // pred_check_branch
      %251 = sbr.rel (%p248) target = $region48
    $region47: #{pc_transformer_proj_forward.8} parent=5 // pred_region
      %s252 = ssub.s32 %s13, 1
      %p253 = scmp.lt.s32.totalorder %s18, 1
      %s254 = scalar_select %p253, %s18, 1
      %s255 = smul.addr %s254, 6
      %s256 = smul.addr %s255, 8
      %s257 = scalar_lea.vmem %s0, %s256
      %p258 = pneg %p39
      %p259 = pneg %p36
      %p260 = scmp.lt.s32.totalorder %s18, 1
      %s261 = scalar_select %p260, %s18, 1
      %s262 = smul.addr %s261, 2
      %s263 = smul.addr %s262, 8
      %s264 = scalar_lea.vmem %s1, %s263
      %p265 = pneg %p65
      %p266 = pneg %p62
      %p267 = pneg %p86
      %p268 = pneg %p83
      %p269 = pneg %p107
      %p270 = pneg %p104
      %p271 = pneg %p128
      %p272 = pneg %p125
      %p273 = pneg %p149
      %p274 = pneg %p146
      %p275 = pneg %p170
      %p276 = pneg %p167
      %p277 = pneg %p196
      %p278 = pneg %p193
      %p279 = scmp.lt.s32.totalorder %s18, 1
      %s280 = scalar_select %p279, %s18, 1
      %s281 = smul.addr %s280, 2
      %s282 = smul.addr %s281, 8
      %s283 = scalar_lea.vmem %s7, %s282
      %p284 = scmp.lt.s32.totalorder %s18, 1
      %s285 = scalar_select %p284, %s18, 1
      %s286 = smul.addr %s285, 6
      %s287 = smul.addr %s286, 8
      %s288 = scalar_lea.vmem %s0, %s287
      %p289 = scmp.lt.s32.totalorder %s18, 1
      %s290 = scalar_select %p289, %s18, 1
      %s291 = smul.addr %s290, 2
      %s292 = smul.addr %s291, 8
      %s293 = scalar_lea.vmem %s1, %s292
      %p294 = scmp.lt.s32.totalorder %s18, 1
      %s295 = scalar_select %p294, %s18, 1
      %s296 = smul.addr %s295, 2
      %s297 = smul.addr %s296, 8
      %s298 = scalar_lea.vmem %s7, %s297
      %v299 = vld [vmem:[%s288] sm:$0xff]
      %v300 = vld [vmem:[%s288 + $0x8] sm:$0xff]
      %v301 = vld [vmem:[%s288 + $0x10] sm:$0xff]
      %v302 = vld [vmem:[%s288 + $0x18] sm:$0xff]
      %v303 = vld [vmem:[%s288 + $0x20] sm:$0x3]
      %v304 = vld [vmem:[%s288 + $0x28] sm:$0x3]
      %v305 = vpack.c.bf16 %v300, %v299
      %v306 = vpack.c.bf16 %v302, %v301
      %v307 = vpack.c.bf16 %v304, %v303
      %v308 = vld [vmem:[%s2] sm:$0xff]
      %v309 = vld [vmem:[%s2 + $0x8] sm:$0xff]
      %v310 = vld [vmem:[%s2 + $0x10] sm:$0xff]
      %v311 = vld [vmem:[%s2 + $0x18] sm:$0xff]
      %v312 = vld [vmem:[%s2 + $0x20] sm:$0xff]
      %v313 = vld [vmem:[%s2 + $0x28] sm:$0xff]
      %v314 = vld [vmem:[%s2 + $0x30] sm:$0xff]
      %v315 = vld [vmem:[%s2 + $0x38] sm:$0xff]
      %v316 = vld [vmem:[%s2 + $0x40] sm:$0xff]
      %v317 = vld [vmem:[%s2 + $0x48] sm:$0xff]
      %v318 = vld [vmem:[%s2 + $0x50] sm:$0xff]
      %v319 = vld [vmem:[%s2 + $0x58] sm:$0xff]
      %v320 = vld [vmem:[%s2 + $0x60] sm:$0xff]
      %v321 = vld [vmem:[%s2 + $0x68] sm:$0xff]
      %v322 = vld [vmem:[%s2 + $0x70] sm:$0xff]
      %v323 = vld [vmem:[%s2 + $0x78] sm:$0xff]
      %v324 = vld [vmem:[%s2 + $0x80] sm:$0xff]
      %v325 = vld [vmem:[%s2 + $0x88] sm:$0xff]
      %v326 = vld [vmem:[%s2 + $0x90] sm:$0xff]
      %v327 = vld [vmem:[%s2 + $0x98] sm:$0xff]
      %v328 = vld [vmem:[%s2 + $0xa0] sm:$0xff]
      %v329 = vld [vmem:[%s2 + $0xa8] sm:$0xff]
      %v330 = vld [vmem:[%s2 + $0xb0] sm:$0xff]
      %v331 = vld [vmem:[%s2 + $0xb8] sm:$0xff]
      %v332 = vld [vmem:[%s2 + $0xc0] sm:$0xff]
      %v333 = vld [vmem:[%s2 + $0xc8] sm:$0xff]
      %v334 = vld [vmem:[%s2 + $0xd0] sm:$0xff]
      %v335 = vld [vmem:[%s2 + $0xd8] sm:$0xff]
      %v336 = vld [vmem:[%s2 + $0xe0] sm:$0xff]
      %v337 = vld [vmem:[%s2 + $0xe8] sm:$0xff]
      %v338 = vld [vmem:[%s2 + $0xf0] sm:$0xff]
      %v339 = vld [vmem:[%s2 + $0xf8] sm:$0xff]
      %v340 = vpack.c.bf16 %v309, %v308
      %v341 = vpack.c.bf16 %v311, %v310
      %v342 = vpack.c.bf16 %v313, %v312
      %v343 = vpack.c.bf16 %v315, %v314
      %v344 = vpack.c.bf16 %v317, %v316
      %v345 = vpack.c.bf16 %v319, %v318
      %v346 = vpack.c.bf16 %v321, %v320
      %v347 = vpack.c.bf16 %v323, %v322
      %v348 = vpack.c.bf16 %v325, %v324
      %v349 = vpack.c.bf16 %v327, %v326
      %v350 = vpack.c.bf16 %v329, %v328
      %v351 = vpack.c.bf16 %v331, %v330
      %v352 = vpack.c.bf16 %v333, %v332
      %v353 = vpack.c.bf16 %v335, %v334
      %v354 = vpack.c.bf16 %v337, %v336
      %v355 = vpack.c.bf16 %v339, %v338
      %s356 = scalar_lea.vmem %s2, 256
      %v357 = vld [vmem:[%s356] sm:$0xff]
      %v358 = vld [vmem:[%s356 + $0x8] sm:$0xff]
      %v359 = vld [vmem:[%s356 + $0x10] sm:$0xff]
      %v360 = vld [vmem:[%s356 + $0x18] sm:$0xff]
      %v361 = vld [vmem:[%s356 + $0x20] sm:$0xff]
      %v362 = vld [vmem:[%s356 + $0x28] sm:$0xff]
      %v363 = vld [vmem:[%s356 + $0x30] sm:$0xff]
      %v364 = vld [vmem:[%s356 + $0x38] sm:$0xff]
      %v365 = vld [vmem:[%s356 + $0x40] sm:$0xff]
      %v366 = vld [vmem:[%s356 + $0x48] sm:$0xff]
      %v367 = vld [vmem:[%s356 + $0x50] sm:$0xff]
      %v368 = vld [vmem:[%s356 + $0x58] sm:$0xff]
      %v369 = vld [vmem:[%s356 + $0x60] sm:$0xff]
      %v370 = vld [vmem:[%s356 + $0x68] sm:$0xff]
      %v371 = vld [vmem:[%s356 + $0x70] sm:$0xff]
      %v372 = vld [vmem:[%s356 + $0x78] sm:$0xff]
      %v373 = vld [vmem:[%s356 + $0x80] sm:$0xff]
      %v374 = vld [vmem:[%s356 + $0x88] sm:$0xff]
      %v375 = vld [vmem:[%s356 + $0x90] sm:$0xff]
      %v376 = vld [vmem:[%s356 + $0x98] sm:$0xff]
      %v377 = vld [vmem:[%s356 + $0xa0] sm:$0xff]
      %v378 = vld [vmem:[%s356 + $0xa8] sm:$0xff]
      %v379 = vld [vmem:[%s356 + $0xb0] sm:$0xff]
      %v380 = vld [vmem:[%s356 + $0xb8] sm:$0xff]
      %v381 = vld [vmem:[%s356 + $0xc0] sm:$0xff]
      %v382 = vld [vmem:[%s356 + $0xc8] sm:$0xff]
      %v383 = vld [vmem:[%s356 + $0xd0] sm:$0xff]
      %v384 = vld [vmem:[%s356 + $0xd8] sm:$0xff]
      %v385 = vld [vmem:[%s356 + $0xe0] sm:$0xff]
      %v386 = vld [vmem:[%s356 + $0xe8] sm:$0xff]
      %v387 = vld [vmem:[%s356 + $0xf0] sm:$0xff]
      %v388 = vld [vmem:[%s356 + $0xf8] sm:$0xff]
      %v389 = vpack.c.bf16 %v358, %v357
      %v390 = vpack.c.bf16 %v360, %v359
      %v391 = vpack.c.bf16 %v362, %v361
      %v392 = vpack.c.bf16 %v364, %v363
      %v393 = vpack.c.bf16 %v366, %v365
      %v394 = vpack.c.bf16 %v368, %v367
      %v395 = vpack.c.bf16 %v370, %v369
      %v396 = vpack.c.bf16 %v372, %v371
      %v397 = vpack.c.bf16 %v374, %v373
      %v398 = vpack.c.bf16 %v376, %v375
      %v399 = vpack.c.bf16 %v378, %v377
      %v400 = vpack.c.bf16 %v380, %v379
      %v401 = vpack.c.bf16 %v382, %v381
      %v402 = vpack.c.bf16 %v384, %v383
      %v403 = vpack.c.bf16 %v386, %v385
      %v404 = vpack.c.bf16 %v388, %v387
      %v408 = vunpack.c.l.b16 %v305
      %v409 = vunpack.c.h.b16 %v305
      %v410 = vunpack.c.l.b16 %v306
      %v411 = vunpack.c.h.b16 %v306
      %v412 = vunpack.c.l.b16 %v307
      %v413 = vunpack.c.h.b16 %v307
      %v414 = vpack.c.b16 %v410, %v408
      %v415 = vpack.c.b16 %v411, %v409
      %v416 = vpack.c.b16 %v412, %v412
      %v417 = vpack.c.b16 %v413, %v413
      %vm418 = vsmask.f32 7424
      %v420 = vshrl.u32 %v414, 16
      %v422 = vshll.u32 %v414, 16
      %v424 = vrot.slane %v422, 1
      %v425 = vor.u32 %v420, %v424
      %v427 = vshll.u32 %v416, 16
      %v429 = vrot.slane %v427, 1
      %v430 = vsel %vm418, %v425, %v429
      %v432 = vshrl.u32 %v415, 16
      %v434 = vshll.u32 %v415, 16
      %v436 = vrot.slane %v434, 1
      %v437 = vor.u32 %v432, %v436
      %v439 = vshll.u32 %v417, 16
      %v441 = vrot.slane %v439, 1
      %v442 = vsel %vm418, %v437, %v441
      %445 = vmatpush.bf16.msra.mxu0 %v396
      %446 = vmatpush.bf16.msra.mxu0 %v395
      %447 = vmatpush.bf16.msra.mxu0 %v394
      %448 = vmatpush.bf16.msra.mxu0 %v393
      %449 = vmatpush.bf16.msra.mxu0 %v392
      %450 = vmatpush.bf16.msra.mxu0 %v391
      %451 = vmatpush.bf16.msra.mxu0 %v390
      %452 = vmatpush.bf16.msra.mxu0 %v389
      %453 = vmatmul.bf16.gmra.mxu0 %v430
      %v454 = vpop.f32.mrf.mxu0
      %v455 = vadd.f32 0.0, %v454
      %v456 = vpop.f32.mrf.mxu0
      %v457 = vadd.f32 0.0, %v456
      %458 = vdwg.mxu0
      %459 = vmatpush.bf16.msra.mxu0 %v404
      %460 = vmatpush.bf16.msra.mxu0 %v403
      %461 = vmatpush.bf16.msra.mxu0 %v402
      %462 = vmatpush.bf16.msra.mxu0 %v401
      %463 = vmatpush.bf16.msra.mxu0 %v400
      %464 = vmatpush.bf16.msra.mxu0 %v399
      %465 = vmatpush.bf16.msra.mxu0 %v398
      %466 = vmatpush.bf16.msra.mxu0 %v397
      %467 = vmatmul.bf16.gmra.mxu0 %v442
      %v468 = vpop.f32.mrf.mxu0
      %v469 = vadd.f32 %v455, %v468
      %v470 = vpop.f32.mrf.mxu0
      %v471 = vadd.f32 %v457, %v470
      %472 = vdwg.mxu0
      %475 = vmatpush.bf16.msra.mxu0 %v347
      %476 = vmatpush.bf16.msra.mxu0 %v346
      %477 = vmatpush.bf16.msra.mxu0 %v345
      %478 = vmatpush.bf16.msra.mxu0 %v344
      %479 = vmatpush.bf16.msra.mxu0 %v343
      %480 = vmatpush.bf16.msra.mxu0 %v342
      %481 = vmatpush.bf16.msra.mxu0 %v341
      %482 = vmatpush.bf16.msra.mxu0 %v340
      %483 = vmatmul.bf16.gmra.mxu0 %v414
      %v484 = vpop.f32.mrf.mxu0
      %v485 = vadd.f32 %v469, %v484
      %v486 = vpop.f32.mrf.mxu0
      %v487 = vadd.f32 %v471, %v486
      %488 = vdwg.mxu0
      %489 = vmatpush.bf16.msra.mxu0 %v355
      %490 = vmatpush.bf16.msra.mxu0 %v354
      %491 = vmatpush.bf16.msra.mxu0 %v353
      %492 = vmatpush.bf16.msra.mxu0 %v352
      %493 = vmatpush.bf16.msra.mxu0 %v351
      %494 = vmatpush.bf16.msra.mxu0 %v350
      %495 = vmatpush.bf16.msra.mxu0 %v349
      %496 = vmatpush.bf16.msra.mxu0 %v348
      %497 = vmatmul.bf16.gmra.mxu0 %v415
      %v498 = vpop.f32.mrf.mxu0
      %v499 = vadd.f32 %v485, %v498
      %v500 = vpop.f32.mrf.mxu0
      %v501 = vadd.f32 %v487, %v500
      %502 = vdwg.mxu0
      %s503 = scalar_lea.vmem %s2, 512
      %v504 = vld [vmem:[%s503] sm:$0xff]
      %v505 = vld [vmem:[%s503 + $0x8] sm:$0xff]
      %v506 = vld [vmem:[%s503 + $0x10] sm:$0xff]
      %v507 = vld [vmem:[%s503 + $0x18] sm:$0xff]
      %v508 = vld [vmem:[%s503 + $0x20] sm:$0xff]
      %v509 = vld [vmem:[%s503 + $0x28] sm:$0xff]
      %v510 = vld [vmem:[%s503 + $0x30] sm:$0xff]
      %v511 = vld [vmem:[%s503 + $0x38] sm:$0xff]
      %v512 = vld [vmem:[%s503 + $0x40] sm:$0xff]
      %v513 = vld [vmem:[%s503 + $0x48] sm:$0xff]
      %v514 = vld [vmem:[%s503 + $0x50] sm:$0xff]
      %v515 = vld [vmem:[%s503 + $0x58] sm:$0xff]
      %v516 = vld [vmem:[%s503 + $0x60] sm:$0xff]
      %v517 = vld [vmem:[%s503 + $0x68] sm:$0xff]
      %v518 = vld [vmem:[%s503 + $0x70] sm:$0xff]
      %v519 = vld [vmem:[%s503 + $0x78] sm:$0xff]
      %v520 = vld [vmem:[%s503 + $0x80] sm:$0xff]
      %v521 = vld [vmem:[%s503 + $0x88] sm:$0xff]
      %v522 = vld [vmem:[%s503 + $0x90] sm:$0xff]
      %v523 = vld [vmem:[%s503 + $0x98] sm:$0xff]
      %v524 = vld [vmem:[%s503 + $0xa0] sm:$0xff]
      %v525 = vld [vmem:[%s503 + $0xa8] sm:$0xff]
      %v526 = vld [vmem:[%s503 + $0xb0] sm:$0xff]
      %v527 = vld [vmem:[%s503 + $0xb8] sm:$0xff]
      %v528 = vld [vmem:[%s503 + $0xc0] sm:$0xff]
      %v529 = vld [vmem:[%s503 + $0xc8] sm:$0xff]
      %v530 = vld [vmem:[%s503 + $0xd0] sm:$0xff]
      %v531 = vld [vmem:[%s503 + $0xd8] sm:$0xff]
      %v532 = vld [vmem:[%s503 + $0xe0] sm:$0xff]
      %v533 = vld [vmem:[%s503 + $0xe8] sm:$0xff]
      %v534 = vld [vmem:[%s503 + $0xf0] sm:$0xff]
      %v535 = vld [vmem:[%s503 + $0xf8] sm:$0xff]
      %v536 = vpack.c.bf16 %v505, %v504
      %v537 = vpack.c.bf16 %v507, %v506
      %v538 = vpack.c.bf16 %v509, %v508
      %v539 = vpack.c.bf16 %v511, %v510
      %v540 = vpack.c.bf16 %v513, %v512
      %v541 = vpack.c.bf16 %v515, %v514
      %v542 = vpack.c.bf16 %v517, %v516
      %v543 = vpack.c.bf16 %v519, %v518
      %v544 = vpack.c.bf16 %v521, %v520
      %v545 = vpack.c.bf16 %v523, %v522
      %v546 = vpack.c.bf16 %v525, %v524
      %v547 = vpack.c.bf16 %v527, %v526
      %v548 = vpack.c.bf16 %v529, %v528
      %v549 = vpack.c.bf16 %v531, %v530
      %v550 = vpack.c.bf16 %v533, %v532
      %v551 = vpack.c.bf16 %v535, %v534
      %vm552 = vcmask 1046528
      %v553 = vrot.slane %v414, 1
      %v554 = vrot.slane %v416, 1
      %v555 = vsel %vm552, %v553, %v554
      %v556 = vrot.slane %v415, 1
      %v557 = vrot.slane %v417, 1
      %v558 = vsel %vm552, %v556, %v557
      %561 = vmatpush.bf16.msra.mxu0 %v543
      %562 = vmatpush.bf16.msra.mxu0 %v542
      %563 = vmatpush.bf16.msra.mxu0 %v541
      %564 = vmatpush.bf16.msra.mxu0 %v540
      %565 = vmatpush.bf16.msra.mxu0 %v539
      %566 = vmatpush.bf16.msra.mxu0 %v538
      %567 = vmatpush.bf16.msra.mxu0 %v537
      %568 = vmatpush.bf16.msra.mxu0 %v536
      %569 = vmatmul.bf16.gmra.mxu0 %v555
      %v570 = vpop.f32.mrf.mxu0
      %v571 = vadd.f32 0.0, %v570
      %v572 = vpop.f32.mrf.mxu0
      %v573 = vadd.f32 0.0, %v572
      %574 = vdwg.mxu0
      %575 = vmatpush.bf16.msra.mxu0 %v551
      %576 = vmatpush.bf16.msra.mxu0 %v550
      %577 = vmatpush.bf16.msra.mxu0 %v549
      %578 = vmatpush.bf16.msra.mxu0 %v548
      %579 = vmatpush.bf16.msra.mxu0 %v547
      %580 = vmatpush.bf16.msra.mxu0 %v546
      %581 = vmatpush.bf16.msra.mxu0 %v545
      %582 = vmatpush.bf16.msra.mxu0 %v544
      %583 = vmatmul.bf16.gmra.mxu0 %v558
      %v584 = vpop.f32.mrf.mxu0
      %v585 = vadd.f32 %v571, %v584
      %v586 = vpop.f32.mrf.mxu0
      %v587 = vadd.f32 %v573, %v586
      %588 = vdwg.mxu0
      %v589 = vadd.f32 %v499, %v585
      %v590 = vadd.f32 %v501, %v587
      %v591 = vld [vmem:[%s293] sm:$0xff]
      %v592 = vld [vmem:[%s293 + $0x8] sm:$0xff]
      %v593 = vld [vmem:[%s3] sm:$0x1]
      %v595 = vperm.slane %v593, 0
      %v597 = vadd.f32 %v589, %v595
      %v598 = vadd.f32 %v590, %v595
      %600 = vset.pattern.permute.xlu0 0
      %601 = vperm.xlu0 %600, %v591
      %v602 = vpop.permute.xlu0 %601
      %605 = vset.pattern.permute.xlu0 0
      %606 = vperm.xlu0 %605, %v592
      %v607 = vpop.permute.xlu0 %606
      %v609 = vmul.f32 %v597, %v602
      %v610 = vmul.f32 %v598, %v607
      %vm611 = vcmask 523264
      %v612 = vsel %vm611, %v609, 0.0
      %613 = vadd.xlane.f32.xlu0 %v612
      %v614 = vpop.xlane.xlu0 %613
      %v615 = vsel %vm611, %v610, 0.0
      %616 = vadd.xlane.f32.xlu0 %v615
      %v617 = vpop.xlane.xlu0 %616
      %v618 = vrcp.pop 64.0
      %v619 = vmul.f32 64.0, %v618
      %v620 = vsub.f32 1.0, %v619
      %v621 = vmul.f32 %v618, %v620
      %v622 = vadd.f32 %v618, %v621
      %vm623 = vweird.f32 %v618
      %v624 = vsel %vm623, %v618, %v622
      %v625 = vmul.f32 %v614, %v624
      %v626 = vmul.f32 %v617, %v624
      %v627 = vsub.f32 %v609, %v625
      %v628 = vsub.f32 %v610, %v626
      %v629 = vmul.f32 %v627, %v627
      %v630 = vmul.f32 %v628, %v628
      %v631 = vsel %vm611, %v629, 0.0
      %632 = vadd.xlane.f32.xlu0 %v631
      %v633 = vpop.xlane.xlu0 %632
      %v634 = vsel %vm611, %v630, 0.0
      %635 = vadd.xlane.f32.xlu0 %v634
      %v636 = vpop.xlane.xlu0 %635
      %v637 = vmul.f32 %v633, %v624
      %v638 = vmul.f32 %v636, %v624
      %v639 = vadd.f32 %v637, 1e-05
      %v640 = vadd.f32 %v638, 1e-05
      %v641 = vrsqrt.pop %v639
      %v642 = vmul.f32 %v641, %v639
      %v643 = vmul.f32 %v642, %v641
      %v644 = vmul.f32 0.5, %v643
      %v645 = vsub.f32 1.5, %v644
      %v646 = vmul.f32 %v641, %v645
      %vm647 = vweird.f32 %v639
      %vm648 = vweird.f32 %v641
      %vm649 = vmor %vm647, %vm648
      %v650 = vsel %vm649, %v641, %v646
      %v651 = vrsqrt.pop %v640
      %v652 = vmul.f32 %v651, %v640
      %v653 = vmul.f32 %v652, %v651
      %v654 = vmul.f32 0.5, %v653
      %v655 = vsub.f32 1.5, %v654
      %v656 = vmul.f32 %v651, %v655
      %vm657 = vweird.f32 %v640
      %vm658 = vweird.f32 %v651
      %vm659 = vmor %vm657, %vm658
      %v660 = vsel %vm659, %v651, %v656
      %v661 = vmul.f32 %v627, %v650
      %v662 = vmul.f32 %v628, %v660
      %v663 = vld [vmem:[%s4] sm:$0x1]
      %v665 = vperm.slane %v663, 0
      %v667 = vmul.f32 %v661, %v665
      %v668 = vmul.f32 %v662, %v665
      %v669 = vld [vmem:[%s5] sm:$0x1]
      %v671 = vperm.slane %v669, 0
      %v673 = vadd.f32 %v667, %v671
      %v674 = vadd.f32 %v668, %v671
      %v675 = vmax.f32 %v673, 0.0
      %v676 = vmax.f32 %v674, 0.0
      %v677 = vld [vmem:[%s6] sm:$0xff]
      %v678 = vld [vmem:[%s6 + $0x8] sm:$0xff]
      %v679 = vmul.f32 %v677, %v602
      %v680 = vmul.f32 %v678, %v607
      %v681 = vadd.f32 %v675, %v679
      %v682 = vadd.f32 %v676, %v680
      %683 = vst.msk [vmem:[%s298] sm:$0xff] %vm611, %v681
      %684 = vst.msk [vmem:[%s298 + $0x8] sm:$0xff] %vm611, %v682
      %p685 = scmp.lt.s32.totalorder %s18, 1
      %s686 = scalar_select %p685, %s18, 1
      %s687 = smul.addr %s686, 2
      %s688 = smul.addr %s687, 8
      %s689 = scalar_lea.vmem %s7, %s688
      // Predicated region
      $region49: #{pc_transformer_proj_forward.8} parent=47 // pred_check
        %p690 = pneg %p193
      $region50: #{pc_transformer_proj_forward.8} parent=47 // pred_check_branch
        %692 = sbr.rel (%p690) target = $region52
      $region51: #{pc_transformer_proj_forward.8} parent=47 // pred_region
        _
      $region52: #{pc_transformer_proj_forward.8} parent=47 // pred_fallthru
        _
    $region48: #{pc_transformer_proj_forward.8} parent=5 // pred_fallthru
      _
    %p693 = scmp.le.s32.totalorder 2, %s13
    // Predicated region
    $region53: #{pc_transformer_proj_forward.8} parent=5 // pred_check
      %p694 = pneg %p693
    $region54: #{pc_transformer_proj_forward.8} parent=5 // pred_check_branch
      %696 = sbr.rel (%p694) target = $region56
    $region55: #{pc_transformer_proj_forward.8} parent=5 // pred_region
      %s697 = ssub.s32 %s13, 2
      // Predicated region
      $region57: #{pc_transformer_proj_forward.8} parent=55 // pred_check
        %p698 = pneg %p199
      $region58: #{pc_transformer_proj_forward.8} parent=55 // pred_check_branch
        %700 = sbr.rel (%p698) target = $region60
      $region59: #{pc_transformer_proj_forward.8} parent=55 // pred_region
        %p701 = scmp.lt.s32.totalorder %s19, 1
        %s702 = scalar_select %p701, %s19, 1
        %s703 = smul.addr %s702, 2
        %s704 = smul.addr %s703, 8
        %s705 = scalar_lea.vmem %s7, %s704
      $region60: #{pc_transformer_proj_forward.8} parent=55 // pred_fallthru
        _
    $region56: #{pc_transformer_proj_forward.8} parent=5 // pred_fallthru
      _
  $region6: #{pc_transformer_proj_forward.8} parent=0 // loop_footer
    %s17 = sadd.s32 1, %s13
  $region7: #{pc_transformer_proj_forward.8} parent=0 // loop_footer_branch
    %12 = sbr.rel target = $region3
  $region8: #{pc_transformer_proj_forward.8} parent=0 // loop_exit
    _

// kernel: pc_transformer_proj_forward.10
$region0: #{pc_transformer_proj_forward.10}
  #allocation0 [shape = 'u32[]', space=smem, size = 0x4, offset = 0x4, fixed_abs, tag = 'smem constant byte address 0x4 - core index']
  #allocation1 [shape = 'u32[72,128]{1,0:T(1,128)}', space=vmem, size = 0x9000, scoped, tag = 'internal scratch']
  %s0 = inlined_call_operand.vmem [shape: f32[2,18,64], index: 0, kind: input, shape index: {}]
  %s1 = inlined_call_operand.vmem [shape: f32[2,8,1], index: 1, kind: input, shape index: {}]
  %s2 = inlined_call_operand.vmem [shape: f32[2,1,8], index: 2, kind: input, shape index: {}]
  %s3 = inlined_call_operand.vmem [shape: f32[10,64], index: 3, kind: input, shape index: {}]
  %s4 = inlined_call_operand.vmem [shape: f32[3,3,64], index: 4, kind: input, shape index: {}]
  %s5 = inlined_call_operand.vmem [shape: f32[3,64,64], index: 5, kind: input, shape index: {}]
  %s6 = inlined_call_operand.vmem [shape: f32[3,64], index: 6, kind: input, shape index: {}]
  %s7 = inlined_call_operand.vmem [shape: f32[64,64], index: 7, kind: input, shape index: {}]
  %s8 = inlined_call_operand.vmem [shape: f32[1,64], index: 8, kind: input, shape index: {}]
  %s9 = inlined_call_operand.vmem [shape: f32[64,256], index: 9, kind: input, shape index: {}]
  %s10 = inlined_call_operand.vmem [shape: f32[1,256], index: 10, kind: input, shape index: {}]
  %s11 = inlined_call_operand.vmem [shape: f32[256,64], index: 11, kind: input, shape index: {}]
  %s12 = inlined_call_operand.vmem [shape: f32[1,64], index: 12, kind: input, shape index: {}]
  %s13 = inlined_call_operand.vmem [shape: f32[2,8,64], index: 13, kind: output, shape index: {}]
  %s14 = sld [smem:[#allocation0]]
  $region85: #{pc_transformer_proj_forward.10} parent=0
    _
  %s16 = ssub.s32 1, %s14
  %s17 = scalar_select 0, %s16, %s14
  loop: start=0, step=1, limit=4
  $region2: #{pc_transformer_proj_forward.10} parent=0 // loop_pre_header
    _
  $region3: #{pc_transformer_proj_forward.10} parent=0 // loop_header
    %s19 = sphi 0, %s23
    %p20 = scmp.ge.s32.totalorder %s19, 4
    %s29 = sphi 0, %s31
    %s32 = sphi 0, %s29
    %s33 = sphi 0, %s32
    %s49 = sphi 0, %s33
    %s55 = sphi 0, %s57
    %s58 = sphi 0, %s55
    %s59 = sphi 0, %s58
    %s75 = sphi 0, %s59
    %s81 = sphi 0, %s83
    %s84 = sphi 0, %s81
    %s85 = sphi 0, %s84
    %s101 = sphi 0, %s85
    %s105 = sphi 0, %s105
    %s107 = sphi 0, %s105
    %s108 = sphi 0, %s107
    %s122 = sphi 0, %s108
    %s126 = sphi 0, %s126
    %s128 = sphi 0, %s126
    %s129 = sphi 0, %s128
    %s143 = sphi 0, %s129
    %s147 = sphi 0, %s147
    %s149 = sphi 0, %s147
    %s150 = sphi 0, %s149
    %s164 = sphi 0, %s150
    %s168 = sphi 0, %s168
    %s170 = sphi 0, %s168
    %s171 = sphi 0, %s170
    %s185 = sphi 0, %s171
    %s189 = sphi 0, %s189
    %s191 = sphi 0, %s189
    %s192 = sphi 0, %s191
    %s206 = sphi 0, %s192
    %s210 = sphi 0, %s210
    %s212 = sphi 0, %s210
    %s213 = sphi 0, %s212
    %s227 = sphi 0, %s213
    %s231 = sphi 0, %s231
    %s233 = sphi 0, %s231
    %s234 = sphi 0, %s233
    %s248 = sphi 0, %s234
    %s252 = sphi 0, %s252
    %s254 = sphi 0, %s252
    %s255 = sphi 0, %s254
    %s269 = sphi 0, %s255
    %s273 = sphi 0, %s273
    %s275 = sphi 0, %s273
    %s276 = sphi 0, %s275
    %s290 = sphi 0, %s276
    %s294 = sphi 0, %s294
    %s296 = sphi 0, %s294
    %s297 = sphi 0, %s296
    %s311 = sphi 0, %s297
    %s317 = sphi 0, %s319
    %s320 = sphi 0, %s317
    %s321 = sphi 0, %s320
    %s337 = sphi 0, %s321
  $region4: #{pc_transformer_proj_forward.10} parent=0 // loop_header_branch
    %22 = sbr.rel (%p20) target = $region8
  $region5: #{pc_transformer_proj_forward.10} parent=0 // loop_body
    %s24 = ssub.s32 %s19, 1
    %s25 = ssub.s32 %s19, 2
    %s26 = sadd.s32 %s19, 1
    %s27 = ssub.s32 %s19, %s26
    %p28 = scmp.eq.s32.totalorder %s27, 0
    %s30 = sadd.s32 %s29, 1
    %s31 = scalar_select %p28, %s29, %s30
    %p34 = pneg %p28
    %p35 = scmp.eq.s32.totalorder %s19, 1
    %p36 = por %p34, %p35
    %p37 = scmp.ne.s32.totalorder %s29, %s32
    %p38 = scmp.eq.s32.totalorder %s19, 0
    %p39 = por %p37, %p38
    %p40 = scmp.ne.s32.totalorder %s29, %s32
    %p41 = scmp.eq.s32.totalorder %s24, 1
    %p42 = por %p40, %p41
    %p43 = scmp.ne.s32.totalorder %s32, %s33
    %p44 = scmp.eq.s32.totalorder %s24, 0
    %p45 = por %p43, %p44
    %p46 = scmp.ne.s32.totalorder %s32, %s33
    %p47 = scmp.eq.s32.totalorder %s25, 1
    %p48 = por %p46, %p47
    %p50 = scmp.ne.s32.totalorder %s33, %s49
    %p51 = scmp.eq.s32.totalorder %s25, 0
    %p52 = por %p50, %p51
    %s53 = ssub.s32 %s19, %s26
    %p54 = scmp.eq.s32.totalorder %s53, 0
    %s56 = sadd.s32 %s55, 1
    %s57 = scalar_select %p54, %s55, %s56
    %p60 = pneg %p54
    %p61 = scmp.eq.s32.totalorder %s19, 1
    %p62 = por %p60, %p61
    %p63 = scmp.ne.s32.totalorder %s55, %s58
    %p64 = scmp.eq.s32.totalorder %s19, 0
    %p65 = por %p63, %p64
    %p66 = scmp.ne.s32.totalorder %s55, %s58
    %p67 = scmp.eq.s32.totalorder %s24, 1
    %p68 = por %p66, %p67
    %p69 = scmp.ne.s32.totalorder %s58, %s59
    %p70 = scmp.eq.s32.totalorder %s24, 0
    %p71 = por %p69, %p70
    %p72 = scmp.ne.s32.totalorder %s58, %s59
    %p73 = scmp.eq.s32.totalorder %s25, 1
    %p74 = por %p72, %p73
    %p76 = scmp.ne.s32.totalorder %s59, %s75
    %p77 = scmp.eq.s32.totalorder %s25, 0
    %p78 = por %p76, %p77
    %s79 = ssub.s32 %s19, %s26
    %p80 = scmp.eq.s32.totalorder %s79, 0
    %s82 = sadd.s32 %s81, 1
    %s83 = scalar_select %p80, %s81, %s82
    %p86 = pneg %p80
    %p87 = scmp.eq.s32.totalorder %s19, 1
    %p88 = por %p86, %p87
    %p89 = scmp.ne.s32.totalorder %s81, %s84
    %p90 = scmp.eq.s32.totalorder %s19, 0
    %p91 = por %p89, %p90
    %p92 = scmp.ne.s32.totalorder %s81, %s84
    %p93 = scmp.eq.s32.totalorder %s24, 1
    %p94 = por %p92, %p93
    %p95 = scmp.ne.s32.totalorder %s84, %s85
    %p96 = scmp.eq.s32.totalorder %s24, 0
    %p97 = por %p95, %p96
    %p98 = scmp.ne.s32.totalorder %s84, %s85
    %p99 = scmp.eq.s32.totalorder %s25, 1
    %p100 = por %p98, %p99
    %p102 = scmp.ne.s32.totalorder %s85, %s101
    %p103 = scmp.eq.s32.totalorder %s25, 0
    %p104 = por %p102, %p103
    %s106 = sadd.s32 %s105, 1
    %p109 = scmp.eq.s32.totalorder %s19, 1
    %p110 = scmp.ne.s32.totalorder %s105, %s107
    %p111 = scmp.eq.s32.totalorder %s19, 0
    %p112 = por %p110, %p111
    %p113 = scmp.ne.s32.totalorder %s105, %s107
    %p114 = scmp.eq.s32.totalorder %s24, 1
    %p115 = por %p113, %p114
    %p116 = scmp.ne.s32.totalorder %s107, %s108
    %p117 = scmp.eq.s32.totalorder %s24, 0
    %p118 = por %p116, %p117
    %p119 = scmp.ne.s32.totalorder %s107, %s108
    %p120 = scmp.eq.s32.totalorder %s25, 1
    %p121 = por %p119, %p120
    %p123 = scmp.ne.s32.totalorder %s108, %s122
    %p124 = scmp.eq.s32.totalorder %s25, 0
    %p125 = por %p123, %p124
    %s127 = sadd.s32 %s126, 1
    %p130 = scmp.eq.s32.totalorder %s19, 1
    %p131 = scmp.ne.s32.totalorder %s126, %s128
    %p132 = scmp.eq.s32.totalorder %s19, 0
    %p133 = por %p131, %p132
    %p134 = scmp.ne.s32.totalorder %s126, %s128
    %p135 = scmp.eq.s32.totalorder %s24, 1
    %p136 = por %p134, %p135
    %p137 = scmp.ne.s32.totalorder %s128, %s129
    %p138 = scmp.eq.s32.totalorder %s24, 0
    %p139 = por %p137, %p138
    %p140 = scmp.ne.s32.totalorder %s128, %s129
    %p141 = scmp.eq.s32.totalorder %s25, 1
    %p142 = por %p140, %p141
    %p144 = scmp.ne.s32.totalorder %s129, %s143
    %p145 = scmp.eq.s32.totalorder %s25, 0
    %p146 = por %p144, %p145
    %s148 = sadd.s32 %s147, 1
    %p151 = scmp.eq.s32.totalorder %s19, 1
    %p152 = scmp.ne.s32.totalorder %s147, %s149
    %p153 = scmp.eq.s32.totalorder %s19, 0
    %p154 = por %p152, %p153
    %p155 = scmp.ne.s32.totalorder %s147, %s149
    %p156 = scmp.eq.s32.totalorder %s24, 1
    %p157 = por %p155, %p156
    %p158 = scmp.ne.s32.totalorder %s149, %s150
    %p159 = scmp.eq.s32.totalorder %s24, 0
    %p160 = por %p158, %p159
    %p161 = scmp.ne.s32.totalorder %s149, %s150
    %p162 = scmp.eq.s32.totalorder %s25, 1
    %p163 = por %p161, %p162
    %p165 = scmp.ne.s32.totalorder %s150, %s164
    %p166 = scmp.eq.s32.totalorder %s25, 0
    %p167 = por %p165, %p166
    %s169 = sadd.s32 %s168, 1
    %p172 = scmp.eq.s32.totalorder %s19, 1
    %p173 = scmp.ne.s32.totalorder %s168, %s170
    %p174 = scmp.eq.s32.totalorder %s19, 0
    %p175 = por %p173, %p174
    %p176 = scmp.ne.s32.totalorder %s168, %s170
    %p177 = scmp.eq.s32.totalorder %s24, 1
    %p178 = por %p176, %p177
    %p179 = scmp.ne.s32.totalorder %s170, %s171
    %p180 = scmp.eq.s32.totalorder %s24, 0
    %p181 = por %p179, %p180
    %p182 = scmp.ne.s32.totalorder %s170, %s171
    %p183 = scmp.eq.s32.totalorder %s25, 1
    %p184 = por %p182, %p183
    %p186 = scmp.ne.s32.totalorder %s171, %s185
    %p187 = scmp.eq.s32.totalorder %s25, 0
    %p188 = por %p186, %p187
    %s190 = sadd.s32 %s189, 1
    %p193 = scmp.eq.s32.totalorder %s19, 1
    %p194 = scmp.ne.s32.totalorder %s189, %s191
    %p195 = scmp.eq.s32.totalorder %s19, 0
    %p196 = por %p194, %p195
    %p197 = scmp.ne.s32.totalorder %s189, %s191
    %p198 = scmp.eq.s32.totalorder %s24, 1
    %p199 = por %p197, %p198
    %p200 = scmp.ne.s32.totalorder %s191, %s192
    %p201 = scmp.eq.s32.totalorder %s24, 0
    %p202 = por %p200, %p201
    %p203 = scmp.ne.s32.totalorder %s191, %s192
    %p204 = scmp.eq.s32.totalorder %s25, 1
    %p205 = por %p203, %p204
    %p207 = scmp.ne.s32.totalorder %s192, %s206
    %p208 = scmp.eq.s32.totalorder %s25, 0
    %p209 = por %p207, %p208
    %s211 = sadd.s32 %s210, 1
    %p214 = scmp.eq.s32.totalorder %s19, 1
    %p215 = scmp.ne.s32.totalorder %s210, %s212
    %p216 = scmp.eq.s32.totalorder %s19, 0
    %p217 = por %p215, %p216
    %p218 = scmp.ne.s32.totalorder %s210, %s212
    %p219 = scmp.eq.s32.totalorder %s24, 1
    %p220 = por %p218, %p219
    %p221 = scmp.ne.s32.totalorder %s212, %s213
    %p222 = scmp.eq.s32.totalorder %s24, 0
    %p223 = por %p221, %p222
    %p224 = scmp.ne.s32.totalorder %s212, %s213
    %p225 = scmp.eq.s32.totalorder %s25, 1
    %p226 = por %p224, %p225
    %p228 = scmp.ne.s32.totalorder %s213, %s227
    %p229 = scmp.eq.s32.totalorder %s25, 0
    %p230 = por %p228, %p229
    %s232 = sadd.s32 %s231, 1
    %p235 = scmp.eq.s32.totalorder %s19, 1
    %p236 = scmp.ne.s32.totalorder %s231, %s233
    %p237 = scmp.eq.s32.totalorder %s19, 0
    %p238 = por %p236, %p237
    %p239 = scmp.ne.s32.totalorder %s231, %s233
    %p240 = scmp.eq.s32.totalorder %s24, 1
    %p241 = por %p239, %p240
    %p242 = scmp.ne.s32.totalorder %s233, %s234
    %p243 = scmp.eq.s32.totalorder %s24, 0
    %p244 = por %p242, %p243
    %p245 = scmp.ne.s32.totalorder %s233, %s234
    %p246 = scmp.eq.s32.totalorder %s25, 1
    %p247 = por %p245, %p246
    %p249 = scmp.ne.s32.totalorder %s234, %s248
    %p250 = scmp.eq.s32.totalorder %s25, 0
    %p251 = por %p249, %p250
    %s253 = sadd.s32 %s252, 1
    %p256 = scmp.eq.s32.totalorder %s19, 1
    %p257 = scmp.ne.s32.totalorder %s252, %s254
    %p258 = scmp.eq.s32.totalorder %s19, 0
    %p259 = por %p257, %p258
    %p260 = scmp.ne.s32.totalorder %s252, %s254
    %p261 = scmp.eq.s32.totalorder %s24, 1
    %p262 = por %p260, %p261
    %p263 = scmp.ne.s32.totalorder %s254, %s255
    %p264 = scmp.eq.s32.totalorder %s24, 0
    %p265 = por %p263, %p264
    %p266 = scmp.ne.s32.totalorder %s254, %s255
    %p267 = scmp.eq.s32.totalorder %s25, 1
    %p268 = por %p266, %p267
    %p270 = scmp.ne.s32.totalorder %s255, %s269
    %p271 = scmp.eq.s32.totalorder %s25, 0
    %p272 = por %p270, %p271
    %s274 = sadd.s32 %s273, 1
    %p277 = scmp.eq.s32.totalorder %s19, 1
    %p278 = scmp.ne.s32.totalorder %s273, %s275
    %p279 = scmp.eq.s32.totalorder %s19, 0
    %p280 = por %p278, %p279
    %p281 = scmp.ne.s32.totalorder %s273, %s275
    %p282 = scmp.eq.s32.totalorder %s24, 1
    %p283 = por %p281, %p282
    %p284 = scmp.ne.s32.totalorder %s275, %s276
    %p285 = scmp.eq.s32.totalorder %s24, 0
    %p286 = por %p284, %p285
    %p287 = scmp.ne.s32.totalorder %s275, %s276
    %p288 = scmp.eq.s32.totalorder %s25, 1
    %p289 = por %p287, %p288
    %p291 = scmp.ne.s32.totalorder %s276, %s290
    %p292 = scmp.eq.s32.totalorder %s25, 0
    %p293 = por %p291, %p292
    %s295 = sadd.s32 %s294, 1
    %p298 = scmp.eq.s32.totalorder %s19, 1
    %p299 = scmp.ne.s32.totalorder %s294, %s296
    %p300 = scmp.eq.s32.totalorder %s19, 0
    %p301 = por %p299, %p300
    %p302 = scmp.ne.s32.totalorder %s294, %s296
    %p303 = scmp.eq.s32.totalorder %s24, 1
    %p304 = por %p302, %p303
    %p305 = scmp.ne.s32.totalorder %s296, %s297
    %p306 = scmp.eq.s32.totalorder %s24, 0
    %p307 = por %p305, %p306
    %p308 = scmp.ne.s32.totalorder %s296, %s297
    %p309 = scmp.eq.s32.totalorder %s25, 1
    %p310 = por %p308, %p309
    %p312 = scmp.ne.s32.totalorder %s297, %s311
    %p313 = scmp.eq.s32.totalorder %s25, 0
    %p314 = por %p312, %p313
    %s315 = ssub.s32 %s19, %s26
    %p316 = scmp.eq.s32.totalorder %s315, 0
    %s318 = sadd.s32 %s317, 1
    %s319 = scalar_select %p316, %s317, %s318
    %p322 = pneg %p316
    %p323 = scmp.eq.s32.totalorder %s19, 1
    %p324 = por %p322, %p323
    %p325 = scmp.ne.s32.totalorder %s317, %s320
    %p326 = scmp.eq.s32.totalorder %s19, 0
    %p327 = por %p325, %p326
    %p328 = scmp.ne.s32.totalorder %s317, %s320
    %p329 = scmp.eq.s32.totalorder %s24, 1
    %p330 = por %p328, %p329
    %p331 = scmp.ne.s32.totalorder %s320, %s321
    %p332 = scmp.eq.s32.totalorder %s24, 0
    %p333 = por %p331, %p332
    %p334 = scmp.ne.s32.totalorder %s320, %s321
    %p335 = scmp.eq.s32.totalorder %s25, 1
    %p336 = por %p334, %p335
    %p338 = scmp.ne.s32.totalorder %s321, %s337
    %p339 = scmp.eq.s32.totalorder %s25, 0
    %p340 = por %p338, %p339
    %p341 = scmp.le.s32.totalorder 1, %s19
    %p342 = scmp.lt.s32.totalorder %s19, 3
    %p343 = pnand %p341, %p342
    %p344 = pneg %p343
    // Predicated region
    $region9: #{pc_transformer_proj_forward.10} parent=5 // pred_check
      _
    $region10: #{pc_transformer_proj_forward.10} parent=5 // pred_check_branch
      %346 = sbr.rel (%p343) target = $region12
    $region11: #{pc_transformer_proj_forward.10} parent=5 // pred_region
      %s347 = ssub.s32 %s19, 1
      // Predicated region
      $region13: #{pc_transformer_proj_forward.10} parent=11 // pred_check
        %p348 = pneg %p118
      $region14: #{pc_transformer_proj_forward.10} parent=11 // pred_check_branch
        %350 = sbr.rel (%p348) target = $region16
      $region15: #{pc_transformer_proj_forward.10} parent=11 // pred_region
        _
      $region16: #{pc_transformer_proj_forward.10} parent=11 // pred_fallthru
        _
      // Predicated region
      $region17: #{pc_transformer_proj_forward.10} parent=11 // pred_check
        %p351 = pneg %p139
      $region18: #{pc_transformer_proj_forward.10} parent=11 // pred_check_branch
        %353 = sbr.rel (%p351) target = $region20
      $region19: #{pc_transformer_proj_forward.10} parent=11 // pred_region
        _
      $region20: #{pc_transformer_proj_forward.10} parent=11 // pred_fallthru
        _
      // Predicated region
      $region21: #{pc_transformer_proj_forward.10} parent=11 // pred_check
        %p354 = pneg %p160
      $region22: #{pc_transformer_proj_forward.10} parent=11 // pred_check_branch
        %356 = sbr.rel (%p354) target = $region24
      $region23: #{pc_transformer_proj_forward.10} parent=11 // pred_region
        _
      $region24: #{pc_transformer_proj_forward.10} parent=11 // pred_fallthru
        _
      // Predicated region
      $region25: #{pc_transformer_proj_forward.10} parent=11 // pred_check
        %p357 = pneg %p181
      $region26: #{pc_transformer_proj_forward.10} parent=11 // pred_check_branch
        %359 = sbr.rel (%p357) target = $region28
      $region27: #{pc_transformer_proj_forward.10} parent=11 // pred_region
        _
      $region28: #{pc_transformer_proj_forward.10} parent=11 // pred_fallthru
        _
      // Predicated region
      $region29: #{pc_transformer_proj_forward.10} parent=11 // pred_check
        %p360 = pneg %p202
      $region30: #{pc_transformer_proj_forward.10} parent=11 // pred_check_branch
        %362 = sbr.rel (%p360) target = $region32
      $region31: #{pc_transformer_proj_forward.10} parent=11 // pred_region
        _
      $region32: #{pc_transformer_proj_forward.10} parent=11 // pred_fallthru
        _
      // Predicated region
      $region33: #{pc_transformer_proj_forward.10} parent=11 // pred_check
        %p363 = pneg %p223
      $region34: #{pc_transformer_proj_forward.10} parent=11 // pred_check_branch
        %365 = sbr.rel (%p363) target = $region36
      $region35: #{pc_transformer_proj_forward.10} parent=11 // pred_region
        _
      $region36: #{pc_transformer_proj_forward.10} parent=11 // pred_fallthru
        _
      // Predicated region
      $region37: #{pc_transformer_proj_forward.10} parent=11 // pred_check
        %p366 = pneg %p244
      $region38: #{pc_transformer_proj_forward.10} parent=11 // pred_check_branch
        %368 = sbr.rel (%p366) target = $region40
      $region39: #{pc_transformer_proj_forward.10} parent=11 // pred_region
        _
      $region40: #{pc_transformer_proj_forward.10} parent=11 // pred_fallthru
        _
      // Predicated region
      $region41: #{pc_transformer_proj_forward.10} parent=11 // pred_check
        %p369 = pneg %p265
      $region42: #{pc_transformer_proj_forward.10} parent=11 // pred_check_branch
        %371 = sbr.rel (%p369) target = $region44
      $region43: #{pc_transformer_proj_forward.10} parent=11 // pred_region
        _
      $region44: #{pc_transformer_proj_forward.10} parent=11 // pred_fallthru
        _
      // Predicated region
      $region45: #{pc_transformer_proj_forward.10} parent=11 // pred_check
        %p372 = pneg %p286
      $region46: #{pc_transformer_proj_forward.10} parent=11 // pred_check_branch
        %374 = sbr.rel (%p372) target = $region48
      $region47: #{pc_transformer_proj_forward.10} parent=11 // pred_region
        _
      $region48: #{pc_transformer_proj_forward.10} parent=11 // pred_fallthru
        _
      // Predicated region
      $region49: #{pc_transformer_proj_forward.10} parent=11 // pred_check
        %p375 = pneg %p307
      $region50: #{pc_transformer_proj_forward.10} parent=11 // pred_check_branch
        %377 = sbr.rel (%p375) target = $region52
      $region51: #{pc_transformer_proj_forward.10} parent=11 // pred_region
        _
      $region52: #{pc_transformer_proj_forward.10} parent=11 // pred_fallthru
        _
    $region12: #{pc_transformer_proj_forward.10} parent=5 // pred_fallthru
      _
    %p378 = scmp.lt.s32.totalorder %s19, 2
    // Predicated region
    $region53: #{pc_transformer_proj_forward.10} parent=5 // pred_check
      %p379 = pneg %p378
    $region54: #{pc_transformer_proj_forward.10} parent=5 // pred_check_branch
      %381 = sbr.rel (%p379) target = $region56
    $region55: #{pc_transformer_proj_forward.10} parent=5 // pred_region
      // Predicated region
      $region57: #{pc_transformer_proj_forward.10} parent=55 // pred_check
        %p382 = pneg %p39
      $region58: #{pc_transformer_proj_forward.10} parent=55 // pred_check_branch
        %384 = sbr.rel (%p382) target = $region60
      $region59: #{pc_transformer_proj_forward.10} parent=55 // pred_region
        %p385 = scmp.lt.s32.totalorder %s19, 1
        %s386 = scalar_select %p385, %s19, 1
        %s387 = smul.addr %s386, 3
        %s388 = smul.addr %s387, 8
        %s389 = scalar_lea.vmem %s0, %s388
      $region60: #{pc_transformer_proj_forward.10} parent=55 // pred_fallthru
        _
      // Predicated region
      $region61: #{pc_transformer_proj_forward.10} parent=55 // pred_check
        %p390 = pneg %p65
      $region62: #{pc_transformer_proj_forward.10} parent=55 // pred_check_branch
        %392 = sbr.rel (%p390) target = $region64
      $region63: #{pc_transformer_proj_forward.10} parent=55 // pred_region
        %p393 = scmp.lt.s32.totalorder %s19, 1
        %s394 = scalar_select %p393, %s19, 1
        %s395 = smul.addr %s394, 8
        %s396 = scalar_lea.vmem %s1, %s395
      $region64: #{pc_transformer_proj_forward.10} parent=55 // pred_fallthru
        _
      // Predicated region
      $region65: #{pc_transformer_proj_forward.10} parent=55 // pred_check
        %p397 = pneg %p91
      $region66: #{pc_transformer_proj_forward.10} parent=55 // pred_check_branch
        %399 = sbr.rel (%p397) target = $region68
      $region67: #{pc_transformer_proj_forward.10} parent=55 // pred_region
        %p400 = scmp.lt.s32.totalorder %s19, 1
        %s401 = scalar_select %p400, %s19, 1
        %s402 = scalar_lea.vmem %s2, %s401
      $region68: #{pc_transformer_proj_forward.10} parent=55 // pred_fallthru
        _
    $region56: #{pc_transformer_proj_forward.10} parent=5 // pred_fallthru
      _
    %p403 = scmp.le.s32.totalorder 1, %s19
    %p404 = scmp.lt.s32.totalorder %s19, 3
    %p405 = pnand %p403, %p404
    %p406 = pneg %p405
    // Predicated region
    $region69: #{pc_transformer_proj_forward.10} parent=5 // pred_check
      _
    $region70: #{pc_transformer_proj_forward.10} parent=5 // pred_check_branch
      %408 = sbr.rel (%p405) target = $region72
    $region71: #{pc_transformer_proj_forward.10} parent=5 // pred_region
      %s409 = ssub.s32 %s19, 1
      %p410 = scmp.lt.s32.totalorder %s24, 1
      %s411 = scalar_select %p410, %s24, 1
      %s412 = smul.addr %s411, 3
      %s413 = smul.addr %s412, 8
      %s414 = scalar_lea.vmem %s0, %s413
      %p415 = pneg %p45
      %p416 = pneg %p42
      %p417 = scmp.lt.s32.totalorder %s24, 1
      %s418 = scalar_select %p417, %s24, 1
      %s419 = smul.addr %s418, 8
      %s420 = scalar_lea.vmem %s1, %s419
      %p421 = pneg %p71
      %p422 = pneg %p68
      %p423 = scmp.lt.s32.totalorder %s24, 1
      %s424 = scalar_select %p423, %s24, 1
      %s425 = scalar_lea.vmem %s2, %s424
      %p426 = pneg %p97
      %p427 = pneg %p94
      %p428 = pneg %p118
      %p429 = pneg %p115
      %p430 = pneg %p139
      %p431 = pneg %p136
      %p432 = pneg %p160
      %p433 = pneg %p157
      %p434 = pneg %p181
      %p435 = pneg %p178
      %p436 = pneg %p202
      %p437 = pneg %p199
      %p438 = pneg %p223
      %p439 = pneg %p220
      %p440 = pneg %p244
      %p441 = pneg %p241
      %p442 = pneg %p265
      %p443 = pneg %p262
      %p444 = pneg %p286
      %p445 = pneg %p283
      %p446 = pneg %p307
      %p447 = pneg %p304
      %p448 = pneg %p333
      %p449 = pneg %p330
      %p450 = scmp.lt.s32.totalorder %s24, 1
      %s451 = scalar_select %p450, %s24, 1
      %s452 = smul.addr %s451, 8
      %s453 = scalar_lea.vmem %s13, %s452
      %p454 = scmp.lt.s32.totalorder %s24, 1
      %s455 = scalar_select %p454, %s24, 1
      %s456 = smul.addr %s455, 3
      %s457 = smul.addr %s456, 8
      %s458 = scalar_lea.vmem %s0, %s457
      %p459 = scmp.lt.s32.totalorder %s24, 1
      %s460 = scalar_select %p459, %s24, 1
      %s461 = smul.addr %s460, 8
      %s462 = scalar_lea.vmem %s1, %s461
      %p463 = scmp.lt.s32.totalorder %s24, 1
      %s464 = scalar_select %p463, %s24, 1
      %s465 = scalar_lea.vmem %s2, %s464
      %p466 = scmp.lt.s32.totalorder %s24, 1
      %s467 = scalar_select %p466, %s24, 1
      %s468 = smul.addr %s467, 8
      %s469 = scalar_lea.vmem %s13, %s468
      %v471 = vld [vmem:[%s3] sm:$0xff]
      %v472 = vld [vmem:[%s3 + $0x8] sm:$0x3]
      %v473 = vld [vmem:[%s458] sm:$0xff]
      %v474 = vld [vmem:[%s458 + $0x8] sm:$0xff]
      %v475 = vld [vmem:[%s458 + $0x10] sm:$0x3]
      %v476 = vld [vmem:[%s462] sm:$0xff]
      %v477 = vld [vmem:[%s465] sm:$0x1]
      %v478 = vlaneseq
      %v479 = vshrl.u32 %v478, 7
      %v480 = vadd.s32 %v479, 8
      %v481 = vadd.s32 %v479, 16
      %vm482 = vcmp.ge.s32.totalorder %v479, 1
      %vm483 = vcmp.ge.s32.totalorder %v480, 1
      %vm484 = vcmp.ge.s32.totalorder %v481, 1
      %vm485 = vcmp.le.s32.totalorder %v479, 16
      %vm486 = vcmp.le.s32.totalorder %v480, 16
      %vm487 = vcmp.le.s32.totalorder %v481, 16
      %vm488 = vmand %vm482, %vm485
      %vm489 = vmand %vm483, %vm486
      %vm490 = vmand %vm484, %vm487
      %vm491 = vcmask 523264
      %v492 = vsel %vm491, %v473, 0.0
      %493 = vadd.xlane.f32.xlu0 %v492
      %v494 = vpop.xlane.xlu0 %493
      %v495 = vsel %vm491, %v474, 0.0
      %496 = vadd.xlane.f32.xlu0 %v495
      %v497 = vpop.xlane.xlu0 %496
      %vm498 = vcmask 517120
      %v499 = vsel %vm498, %v475, 0.0
      %500 = vadd.xlane.f32.xlu0 %v499
      %v501 = vpop.xlane.xlu0 %500
      %v502 = vrcp.pop 64.0
      %v503 = vmul.f32 64.0, %v502
      %v504 = vsub.f32 1.0, %v503
      %v505 = vmul.f32 %v502, %v504
      %v506 = vadd.f32 %v502, %v505
      %vm507 = vweird.f32 %v502
      %v508 = vsel %vm507, %v502, %v506
      %v509 = vmul.f32 %v494, %v508
      %v510 = vmul.f32 %v497, %v508
      %v511 = vmul.f32 %v501, %v508
      %v512 = vsub.f32 %v473, %v509
      %v513 = vsub.f32 %v474, %v510
      %v514 = vsub.f32 %v475, %v511
      %v515 = vmul.f32 %v512, %v512
      %v516 = vmul.f32 %v513, %v513
      %v517 = vmul.f32 %v514, %v514
      %v518 = vsel %vm491, %v515, 0.0
      %519 = vadd.xlane.f32.xlu0 %v518
      %v520 = vpop.xlane.xlu0 %519
      %v521 = vsel %vm491, %v516, 0.0
      %522 = vadd.xlane.f32.xlu0 %v521
      %v523 = vpop.xlane.xlu0 %522
      %v524 = vsel %vm498, %v517, 0.0
      %525 = vadd.xlane.f32.xlu0 %v524
      %v526 = vpop.xlane.xlu0 %525
      %v527 = vmul.f32 %v520, %v508
      %v528 = vmul.f32 %v523, %v508
      %v529 = vmul.f32 %v526, %v508
      %v530 = vadd.f32 %v527, 1e-05
      %v531 = vadd.f32 %v528, 1e-05
      %v532 = vadd.f32 %v529, 1e-05
      %v533 = vrsqrt.pop %v530
      %v534 = vmul.f32 %v533, %v530
      %v535 = vmul.f32 %v534, %v533
      %v536 = vmul.f32 0.5, %v535
      %v537 = vsub.f32 1.5, %v536
      %v538 = vmul.f32 %v533, %v537
      %vm539 = vweird.f32 %v530
      %vm540 = vweird.f32 %v533
      %vm541 = vmor %vm539, %vm540
      %v542 = vsel %vm541, %v533, %v538
      %v543 = vrsqrt.pop %v531
      %v544 = vmul.f32 %v543, %v531
      %v545 = vmul.f32 %v544, %v543
      %v546 = vmul.f32 0.5, %v545
      %v547 = vsub.f32 1.5, %v546
      %v548 = vmul.f32 %v543, %v547
      %vm549 = vweird.f32 %v531
      %vm550 = vweird.f32 %v543
      %vm551 = vmor %vm549, %vm550
      %v552 = vsel %vm551, %v543, %v548
      %v553 = vrsqrt.pop %v532
      %v554 = vmul.f32 %v553, %v532
      %v555 = vmul.f32 %v554, %v553
      %v556 = vmul.f32 0.5, %v555
      %v557 = vsub.f32 1.5, %v556
      %v558 = vmul.f32 %v553, %v557
      %vm559 = vweird.f32 %v532
      %vm560 = vweird.f32 %v553
      %vm561 = vmor %vm559, %vm560
      %v562 = vsel %vm561, %v553, %v558
      %v563 = vmul.f32 %v512, %v542
      %v564 = vmul.f32 %v513, %v552
      %v565 = vmul.f32 %v514, %v562
      %v566 = vperm.slane %v471, 0
      %v567 = vmul.f32 %v563, %v566
      %v568 = vmul.f32 %v564, %v566
      %v569 = vmul.f32 %v565, %v566
      %v570 = vperm.slane %v471, 1
      %v571 = vadd.f32 %v567, %v570
      %v572 = vadd.f32 %v568, %v570
      %v573 = vadd.f32 %v569, %v570
      %v574 = vsel %vm488, 1, 0
      %v575 = vsel %vm489, 1, 0
      %v576 = vsel %vm490, 1, 0
      %vm577 = vcmp.eq.s32.totalorder %v574, 1
      %vm578 = vcmp.eq.s32.totalorder %v575, 1
      %vm579 = vcmp.eq.s32.totalorder %v576, 1
      %v580 = vsel %vm577, %v571, 0.0
      %v581 = vsel %vm578, %v572, 0.0
      %v582 = vsel %vm579, %v573, 0.0
      %v583 = vlaneseq
      %v584 = vand.u32 %v583, 127
      %v585 = vmul.u32 %v479, 2
      %vm586 = vcmp.eq.s32.totalorder %v584, %v585
      %v587 = vsel %vm586, 1, 0
      %v588 = vcvt.s32.f32 %v587
      %v589 = vld [vmem:[%s6] sm:$0x7]
      %v590 = vld [vmem:[%s4] sm:$0x7]
      %v591 = vperm.slane %v590, 0
      %v592 = vmul.f32 %v580, %v591
      %v593 = vmul.f32 %v581, %v591
      %v594 = vperm.slane %v590, 1
      %v595 = vmul.f32 %v580, %v594
      %v596 = vmul.f32 %v581, %v594
      %v597 = vmul.f32 %v582, %v594
      %vm601 = vcmask 1046528
      %v602 = vrot.slane %v595, 1
      %v603 = vrot.slane %v596, 1
      %v604 = vsel %vm601, %v602, %v603
      %v605 = vrot.slane %v597, 1
      %v606 = vsel %vm601, %v603, %v605
      %v609 = vadd.f32 %v592, %v604
      %v610 = vadd.f32 %v593, %v606
      %v611 = vperm.slane %v590, 2
      %v612 = vmul.f32 %v580, %v611
      %v613 = vmul.f32 %v581, %v611
      %v614 = vmul.f32 %v582, %v611
      %vm618 = vcmask 1045504
      %v619 = vrot.slane %v612, 2
      %v620 = vrot.slane %v613, 2
      %v621 = vsel %vm618, %v619, %v620
      %v622 = vrot.slane %v614, 2
      %v623 = vsel %vm618, %v620, %v622
      %v626 = vadd.f32 %v609, %v621
      %v627 = vadd.f32 %v610, %v623
      %vm628 = vcmask 130048
      %v630 = vsel %vm628, %v588, 0
      %632 = vmatpush.msra.mxu0 0.0
      %633 = vmatpush.msra.mxu0 0.0
      %634 = vmatpush.msra.mxu0 0.0
      %635 = vmatpush.msra.mxu0 0.0
      %636 = vmatpush.msra.mxu0 0.0
      %637 = vmatpush.msra.mxu0 0.0
      %638 = vmatpush.msra.mxu0 0.0
      %639 = vmatpush.msra.mxu0 0.0
      %640 = vmatpush.msra.mxu0 0.0
      %641 = vmatpush.msra.mxu0 0.0
      %642 = vmatpush.msra.mxu0 0.0
      %643 = vmatpush.msra.mxu0 0.0
      %644 = vmatpush.msra.mxu0 0.0
      %645 = vmatpush.msra.mxu0 0.0
      %646 = vmatpush.msra.mxu0 %v627
      %647 = vmatpush.msra.mxu0 %v626
      %648 = vmatmul.f32.gmra.mxu0 %v630
      %v649 = vpop.f32.mrf.mxu0
      %v650 = vadd.f32 0.0, %v649
      %651 = vdwg.mxu0
      %653 = vset.pattern.permute.xlu0 0
      %654 = vperm.xlu0 %653, %v476
      %v655 = vpop.permute.xlu0 %654
      %v657 = vmul.f32 %v650, %v655
      %v658 = vsel %vm491, %v657, 0.0
      %659 = vadd.xlane.f32.xlu0 %v658
      %v660 = vpop.xlane.xlu0 %659
      %v661 = vmul.f32 %v660, %v508
      %v662 = vsub.f32 %v657, %v661
      %v663 = vmul.f32 %v662, %v662
      %v664 = vsel %vm491, %v663, 0.0
      %665 = vadd.xlane.f32.xlu0 %v664
      %v666 = vpop.xlane.xlu0 %665
      %v667 = vmul.f32 %v666, %v508
      %v668 = vadd.f32 %v667, 1e-05
      %v669 = vrsqrt.pop %v668
      %v670 = vmul.f32 %v669, %v668
      %v671 = vmul.f32 %v670, %v669
      %v672 = vmul.f32 0.5, %v671
      %v673 = vsub.f32 1.5, %v672
      %v674 = vmul.f32 %v669, %v673
      %vm675 = vweird.f32 %v668
      %vm676 = vweird.f32 %v669
      %vm677 = vmor %vm675, %vm676
      %v678 = vsel %vm677, %v669, %v674
      %v679 = vmul.f32 %v662, %v678
      %v680 = vperm.slane %v471, 2
      %v681 = vmul.f32 %v679, %v680
      %v682 = vperm.slane %v471, 3
      %v683 = vadd.f32 %v681, %v682
      %v684 = vpack.c.bf16 %v683, %v683
      %v685 = vld [vmem:[%s5] sm:$0xff]
      %v686 = vld [vmem:[%s5 + $0x8] sm:$0xff]
      %v687 = vld [vmem:[%s5 + $0x10] sm:$0xff]
      %v688 = vld [vmem:[%s5 + $0x18] sm:$0xff]
      %v689 = vld [vmem:[%s5 + $0x20] sm:$0xff]
      %v690 = vld [vmem:[%s5 + $0x28] sm:$0xff]
      %v691 = vld [vmem:[%s5 + $0x30] sm:$0xff]
      %v692 = vld [vmem:[%s5 + $0x38] sm:$0xff]
      %v693 = vpack.c.bf16 %v686, %v685
      %v694 = vpack.c.bf16 %v688, %v687
      %v695 = vpack.c.bf16 %v690, %v689
      %v696 = vpack.c.bf16 %v692, %v691
      %v697 = vperm.slane %v589, 0
      %v699 = vsel %vm491, %v684, 0
      %701 = vmatpush.bf16.msra.mxu0 0
      %702 = vmatpush.bf16.msra.mxu0 0
      %703 = vmatpush.bf16.msra.mxu0 0
      %704 = vmatpush.bf16.msra.mxu0 0
      %705 = vmatpush.bf16.msra.mxu0 %v696
      %706 = vmatpush.bf16.msra.mxu0 %v695
      %707 = vmatpush.bf16.msra.mxu0 %v694
      %708 = vmatpush.bf16.msra.mxu0 %v693
      %709 = vmatmul.bf16.gmra.mxu0 %v699
      %v710 = vpop.f32.mrf.mxu0
      %v711 = vadd.f32 %v697, %v710
      %v712 = vpop.f32.mrf.mxu0
      %713 = vdwg.mxu0
      %s714 = scalar_lea.vmem %s4, 4
      %v715 = vld [vmem:[%s714] sm:$0x7]
      %v716 = vperm.slane %v715, 0
      %v717 = vmul.f32 %v580, %v716
      %v718 = vmul.f32 %v581, %v716
      %v719 = vperm.slane %v715, 1
      %v720 = vmul.f32 %v580, %v719
      %v721 = vmul.f32 %v581, %v719
      %v722 = vmul.f32 %v582, %v719
      %v726 = vrot.slane %v720, 1
      %v727 = vrot.slane %v721, 1
      %v728 = vsel %vm601, %v726, %v727
      %v729 = vrot.slane %v722, 1
      %v730 = vsel %vm601, %v727, %v729
      %v733 = vadd.f32 %v717, %v728
      %v734 = vadd.f32 %v718, %v730
      %v735 = vperm.slane %v715, 2
      %v736 = vmul.f32 %v580, %v735
      %v737 = vmul.f32 %v581, %v735
      %v738 = vmul.f32 %v582, %v735
      %v742 = vrot.slane %v736, 2
      %v743 = vrot.slane %v737, 2
      %v744 = vsel %vm618, %v742, %v743
      %v745 = vrot.slane %v738, 2
      %v746 = vsel %vm618, %v743, %v745
      %v749 = vadd.f32 %v733, %v744
      %v750 = vadd.f32 %v734, %v746
      %751 = vmatpush.msra.mxu0 0.0
      %752 = vmatpush.msra.mxu0 0.0
      %753 = vmatpush.msra.mxu0 0.0
      %754 = vmatpush.msra.mxu0 0.0
      %755 = vmatpush.msra.mxu0 0.0
      %756 = vmatpush.msra.mxu0 0.0
      %757 = vmatpush.msra.mxu0 0.0
      %758 = vmatpush.msra.mxu0 0.0
      %759 = vmatpush.msra.mxu0 0.0
      %760 = vmatpush.msra.mxu0 0.0
      %761 = vmatpush.msra.mxu0 0.0
      %762 = vmatpush.msra.mxu0 0.0
      %763 = vmatpush.msra.mxu0 0.0
      %764 = vmatpush.msra.mxu0 0.0
      %765 = vmatpush.msra.mxu0 %v750
      %766 = vmatpush.msra.mxu0 %v749
      %767 = vmatmul.f32.gmra.mxu0 %v630
      %v768 = vpop.f32.mrf.mxu0
      %v769 = vadd.f32 0.0, %v768
      %770 = vdwg.mxu0
      %v771 = vmul.f32 %v769, %v655
      %v772 = vsel %vm491, %v771, 0.0
      %773 = vadd.xlane.f32.xlu0 %v772
      %v774 = vpop.xlane.xlu0 %773
      %v775 = vmul.f32 %v774, %v508
      %v776 = vsub.f32 %v771, %v775
      %v777 = vmul.f32 %v776, %v776
      %v778 = vsel %vm491, %v777, 0.0
      %779 = vadd.xlane.f32.xlu0 %v778
      %v780 = vpop.xlane.xlu0 %779
      %v781 = vmul.f32 %v780, %v508
      %v782 = vadd.f32 %v781, 1e-05
      %v783 = vrsqrt.pop %v782
      %v784 = vmul.f32 %v783, %v782
      %v785 = vmul.f32 %v784, %v783
      %v786 = vmul.f32 0.5, %v785
      %v787 = vsub.f32 1.5, %v786
      %v788 = vmul.f32 %v783, %v787
      %vm789 = vweird.f32 %v782
      %vm790 = vweird.f32 %v783
      %vm791 = vmor %vm789, %vm790
      %v792 = vsel %vm791, %v783, %v788
      %v793 = vmul.f32 %v776, %v792
      %v794 = vperm.slane %v471, 4
      %v795 = vmul.f32 %v793, %v794
      %v796 = vperm.slane %v471, 5
      %v797 = vadd.f32 %v795, %v796
      %v798 = vpack.c.bf16 %v797, %v797
      %s799 = scalar_lea.vmem %s5, 64
      %v800 = vld [vmem:[%s799] sm:$0xff]
      %v801 = vld [vmem:[%s799 + $0x8] sm:$0xff]
      %v802 = vld [vmem:[%s799 + $0x10] sm:$0xff]
      %v803 = vld [vmem:[%s799 + $0x18] sm:$0xff]
      %v804 = vld [vmem:[%s799 + $0x20] sm:$0xff]
      %v805 = vld [vmem:[%s799 + $0x28] sm:$0xff]
      %v806 = vld [vmem:[%s799 + $0x30] sm:$0xff]
      %v807 = vld [vmem:[%s799 + $0x38] sm:$0xff]
      %v808 = vpack.c.bf16 %v801, %v800
      %v809 = vpack.c.bf16 %v803, %v802
      %v810 = vpack.c.bf16 %v805, %v804
      %v811 = vpack.c.bf16 %v807, %v806
      %v812 = vperm.slane %v589, 1
      %v814 = vsel %vm491, %v798, 0
      %816 = vmatpush.bf16.msra.mxu0 0
      %817 = vmatpush.bf16.msra.mxu0 0
      %818 = vmatpush.bf16.msra.mxu0 0
      %819 = vmatpush.bf16.msra.mxu0 0
      %820 = vmatpush.bf16.msra.mxu0 %v811
      %821 = vmatpush.bf16.msra.mxu0 %v810
      %822 = vmatpush.bf16.msra.mxu0 %v809
      %823 = vmatpush.bf16.msra.mxu0 %v808
      %824 = vmatmul.bf16.gmra.mxu0 %v814
      %v825 = vpop.f32.mrf.mxu0
      %v826 = vadd.f32 %v812, %v825
      %v827 = vpop.f32.mrf.mxu0
      %828 = vdwg.mxu0
      %s829 = scalar_lea.vmem %s4, 8
      %v830 = vld [vmem:[%s829] sm:$0x7]
      %v831 = vperm.slane %v830, 0
      %v832 = vmul.f32 %v580, %v831
      %v833 = vmul.f32 %v581, %v831
      %v834 = vperm.slane %v830, 1
      %v835 = vmul.f32 %v580, %v834
      %v836 = vmul.f32 %v581, %v834
      %v837 = vmul.f32 %v582, %v834
      %v841 = vrot.slane %v835, 1
      %v842 = vrot.slane %v836, 1
      %v843 = vsel %vm601, %v841, %v842
      %v844 = vrot.slane %v837, 1
      %v845 = vsel %vm601, %v842, %v844
      %v848 = vadd.f32 %v832, %v843
      %v849 = vadd.f32 %v833, %v845
      %v850 = vperm.slane %v830, 2
      %v851 = vmul.f32 %v580, %v850
      %v852 = vmul.f32 %v581, %v850
      %v853 = vmul.f32 %v582, %v850
      %v857 = vrot.slane %v851, 2
      %v858 = vrot.slane %v852, 2
      %v859 = vsel %vm618, %v857, %v858
      %v860 = vrot.slane %v853, 2
      %v861 = vsel %vm618, %v858, %v860
      %v864 = vadd.f32 %v848, %v859
      %v865 = vadd.f32 %v849, %v861
      %866 = vmatpush.msra.mxu0 0.0
      %867 = vmatpush.msra.mxu0 0.0
      %868 = vmatpush.msra.mxu0 0.0
      %869 = vmatpush.msra.mxu0 0.0
      %870 = vmatpush.msra.mxu0 0.0
      %871 = vmatpush.msra.mxu0 0.0
      %872 = vmatpush.msra.mxu0 0.0
      %873 = vmatpush.msra.mxu0 0.0
      %874 = vmatpush.msra.mxu0 0.0
      %875 = vmatpush.msra.mxu0 0.0
      %876 = vmatpush.msra.mxu0 0.0
      %877 = vmatpush.msra.mxu0 0.0
      %878 = vmatpush.msra.mxu0 0.0
      %879 = vmatpush.msra.mxu0 0.0
      %880 = vmatpush.msra.mxu0 %v865
      %881 = vmatpush.msra.mxu0 %v864
      %882 = vmatmul.f32.gmra.mxu0 %v630
      %v883 = vpop.f32.mrf.mxu0
      %v884 = vadd.f32 0.0, %v883
      %885 = vdwg.mxu0
      %v886 = vmul.f32 %v884, %v655
      %v887 = vsel %vm491, %v886, 0.0
      %888 = vadd.xlane.f32.xlu0 %v887
      %v889 = vpop.xlane.xlu0 %888
      %v890 = vmul.f32 %v889, %v508
      %v891 = vsub.f32 %v886, %v890
      %v892 = vmul.f32 %v891, %v891
      %v893 = vsel %vm491, %v892, 0.0
      %894 = vadd.xlane.f32.xlu0 %v893
      %v895 = vpop.xlane.xlu0 %894
      %v896 = vmul.f32 %v895, %v508
      %v897 = vadd.f32 %v896, 1e-05
      %v898 = vrsqrt.pop %v897
      %v899 = vmul.f32 %v898, %v897
      %v900 = vmul.f32 %v899, %v898
      %v901 = vmul.f32 0.5, %v900
      %v902 = vsub.f32 1.5, %v901
      %v903 = vmul.f32 %v898, %v902
      %vm904 = vweird.f32 %v897
      %vm905 = vweird.f32 %v898
      %vm906 = vmor %vm904, %vm905
      %v907 = vsel %vm906, %v898, %v903
      %v908 = vmul.f32 %v891, %v907
      %v909 = vperm.slane %v471, 6
      %v910 = vmul.f32 %v908, %v909
      %v911 = vperm.slane %v471, 7
      %v912 = vadd.f32 %v910, %v911
      %v913 = vpack.c.bf16 %v912, %v912
      %s914 = scalar_lea.vmem %s5, 128
      %v915 = vld [vmem:[%s914] sm:$0xff]
      %v916 = vld [vmem:[%s914 + $0x8] sm:$0xff]
      %v917 = vld [vmem:[%s914 + $0x10] sm:$0xff]
      %v918 = vld [vmem:[%s914 + $0x18] sm:$0xff]
      %v919 = vld [vmem:[%s914 + $0x20] sm:$0xff]
      %v920 = vld [vmem:[%s914 + $0x28] sm:$0xff]
      %v921 = vld [vmem:[%s914 + $0x30] sm:$0xff]
      %v922 = vld [vmem:[%s914 + $0x38] sm:$0xff]
      %v923 = vpack.c.bf16 %v916, %v915
      %v924 = vpack.c.bf16 %v918, %v917
      %v925 = vpack.c.bf16 %v920, %v919
      %v926 = vpack.c.bf16 %v922, %v921
      %v927 = vperm.slane %v589, 2
      %v929 = vsel %vm491, %v913, 0
      %931 = vmatpush.bf16.msra.mxu0 0
      %932 = vmatpush.bf16.msra.mxu0 0
      %933 = vmatpush.bf16.msra.mxu0 0
      %934 = vmatpush.bf16.msra.mxu0 0
      %935 = vmatpush.bf16.msra.mxu0 %v926
      %936 = vmatpush.bf16.msra.mxu0 %v925
      %937 = vmatpush.bf16.msra.mxu0 %v924
      %938 = vmatpush.bf16.msra.mxu0 %v923
      %939 = vmatmul.bf16.gmra.mxu0 %v929
      %v940 = vpop.f32.mrf.mxu0
      %v941 = vadd.f32 %v927, %v940
      %v942 = vpop.f32.mrf.mxu0
      %943 = vdwg.mxu0
      %v944 = vmul.f32 %v711, 0.25
      %v945 = vpack.c.bf16 %v944, %v944
      %v946 = vpack.c.bf16 %v826, %v826
      %v947 = vpack.c.bf16 %v941, %v941
      %v949 = vsel %vm628, %v945, 0
      %v952 = vsel %vm628, %v946, 0
      %954 = vmatpush.bf16.xpose.msra.mxu0 0
      %955 = vmatpush.bf16.xpose.msra.mxu0 0
      %956 = vmatpush.bf16.xpose.msra.mxu0 0
      %957 = vmatpush.bf16.xpose.msra.mxu0 0
      %958 = vmatpush.bf16.xpose.msra.mxu0 0
      %959 = vmatpush.bf16.xpose.msra.mxu0 0
      %960 = vmatpush.bf16.xpose.msra.mxu0 0
      %961 = vmatpush.bf16.xpose.msra.mxu0 %v952
      %962 = vmatmul.bf16.gmra.mxu0 %v949
      %v963 = vpop.f32.mrf.mxu0
      %v964 = vadd.f32 0.0, %v963
      %v965 = vpop.f32.mrf.mxu0
      %966 = vdwg.mxu0
      %vm967 = vcmp.gt.f32.partialorder %v477, 0.0
      %v968 = vsel %vm967, 1, 0
      %v969 = vperm.slane %v968, 0
      %vm970 = vcmp.eq.s32.totalorder %v969, 1
      %v971 = vsel %vm970, %v964, -1e+30
      %vm972 = vcmask 64512
      %v973 = vsel %vm972, %v971, -inf
      %974 = vmax.xlane.f32.xlu0 %v973
      %v975 = vpop.xlane.xlu0 %974
      %v976 = vsub.f32 %v971, %v975
      %v977 = vmul.f32 %v976, 1.442695
      %v978 = vpow.pop %v977
      %v979 = vsel %vm972, %v978, 0.0
      %980 = vadd.xlane.f32.xlu0 %v979
      %v981 = vpop.xlane.xlu0 %980
      %v982 = vrcp.pop %v981
      %v983 = vmul.f32 %v978, %v982
      %v984 = vpack.c.bf16 %v983, %v983
      %v986 = vsel %vm972, %v984, 0
      %vm988 = vcmask 1043456
      %v990 = vsel %vm988, %v947, 0
      %992 = vmatpush.bf16.msra.mxu0 0
      %993 = vmatpush.bf16.msra.mxu0 0
      %994 = vmatpush.bf16.msra.mxu0 0
      %995 = vmatpush.bf16.msra.mxu0 0
      %996 = vmatpush.bf16.msra.mxu0 0
      %997 = vmatpush.bf16.msra.mxu0 0
      %998 = vmatpush.bf16.msra.mxu0 0
      %999 = vmatpush.bf16.msra.mxu0 %v990
      %1000 = vmatmul.bf16.gmra.mxu0 %v986
      %v1001 = vpop.f32.mrf.mxu0
      %v1002 = vadd.f32 0.0, %v1001
      %v1003 = vpop.f32.mrf.mxu0
      %1004 = vdwg.mxu0
      %1006 = vrot.lane.b32.xlu0 %v945, 112
      %v1007 = vpop.permute.xlu0 %1006
      %1009 = vrot.lane.b32.xlu0 %v946, 112
      %v1010 = vpop.permute.xlu0 %1009
      %v1012 = vsel %vm628, %v1007, 0
      %v1015 = vsel %vm628, %v1010, 0
      %1017 = vmatpush.bf16.xpose.msra.mxu0 0
      %1018 = vmatpush.bf16.xpose.msra.mxu0 0
      %1019 = vmatpush.bf16.xpose.msra.mxu0 0
      %1020 = vmatpush.bf16.xpose.msra.mxu0 0
      %1021 = vmatpush.bf16.xpose.msra.mxu0 0
      %1022 = vmatpush.bf16.xpose.msra.mxu0 0
      %1023 = vmatpush.bf16.xpose.msra.mxu0 0
      %1024 = vmatpush.bf16.xpose.msra.mxu0 %v1015
      %1025 = vmatmul.bf16.gmra.mxu0 %v1012
      %v1026 = vpop.f32.mrf.mxu0
      %v1027 = vadd.f32 0.0, %v1026
      %v1028 = vpop.f32.mrf.mxu0
      %1029 = vdwg.mxu0
      %v1030 = vsel %vm970, %v1027, -1e+30
      %v1031 = vsel %vm972, %v1030, -inf
      %1032 = vmax.xlane.f32.xlu0 %v1031
      %v1033 = vpop.xlane.xlu0 %1032
      %v1034 = vsub.f32 %v1030, %v1033
      %v1035 = vmul.f32 %v1034, 1.442695
      %v1036 = vpow.pop %v1035
      %v1037 = vsel %vm972, %v1036, 0.0
      %1038 = vadd.xlane.f32.xlu0 %v1037
      %v1039 = vpop.xlane.xlu0 %1038
      %v1040 = vrcp.pop %v1039
      %v1041 = vmul.f32 %v1036, %v1040
      %v1042 = vpack.c.bf16 %v1041, %v1041
      %1044 = vrot.lane.b32.xlu0 %v947, 112
      %v1045 = vpop.permute.xlu0 %1044
      %v1047 = vsel %vm972, %v1042, 0
      %v1050 = vsel %vm988, %v1045, 0
      %1052 = vmatpush.bf16.msra.mxu0 0
      %1053 = vmatpush.bf16.msra.mxu0 0
      %1054 = vmatpush.bf16.msra.mxu0 0
      %1055 = vmatpush.bf16.msra.mxu0 0
      %1056 = vmatpush.bf16.msra.mxu0 0
      %1057 = vmatpush.bf16.msra.mxu0 0
      %1058 = vmatpush.bf16.msra.mxu0 0
      %1059 = vmatpush.bf16.msra.mxu0 %v1050
      %1060 = vmatmul.bf16.gmra.mxu0 %v1047
      %v1061 = vpop.f32.mrf.mxu0
      %v1062 = vadd.f32 0.0, %v1061
      %v1063 = vpop.f32.mrf.mxu0
      %1064 = vdwg.mxu0
      %1065 = vrot.lane.b32.xlu0 %v945, 96
      %v1066 = vpop.permute.xlu0 %1065
      %1067 = vrot.lane.b32.xlu0 %v946, 96
      %v1068 = vpop.permute.xlu0 %1067
      %v1070 = vsel %vm628, %v1066, 0
      %v1073 = vsel %vm628, %v1068, 0
      %1075 = vmatpush.bf16.xpose.msra.mxu0 0
      %1076 = vmatpush.bf16.xpose.msra.mxu0 0
      %1077 = vmatpush.bf16.xpose.msra.mxu0 0
      %1078 = vmatpush.bf16.xpose.msra.mxu0 0
      %1079 = vmatpush.bf16.xpose.msra.mxu0 0
      %1080 = vmatpush.bf16.xpose.msra.mxu0 0
      %1081 = vmatpush.bf16.xpose.msra.mxu0 0
      %1082 = vmatpush.bf16.xpose.msra.mxu0 %v1073
      %1083 = vmatmul.bf16.gmra.mxu0 %v1070
      %v1084 = vpop.f32.mrf.mxu0
      %v1085 = vadd.f32 0.0, %v1084
      %v1086 = vpop.f32.mrf.mxu0
      %1087 = vdwg.mxu0
      %v1088 = vsel %vm970, %v1085, -1e+30
      %v1089 = vsel %vm972, %v1088, -inf
      %1090 = vmax.xlane.f32.xlu0 %v1089
      %v1091 = vpop.xlane.xlu0 %1090
      %v1092 = vsub.f32 %v1088, %v1091
      %v1093 = vmul.f32 %v1092, 1.442695
      %v1094 = vpow.pop %v1093
      %v1095 = vsel %vm972, %v1094, 0.0
      %1096 = vadd.xlane.f32.xlu0 %v1095
      %v1097 = vpop.xlane.xlu0 %1096
      %v1098 = vrcp.pop %v1097
      %v1099 = vmul.f32 %v1094, %v1098
      %v1100 = vpack.c.bf16 %v1099, %v1099
      %1101 = vrot.lane.b32.xlu0 %v947, 96
      %v1102 = vpop.permute.xlu0 %1101
      %v1104 = vsel %vm972, %v1100, 0
      %v1107 = vsel %vm988, %v1102, 0
      %1109 = vmatpush.bf16.msra.mxu0 0
      %1110 = vmatpush.bf16.msra.mxu0 0
      %1111 = vmatpush.bf16.msra.mxu0 0
      %1112 = vmatpush.bf16.msra.mxu0 0
      %1113 = vmatpush.bf16.msra.mxu0 0
      %1114 = vmatpush.bf16.msra.mxu0 0
      %1115 = vmatpush.bf16.msra.mxu0 0
      %1116 = vmatpush.bf16.msra.mxu0 %v1107
      %1117 = vmatmul.bf16.gmra.mxu0 %v1104
      %v1118 = vpop.f32.mrf.mxu0
      %v1119 = vadd.f32 0.0, %v1118
      %v1120 = vpop.f32.mrf.mxu0
      %1121 = vdwg.mxu0
      %1122 = vrot.lane.b32.xlu0 %v945, 80
      %v1123 = vpop.permute.xlu0 %1122
      %1124 = vrot.lane.b32.xlu0 %v946, 80
      %v1125 = vpop.permute.xlu0 %1124
      %v1127 = vsel %vm628, %v1123, 0
      %v1130 = vsel %vm628, %v1125, 0
      %1132 = vmatpush.bf16.xpose.msra.mxu0 0
      %1133 = vmatpush.bf16.xpose.msra.mxu0 0
      %1134 = vmatpush.bf16.xpose.msra.mxu0 0
      %1135 = vmatpush.bf16.xpose.msra.mxu0 0
      %1136 = vmatpush.bf16.xpose.msra.mxu0 0
      %1137 = vmatpush.bf16.xpose.msra.mxu0 0
      %1138 = vmatpush.bf16.xpose.msra.mxu0 0
      %1139 = vmatpush.bf16.xpose.msra.mxu0 %v1130
      %1140 = vmatmul.bf16.gmra.mxu0 %v1127
      %v1141 = vpop.f32.mrf.mxu0
      %v1142 = vadd.f32 0.0, %v1141
      %v1143 = vpop.f32.mrf.mxu0
      %1144 = vdwg.mxu0
      %v1145 = vsel %vm970, %v1142, -1e+30
      %v1146 = vsel %vm972, %v1145, -inf
      %1147 = vmax.xlane.f32.xlu0 %v1146
      %v1148 = vpop.xlane.xlu0 %1147
      %v1149 = vsub.f32 %v1145, %v1148
      %v1150 = vmul.f32 %v1149, 1.442695
      %v1151 = vpow.pop %v1150
      %v1152 = vsel %vm972, %v1151, 0.0
      %1153 = vadd.xlane.f32.xlu0 %v1152
      %v1154 = vpop.xlane.xlu0 %1153
      %v1155 = vrcp.pop %v1154
      %v1156 = vmul.f32 %v1151, %v1155
      %v1157 = vpack.c.bf16 %v1156, %v1156
      %1158 = vrot.lane.b32.xlu0 %v947, 80
      %v1159 = vpop.permute.xlu0 %1158
      %v1161 = vsel %vm972, %v1157, 0
      %v1164 = vsel %vm988, %v1159, 0
      %1166 = vmatpush.bf16.msra.mxu0 0
      %1167 = vmatpush.bf16.msra.mxu0 0
      %1168 = vmatpush.bf16.msra.mxu0 0
      %1169 = vmatpush.bf16.msra.mxu0 0
      %1170 = vmatpush.bf16.msra.mxu0 0
      %1171 = vmatpush.bf16.msra.mxu0 0
      %1172 = vmatpush.bf16.msra.mxu0 0
      %1173 = vmatpush.bf16.msra.mxu0 %v1164
      %1174 = vmatmul.bf16.gmra.mxu0 %v1161
      %v1175 = vpop.f32.mrf.mxu0
      %v1176 = vadd.f32 0.0, %v1175
      %v1177 = vpop.f32.mrf.mxu0
      %1178 = vdwg.mxu0
      %1180 = vrot.lane.b32.xlu0 %v1062, 16
      %v1181 = vpop.permute.xlu0 %1180
      %1184 = vrot.lane.b32.xlu0 %v1119, 32
      %v1185 = vpop.permute.xlu0 %1184
      %1188 = vrot.lane.b32.xlu0 %v1176, 48
      %v1189 = vpop.permute.xlu0 %1188
      %v1191 = vsel %vm628, %v1002, %v1181
      %vm1192 = vcmask 261120
      %v1193 = vsel %vm1192, %v1191, %v1185
      %vm1194 = vcmask 392192
      %v1195 = vsel %vm1194, %v1193, %v1189
      %v1196 = vpack.c.bf16 %v1195, %v1195
      %v1197 = vld [vmem:[%s7] sm:$0xff]
      %v1198 = vld [vmem:[%s7 + $0x8] sm:$0xff]
      %v1199 = vld [vmem:[%s7 + $0x10] sm:$0xff]
      %v1200 = vld [vmem:[%s7 + $0x18] sm:$0xff]
      %v1201 = vld [vmem:[%s7 + $0x20] sm:$0xff]
      %v1202 = vld [vmem:[%s7 + $0x28] sm:$0xff]
      %v1203 = vld [vmem:[%s7 + $0x30] sm:$0xff]
      %v1204 = vld [vmem:[%s7 + $0x38] sm:$0xff]
      %v1205 = vpack.c.bf16 %v1198, %v1197
      %v1206 = vpack.c.bf16 %v1200, %v1199
      %v1207 = vpack.c.bf16 %v1202, %v1201
      %v1208 = vpack.c.bf16 %v1204, %v1203
      %v1209 = vld [vmem:[%s8] sm:$0x1]
      %v1211 = vperm.slane %v1209, 0
      %v1214 = vsel %vm491, %v1196, 0
      %1216 = vmatpush.bf16.msra.mxu0 0
      %1217 = vmatpush.bf16.msra.mxu0 0
      %1218 = vmatpush.bf16.msra.mxu0 0
      %1219 = vmatpush.bf16.msra.mxu0 0
      %1220 = vmatpush.bf16.msra.mxu0 %v1208
      %1221 = vmatpush.bf16.msra.mxu0 %v1207
      %1222 = vmatpush.bf16.msra.mxu0 %v1206
      %1223 = vmatpush.bf16.msra.mxu0 %v1205
      %1224 = vmatmul.bf16.gmra.mxu0 %v1214
      %v1225 = vpop.f32.mrf.mxu0
      %v1226 = vadd.f32 %v1211, %v1225
      %v1227 = vpop.f32.mrf.mxu0
      %1228 = vdwg.mxu0
      %v1229 = vmul.f32 %v1226, %v655
      %v1230 = vsel %vm577, %v473, -1e+30
      %v1231 = vsel %vm578, %v474, -1e+30
      %v1232 = vsel %vm579, %v475, -1e+30
      %v1236 = vrot.slane %v1230, 1
      %v1237 = vrot.slane %v1231, 1
      %v1238 = vsel %vm601, %v1236, %v1237
      %v1239 = vrot.slane %v1232, 1
      %v1240 = vsel %vm601, %v1237, %v1239
      %v1243 = vmax.f32 %v1230, %v1238
      %v1244 = vmax.f32 %v1231, %v1240
      %v1245 = vrot.slane %v1230, 2
      %v1246 = vrot.slane %v1231, 2
      %v1247 = vsel %vm618, %v1245, %v1246
      %v1248 = vrot.slane %v1232, 2
      %v1249 = vsel %vm618, %v1246, %v1248
      %v1252 = vmax.f32 %v1243, %v1247
      %v1253 = vmax.f32 %v1244, %v1249
      %1254 = vmatpush.msra.mxu0 0.0
      %1255 = vmatpush.msra.mxu0 0.0
      %1256 = vmatpush.msra.mxu0 0.0
      %1257 = vmatpush.msra.mxu0 0.0
      %1258 = vmatpush.msra.mxu0 0.0
      %1259 = vmatpush.msra.mxu0 0.0
      %1260 = vmatpush.msra.mxu0 0.0
      %1261 = vmatpush.msra.mxu0 0.0
      %1262 = vmatpush.msra.mxu0 0.0
      %1263 = vmatpush.msra.mxu0 0.0
      %1264 = vmatpush.msra.mxu0 0.0
      %1265 = vmatpush.msra.mxu0 0.0
      %1266 = vmatpush.msra.mxu0 0.0
      %1267 = vmatpush.msra.mxu0 0.0
      %1268 = vmatpush.msra.mxu0 %v1253
      %1269 = vmatpush.msra.mxu0 %v1252
      %1270 = vmatmul.f32.gmra.mxu0 %v630
      %v1271 = vpop.f32.mrf.mxu0
      %v1272 = vadd.f32 0.0, %v1271
      %1273 = vdwg.mxu0
      %v1274 = vmul.f32 %v1272, %v655
      %v1275 = vadd.f32 %v1274, %v1229
      %v1276 = vsel %vm491, %v1275, 0.0
      %1277 = vadd.xlane.f32.xlu0 %v1276
      %v1278 = vpop.xlane.xlu0 %1277
      %v1279 = vmul.f32 %v1278, %v508
      %v1280 = vsub.f32 %v1275, %v1279
      %v1281 = vmul.f32 %v1280, %v1280
      %v1282 = vsel %vm491, %v1281, 0.0
      %1283 = vadd.xlane.f32.xlu0 %v1282
      %v1284 = vpop.xlane.xlu0 %1283
      %v1285 = vmul.f32 %v1284, %v508
      %v1286 = vadd.f32 %v1285, 1e-05
      %v1287 = vrsqrt.pop %v1286
      %v1288 = vmul.f32 %v1287, %v1286
      %v1289 = vmul.f32 %v1288, %v1287
      %v1290 = vmul.f32 0.5, %v1289
      %v1291 = vsub.f32 1.5, %v1290
      %v1292 = vmul.f32 %v1287, %v1291
      %vm1293 = vweird.f32 %v1286
      %vm1294 = vweird.f32 %v1287
      %vm1295 = vmor %vm1293, %vm1294
      %v1296 = vsel %vm1295, %v1287, %v1292
      %v1297 = vmul.f32 %v1280, %v1296
      %v1298 = vperm.slane %v472, 0
      %v1299 = vmul.f32 %v1297, %v1298
      %v1300 = vperm.slane %v472, 1
      %v1301 = vadd.f32 %v1299, %v1300
      %v1302 = vpack.c.bf16 %v1301, %v1301
      %v1303 = vld [vmem:[%s9] sm:$0xff]
      %v1304 = vld [vmem:[%s9 + $0x8] sm:$0xff]
      %v1305 = vld [vmem:[%s9 + $0x10] sm:$0xff]
      %v1306 = vld [vmem:[%s9 + $0x18] sm:$0xff]
      %v1307 = vld [vmem:[%s9 + $0x20] sm:$0xff]
      %v1308 = vld [vmem:[%s9 + $0x28] sm:$0xff]
      %v1309 = vld [vmem:[%s9 + $0x30] sm:$0xff]
      %v1310 = vld [vmem:[%s9 + $0x38] sm:$0xff]
      %v1311 = vld [vmem:[%s9 + $0x40] sm:$0xff]
      %v1312 = vld [vmem:[%s9 + $0x48] sm:$0xff]
      %v1313 = vld [vmem:[%s9 + $0x50] sm:$0xff]
      %v1314 = vld [vmem:[%s9 + $0x58] sm:$0xff]
      %v1315 = vld [vmem:[%s9 + $0x60] sm:$0xff]
      %v1316 = vld [vmem:[%s9 + $0x68] sm:$0xff]
      %v1317 = vld [vmem:[%s9 + $0x70] sm:$0xff]
      %v1318 = vld [vmem:[%s9 + $0x78] sm:$0xff]
      %v1319 = vpack.c.bf16 %v1305, %v1303
      %v1320 = vpack.c.bf16 %v1306, %v1304
      %v1321 = vpack.c.bf16 %v1309, %v1307
      %v1322 = vpack.c.bf16 %v1310, %v1308
      %v1323 = vpack.c.bf16 %v1313, %v1311
      %v1324 = vpack.c.bf16 %v1314, %v1312
      %v1325 = vpack.c.bf16 %v1317, %v1315
      %v1326 = vpack.c.bf16 %v1318, %v1316
      %v1327 = vld [vmem:[%s10] sm:$0x3]
      %v1329 = vperm.slane %v1327, 0
      %v1330 = vperm.slane %v1327, 1
      %v1334 = vsel %vm491, %v1302, 0
      %1336 = vmatpush.bf16.msra.mxu0 0
      %1337 = vmatpush.bf16.msra.mxu0 0
      %1338 = vmatpush.bf16.msra.mxu0 0
      %1339 = vmatpush.bf16.msra.mxu0 0
      %1340 = vmatpush.bf16.msra.mxu0 %v1325
      %1341 = vmatpush.bf16.msra.mxu0 %v1323
      %1342 = vmatpush.bf16.msra.mxu0 %v1321
      %1343 = vmatpush.bf16.msra.mxu0 %v1319
      %1344 = vmatmul.bf16.gmra.mxu0 %v1334
      %v1345 = vpop.f32.mrf.mxu0
      %v1346 = vadd.f32 %v1329, %v1345
      %v1347 = vpop.f32.mrf.mxu0
      %1348 = vdwg.mxu0
      %1349 = vmatpush.bf16.msra.mxu0 0
      %1350 = vmatpush.bf16.msra.mxu0 0
      %1351 = vmatpush.bf16.msra.mxu0 0
      %1352 = vmatpush.bf16.msra.mxu0 0
      %1353 = vmatpush.bf16.msra.mxu0 %v1326
      %1354 = vmatpush.bf16.msra.mxu0 %v1324
      %1355 = vmatpush.bf16.msra.mxu0 %v1322
      %1356 = vmatpush.bf16.msra.mxu0 %v1320
      %1357 = vmatmul.bf16.gmra.mxu0 %v1334
      %v1358 = vpop.f32.mrf.mxu0
      %v1359 = vadd.f32 %v1330, %v1358
      %v1360 = vpop.f32.mrf.mxu0
      %1361 = vdwg.mxu0
      %v1362 = vmul.f32 %v1346, 0.5
      %v1363 = vmul.f32 %v1359, 0.5
      %v1364 = vmul.f32 %v1346, 0.044715
      %v1365 = vmul.f32 %v1359, 0.044715
      %v1366 = vmul.f32 %v1364, %v1346
      %v1367 = vmul.f32 %v1365, %v1359
      %v1368 = vmul.f32 %v1366, %v1346
      %v1369 = vmul.f32 %v1367, %v1359
      %v1370 = vadd.f32 %v1346, %v1368
      %v1371 = vadd.f32 %v1359, %v1369
      %v1372 = vmul.f32 %v1370, 0.7978846
      %v1373 = vmul.f32 %v1371, 0.7978846
      %v1374 = vtanh.pop %v1372
      %v1375 = vtanh.pop %v1373
      %v1376 = vadd.f32 %v1374, 1.0
      %v1377 = vadd.f32 %v1375, 1.0
      %v1378 = vmul.f32 %v1362, %v1376
      %v1379 = vmul.f32 %v1363, %v1377
      %v1380 = vpack.c.bf16 %v1378, %v1378
      %v1381 = vpack.c.bf16 %v1379, %v1379
      %v1382 = vld [vmem:[%s11] sm:$0xff]
      %v1383 = vld [vmem:[%s11 + $0x8] sm:$0xff]
      %v1384 = vld [vmem:[%s11 + $0x10] sm:$0xff]
      %v1385 = vld [vmem:[%s11 + $0x18] sm:$0xff]
      %v1386 = vld [vmem:[%s11 + $0x20] sm:$0xff]
      %v1387 = vld [vmem:[%s11 + $0x28] sm:$0xff]
      %v1388 = vld [vmem:[%s11 + $0x30] sm:$0xff]
      %v1389 = vld [vmem:[%s11 + $0x38] sm:$0xff]
      %v1390 = vld [vmem:[%s11 + $0x40] sm:$0xff]
      %v1391 = vld [vmem:[%s11 + $0x48] sm:$0xff]
      %v1392 = vld [vmem:[%s11 + $0x50] sm:$0xff]
      %v1393 = vld [vmem:[%s11 + $0x58] sm:$0xff]
      %v1394 = vld [vmem:[%s11 + $0x60] sm:$0xff]
      %v1395 = vld [vmem:[%s11 + $0x68] sm:$0xff]
      %v1396 = vld [vmem:[%s11 + $0x70] sm:$0xff]
      %v1397 = vld [vmem:[%s11 + $0x78] sm:$0xff]
      %v1398 = vld [vmem:[%s11 + $0x80] sm:$0xff]
      %v1399 = vld [vmem:[%s11 + $0x88] sm:$0xff]
      %v1400 = vld [vmem:[%s11 + $0x90] sm:$0xff]
      %v1401 = vld [vmem:[%s11 + $0x98] sm:$0xff]
      %v1402 = vld [vmem:[%s11 + $0xa0] sm:$0xff]
      %v1403 = vld [vmem:[%s11 + $0xa8] sm:$0xff]
      %v1404 = vld [vmem:[%s11 + $0xb0] sm:$0xff]
      %v1405 = vld [vmem:[%s11 + $0xb8] sm:$0xff]
      %v1406 = vld [vmem:[%s11 + $0xc0] sm:$0xff]
      %v1407 = vld [vmem:[%s11 + $0xc8] sm:$0xff]
      %v1408 = vld [vmem:[%s11 + $0xd0] sm:$0xff]
      %v1409 = vld [vmem:[%s11 + $0xd8] sm:$0xff]
      %v1410 = vld [vmem:[%s11 + $0xe0] sm:$0xff]
      %v1411 = vld [vmem:[%s11 + $0xe8] sm:$0xff]
      %v1412 = vld [vmem:[%s11 + $0xf0] sm:$0xff]
      %v1413 = vld [vmem:[%s11 + $0xf8] sm:$0xff]
      %v1414 = vpack.c.bf16 %v1383, %v1382
      %v1415 = vpack.c.bf16 %v1385, %v1384
      %v1416 = vpack.c.bf16 %v1387, %v1386
      %v1417 = vpack.c.bf16 %v1389, %v1388
      %v1418 = vpack.c.bf16 %v1391, %v1390
      %v1419 = vpack.c.bf16 %v1393, %v1392
      %v1420 = vpack.c.bf16 %v1395, %v1394
      %v1421 = vpack.c.bf16 %v1397, %v1396
      %v1422 = vpack.c.bf16 %v1399, %v1398
      %v1423 = vpack.c.bf16 %v1401, %v1400
      %v1424 = vpack.c.bf16 %v1403, %v1402
      %v1425 = vpack.c.bf16 %v1405, %v1404
      %v1426 = vpack.c.bf16 %v1407, %v1406
      %v1427 = vpack.c.bf16 %v1409, %v1408
      %v1428 = vpack.c.bf16 %v1411, %v1410
      %v1429 = vpack.c.bf16 %v1413, %v1412
      %v1430 = vld [vmem:[%s12] sm:$0x1]
      %v1432 = vperm.slane %v1430, 0
      %1434 = vmatpush.bf16.msra.mxu0 %v1421
      %1435 = vmatpush.bf16.msra.mxu0 %v1420
      %1436 = vmatpush.bf16.msra.mxu0 %v1419
      %1437 = vmatpush.bf16.msra.mxu0 %v1418
      %1438 = vmatpush.bf16.msra.mxu0 %v1417
      %1439 = vmatpush.bf16.msra.mxu0 %v1416
      %1440 = vmatpush.bf16.msra.mxu0 %v1415
      %1441 = vmatpush.bf16.msra.mxu0 %v1414
      %1442 = vmatmul.bf16.gmra.mxu0 %v1380
      %v1443 = vpop.f32.mrf.mxu0
      %v1444 = vadd.f32 %v1432, %v1443
      %v1445 = vpop.f32.mrf.mxu0
      %1446 = vdwg.mxu0
      %1447 = vmatpush.bf16.msra.mxu0 %v1429
      %1448 = vmatpush.bf16.msra.mxu0 %v1428
      %1449 = vmatpush.bf16.msra.mxu0 %v1427
      %1450 = vmatpush.bf16.msra.mxu0 %v1426
      %1451 = vmatpush.bf16.msra.mxu0 %v1425
      %1452 = vmatpush.bf16.msra.mxu0 %v1424
      %1453 = vmatpush.bf16.msra.mxu0 %v1423
      %1454 = vmatpush.bf16.msra.mxu0 %v1422
      %1455 = vmatmul.bf16.gmra.mxu0 %v1381
      %v1456 = vpop.f32.mrf.mxu0
      %v1457 = vadd.f32 %v1444, %v1456
      %v1458 = vpop.f32.mrf.mxu0
      %1459 = vdwg.mxu0
      %v1460 = vmul.f32 %v1457, %v655
      %v1461 = vadd.f32 %v1275, %v1460
      %1462 = vst.msk [vmem:[%s469] sm:$0xff] %vm491, %v1461
      %p1463 = scmp.lt.s32.totalorder %s24, 1
      %s1464 = scalar_select %p1463, %s24, 1
      %s1465 = smul.addr %s1464, 8
      %s1466 = scalar_lea.vmem %s13, %s1465
      // Predicated region
      $region73: #{pc_transformer_proj_forward.10} parent=71 // pred_check
        %p1467 = pneg %p330
      $region74: #{pc_transformer_proj_forward.10} parent=71 // pred_check_branch
        %1469 = sbr.rel (%p1467) target = $region76
      $region75: #{pc_transformer_proj_forward.10} parent=71 // pred_region
        _
      $region76: #{pc_transformer_proj_forward.10} parent=71 // pred_fallthru
        _
    $region72: #{pc_transformer_proj_forward.10} parent=5 // pred_fallthru
      _
    %p1470 = scmp.le.s32.totalorder 2, %s19
    // Predicated region
    $region77: #{pc_transformer_proj_forward.10} parent=5 // pred_check
      %p1471 = pneg %p1470
    $region78: #{pc_transformer_proj_forward.10} parent=5 // pred_check_branch
      %1473 = sbr.rel (%p1471) target = $region80
    $region79: #{pc_transformer_proj_forward.10} parent=5 // pred_region
      %s1474 = ssub.s32 %s19, 2
      // Predicated region
      $region81: #{pc_transformer_proj_forward.10} parent=79 // pred_check
        %p1475 = pneg %p336
      $region82: #{pc_transformer_proj_forward.10} parent=79 // pred_check_branch
        %1477 = sbr.rel (%p1475) target = $region84
      $region83: #{pc_transformer_proj_forward.10} parent=79 // pred_region
        %p1478 = scmp.lt.s32.totalorder %s25, 1
        %s1479 = scalar_select %p1478, %s25, 1
        %s1480 = smul.addr %s1479, 8
        %s1481 = scalar_lea.vmem %s13, %s1480
      $region84: #{pc_transformer_proj_forward.10} parent=79 // pred_fallthru
        _
    $region80: #{pc_transformer_proj_forward.10} parent=5 // pred_fallthru
      _
  $region6: #{pc_transformer_proj_forward.10} parent=0 // loop_footer
    %s23 = sadd.s32 1, %s19
  $region7: #{pc_transformer_proj_forward.10} parent=0 // loop_footer_branch
    %18 = sbr.rel target = $region3
  $region8: #{pc_transformer_proj_forward.10} parent=0 // loop_exit
    _

// kernel: pc_transformer_proj_forward.9
$region0: #{pc_transformer_proj_forward.9}
  #allocation0 [shape = 'u32[]', space=smem, size = 0x4, offset = 0x4, fixed_abs, tag = 'smem constant byte address 0x4 - core index']
  #allocation1 [shape = 'u32[72,128]{1,0:T(1,128)}', space=vmem, size = 0x9000, scoped, tag = 'internal scratch']
  %s0 = inlined_call_operand.vmem [shape: f32[2,18,64], index: 0, kind: input, shape index: {}]
  %s1 = inlined_call_operand.vmem [shape: f32[2,16,1], index: 1, kind: input, shape index: {}]
  %s2 = inlined_call_operand.vmem [shape: f32[2,1,16], index: 2, kind: input, shape index: {}]
  %s3 = inlined_call_operand.vmem [shape: f32[10,64], index: 3, kind: input, shape index: {}]
  %s4 = inlined_call_operand.vmem [shape: f32[3,3,64], index: 4, kind: input, shape index: {}]
  %s5 = inlined_call_operand.vmem [shape: f32[3,64,64], index: 5, kind: input, shape index: {}]
  %s6 = inlined_call_operand.vmem [shape: f32[3,64], index: 6, kind: input, shape index: {}]
  %s7 = inlined_call_operand.vmem [shape: f32[64,64], index: 7, kind: input, shape index: {}]
  %s8 = inlined_call_operand.vmem [shape: f32[1,64], index: 8, kind: input, shape index: {}]
  %s9 = inlined_call_operand.vmem [shape: f32[64,256], index: 9, kind: input, shape index: {}]
  %s10 = inlined_call_operand.vmem [shape: f32[1,256], index: 10, kind: input, shape index: {}]
  %s11 = inlined_call_operand.vmem [shape: f32[256,64], index: 11, kind: input, shape index: {}]
  %s12 = inlined_call_operand.vmem [shape: f32[1,64], index: 12, kind: input, shape index: {}]
  %s13 = inlined_call_operand.vmem [shape: f32[2,16,64], index: 13, kind: output, shape index: {}]
  %s14 = sld [smem:[#allocation0]]
  $region85: #{pc_transformer_proj_forward.9} parent=0
    _
  %s16 = ssub.s32 1, %s14
  %s17 = scalar_select 0, %s16, %s14
  loop: start=0, step=1, limit=4
  $region2: #{pc_transformer_proj_forward.9} parent=0 // loop_pre_header
    _
  $region3: #{pc_transformer_proj_forward.9} parent=0 // loop_header
    %s19 = sphi 0, %s23
    %p20 = scmp.ge.s32.totalorder %s19, 4
    %s29 = sphi 0, %s31
    %s32 = sphi 0, %s29
    %s33 = sphi 0, %s32
    %s49 = sphi 0, %s33
    %s55 = sphi 0, %s57
    %s58 = sphi 0, %s55
    %s59 = sphi 0, %s58
    %s75 = sphi 0, %s59
    %s81 = sphi 0, %s83
    %s84 = sphi 0, %s81
    %s85 = sphi 0, %s84
    %s101 = sphi 0, %s85
    %s105 = sphi 0, %s105
    %s107 = sphi 0, %s105
    %s108 = sphi 0, %s107
    %s122 = sphi 0, %s108
    %s126 = sphi 0, %s126
    %s128 = sphi 0, %s126
    %s129 = sphi 0, %s128
    %s143 = sphi 0, %s129
    %s147 = sphi 0, %s147
    %s149 = sphi 0, %s147
    %s150 = sphi 0, %s149
    %s164 = sphi 0, %s150
    %s168 = sphi 0, %s168
    %s170 = sphi 0, %s168
    %s171 = sphi 0, %s170
    %s185 = sphi 0, %s171
    %s189 = sphi 0, %s189
    %s191 = sphi 0, %s189
    %s192 = sphi 0, %s191
    %s206 = sphi 0, %s192
    %s210 = sphi 0, %s210
    %s212 = sphi 0, %s210
    %s213 = sphi 0, %s212
    %s227 = sphi 0, %s213
    %s231 = sphi 0, %s231
    %s233 = sphi 0, %s231
    %s234 = sphi 0, %s233
    %s248 = sphi 0, %s234
    %s252 = sphi 0, %s252
    %s254 = sphi 0, %s252
    %s255 = sphi 0, %s254
    %s269 = sphi 0, %s255
    %s273 = sphi 0, %s273
    %s275 = sphi 0, %s273
    %s276 = sphi 0, %s275
    %s290 = sphi 0, %s276
    %s294 = sphi 0, %s294
    %s296 = sphi 0, %s294
    %s297 = sphi 0, %s296
    %s311 = sphi 0, %s297
    %s317 = sphi 0, %s319
    %s320 = sphi 0, %s317
    %s321 = sphi 0, %s320
    %s337 = sphi 0, %s321
  $region4: #{pc_transformer_proj_forward.9} parent=0 // loop_header_branch
    %22 = sbr.rel (%p20) target = $region8
  $region5: #{pc_transformer_proj_forward.9} parent=0 // loop_body
    %s24 = ssub.s32 %s19, 1
    %s25 = ssub.s32 %s19, 2
    %s26 = sadd.s32 %s19, 1
    %s27 = ssub.s32 %s19, %s26
    %p28 = scmp.eq.s32.totalorder %s27, 0
    %s30 = sadd.s32 %s29, 1
    %s31 = scalar_select %p28, %s29, %s30
    %p34 = pneg %p28
    %p35 = scmp.eq.s32.totalorder %s19, 1
    %p36 = por %p34, %p35
    %p37 = scmp.ne.s32.totalorder %s29, %s32
    %p38 = scmp.eq.s32.totalorder %s19, 0
    %p39 = por %p37, %p38
    %p40 = scmp.ne.s32.totalorder %s29, %s32
    %p41 = scmp.eq.s32.totalorder %s24, 1
    %p42 = por %p40, %p41
    %p43 = scmp.ne.s32.totalorder %s32, %s33
    %p44 = scmp.eq.s32.totalorder %s24, 0
    %p45 = por %p43, %p44
    %p46 = scmp.ne.s32.totalorder %s32, %s33
    %p47 = scmp.eq.s32.totalorder %s25, 1
    %p48 = por %p46, %p47
    %p50 = scmp.ne.s32.totalorder %s33, %s49
    %p51 = scmp.eq.s32.totalorder %s25, 0
    %p52 = por %p50, %p51
    %s53 = ssub.s32 %s19, %s26
    %p54 = scmp.eq.s32.totalorder %s53, 0
    %s56 = sadd.s32 %s55, 1
    %s57 = scalar_select %p54, %s55, %s56
    %p60 = pneg %p54
    %p61 = scmp.eq.s32.totalorder %s19, 1
    %p62 = por %p60, %p61
    %p63 = scmp.ne.s32.totalorder %s55, %s58
    %p64 = scmp.eq.s32.totalorder %s19, 0
    %p65 = por %p63, %p64
    %p66 = scmp.ne.s32.totalorder %s55, %s58
    %p67 = scmp.eq.s32.totalorder %s24, 1
    %p68 = por %p66, %p67
    %p69 = scmp.ne.s32.totalorder %s58, %s59
    %p70 = scmp.eq.s32.totalorder %s24, 0
    %p71 = por %p69, %p70
    %p72 = scmp.ne.s32.totalorder %s58, %s59
    %p73 = scmp.eq.s32.totalorder %s25, 1
    %p74 = por %p72, %p73
    %p76 = scmp.ne.s32.totalorder %s59, %s75
    %p77 = scmp.eq.s32.totalorder %s25, 0
    %p78 = por %p76, %p77
    %s79 = ssub.s32 %s19, %s26
    %p80 = scmp.eq.s32.totalorder %s79, 0
    %s82 = sadd.s32 %s81, 1
    %s83 = scalar_select %p80, %s81, %s82
    %p86 = pneg %p80
    %p87 = scmp.eq.s32.totalorder %s19, 1
    %p88 = por %p86, %p87
    %p89 = scmp.ne.s32.totalorder %s81, %s84
    %p90 = scmp.eq.s32.totalorder %s19, 0
    %p91 = por %p89, %p90
    %p92 = scmp.ne.s32.totalorder %s81, %s84
    %p93 = scmp.eq.s32.totalorder %s24, 1
    %p94 = por %p92, %p93
    %p95 = scmp.ne.s32.totalorder %s84, %s85
    %p96 = scmp.eq.s32.totalorder %s24, 0
    %p97 = por %p95, %p96
    %p98 = scmp.ne.s32.totalorder %s84, %s85
    %p99 = scmp.eq.s32.totalorder %s25, 1
    %p100 = por %p98, %p99
    %p102 = scmp.ne.s32.totalorder %s85, %s101
    %p103 = scmp.eq.s32.totalorder %s25, 0
    %p104 = por %p102, %p103
    %s106 = sadd.s32 %s105, 1
    %p109 = scmp.eq.s32.totalorder %s19, 1
    %p110 = scmp.ne.s32.totalorder %s105, %s107
    %p111 = scmp.eq.s32.totalorder %s19, 0
    %p112 = por %p110, %p111
    %p113 = scmp.ne.s32.totalorder %s105, %s107
    %p114 = scmp.eq.s32.totalorder %s24, 1
    %p115 = por %p113, %p114
    %p116 = scmp.ne.s32.totalorder %s107, %s108
    %p117 = scmp.eq.s32.totalorder %s24, 0
    %p118 = por %p116, %p117
    %p119 = scmp.ne.s32.totalorder %s107, %s108
    %p120 = scmp.eq.s32.totalorder %s25, 1
    %p121 = por %p119, %p120
    %p123 = scmp.ne.s32.totalorder %s108, %s122
    %p124 = scmp.eq.s32.totalorder %s25, 0
    %p125 = por %p123, %p124
    %s127 = sadd.s32 %s126, 1
    %p130 = scmp.eq.s32.totalorder %s19, 1
    %p131 = scmp.ne.s32.totalorder %s126, %s128
    %p132 = scmp.eq.s32.totalorder %s19, 0
    %p133 = por %p131, %p132
    %p134 = scmp.ne.s32.totalorder %s126, %s128
    %p135 = scmp.eq.s32.totalorder %s24, 1
    %p136 = por %p134, %p135
    %p137 = scmp.ne.s32.totalorder %s128, %s129
    %p138 = scmp.eq.s32.totalorder %s24, 0
    %p139 = por %p137, %p138
    %p140 = scmp.ne.s32.totalorder %s128, %s129
    %p141 = scmp.eq.s32.totalorder %s25, 1
    %p142 = por %p140, %p141
    %p144 = scmp.ne.s32.totalorder %s129, %s143
    %p145 = scmp.eq.s32.totalorder %s25, 0
    %p146 = por %p144, %p145
    %s148 = sadd.s32 %s147, 1
    %p151 = scmp.eq.s32.totalorder %s19, 1
    %p152 = scmp.ne.s32.totalorder %s147, %s149
    %p153 = scmp.eq.s32.totalorder %s19, 0
    %p154 = por %p152, %p153
    %p155 = scmp.ne.s32.totalorder %s147, %s149
    %p156 = scmp.eq.s32.totalorder %s24, 1
    %p157 = por %p155, %p156
    %p158 = scmp.ne.s32.totalorder %s149, %s150
    %p159 = scmp.eq.s32.totalorder %s24, 0
    %p160 = por %p158, %p159
    %p161 = scmp.ne.s32.totalorder %s149, %s150
    %p162 = scmp.eq.s32.totalorder %s25, 1
    %p163 = por %p161, %p162
    %p165 = scmp.ne.s32.totalorder %s150, %s164
    %p166 = scmp.eq.s32.totalorder %s25, 0
    %p167 = por %p165, %p166
    %s169 = sadd.s32 %s168, 1
    %p172 = scmp.eq.s32.totalorder %s19, 1
    %p173 = scmp.ne.s32.totalorder %s168, %s170
    %p174 = scmp.eq.s32.totalorder %s19, 0
    %p175 = por %p173, %p174
    %p176 = scmp.ne.s32.totalorder %s168, %s170
    %p177 = scmp.eq.s32.totalorder %s24, 1
    %p178 = por %p176, %p177
    %p179 = scmp.ne.s32.totalorder %s170, %s171
    %p180 = scmp.eq.s32.totalorder %s24, 0
    %p181 = por %p179, %p180
    %p182 = scmp.ne.s32.totalorder %s170, %s171
    %p183 = scmp.eq.s32.totalorder %s25, 1
    %p184 = por %p182, %p183
    %p186 = scmp.ne.s32.totalorder %s171, %s185
    %p187 = scmp.eq.s32.totalorder %s25, 0
    %p188 = por %p186, %p187
    %s190 = sadd.s32 %s189, 1
    %p193 = scmp.eq.s32.totalorder %s19, 1
    %p194 = scmp.ne.s32.totalorder %s189, %s191
    %p195 = scmp.eq.s32.totalorder %s19, 0
    %p196 = por %p194, %p195
    %p197 = scmp.ne.s32.totalorder %s189, %s191
    %p198 = scmp.eq.s32.totalorder %s24, 1
    %p199 = por %p197, %p198
    %p200 = scmp.ne.s32.totalorder %s191, %s192
    %p201 = scmp.eq.s32.totalorder %s24, 0
    %p202 = por %p200, %p201
    %p203 = scmp.ne.s32.totalorder %s191, %s192
    %p204 = scmp.eq.s32.totalorder %s25, 1
    %p205 = por %p203, %p204
    %p207 = scmp.ne.s32.totalorder %s192, %s206
    %p208 = scmp.eq.s32.totalorder %s25, 0
    %p209 = por %p207, %p208
    %s211 = sadd.s32 %s210, 1
    %p214 = scmp.eq.s32.totalorder %s19, 1
    %p215 = scmp.ne.s32.totalorder %s210, %s212
    %p216 = scmp.eq.s32.totalorder %s19, 0
    %p217 = por %p215, %p216
    %p218 = scmp.ne.s32.totalorder %s210, %s212
    %p219 = scmp.eq.s32.totalorder %s24, 1
    %p220 = por %p218, %p219
    %p221 = scmp.ne.s32.totalorder %s212, %s213
    %p222 = scmp.eq.s32.totalorder %s24, 0
    %p223 = por %p221, %p222
    %p224 = scmp.ne.s32.totalorder %s212, %s213
    %p225 = scmp.eq.s32.totalorder %s25, 1
    %p226 = por %p224, %p225
    %p228 = scmp.ne.s32.totalorder %s213, %s227
    %p229 = scmp.eq.s32.totalorder %s25, 0
    %p230 = por %p228, %p229
    %s232 = sadd.s32 %s231, 1
    %p235 = scmp.eq.s32.totalorder %s19, 1
    %p236 = scmp.ne.s32.totalorder %s231, %s233
    %p237 = scmp.eq.s32.totalorder %s19, 0
    %p238 = por %p236, %p237
    %p239 = scmp.ne.s32.totalorder %s231, %s233
    %p240 = scmp.eq.s32.totalorder %s24, 1
    %p241 = por %p239, %p240
    %p242 = scmp.ne.s32.totalorder %s233, %s234
    %p243 = scmp.eq.s32.totalorder %s24, 0
    %p244 = por %p242, %p243
    %p245 = scmp.ne.s32.totalorder %s233, %s234
    %p246 = scmp.eq.s32.totalorder %s25, 1
    %p247 = por %p245, %p246
    %p249 = scmp.ne.s32.totalorder %s234, %s248
    %p250 = scmp.eq.s32.totalorder %s25, 0
    %p251 = por %p249, %p250
    %s253 = sadd.s32 %s252, 1
    %p256 = scmp.eq.s32.totalorder %s19, 1
    %p257 = scmp.ne.s32.totalorder %s252, %s254
    %p258 = scmp.eq.s32.totalorder %s19, 0
    %p259 = por %p257, %p258
    %p260 = scmp.ne.s32.totalorder %s252, %s254
    %p261 = scmp.eq.s32.totalorder %s24, 1
    %p262 = por %p260, %p261
    %p263 = scmp.ne.s32.totalorder %s254, %s255
    %p264 = scmp.eq.s32.totalorder %s24, 0
    %p265 = por %p263, %p264
    %p266 = scmp.ne.s32.totalorder %s254, %s255
    %p267 = scmp.eq.s32.totalorder %s25, 1
    %p268 = por %p266, %p267
    %p270 = scmp.ne.s32.totalorder %s255, %s269
    %p271 = scmp.eq.s32.totalorder %s25, 0
    %p272 = por %p270, %p271
    %s274 = sadd.s32 %s273, 1
    %p277 = scmp.eq.s32.totalorder %s19, 1
    %p278 = scmp.ne.s32.totalorder %s273, %s275
    %p279 = scmp.eq.s32.totalorder %s19, 0
    %p280 = por %p278, %p279
    %p281 = scmp.ne.s32.totalorder %s273, %s275
    %p282 = scmp.eq.s32.totalorder %s24, 1
    %p283 = por %p281, %p282
    %p284 = scmp.ne.s32.totalorder %s275, %s276
    %p285 = scmp.eq.s32.totalorder %s24, 0
    %p286 = por %p284, %p285
    %p287 = scmp.ne.s32.totalorder %s275, %s276
    %p288 = scmp.eq.s32.totalorder %s25, 1
    %p289 = por %p287, %p288
    %p291 = scmp.ne.s32.totalorder %s276, %s290
    %p292 = scmp.eq.s32.totalorder %s25, 0
    %p293 = por %p291, %p292
    %s295 = sadd.s32 %s294, 1
    %p298 = scmp.eq.s32.totalorder %s19, 1
    %p299 = scmp.ne.s32.totalorder %s294, %s296
    %p300 = scmp.eq.s32.totalorder %s19, 0
    %p301 = por %p299, %p300
    %p302 = scmp.ne.s32.totalorder %s294, %s296
    %p303 = scmp.eq.s32.totalorder %s24, 1
    %p304 = por %p302, %p303
    %p305 = scmp.ne.s32.totalorder %s296, %s297
    %p306 = scmp.eq.s32.totalorder %s24, 0
    %p307 = por %p305, %p306
    %p308 = scmp.ne.s32.totalorder %s296, %s297
    %p309 = scmp.eq.s32.totalorder %s25, 1
    %p310 = por %p308, %p309
    %p312 = scmp.ne.s32.totalorder %s297, %s311
    %p313 = scmp.eq.s32.totalorder %s25, 0
    %p314 = por %p312, %p313
    %s315 = ssub.s32 %s19, %s26
    %p316 = scmp.eq.s32.totalorder %s315, 0
    %s318 = sadd.s32 %s317, 1
    %s319 = scalar_select %p316, %s317, %s318
    %p322 = pneg %p316
    %p323 = scmp.eq.s32.totalorder %s19, 1
    %p324 = por %p322, %p323
    %p325 = scmp.ne.s32.totalorder %s317, %s320
    %p326 = scmp.eq.s32.totalorder %s19, 0
    %p327 = por %p325, %p326
    %p328 = scmp.ne.s32.totalorder %s317, %s320
    %p329 = scmp.eq.s32.totalorder %s24, 1
    %p330 = por %p328, %p329
    %p331 = scmp.ne.s32.totalorder %s320, %s321
    %p332 = scmp.eq.s32.totalorder %s24, 0
    %p333 = por %p331, %p332
    %p334 = scmp.ne.s32.totalorder %s320, %s321
    %p335 = scmp.eq.s32.totalorder %s25, 1
    %p336 = por %p334, %p335
    %p338 = scmp.ne.s32.totalorder %s321, %s337
    %p339 = scmp.eq.s32.totalorder %s25, 0
    %p340 = por %p338, %p339
    %p341 = scmp.le.s32.totalorder 1, %s19
    %p342 = scmp.lt.s32.totalorder %s19, 3
    %p343 = pnand %p341, %p342
    %p344 = pneg %p343
    // Predicated region
    $region9: #{pc_transformer_proj_forward.9} parent=5 // pred_check
      _
    $region10: #{pc_transformer_proj_forward.9} parent=5 // pred_check_branch
      %346 = sbr.rel (%p343) target = $region12
    $region11: #{pc_transformer_proj_forward.9} parent=5 // pred_region
      %s347 = ssub.s32 %s19, 1
      // Predicated region
      $region13: #{pc_transformer_proj_forward.9} parent=11 // pred_check
        %p348 = pneg %p118
      $region14: #{pc_transformer_proj_forward.9} parent=11 // pred_check_branch
        %350 = sbr.rel (%p348) target = $region16
      $region15: #{pc_transformer_proj_forward.9} parent=11 // pred_region
        _
      $region16: #{pc_transformer_proj_forward.9} parent=11 // pred_fallthru
        _
      // Predicated region
      $region17: #{pc_transformer_proj_forward.9} parent=11 // pred_check
        %p351 = pneg %p139
      $region18: #{pc_transformer_proj_forward.9} parent=11 // pred_check_branch
        %353 = sbr.rel (%p351) target = $region20
      $region19: #{pc_transformer_proj_forward.9} parent=11 // pred_region
        _
      $region20: #{pc_transformer_proj_forward.9} parent=11 // pred_fallthru
        _
      // Predicated region
      $region21: #{pc_transformer_proj_forward.9} parent=11 // pred_check
        %p354 = pneg %p160
      $region22: #{pc_transformer_proj_forward.9} parent=11 // pred_check_branch
        %356 = sbr.rel (%p354) target = $region24
      $region23: #{pc_transformer_proj_forward.9} parent=11 // pred_region
        _
      $region24: #{pc_transformer_proj_forward.9} parent=11 // pred_fallthru
        _
      // Predicated region
      $region25: #{pc_transformer_proj_forward.9} parent=11 // pred_check
        %p357 = pneg %p181
      $region26: #{pc_transformer_proj_forward.9} parent=11 // pred_check_branch
        %359 = sbr.rel (%p357) target = $region28
      $region27: #{pc_transformer_proj_forward.9} parent=11 // pred_region
        _
      $region28: #{pc_transformer_proj_forward.9} parent=11 // pred_fallthru
        _
      // Predicated region
      $region29: #{pc_transformer_proj_forward.9} parent=11 // pred_check
        %p360 = pneg %p202
      $region30: #{pc_transformer_proj_forward.9} parent=11 // pred_check_branch
        %362 = sbr.rel (%p360) target = $region32
      $region31: #{pc_transformer_proj_forward.9} parent=11 // pred_region
        _
      $region32: #{pc_transformer_proj_forward.9} parent=11 // pred_fallthru
        _
      // Predicated region
      $region33: #{pc_transformer_proj_forward.9} parent=11 // pred_check
        %p363 = pneg %p223
      $region34: #{pc_transformer_proj_forward.9} parent=11 // pred_check_branch
        %365 = sbr.rel (%p363) target = $region36
      $region35: #{pc_transformer_proj_forward.9} parent=11 // pred_region
        _
      $region36: #{pc_transformer_proj_forward.9} parent=11 // pred_fallthru
        _
      // Predicated region
      $region37: #{pc_transformer_proj_forward.9} parent=11 // pred_check
        %p366 = pneg %p244
      $region38: #{pc_transformer_proj_forward.9} parent=11 // pred_check_branch
        %368 = sbr.rel (%p366) target = $region40
      $region39: #{pc_transformer_proj_forward.9} parent=11 // pred_region
        _
      $region40: #{pc_transformer_proj_forward.9} parent=11 // pred_fallthru
        _
      // Predicated region
      $region41: #{pc_transformer_proj_forward.9} parent=11 // pred_check
        %p369 = pneg %p265
      $region42: #{pc_transformer_proj_forward.9} parent=11 // pred_check_branch
        %371 = sbr.rel (%p369) target = $region44
      $region43: #{pc_transformer_proj_forward.9} parent=11 // pred_region
        _
      $region44: #{pc_transformer_proj_forward.9} parent=11 // pred_fallthru
        _
      // Predicated region
      $region45: #{pc_transformer_proj_forward.9} parent=11 // pred_check
        %p372 = pneg %p286
      $region46: #{pc_transformer_proj_forward.9} parent=11 // pred_check_branch
        %374 = sbr.rel (%p372) target = $region48
      $region47: #{pc_transformer_proj_forward.9} parent=11 // pred_region
        _
      $region48: #{pc_transformer_proj_forward.9} parent=11 // pred_fallthru
        _
      // Predicated region
      $region49: #{pc_transformer_proj_forward.9} parent=11 // pred_check
        %p375 = pneg %p307
      $region50: #{pc_transformer_proj_forward.9} parent=11 // pred_check_branch
        %377 = sbr.rel (%p375) target = $region52
      $region51: #{pc_transformer_proj_forward.9} parent=11 // pred_region
        _
      $region52: #{pc_transformer_proj_forward.9} parent=11 // pred_fallthru
        _
    $region12: #{pc_transformer_proj_forward.9} parent=5 // pred_fallthru
      _
    %p378 = scmp.lt.s32.totalorder %s19, 2
    // Predicated region
    $region53: #{pc_transformer_proj_forward.9} parent=5 // pred_check
      %p379 = pneg %p378
    $region54: #{pc_transformer_proj_forward.9} parent=5 // pred_check_branch
      %381 = sbr.rel (%p379) target = $region56
    $region55: #{pc_transformer_proj_forward.9} parent=5 // pred_region
      // Predicated region
      $region57: #{pc_transformer_proj_forward.9} parent=55 // pred_check
        %p382 = pneg %p39
      $region58: #{pc_transformer_proj_forward.9} parent=55 // pred_check_branch
        %384 = sbr.rel (%p382) target = $region60
      $region59: #{pc_transformer_proj_forward.9} parent=55 // pred_region
        %p385 = scmp.lt.s32.totalorder %s19, 1
        %s386 = scalar_select %p385, %s19, 1
        %s387 = smul.addr %s386, 3
        %s388 = smul.addr %s387, 8
        %s389 = scalar_lea.vmem %s0, %s388
      $region60: #{pc_transformer_proj_forward.9} parent=55 // pred_fallthru
        _
      // Predicated region
      $region61: #{pc_transformer_proj_forward.9} parent=55 // pred_check
        %p390 = pneg %p65
      $region62: #{pc_transformer_proj_forward.9} parent=55 // pred_check_branch
        %392 = sbr.rel (%p390) target = $region64
      $region63: #{pc_transformer_proj_forward.9} parent=55 // pred_region
        %p393 = scmp.lt.s32.totalorder %s19, 1
        %s394 = scalar_select %p393, %s19, 1
        %s395 = smul.addr %s394, 2
        %s396 = smul.addr %s395, 8
        %s397 = scalar_lea.vmem %s1, %s396
      $region64: #{pc_transformer_proj_forward.9} parent=55 // pred_fallthru
        _
      // Predicated region
      $region65: #{pc_transformer_proj_forward.9} parent=55 // pred_check
        %p398 = pneg %p91
      $region66: #{pc_transformer_proj_forward.9} parent=55 // pred_check_branch
        %400 = sbr.rel (%p398) target = $region68
      $region67: #{pc_transformer_proj_forward.9} parent=55 // pred_region
        %p401 = scmp.lt.s32.totalorder %s19, 1
        %s402 = scalar_select %p401, %s19, 1
        %s403 = scalar_lea.vmem %s2, %s402
      $region68: #{pc_transformer_proj_forward.9} parent=55 // pred_fallthru
        _
    $region56: #{pc_transformer_proj_forward.9} parent=5 // pred_fallthru
      _
    %p404 = scmp.le.s32.totalorder 1, %s19
    %p405 = scmp.lt.s32.totalorder %s19, 3
    %p406 = pnand %p404, %p405
    %p407 = pneg %p406
    // Predicated region
    $region69: #{pc_transformer_proj_forward.9} parent=5 // pred_check
      _
    $region70: #{pc_transformer_proj_forward.9} parent=5 // pred_check_branch
      %409 = sbr.rel (%p406) target = $region72
    $region71: #{pc_transformer_proj_forward.9} parent=5 // pred_region
      %s410 = ssub.s32 %s19, 1
      %p411 = scmp.lt.s32.totalorder %s24, 1
      %s412 = scalar_select %p411, %s24, 1
      %s413 = smul.addr %s412, 3
      %s414 = smul.addr %s413, 8
      %s415 = scalar_lea.vmem %s0, %s414
      %p416 = pneg %p45
      %p417 = pneg %p42
      %p418 = scmp.lt.s32.totalorder %s24, 1
      %s419 = scalar_select %p418, %s24, 1
      %s420 = smul.addr %s419, 2
      %s421 = smul.addr %s420, 8
      %s422 = scalar_lea.vmem %s1, %s421
      %p423 = pneg %p71
      %p424 = pneg %p68
      %p425 = scmp.lt.s32.totalorder %s24, 1
      %s426 = scalar_select %p425, %s24, 1
      %s427 = scalar_lea.vmem %s2, %s426
      %p428 = pneg %p97
      %p429 = pneg %p94
      %p430 = pneg %p118
      %p431 = pneg %p115
      %p432 = pneg %p139
      %p433 = pneg %p136
      %p434 = pneg %p160
      %p435 = pneg %p157
      %p436 = pneg %p181
      %p437 = pneg %p178
      %p438 = pneg %p202
      %p439 = pneg %p199
      %p440 = pneg %p223
      %p441 = pneg %p220
      %p442 = pneg %p244
      %p443 = pneg %p241
      %p444 = pneg %p265
      %p445 = pneg %p262
      %p446 = pneg %p286
      %p447 = pneg %p283
      %p448 = pneg %p307
      %p449 = pneg %p304
      %p450 = pneg %p333
      %p451 = pneg %p330
      %p452 = scmp.lt.s32.totalorder %s24, 1
      %s453 = scalar_select %p452, %s24, 1
      %s454 = smul.addr %s453, 2
      %s455 = smul.addr %s454, 8
      %s456 = scalar_lea.vmem %s13, %s455
      %p457 = scmp.lt.s32.totalorder %s24, 1
      %s458 = scalar_select %p457, %s24, 1
      %s459 = smul.addr %s458, 3
      %s460 = smul.addr %s459, 8
      %s461 = scalar_lea.vmem %s0, %s460
      %p462 = scmp.lt.s32.totalorder %s24, 1
      %s463 = scalar_select %p462, %s24, 1
      %s464 = smul.addr %s463, 2
      %s465 = smul.addr %s464, 8
      %s466 = scalar_lea.vmem %s1, %s465
      %p467 = scmp.lt.s32.totalorder %s24, 1
      %s468 = scalar_select %p467, %s24, 1
      %s469 = scalar_lea.vmem %s2, %s468
      %p470 = scmp.lt.s32.totalorder %s24, 1
      %s471 = scalar_select %p470, %s24, 1
      %s472 = smul.addr %s471, 2
      %s473 = smul.addr %s472, 8
      %s474 = scalar_lea.vmem %s13, %s473
      %v476 = vld [vmem:[%s3] sm:$0xff]
      %v477 = vld [vmem:[%s3 + $0x8] sm:$0x3]
      %v478 = vld [vmem:[%s461] sm:$0xff]
      %v479 = vld [vmem:[%s461 + $0x8] sm:$0xff]
      %v480 = vld [vmem:[%s461 + $0x10] sm:$0x3]
      %v481 = vld [vmem:[%s466] sm:$0xff]
      %v482 = vld [vmem:[%s466 + $0x8] sm:$0xff]
      %v483 = vld [vmem:[%s469] sm:$0x1]
      %v484 = vlaneseq
      %v485 = vshrl.u32 %v484, 7
      %v486 = vadd.s32 %v485, 8
      %v487 = vadd.s32 %v485, 16
      %vm488 = vcmp.ge.s32.totalorder %v485, 1
      %vm489 = vcmp.ge.s32.totalorder %v486, 1
      %vm490 = vcmp.ge.s32.totalorder %v487, 1
      %vm491 = vcmp.le.s32.totalorder %v485, 16
      %vm492 = vcmp.le.s32.totalorder %v486, 16
      %vm493 = vcmp.le.s32.totalorder %v487, 16
      %vm494 = vmand %vm488, %vm491
      %vm495 = vmand %vm489, %vm492
      %vm496 = vmand %vm490, %vm493
      %vm497 = vcmask 523264
      %v498 = vsel %vm497, %v478, 0.0
      %499 = vadd.xlane.f32.xlu0 %v498
      %v500 = vpop.xlane.xlu0 %499
      %v501 = vsel %vm497, %v479, 0.0
      %502 = vadd.xlane.f32.xlu0 %v501
      %v503 = vpop.xlane.xlu0 %502
      %vm504 = vcmask 517120
      %v505 = vsel %vm504, %v480, 0.0
      %506 = vadd.xlane.f32.xlu0 %v505
      %v507 = vpop.xlane.xlu0 %506
      %v508 = vrcp.pop 64.0
      %v509 = vmul.f32 64.0, %v508
      %v510 = vsub.f32 1.0, %v509
      %v511 = vmul.f32 %v508, %v510
      %v512 = vadd.f32 %v508, %v511
      %vm513 = vweird.f32 %v508
      %v514 = vsel %vm513, %v508, %v512
      %v515 = vmul.f32 %v500, %v514
      %v516 = vmul.f32 %v503, %v514
      %v517 = vmul.f32 %v507, %v514
      %v518 = vsub.f32 %v478, %v515
      %v519 = vsub.f32 %v479, %v516
      %v520 = vsub.f32 %v480, %v517
      %v521 = vmul.f32 %v518, %v518
      %v522 = vmul.f32 %v519, %v519
      %v523 = vmul.f32 %v520, %v520
      %v524 = vsel %vm497, %v521, 0.0
      %525 = vadd.xlane.f32.xlu0 %v524
      %v526 = vpop.xlane.xlu0 %525
      %v527 = vsel %vm497, %v522, 0.0
      %528 = vadd.xlane.f32.xlu0 %v527
      %v529 = vpop.xlane.xlu0 %528
      %v530 = vsel %vm504, %v523, 0.0
      %531 = vadd.xlane.f32.xlu0 %v530
      %v532 = vpop.xlane.xlu0 %531
      %v533 = vmul.f32 %v526, %v514
      %v534 = vmul.f32 %v529, %v514
      %v535 = vmul.f32 %v532, %v514
      %v536 = vadd.f32 %v533, 1e-05
      %v537 = vadd.f32 %v534, 1e-05
      %v538 = vadd.f32 %v535, 1e-05
      %v539 = vrsqrt.pop %v536
      %v540 = vmul.f32 %v539, %v536
      %v541 = vmul.f32 %v540, %v539
      %v542 = vmul.f32 0.5, %v541
      %v543 = vsub.f32 1.5, %v542
      %v544 = vmul.f32 %v539, %v543
      %vm545 = vweird.f32 %v536
      %vm546 = vweird.f32 %v539
      %vm547 = vmor %vm545, %vm546
      %v548 = vsel %vm547, %v539, %v544
      %v549 = vrsqrt.pop %v537
      %v550 = vmul.f32 %v549, %v537
      %v551 = vmul.f32 %v550, %v549
      %v552 = vmul.f32 0.5, %v551
      %v553 = vsub.f32 1.5, %v552
      %v554 = vmul.f32 %v549, %v553
      %vm555 = vweird.f32 %v537
      %vm556 = vweird.f32 %v549
      %vm557 = vmor %vm555, %vm556
      %v558 = vsel %vm557, %v549, %v554
      %v559 = vrsqrt.pop %v538
      %v560 = vmul.f32 %v559, %v538
      %v561 = vmul.f32 %v560, %v559
      %v562 = vmul.f32 0.5, %v561
      %v563 = vsub.f32 1.5, %v562
      %v564 = vmul.f32 %v559, %v563
      %vm565 = vweird.f32 %v538
      %vm566 = vweird.f32 %v559
      %vm567 = vmor %vm565, %vm566
      %v568 = vsel %vm567, %v559, %v564
      %v569 = vmul.f32 %v518, %v548
      %v570 = vmul.f32 %v519, %v558
      %v571 = vmul.f32 %v520, %v568
      %v572 = vperm.slane %v476, 0
      %v573 = vmul.f32 %v569, %v572
      %v574 = vmul.f32 %v570, %v572
      %v575 = vmul.f32 %v571, %v572
      %v576 = vperm.slane %v476, 1
      %v577 = vadd.f32 %v573, %v576
      %v578 = vadd.f32 %v574, %v576
      %v579 = vadd.f32 %v575, %v576
      %v580 = vsel %vm494, 1, 0
      %v581 = vsel %vm495, 1, 0
      %v582 = vsel %vm496, 1, 0
      %vm583 = vcmp.eq.s32.totalorder %v580, 1
      %vm584 = vcmp.eq.s32.totalorder %v581, 1
      %vm585 = vcmp.eq.s32.totalorder %v582, 1
      %v586 = vsel %vm583, %v577, 0.0
      %v587 = vsel %vm584, %v578, 0.0
      %v588 = vsel %vm585, %v579, 0.0
      %v589 = vld [vmem:[%s6] sm:$0x7]
      %v590 = vld [vmem:[%s4] sm:$0x7]
      %v591 = vperm.slane %v590, 0
      %v592 = vmul.f32 %v586, %v591
      %v593 = vmul.f32 %v587, %v591
      %v594 = vperm.slane %v590, 1
      %v595 = vmul.f32 %v586, %v594
      %v596 = vmul.f32 %v587, %v594
      %v597 = vmul.f32 %v588, %v594
      %vm601 = vcmask 1046528
      %v602 = vrot.slane %v595, 1
      %v603 = vrot.slane %v596, 1
      %v604 = vsel %vm601, %v602, %v603
      %v605 = vrot.slane %v597, 1
      %v606 = vsel %vm601, %v603, %v605
      %v609 = vadd.f32 %v592, %v604
      %v610 = vadd.f32 %v593, %v606
      %v611 = vperm.slane %v590, 2
      %v612 = vmul.f32 %v586, %v611
      %v613 = vmul.f32 %v587, %v611
      %v614 = vmul.f32 %v588, %v611
      %vm618 = vcmask 1045504
      %v619 = vrot.slane %v612, 2
      %v620 = vrot.slane %v613, 2
      %v621 = vsel %vm618, %v619, %v620
      %v622 = vrot.slane %v614, 2
      %v623 = vsel %vm618, %v620, %v622
      %v626 = vadd.f32 %v609, %v621
      %v627 = vadd.f32 %v610, %v623
      %629 = vset.pattern.permute.xlu0 0
      %630 = vperm.xlu0 %629, %v481
      %v631 = vpop.permute.xlu0 %630
      %634 = vset.pattern.permute.xlu0 0
      %635 = vperm.xlu0 %634, %v482
      %v636 = vpop.permute.xlu0 %635
      %v638 = vmul.f32 %v626, %v631
      %v639 = vmul.f32 %v627, %v636
      %v640 = vsel %vm497, %v638, 0.0
      %641 = vadd.xlane.f32.xlu0 %v640
      %v642 = vpop.xlane.xlu0 %641
      %v643 = vsel %vm497, %v639, 0.0
      %644 = vadd.xlane.f32.xlu0 %v643
      %v645 = vpop.xlane.xlu0 %644
      %v646 = vmul.f32 %v642, %v514
      %v647 = vmul.f32 %v645, %v514
      %v648 = vsub.f32 %v638, %v646
      %v649 = vsub.f32 %v639, %v647
      %v650 = vmul.f32 %v648, %v648
      %v651 = vmul.f32 %v649, %v649
      %v652 = vsel %vm497, %v650, 0.0
      %653 = vadd.xlane.f32.xlu0 %v652
      %v654 = vpop.xlane.xlu0 %653
      %v655 = vsel %vm497, %v651, 0.0
      %656 = vadd.xlane.f32.xlu0 %v655
      %v657 = vpop.xlane.xlu0 %656
      %v658 = vmul.f32 %v654, %v514
      %v659 = vmul.f32 %v657, %v514
      %v660 = vadd.f32 %v658, 1e-05
      %v661 = vadd.f32 %v659, 1e-05
      %v662 = vrsqrt.pop %v660
      %v663 = vmul.f32 %v662, %v660
      %v664 = vmul.f32 %v663, %v662
      %v665 = vmul.f32 0.5, %v664
      %v666 = vsub.f32 1.5, %v665
      %v667 = vmul.f32 %v662, %v666
      %vm668 = vweird.f32 %v660
      %vm669 = vweird.f32 %v662
      %vm670 = vmor %vm668, %vm669
      %v671 = vsel %vm670, %v662, %v667
      %v672 = vrsqrt.pop %v661
      %v673 = vmul.f32 %v672, %v661
      %v674 = vmul.f32 %v673, %v672
      %v675 = vmul.f32 0.5, %v674
      %v676 = vsub.f32 1.5, %v675
      %v677 = vmul.f32 %v672, %v676
      %vm678 = vweird.f32 %v661
      %vm679 = vweird.f32 %v672
      %vm680 = vmor %vm678, %vm679
      %v681 = vsel %vm680, %v672, %v677
      %v682 = vmul.f32 %v648, %v671
      %v683 = vmul.f32 %v649, %v681
      %v684 = vperm.slane %v476, 2
      %v685 = vmul.f32 %v682, %v684
      %v686 = vmul.f32 %v683, %v684
      %v687 = vperm.slane %v476, 3
      %v688 = vadd.f32 %v685, %v687
      %v689 = vadd.f32 %v686, %v687
      %v690 = vpack.c.bf16 %v689, %v688
      %v691 = vld [vmem:[%s5] sm:$0xff]
      %v692 = vld [vmem:[%s5 + $0x8] sm:$0xff]
      %v693 = vld [vmem:[%s5 + $0x10] sm:$0xff]
      %v694 = vld [vmem:[%s5 + $0x18] sm:$0xff]
      %v695 = vld [vmem:[%s5 + $0x20] sm:$0xff]
      %v696 = vld [vmem:[%s5 + $0x28] sm:$0xff]
      %v697 = vld [vmem:[%s5 + $0x30] sm:$0xff]
      %v698 = vld [vmem:[%s5 + $0x38] sm:$0xff]
      %v699 = vpack.c.bf16 %v692, %v691
      %v700 = vpack.c.bf16 %v694, %v693
      %v701 = vpack.c.bf16 %v696, %v695
      %v702 = vpack.c.bf16 %v698, %v697
      %v703 = vperm.slane %v589, 0
      %v705 = vsel %vm497, %v690, 0
      %707 = vmatpush.bf16.msra.mxu0 0
      %708 = vmatpush.bf16.msra.mxu0 0
      %709 = vmatpush.bf16.msra.mxu0 0
      %710 = vmatpush.bf16.msra.mxu0 0
      %711 = vmatpush.bf16.msra.mxu0 %v702
      %712 = vmatpush.bf16.msra.mxu0 %v701
      %713 = vmatpush.bf16.msra.mxu0 %v700
      %714 = vmatpush.bf16.msra.mxu0 %v699
      %715 = vmatmul.bf16.gmra.mxu0 %v705
      %v716 = vpop.f32.mrf.mxu0
      %v717 = vadd.f32 %v703, %v716
      %v718 = vpop.f32.mrf.mxu0
      %v719 = vadd.f32 %v703, %v718
      %720 = vdwg.mxu0
      %s721 = scalar_lea.vmem %s4, 4
      %v722 = vld [vmem:[%s721] sm:$0x7]
      %v723 = vperm.slane %v722, 0
      %v724 = vmul.f32 %v586, %v723
      %v725 = vmul.f32 %v587, %v723
      %v726 = vperm.slane %v722, 1
      %v727 = vmul.f32 %v586, %v726
      %v728 = vmul.f32 %v587, %v726
      %v729 = vmul.f32 %v588, %v726
      %v733 = vrot.slane %v727, 1
      %v734 = vrot.slane %v728, 1
      %v735 = vsel %vm601, %v733, %v734
      %v736 = vrot.slane %v729, 1
      %v737 = vsel %vm601, %v734, %v736
      %v740 = vadd.f32 %v724, %v735
      %v741 = vadd.f32 %v725, %v737
      %v742 = vperm.slane %v722, 2
      %v743 = vmul.f32 %v586, %v742
      %v744 = vmul.f32 %v587, %v742
      %v745 = vmul.f32 %v588, %v742
      %v749 = vrot.slane %v743, 2
      %v750 = vrot.slane %v744, 2
      %v751 = vsel %vm618, %v749, %v750
      %v752 = vrot.slane %v745, 2
      %v753 = vsel %vm618, %v750, %v752
      %v756 = vadd.f32 %v740, %v751
      %v757 = vadd.f32 %v741, %v753
      %v758 = vmul.f32 %v756, %v631
      %v759 = vmul.f32 %v757, %v636
      %v760 = vsel %vm497, %v758, 0.0
      %761 = vadd.xlane.f32.xlu0 %v760
      %v762 = vpop.xlane.xlu0 %761
      %v763 = vsel %vm497, %v759, 0.0
      %764 = vadd.xlane.f32.xlu0 %v763
      %v765 = vpop.xlane.xlu0 %764
      %v766 = vmul.f32 %v762, %v514
      %v767 = vmul.f32 %v765, %v514
      %v768 = vsub.f32 %v758, %v766
      %v769 = vsub.f32 %v759, %v767
      %v770 = vmul.f32 %v768, %v768
      %v771 = vmul.f32 %v769, %v769
      %v772 = vsel %vm497, %v770, 0.0
      %773 = vadd.xlane.f32.xlu0 %v772
      %v774 = vpop.xlane.xlu0 %773
      %v775 = vsel %vm497, %v771, 0.0
      %776 = vadd.xlane.f32.xlu0 %v775
      %v777 = vpop.xlane.xlu0 %776
      %v778 = vmul.f32 %v774, %v514
      %v779 = vmul.f32 %v777, %v514
      %v780 = vadd.f32 %v778, 1e-05
      %v781 = vadd.f32 %v779, 1e-05
      %v782 = vrsqrt.pop %v780
      %v783 = vmul.f32 %v782, %v780
      %v784 = vmul.f32 %v783, %v782
      %v785 = vmul.f32 0.5, %v784
      %v786 = vsub.f32 1.5, %v785
      %v787 = vmul.f32 %v782, %v786
      %vm788 = vweird.f32 %v780
      %vm789 = vweird.f32 %v782
      %vm790 = vmor %vm788, %vm789
      %v791 = vsel %vm790, %v782, %v787
      %v792 = vrsqrt.pop %v781
      %v793 = vmul.f32 %v792, %v781
      %v794 = vmul.f32 %v793, %v792
      %v795 = vmul.f32 0.5, %v794
      %v796 = vsub.f32 1.5, %v795
      %v797 = vmul.f32 %v792, %v796
      %vm798 = vweird.f32 %v781
      %vm799 = vweird.f32 %v792
      %vm800 = vmor %vm798, %vm799
      %v801 = vsel %vm800, %v792, %v797
      %v802 = vmul.f32 %v768, %v791
      %v803 = vmul.f32 %v769, %v801
      %v804 = vperm.slane %v476, 4
      %v805 = vmul.f32 %v802, %v804
      %v806 = vmul.f32 %v803, %v804
      %v807 = vperm.slane %v476, 5
      %v808 = vadd.f32 %v805, %v807
      %v809 = vadd.f32 %v806, %v807
      %v810 = vpack.c.bf16 %v809, %v808
      %s811 = scalar_lea.vmem %s5, 64
      %v812 = vld [vmem:[%s811] sm:$0xff]
      %v813 = vld [vmem:[%s811 + $0x8] sm:$0xff]
      %v814 = vld [vmem:[%s811 + $0x10] sm:$0xff]
      %v815 = vld [vmem:[%s811 + $0x18] sm:$0xff]
      %v816 = vld [vmem:[%s811 + $0x20] sm:$0xff]
      %v817 = vld [vmem:[%s811 + $0x28] sm:$0xff]
      %v818 = vld [vmem:[%s811 + $0x30] sm:$0xff]
      %v819 = vld [vmem:[%s811 + $0x38] sm:$0xff]
      %v820 = vpack.c.bf16 %v813, %v812
      %v821 = vpack.c.bf16 %v815, %v814
      %v822 = vpack.c.bf16 %v817, %v816
      %v823 = vpack.c.bf16 %v819, %v818
      %v824 = vperm.slane %v589, 1
      %v826 = vsel %vm497, %v810, 0
      %828 = vmatpush.bf16.msra.mxu0 0
      %829 = vmatpush.bf16.msra.mxu0 0
      %830 = vmatpush.bf16.msra.mxu0 0
      %831 = vmatpush.bf16.msra.mxu0 0
      %832 = vmatpush.bf16.msra.mxu0 %v823
      %833 = vmatpush.bf16.msra.mxu0 %v822
      %834 = vmatpush.bf16.msra.mxu0 %v821
      %835 = vmatpush.bf16.msra.mxu0 %v820
      %836 = vmatmul.bf16.gmra.mxu0 %v826
      %v837 = vpop.f32.mrf.mxu0
      %v838 = vadd.f32 %v824, %v837
      %v839 = vpop.f32.mrf.mxu0
      %v840 = vadd.f32 %v824, %v839
      %841 = vdwg.mxu0
      %s842 = scalar_lea.vmem %s4, 8
      %v843 = vld [vmem:[%s842] sm:$0x7]
      %v844 = vperm.slane %v843, 0
      %v845 = vmul.f32 %v586, %v844
      %v846 = vmul.f32 %v587, %v844
      %v847 = vperm.slane %v843, 1
      %v848 = vmul.f32 %v586, %v847
      %v849 = vmul.f32 %v587, %v847
      %v850 = vmul.f32 %v588, %v847
      %v854 = vrot.slane %v848, 1
      %v855 = vrot.slane %v849, 1
      %v856 = vsel %vm601, %v854, %v855
      %v857 = vrot.slane %v850, 1
      %v858 = vsel %vm601, %v855, %v857
      %v861 = vadd.f32 %v845, %v856
      %v862 = vadd.f32 %v846, %v858
      %v863 = vperm.slane %v843, 2
      %v864 = vmul.f32 %v586, %v863
      %v865 = vmul.f32 %v587, %v863
      %v866 = vmul.f32 %v588, %v863
      %v870 = vrot.slane %v864, 2
      %v871 = vrot.slane %v865, 2
      %v872 = vsel %vm618, %v870, %v871
      %v873 = vrot.slane %v866, 2
      %v874 = vsel %vm618, %v871, %v873
      %v877 = vadd.f32 %v861, %v872
      %v878 = vadd.f32 %v862, %v874
      %v879 = vmul.f32 %v877, %v631
      %v880 = vmul.f32 %v878, %v636
      %v881 = vsel %vm497, %v879, 0.0
      %882 = vadd.xlane.f32.xlu0 %v881
      %v883 = vpop.xlane.xlu0 %882
      %v884 = vsel %vm497, %v880, 0.0
      %885 = vadd.xlane.f32.xlu0 %v884
      %v886 = vpop.xlane.xlu0 %885
      %v887 = vmul.f32 %v883, %v514
      %v888 = vmul.f32 %v886, %v514
      %v889 = vsub.f32 %v879, %v887
      %v890 = vsub.f32 %v880, %v888
      %v891 = vmul.f32 %v889, %v889
      %v892 = vmul.f32 %v890, %v890
      %v893 = vsel %vm497, %v891, 0.0
      %894 = vadd.xlane.f32.xlu0 %v893
      %v895 = vpop.xlane.xlu0 %894
      %v896 = vsel %vm497, %v892, 0.0
      %897 = vadd.xlane.f32.xlu0 %v896
      %v898 = vpop.xlane.xlu0 %897
      %v899 = vmul.f32 %v895, %v514
      %v900 = vmul.f32 %v898, %v514
      %v901 = vadd.f32 %v899, 1e-05
      %v902 = vadd.f32 %v900, 1e-05
      %v903 = vrsqrt.pop %v901
      %v904 = vmul.f32 %v903, %v901
      %v905 = vmul.f32 %v904, %v903
      %v906 = vmul.f32 0.5, %v905
      %v907 = vsub.f32 1.5, %v906
      %v908 = vmul.f32 %v903, %v907
      %vm909 = vweird.f32 %v901
      %vm910 = vweird.f32 %v903
      %vm911 = vmor %vm909, %vm910
      %v912 = vsel %vm911, %v903, %v908
      %v913 = vrsqrt.pop %v902
      %v914 = vmul.f32 %v913, %v902
      %v915 = vmul.f32 %v914, %v913
      %v916 = vmul.f32 0.5, %v915
      %v917 = vsub.f32 1.5, %v916
      %v918 = vmul.f32 %v913, %v917
      %vm919 = vweird.f32 %v902
      %vm920 = vweird.f32 %v913
      %vm921 = vmor %vm919, %vm920
      %v922 = vsel %vm921, %v913, %v918
      %v923 = vmul.f32 %v889, %v912
      %v924 = vmul.f32 %v890, %v922
      %v925 = vperm.slane %v476, 6
      %v926 = vmul.f32 %v923, %v925
      %v927 = vmul.f32 %v924, %v925
      %v928 = vperm.slane %v476, 7
      %v929 = vadd.f32 %v926, %v928
      %v930 = vadd.f32 %v927, %v928
      %v931 = vpack.c.bf16 %v930, %v929
      %s932 = scalar_lea.vmem %s5, 128
      %v933 = vld [vmem:[%s932] sm:$0xff]
      %v934 = vld [vmem:[%s932 + $0x8] sm:$0xff]
      %v935 = vld [vmem:[%s932 + $0x10] sm:$0xff]
      %v936 = vld [vmem:[%s932 + $0x18] sm:$0xff]
      %v937 = vld [vmem:[%s932 + $0x20] sm:$0xff]
      %v938 = vld [vmem:[%s932 + $0x28] sm:$0xff]
      %v939 = vld [vmem:[%s932 + $0x30] sm:$0xff]
      %v940 = vld [vmem:[%s932 + $0x38] sm:$0xff]
      %v941 = vpack.c.bf16 %v934, %v933
      %v942 = vpack.c.bf16 %v936, %v935
      %v943 = vpack.c.bf16 %v938, %v937
      %v944 = vpack.c.bf16 %v940, %v939
      %v945 = vperm.slane %v589, 2
      %v947 = vsel %vm497, %v931, 0
      %949 = vmatpush.bf16.msra.mxu0 0
      %950 = vmatpush.bf16.msra.mxu0 0
      %951 = vmatpush.bf16.msra.mxu0 0
      %952 = vmatpush.bf16.msra.mxu0 0
      %953 = vmatpush.bf16.msra.mxu0 %v944
      %954 = vmatpush.bf16.msra.mxu0 %v943
      %955 = vmatpush.bf16.msra.mxu0 %v942
      %956 = vmatpush.bf16.msra.mxu0 %v941
      %957 = vmatmul.bf16.gmra.mxu0 %v947
      %v958 = vpop.f32.mrf.mxu0
      %v959 = vadd.f32 %v945, %v958
      %v960 = vpop.f32.mrf.mxu0
      %v961 = vadd.f32 %v945, %v960
      %962 = vdwg.mxu0
      %v963 = vmul.f32 %v717, 0.25
      %v964 = vmul.f32 %v719, 0.25
      %v965 = vpack.c.bf16 %v964, %v963
      %v966 = vpack.c.bf16 %v840, %v838
      %v967 = vpack.c.bf16 %v961, %v959
      %vm968 = vcmask 130048
      %v970 = vsel %vm968, %v965, 0
      %v973 = vsel %vm968, %v966, 0
      %975 = vmatpush.bf16.xpose.msra.mxu0 0
      %976 = vmatpush.bf16.xpose.msra.mxu0 0
      %977 = vmatpush.bf16.xpose.msra.mxu0 0
      %978 = vmatpush.bf16.xpose.msra.mxu0 0
      %979 = vmatpush.bf16.xpose.msra.mxu0 0
      %980 = vmatpush.bf16.xpose.msra.mxu0 0
      %981 = vmatpush.bf16.xpose.msra.mxu0 0
      %982 = vmatpush.bf16.xpose.msra.mxu0 %v973
      %983 = vmatmul.bf16.gmra.mxu0 %v970
      %v984 = vpop.f32.mrf.mxu0
      %v985 = vadd.f32 0.0, %v984
      %v986 = vpop.f32.mrf.mxu0
      %v987 = vadd.f32 0.0, %v986
      %988 = vdwg.mxu0
      %vm989 = vcmp.gt.f32.partialorder %v483, 0.0
      %v990 = vsel %vm989, 1, 0
      %v991 = vperm.slane %v990, 0
      %vm992 = vcmp.eq.s32.totalorder %v991, 1
      %v993 = vsel %vm992, %v985, -1e+30
      %v994 = vsel %vm992, %v987, -1e+30
      %v995 = vsel %vm968, %v993, -inf
      %996 = vmax.xlane.f32.xlu0 %v995
      %v997 = vpop.xlane.xlu0 %996
      %v998 = vsel %vm968, %v994, -inf
      %999 = vmax.xlane.f32.xlu0 %v998
      %v1000 = vpop.xlane.xlu0 %999
      %v1001 = vsub.f32 %v993, %v997
      %v1002 = vsub.f32 %v994, %v1000
      %v1003 = vmul.f32 %v1001, 1.442695
      %v1004 = vpow.pop %v1003
      %v1005 = vmul.f32 %v1002, 1.442695
      %v1006 = vpow.pop %v1005
      %v1007 = vsel %vm968, %v1004, 0.0
      %1008 = vadd.xlane.f32.xlu0 %v1007
      %v1009 = vpop.xlane.xlu0 %1008
      %v1010 = vsel %vm968, %v1006, 0.0
      %1011 = vadd.xlane.f32.xlu0 %v1010
      %v1012 = vpop.xlane.xlu0 %1011
      %v1013 = vrcp.pop %v1009
      %v1014 = vrcp.pop %v1012
      %v1015 = vmul.f32 %v1004, %v1013
      %v1016 = vmul.f32 %v1006, %v1014
      %v1017 = vpack.c.bf16 %v1016, %v1015
      %v1019 = vsel %vm968, %v1017, 0
      %1021 = vmatpush.bf16.msra.mxu0 0
      %1022 = vmatpush.bf16.msra.mxu0 0
      %1023 = vmatpush.bf16.msra.mxu0 0
      %1024 = vmatpush.bf16.msra.mxu0 0
      %1025 = vmatpush.bf16.msra.mxu0 0
      %1026 = vmatpush.bf16.msra.mxu0 0
      %1027 = vmatpush.bf16.msra.mxu0 0
      %1028 = vmatpush.bf16.msra.mxu0 %v967
      %1029 = vmatmul.bf16.gmra.mxu0 %v1019
      %v1030 = vpop.f32.mrf.mxu0
      %v1031 = vadd.f32 0.0, %v1030
      %v1032 = vpop.f32.mrf.mxu0
      %v1033 = vadd.f32 0.0, %v1032
      %1034 = vdwg.mxu0
      %1036 = vrot.lane.b32.xlu0 %v965, 112
      %v1037 = vpop.permute.xlu0 %1036
      %1039 = vrot.lane.b32.xlu0 %v966, 112
      %v1040 = vpop.permute.xlu0 %1039
      %v1042 = vsel %vm968, %v1037, 0
      %v1045 = vsel %vm968, %v1040, 0
      %1047 = vmatpush.bf16.xpose.msra.mxu0 0
      %1048 = vmatpush.bf16.xpose.msra.mxu0 0
      %1049 = vmatpush.bf16.xpose.msra.mxu0 0
      %1050 = vmatpush.bf16.xpose.msra.mxu0 0
      %1051 = vmatpush.bf16.xpose.msra.mxu0 0
      %1052 = vmatpush.bf16.xpose.msra.mxu0 0
      %1053 = vmatpush.bf16.xpose.msra.mxu0 0
      %1054 = vmatpush.bf16.xpose.msra.mxu0 %v1045
      %1055 = vmatmul.bf16.gmra.mxu0 %v1042
      %v1056 = vpop.f32.mrf.mxu0
      %v1057 = vadd.f32 0.0, %v1056
      %v1058 = vpop.f32.mrf.mxu0
      %v1059 = vadd.f32 0.0, %v1058
      %1060 = vdwg.mxu0
      %v1061 = vsel %vm992, %v1057, -1e+30
      %v1062 = vsel %vm992, %v1059, -1e+30
      %v1063 = vsel %vm968, %v1061, -inf
      %1064 = vmax.xlane.f32.xlu0 %v1063
      %v1065 = vpop.xlane.xlu0 %1064
      %v1066 = vsel %vm968, %v1062, -inf
      %1067 = vmax.xlane.f32.xlu0 %v1066
      %v1068 = vpop.xlane.xlu0 %1067
      %v1069 = vsub.f32 %v1061, %v1065
      %v1070 = vsub.f32 %v1062, %v1068
      %v1071 = vmul.f32 %v1069, 1.442695
      %v1072 = vpow.pop %v1071
      %v1073 = vmul.f32 %v1070, 1.442695
      %v1074 = vpow.pop %v1073
      %v1075 = vsel %vm968, %v1072, 0.0
      %1076 = vadd.xlane.f32.xlu0 %v1075
      %v1077 = vpop.xlane.xlu0 %1076
      %v1078 = vsel %vm968, %v1074, 0.0
      %1079 = vadd.xlane.f32.xlu0 %v1078
      %v1080 = vpop.xlane.xlu0 %1079
      %v1081 = vrcp.pop %v1077
      %v1082 = vrcp.pop %v1080
      %v1083 = vmul.f32 %v1072, %v1081
      %v1084 = vmul.f32 %v1074, %v1082
      %v1085 = vpack.c.bf16 %v1084, %v1083
      %1087 = vrot.lane.b32.xlu0 %v967, 112
      %v1088 = vpop.permute.xlu0 %1087
      %v1091 = vsel %vm968, %v1085, 0
      %1093 = vmatpush.bf16.msra.mxu0 0
      %1094 = vmatpush.bf16.msra.mxu0 0
      %1095 = vmatpush.bf16.msra.mxu0 0
      %1096 = vmatpush.bf16.msra.mxu0 0
      %1097 = vmatpush.bf16.msra.mxu0 0
      %1098 = vmatpush.bf16.msra.mxu0 0
      %1099 = vmatpush.bf16.msra.mxu0 0
      %1100 = vmatpush.bf16.msra.mxu0 %v1088
      %1101 = vmatmul.bf16.gmra.mxu0 %v1091
      %v1102 = vpop.f32.mrf.mxu0
      %v1103 = vadd.f32 0.0, %v1102
      %v1104 = vpop.f32.mrf.mxu0
      %v1105 = vadd.f32 0.0, %v1104
      %1106 = vdwg.mxu0
      %1107 = vrot.lane.b32.xlu0 %v965, 96
      %v1108 = vpop.permute.xlu0 %1107
      %1109 = vrot.lane.b32.xlu0 %v966, 96
      %v1110 = vpop.permute.xlu0 %1109
      %v1112 = vsel %vm968, %v1108, 0
      %v1115 = vsel %vm968, %v1110, 0
      %1117 = vmatpush.bf16.xpose.msra.mxu0 0
      %1118 = vmatpush.bf16.xpose.msra.mxu0 0
      %1119 = vmatpush.bf16.xpose.msra.mxu0 0
      %1120 = vmatpush.bf16.xpose.msra.mxu0 0
      %1121 = vmatpush.bf16.xpose.msra.mxu0 0
      %1122 = vmatpush.bf16.xpose.msra.mxu0 0
      %1123 = vmatpush.bf16.xpose.msra.mxu0 0
      %1124 = vmatpush.bf16.xpose.msra.mxu0 %v1115
      %1125 = vmatmul.bf16.gmra.mxu0 %v1112
      %v1126 = vpop.f32.mrf.mxu0
      %v1127 = vadd.f32 0.0, %v1126
      %v1128 = vpop.f32.mrf.mxu0
      %v1129 = vadd.f32 0.0, %v1128
      %1130 = vdwg.mxu0
      %v1131 = vsel %vm992, %v1127, -1e+30
      %v1132 = vsel %vm992, %v1129, -1e+30
      %v1133 = vsel %vm968, %v1131, -inf
      %1134 = vmax.xlane.f32.xlu0 %v1133
      %v1135 = vpop.xlane.xlu0 %1134
      %v1136 = vsel %vm968, %v1132, -inf
      %1137 = vmax.xlane.f32.xlu0 %v1136
      %v1138 = vpop.xlane.xlu0 %1137
      %v1139 = vsub.f32 %v1131, %v1135
      %v1140 = vsub.f32 %v1132, %v1138
      %v1141 = vmul.f32 %v1139, 1.442695
      %v1142 = vpow.pop %v1141
      %v1143 = vmul.f32 %v1140, 1.442695
      %v1144 = vpow.pop %v1143
      %v1145 = vsel %vm968, %v1142, 0.0
      %1146 = vadd.xlane.f32.xlu0 %v1145
      %v1147 = vpop.xlane.xlu0 %1146
      %v1148 = vsel %vm968, %v1144, 0.0
      %1149 = vadd.xlane.f32.xlu0 %v1148
      %v1150 = vpop.xlane.xlu0 %1149
      %v1151 = vrcp.pop %v1147
      %v1152 = vrcp.pop %v1150
      %v1153 = vmul.f32 %v1142, %v1151
      %v1154 = vmul.f32 %v1144, %v1152
      %v1155 = vpack.c.bf16 %v1154, %v1153
      %1156 = vrot.lane.b32.xlu0 %v967, 96
      %v1157 = vpop.permute.xlu0 %1156
      %v1160 = vsel %vm968, %v1155, 0
      %1162 = vmatpush.bf16.msra.mxu0 0
      %1163 = vmatpush.bf16.msra.mxu0 0
      %1164 = vmatpush.bf16.msra.mxu0 0
      %1165 = vmatpush.bf16.msra.mxu0 0
      %1166 = vmatpush.bf16.msra.mxu0 0
      %1167 = vmatpush.bf16.msra.mxu0 0
      %1168 = vmatpush.bf16.msra.mxu0 0
      %1169 = vmatpush.bf16.msra.mxu0 %v1157
      %1170 = vmatmul.bf16.gmra.mxu0 %v1160
      %v1171 = vpop.f32.mrf.mxu0
      %v1172 = vadd.f32 0.0, %v1171
      %v1173 = vpop.f32.mrf.mxu0
      %v1174 = vadd.f32 0.0, %v1173
      %1175 = vdwg.mxu0
      %1176 = vrot.lane.b32.xlu0 %v965, 80
      %v1177 = vpop.permute.xlu0 %1176
      %1178 = vrot.lane.b32.xlu0 %v966, 80
      %v1179 = vpop.permute.xlu0 %1178
      %v1181 = vsel %vm968, %v1177, 0
      %v1184 = vsel %vm968, %v1179, 0
      %1186 = vmatpush.bf16.xpose.msra.mxu0 0
      %1187 = vmatpush.bf16.xpose.msra.mxu0 0
      %1188 = vmatpush.bf16.xpose.msra.mxu0 0
      %1189 = vmatpush.bf16.xpose.msra.mxu0 0
      %1190 = vmatpush.bf16.xpose.msra.mxu0 0
      %1191 = vmatpush.bf16.xpose.msra.mxu0 0
      %1192 = vmatpush.bf16.xpose.msra.mxu0 0
      %1193 = vmatpush.bf16.xpose.msra.mxu0 %v1184
      %1194 = vmatmul.bf16.gmra.mxu0 %v1181
      %v1195 = vpop.f32.mrf.mxu0
      %v1196 = vadd.f32 0.0, %v1195
      %v1197 = vpop.f32.mrf.mxu0
      %v1198 = vadd.f32 0.0, %v1197
      %1199 = vdwg.mxu0
      %v1200 = vsel %vm992, %v1196, -1e+30
      %v1201 = vsel %vm992, %v1198, -1e+30
      %v1202 = vsel %vm968, %v1200, -inf
      %1203 = vmax.xlane.f32.xlu0 %v1202
      %v1204 = vpop.xlane.xlu0 %1203
      %v1205 = vsel %vm968, %v1201, -inf
      %1206 = vmax.xlane.f32.xlu0 %v1205
      %v1207 = vpop.xlane.xlu0 %1206
      %v1208 = vsub.f32 %v1200, %v1204
      %v1209 = vsub.f32 %v1201, %v1207
      %v1210 = vmul.f32 %v1208, 1.442695
      %v1211 = vpow.pop %v1210
      %v1212 = vmul.f32 %v1209, 1.442695
      %v1213 = vpow.pop %v1212
      %v1214 = vsel %vm968, %v1211, 0.0
      %1215 = vadd.xlane.f32.xlu0 %v1214
      %v1216 = vpop.xlane.xlu0 %1215
      %v1217 = vsel %vm968, %v1213, 0.0
      %1218 = vadd.xlane.f32.xlu0 %v1217
      %v1219 = vpop.xlane.xlu0 %1218
      %v1220 = vrcp.pop %v1216
      %v1221 = vrcp.pop %v1219
      %v1222 = vmul.f32 %v1211, %v1220
      %v1223 = vmul.f32 %v1213, %v1221
      %v1224 = vpack.c.bf16 %v1223, %v1222
      %1225 = vrot.lane.b32.xlu0 %v967, 80
      %v1226 = vpop.permute.xlu0 %1225
      %v1229 = vsel %vm968, %v1224, 0
      %1231 = vmatpush.bf16.msra.mxu0 0
      %1232 = vmatpush.bf16.msra.mxu0 0
      %1233 = vmatpush.bf16.msra.mxu0 0
      %1234 = vmatpush.bf16.msra.mxu0 0
      %1235 = vmatpush.bf16.msra.mxu0 0
      %1236 = vmatpush.bf16.msra.mxu0 0
      %1237 = vmatpush.bf16.msra.mxu0 0
      %1238 = vmatpush.bf16.msra.mxu0 %v1226
      %1239 = vmatmul.bf16.gmra.mxu0 %v1229
      %v1240 = vpop.f32.mrf.mxu0
      %v1241 = vadd.f32 0.0, %v1240
      %v1242 = vpop.f32.mrf.mxu0
      %v1243 = vadd.f32 0.0, %v1242
      %1244 = vdwg.mxu0
      %1247 = vrot.lane.b32.xlu0 %v1103, 16
      %v1248 = vpop.permute.xlu0 %1247
      %1249 = vrot.lane.b32.xlu0 %v1105, 16
      %v1250 = vpop.permute.xlu0 %1249
      %1255 = vrot.lane.b32.xlu0 %v1172, 32
      %v1256 = vpop.permute.xlu0 %1255
      %1257 = vrot.lane.b32.xlu0 %v1174, 32
      %v1258 = vpop.permute.xlu0 %1257
      %1263 = vrot.lane.b32.xlu0 %v1241, 48
      %v1264 = vpop.permute.xlu0 %1263
      %1265 = vrot.lane.b32.xlu0 %v1243, 48
      %v1266 = vpop.permute.xlu0 %1265
      %v1269 = vsel %vm968, %v1031, %v1248
      %v1270 = vsel %vm968, %v1033, %v1250
      %vm1271 = vcmask 261120
      %v1272 = vsel %vm1271, %v1269, %v1256
      %v1273 = vsel %vm1271, %v1270, %v1258
      %vm1274 = vcmask 392192
      %v1275 = vsel %vm1274, %v1272, %v1264
      %v1276 = vsel %vm1274, %v1273, %v1266
      %v1277 = vpack.c.bf16 %v1276, %v1275
      %v1278 = vld [vmem:[%s7] sm:$0xff]
      %v1279 = vld [vmem:[%s7 + $0x8] sm:$0xff]
      %v1280 = vld [vmem:[%s7 + $0x10] sm:$0xff]
      %v1281 = vld [vmem:[%s7 + $0x18] sm:$0xff]
      %v1282 = vld [vmem:[%s7 + $0x20] sm:$0xff]
      %v1283 = vld [vmem:[%s7 + $0x28] sm:$0xff]
      %v1284 = vld [vmem:[%s7 + $0x30] sm:$0xff]
      %v1285 = vld [vmem:[%s7 + $0x38] sm:$0xff]
      %v1286 = vpack.c.bf16 %v1279, %v1278
      %v1287 = vpack.c.bf16 %v1281, %v1280
      %v1288 = vpack.c.bf16 %v1283, %v1282
      %v1289 = vpack.c.bf16 %v1285, %v1284
      %v1290 = vld [vmem:[%s8] sm:$0x1]
      %v1292 = vperm.slane %v1290, 0
      %v1295 = vsel %vm497, %v1277, 0
      %1297 = vmatpush.bf16.msra.mxu0 0
      %1298 = vmatpush.bf16.msra.mxu0 0
      %1299 = vmatpush.bf16.msra.mxu0 0
      %1300 = vmatpush.bf16.msra.mxu0 0
      %1301 = vmatpush.bf16.msra.mxu0 %v1289
      %1302 = vmatpush.bf16.msra.mxu0 %v1288
      %1303 = vmatpush.bf16.msra.mxu0 %v1287
      %1304 = vmatpush.bf16.msra.mxu0 %v1286
      %1305 = vmatmul.bf16.gmra.mxu0 %v1295
      %v1306 = vpop.f32.mrf.mxu0
      %v1307 = vadd.f32 %v1292, %v1306
      %v1308 = vpop.f32.mrf.mxu0
      %v1309 = vadd.f32 %v1292, %v1308
      %1310 = vdwg.mxu0
      %v1311 = vmul.f32 %v1307, %v631
      %v1312 = vmul.f32 %v1309, %v636
      %vm1313 = vcmask 1040384
      %v1314 = vrot.slane %v631, 7
      %v1315 = vrot.slane %v636, 7
      %v1316 = vsel %vm1313, %v1314, %v1315
      %v1320 = vmul.f32 %v478, %v1314
      %v1321 = vmul.f32 %v479, %v1316
      %v1322 = vmul.f32 %v480, %v1315
      %v1325 = vrot.slane %v1311, 7
      %v1326 = vrot.slane %v1312, 7
      %v1327 = vsel %vm1313, %v1325, %v1326
      %v1331 = vadd.f32 %v1320, %v1325
      %v1332 = vadd.f32 %v1321, %v1327
      %v1333 = vadd.f32 %v1322, %v1326
      %vm1334 = vcmask 523265
      %v1335 = vsel %vm1334, %v1331, 0.0
      %1336 = vadd.xlane.f32.xlu0 %v1335
      %v1337 = vpop.xlane.xlu0 %1336
      %v1338 = vsel %vm497, %v1332, 0.0
      %1339 = vadd.xlane.f32.xlu0 %v1338
      %v1340 = vpop.xlane.xlu0 %1339
      %vm1341 = vcmask 516096
      %v1342 = vsel %vm1341, %v1333, 0.0
      %1343 = vadd.xlane.f32.xlu0 %v1342
      %v1344 = vpop.xlane.xlu0 %1343
      %v1345 = vmul.f32 %v1337, %v514
      %v1346 = vmul.f32 %v1340, %v514
      %v1347 = vmul.f32 %v1344, %v514
      %v1348 = vsub.f32 %v1331, %v1345
      %v1349 = vsub.f32 %v1332, %v1346
      %v1350 = vsub.f32 %v1333, %v1347
      %v1351 = vmul.f32 %v1348, %v1348
      %v1352 = vmul.f32 %v1349, %v1349
      %v1353 = vmul.f32 %v1350, %v1350
      %v1354 = vsel %vm1334, %v1351, 0.0
      %1355 = vadd.xlane.f32.xlu0 %v1354
      %v1356 = vpop.xlane.xlu0 %1355
      %v1357 = vsel %vm497, %v1352, 0.0
      %1358 = vadd.xlane.f32.xlu0 %v1357
      %v1359 = vpop.xlane.xlu0 %1358
      %v1360 = vsel %vm1341, %v1353, 0.0
      %1361 = vadd.xlane.f32.xlu0 %v1360
      %v1362 = vpop.xlane.xlu0 %1361
      %v1363 = vmul.f32 %v1356, %v514
      %v1364 = vmul.f32 %v1359, %v514
      %v1365 = vmul.f32 %v1362, %v514
      %v1366 = vadd.f32 %v1363, 1e-05
      %v1367 = vadd.f32 %v1364, 1e-05
      %v1368 = vadd.f32 %v1365, 1e-05
      %v1369 = vrsqrt.pop %v1366
      %v1370 = vmul.f32 %v1369, %v1366
      %v1371 = vmul.f32 %v1370, %v1369
      %v1372 = vmul.f32 0.5, %v1371
      %v1373 = vsub.f32 1.5, %v1372
      %v1374 = vmul.f32 %v1369, %v1373
      %vm1375 = vweird.f32 %v1366
      %vm1376 = vweird.f32 %v1369
      %vm1377 = vmor %vm1375, %vm1376
      %v1378 = vsel %vm1377, %v1369, %v1374
      %v1379 = vrsqrt.pop %v1367
      %v1380 = vmul.f32 %v1379, %v1367
      %v1381 = vmul.f32 %v1380, %v1379
      %v1382 = vmul.f32 0.5, %v1381
      %v1383 = vsub.f32 1.5, %v1382
      %v1384 = vmul.f32 %v1379, %v1383
      %vm1385 = vweird.f32 %v1367
      %vm1386 = vweird.f32 %v1379
      %vm1387 = vmor %vm1385, %vm1386
      %v1388 = vsel %vm1387, %v1379, %v1384
      %v1389 = vrsqrt.pop %v1368
      %v1390 = vmul.f32 %v1389, %v1368
      %v1391 = vmul.f32 %v1390, %v1389
      %v1392 = vmul.f32 0.5, %v1391
      %v1393 = vsub.f32 1.5, %v1392
      %v1394 = vmul.f32 %v1389, %v1393
      %vm1395 = vweird.f32 %v1368
      %vm1396 = vweird.f32 %v1389
      %vm1397 = vmor %vm1395, %vm1396
      %v1398 = vsel %vm1397, %v1389, %v1394
      %v1399 = vmul.f32 %v1348, %v1378
      %v1400 = vmul.f32 %v1349, %v1388
      %v1401 = vmul.f32 %v1350, %v1398
      %v1402 = vperm.slane %v477, 0
      %v1403 = vmul.f32 %v1399, %v1402
      %v1404 = vmul.f32 %v1400, %v1402
      %v1405 = vmul.f32 %v1401, %v1402
      %v1406 = vperm.slane %v477, 1
      %v1407 = vadd.f32 %v1403, %v1406
      %v1408 = vadd.f32 %v1404, %v1406
      %v1409 = vadd.f32 %v1405, %v1406
      %v1410 = vpack.c.bf16 %v1408, %v1407
      %v1411 = vpack.c.bf16 %v1409, %v1409
      %v1412 = vld [vmem:[%s9] sm:$0xff]
      %v1413 = vld [vmem:[%s9 + $0x8] sm:$0xff]
      %v1414 = vld [vmem:[%s9 + $0x10] sm:$0xff]
      %v1415 = vld [vmem:[%s9 + $0x18] sm:$0xff]
      %v1416 = vld [vmem:[%s9 + $0x20] sm:$0xff]
      %v1417 = vld [vmem:[%s9 + $0x28] sm:$0xff]
      %v1418 = vld [vmem:[%s9 + $0x30] sm:$0xff]
      %v1419 = vld [vmem:[%s9 + $0x38] sm:$0xff]
      %v1420 = vld [vmem:[%s9 + $0x40] sm:$0xff]
      %v1421 = vld [vmem:[%s9 + $0x48] sm:$0xff]
      %v1422 = vld [vmem:[%s9 + $0x50] sm:$0xff]
      %v1423 = vld [vmem:[%s9 + $0x58] sm:$0xff]
      %v1424 = vld [vmem:[%s9 + $0x60] sm:$0xff]
      %v1425 = vld [vmem:[%s9 + $0x68] sm:$0xff]
      %v1426 = vld [vmem:[%s9 + $0x70] sm:$0xff]
      %v1427 = vld [vmem:[%s9 + $0x78] sm:$0xff]
      %v1428 = vpack.c.bf16 %v1414, %v1412
      %v1429 = vpack.c.bf16 %v1415, %v1413
      %v1430 = vpack.c.bf16 %v1418, %v1416
      %v1431 = vpack.c.bf16 %v1419, %v1417
      %v1432 = vpack.c.bf16 %v1422, %v1420
      %v1433 = vpack.c.bf16 %v1423, %v1421
      %v1434 = vpack.c.bf16 %v1426, %v1424
      %v1435 = vpack.c.bf16 %v1427, %v1425
      %v1436 = vld [vmem:[%s10] sm:$0x3]
      %v1438 = vperm.slane %v1436, 0
      %v1439 = vperm.slane %v1436, 1
      %vm1442 = vsmask.f32 7424
      %v1444 = vshrl.u32 %v1410, 16
      %v1446 = vshll.u32 %v1410, 16
      %v1448 = vrot.slane %v1446, 1
      %v1449 = vor.u32 %v1444, %v1448
      %v1451 = vshll.u32 %v1411, 16
      %v1453 = vrot.slane %v1451, 1
      %v1454 = vsel %vm1442, %v1449, %v1453
      %v1456 = vsel %vm497, %v1454, 0
      %1458 = vmatpush.bf16.msra.mxu0 0
      %1459 = vmatpush.bf16.msra.mxu0 0
      %1460 = vmatpush.bf16.msra.mxu0 0
      %1461 = vmatpush.bf16.msra.mxu0 0
      %1462 = vmatpush.bf16.msra.mxu0 %v1434
      %1463 = vmatpush.bf16.msra.mxu0 %v1432
      %1464 = vmatpush.bf16.msra.mxu0 %v1430
      %1465 = vmatpush.bf16.msra.mxu0 %v1428
      %1466 = vmatmul.bf16.gmra.mxu0 %v1456
      %v1467 = vpop.f32.mrf.mxu0
      %v1468 = vadd.f32 %v1438, %v1467
      %v1469 = vpop.f32.mrf.mxu0
      %v1470 = vadd.f32 %v1438, %v1469
      %1471 = vdwg.mxu0
      %1472 = vmatpush.bf16.msra.mxu0 0
      %1473 = vmatpush.bf16.msra.mxu0 0
      %1474 = vmatpush.bf16.msra.mxu0 0
      %1475 = vmatpush.bf16.msra.mxu0 0
      %1476 = vmatpush.bf16.msra.mxu0 %v1435
      %1477 = vmatpush.bf16.msra.mxu0 %v1433
      %1478 = vmatpush.bf16.msra.mxu0 %v1431
      %1479 = vmatpush.bf16.msra.mxu0 %v1429
      %1480 = vmatmul.bf16.gmra.mxu0 %v1456
      %v1481 = vpop.f32.mrf.mxu0
      %v1482 = vadd.f32 %v1439, %v1481
      %v1483 = vpop.f32.mrf.mxu0
      %v1484 = vadd.f32 %v1439, %v1483
      %1485 = vdwg.mxu0
      %v1486 = vmul.f32 %v1468, 0.5
      %v1487 = vmul.f32 %v1482, 0.5
      %v1488 = vmul.f32 %v1470, 0.5
      %v1489 = vmul.f32 %v1484, 0.5
      %v1490 = vmul.f32 %v1468, 0.044715
      %v1491 = vmul.f32 %v1482, 0.044715
      %v1492 = vmul.f32 %v1470, 0.044715
      %v1493 = vmul.f32 %v1484, 0.044715
      %v1494 = vmul.f32 %v1490, %v1468
      %v1495 = vmul.f32 %v1491, %v1482
      %v1496 = vmul.f32 %v1492, %v1470
      %v1497 = vmul.f32 %v1493, %v1484
      %v1498 = vmul.f32 %v1494, %v1468
      %v1499 = vmul.f32 %v1495, %v1482
      %v1500 = vmul.f32 %v1496, %v1470
      %v1501 = vmul.f32 %v1497, %v1484
      %v1502 = vadd.f32 %v1468, %v1498
      %v1503 = vadd.f32 %v1482, %v1499
      %v1504 = vadd.f32 %v1470, %v1500
      %v1505 = vadd.f32 %v1484, %v1501
      %v1506 = vmul.f32 %v1502, 0.7978846
      %v1507 = vmul.f32 %v1503, 0.7978846
      %v1508 = vmul.f32 %v1504, 0.7978846
      %v1509 = vmul.f32 %v1505, 0.7978846
      %v1510 = vtanh.pop %v1506
      %v1511 = vtanh.pop %v1507
      %v1512 = vtanh.pop %v1508
      %v1513 = vtanh.pop %v1509
      %v1514 = vadd.f32 %v1510, 1.0
      %v1515 = vadd.f32 %v1511, 1.0
      %v1516 = vadd.f32 %v1512, 1.0
      %v1517 = vadd.f32 %v1513, 1.0
      %v1518 = vmul.f32 %v1486, %v1514
      %v1519 = vmul.f32 %v1487, %v1515
      %v1520 = vmul.f32 %v1488, %v1516
      %v1521 = vmul.f32 %v1489, %v1517
      %v1522 = vpack.c.bf16 %v1520, %v1518
      %v1523 = vpack.c.bf16 %v1521, %v1519
      %v1524 = vld [vmem:[%s11] sm:$0xff]
      %v1525 = vld [vmem:[%s11 + $0x8] sm:$0xff]
      %v1526 = vld [vmem:[%s11 + $0x10] sm:$0xff]
      %v1527 = vld [vmem:[%s11 + $0x18] sm:$0xff]
      %v1528 = vld [vmem:[%s11 + $0x20] sm:$0xff]
      %v1529 = vld [vmem:[%s11 + $0x28] sm:$0xff]
      %v1530 = vld [vmem:[%s11 + $0x30] sm:$0xff]
      %v1531 = vld [vmem:[%s11 + $0x38] sm:$0xff]
      %v1532 = vld [vmem:[%s11 + $0x40] sm:$0xff]
      %v1533 = vld [vmem:[%s11 + $0x48] sm:$0xff]
      %v1534 = vld [vmem:[%s11 + $0x50] sm:$0xff]
      %v1535 = vld [vmem:[%s11 + $0x58] sm:$0xff]
      %v1536 = vld [vmem:[%s11 + $0x60] sm:$0xff]
      %v1537 = vld [vmem:[%s11 + $0x68] sm:$0xff]
      %v1538 = vld [vmem:[%s11 + $0x70] sm:$0xff]
      %v1539 = vld [vmem:[%s11 + $0x78] sm:$0xff]
      %v1540 = vld [vmem:[%s11 + $0x80] sm:$0xff]
      %v1541 = vld [vmem:[%s11 + $0x88] sm:$0xff]
      %v1542 = vld [vmem:[%s11 + $0x90] sm:$0xff]
      %v1543 = vld [vmem:[%s11 + $0x98] sm:$0xff]
      %v1544 = vld [vmem:[%s11 + $0xa0] sm:$0xff]
      %v1545 = vld [vmem:[%s11 + $0xa8] sm:$0xff]
      %v1546 = vld [vmem:[%s11 + $0xb0] sm:$0xff]
      %v1547 = vld [vmem:[%s11 + $0xb8] sm:$0xff]
      %v1548 = vld [vmem:[%s11 + $0xc0] sm:$0xff]
      %v1549 = vld [vmem:[%s11 + $0xc8] sm:$0xff]
      %v1550 = vld [vmem:[%s11 + $0xd0] sm:$0xff]
      %v1551 = vld [vmem:[%s11 + $0xd8] sm:$0xff]
      %v1552 = vld [vmem:[%s11 + $0xe0] sm:$0xff]
      %v1553 = vld [vmem:[%s11 + $0xe8] sm:$0xff]
      %v1554 = vld [vmem:[%s11 + $0xf0] sm:$0xff]
      %v1555 = vld [vmem:[%s11 + $0xf8] sm:$0xff]
      %v1556 = vpack.c.bf16 %v1525, %v1524
      %v1557 = vpack.c.bf16 %v1527, %v1526
      %v1558 = vpack.c.bf16 %v1529, %v1528
      %v1559 = vpack.c.bf16 %v1531, %v1530
      %v1560 = vpack.c.bf16 %v1533, %v1532
      %v1561 = vpack.c.bf16 %v1535, %v1534
      %v1562 = vpack.c.bf16 %v1537, %v1536
      %v1563 = vpack.c.bf16 %v1539, %v1538
      %v1564 = vpack.c.bf16 %v1541, %v1540
      %v1565 = vpack.c.bf16 %v1543, %v1542
      %v1566 = vpack.c.bf16 %v1545, %v1544
      %v1567 = vpack.c.bf16 %v1547, %v1546
      %v1568 = vpack.c.bf16 %v1549, %v1548
      %v1569 = vpack.c.bf16 %v1551, %v1550
      %v1570 = vpack.c.bf16 %v1553, %v1552
      %v1571 = vpack.c.bf16 %v1555, %v1554
      %v1572 = vld [vmem:[%s12] sm:$0x1]
      %v1574 = vperm.slane %v1572, 0
      %1576 = vmatpush.bf16.msra.mxu0 %v1563
      %1577 = vmatpush.bf16.msra.mxu0 %v1562
      %1578 = vmatpush.bf16.msra.mxu0 %v1561
      %1579 = vmatpush.bf16.msra.mxu0 %v1560
      %1580 = vmatpush.bf16.msra.mxu0 %v1559
      %1581 = vmatpush.bf16.msra.mxu0 %v1558
      %1582 = vmatpush.bf16.msra.mxu0 %v1557
      %1583 = vmatpush.bf16.msra.mxu0 %v1556
      %1584 = vmatmul.bf16.gmra.mxu0 %v1522
      %v1585 = vpop.f32.mrf.mxu0
      %v1586 = vadd.f32 %v1574, %v1585
      %v1587 = vpop.f32.mrf.mxu0
      %v1588 = vadd.f32 %v1574, %v1587
      %1589 = vdwg.mxu0
      %1590 = vmatpush.bf16.msra.mxu0 %v1571
      %1591 = vmatpush.bf16.msra.mxu0 %v1570
      %1592 = vmatpush.bf16.msra.mxu0 %v1569
      %1593 = vmatpush.bf16.msra.mxu0 %v1568
      %1594 = vmatpush.bf16.msra.mxu0 %v1567
      %1595 = vmatpush.bf16.msra.mxu0 %v1566
      %1596 = vmatpush.bf16.msra.mxu0 %v1565
      %1597 = vmatpush.bf16.msra.mxu0 %v1564
      %1598 = vmatmul.bf16.gmra.mxu0 %v1523
      %v1599 = vpop.f32.mrf.mxu0
      %v1600 = vadd.f32 %v1586, %v1599
      %v1601 = vpop.f32.mrf.mxu0
      %v1602 = vadd.f32 %v1588, %v1601
      %1603 = vdwg.mxu0
      %v1604 = vmul.f32 %v1600, %v631
      %v1605 = vmul.f32 %v1602, %v636
      %v1608 = vrot.slane %v1604, 7
      %v1609 = vrot.slane %v1605, 7
      %v1610 = vsel %vm1313, %v1608, %v1609
      %v1614 = vadd.f32 %v1331, %v1608
      %v1615 = vadd.f32 %v1332, %v1610
      %v1616 = vadd.f32 %v1333, %v1609
      %1617 = vst.msk [vmem:[%s474 - $0x1] sm:$0xfe] %vm1334, %v1614
      %1618 = vst.msk [vmem:[%s474 + $0x7] sm:$0xff] %vm497, %v1615
      %1619 = vst.msk [vmem:[%s474 + $0xf] sm:$0x1] %vm1341, %v1616
      %p1620 = scmp.lt.s32.totalorder %s24, 1
      %s1621 = scalar_select %p1620, %s24, 1
      %s1622 = smul.addr %s1621, 2
      %s1623 = smul.addr %s1622, 8
      %s1624 = scalar_lea.vmem %s13, %s1623
      // Predicated region
      $region73: #{pc_transformer_proj_forward.9} parent=71 // pred_check
        %p1625 = pneg %p330
      $region74: #{pc_transformer_proj_forward.9} parent=71 // pred_check_branch
        %1627 = sbr.rel (%p1625) target = $region76
      $region75: #{pc_transformer_proj_forward.9} parent=71 // pred_region
        _
      $region76: #{pc_transformer_proj_forward.9} parent=71 // pred_fallthru
        _
    $region72: #{pc_transformer_proj_forward.9} parent=5 // pred_fallthru
      _
    %p1628 = scmp.le.s32.totalorder 2, %s19
    // Predicated region
    $region77: #{pc_transformer_proj_forward.9} parent=5 // pred_check
      %p1629 = pneg %p1628
    $region78: #{pc_transformer_proj_forward.9} parent=5 // pred_check_branch
      %1631 = sbr.rel (%p1629) target = $region80
    $region79: #{pc_transformer_proj_forward.9} parent=5 // pred_region
      %s1632 = ssub.s32 %s19, 2
      // Predicated region
      $region81: #{pc_transformer_proj_forward.9} parent=79 // pred_check
        %p1633 = pneg %p336
      $region82: #{pc_transformer_proj_forward.9} parent=79 // pred_check_branch
        %1635 = sbr.rel (%p1633) target = $region84
      $region83: #{pc_transformer_proj_forward.9} parent=79 // pred_region
        %p1636 = scmp.lt.s32.totalorder %s25, 1
        %s1637 = scalar_select %p1636, %s25, 1
        %s1638 = smul.addr %s1637, 2
        %s1639 = smul.addr %s1638, 8
        %s1640 = scalar_lea.vmem %s13, %s1639
      $region84: #{pc_transformer_proj_forward.9} parent=79 // pred_fallthru
        _
    $region80: #{pc_transformer_proj_forward.9} parent=5 // pred_fallthru
      _
  $region6: #{pc_transformer_proj_forward.9} parent=0 // loop_footer
    %s23 = sadd.s32 1, %s19
  $region7: #{pc_transformer_proj_forward.9} parent=0 // loop_footer_branch
    %18 = sbr.rel target = $region3
  $region8: #{pc_transformer_proj_forward.9} parent=0 // loop_exit
    _

// kernel: pc_transformer_proj_forward.11
$region0: #{pc_transformer_proj_forward.11}
  #allocation0 [shape = 'u32[]', space=smem, size = 0x4, offset = 0x4, fixed_abs, tag = 'smem constant byte address 0x4 - core index']
  #allocation1 [shape = 'u32[72,128]{1,0:T(1,128)}', space=vmem, size = 0x9000, scoped, tag = 'internal scratch']
  %s0 = inlined_call_operand.vmem [shape: f32[2,10,64], index: 0, kind: input, shape index: {}]
  %s1 = inlined_call_operand.vmem [shape: f32[2,4,1], index: 1, kind: input, shape index: {}]
  %s2 = inlined_call_operand.vmem [shape: f32[2,1,4], index: 2, kind: input, shape index: {}]
  %s3 = inlined_call_operand.vmem [shape: f32[10,64], index: 3, kind: input, shape index: {}]
  %s4 = inlined_call_operand.vmem [shape: f32[3,3,64], index: 4, kind: input, shape index: {}]
  %s5 = inlined_call_operand.vmem [shape: f32[3,64,64], index: 5, kind: input, shape index: {}]
  %s6 = inlined_call_operand.vmem [shape: f32[3,64], index: 6, kind: input, shape index: {}]
  %s7 = inlined_call_operand.vmem [shape: f32[64,64], index: 7, kind: input, shape index: {}]
  %s8 = inlined_call_operand.vmem [shape: f32[1,64], index: 8, kind: input, shape index: {}]
  %s9 = inlined_call_operand.vmem [shape: f32[64,256], index: 9, kind: input, shape index: {}]
  %s10 = inlined_call_operand.vmem [shape: f32[1,256], index: 10, kind: input, shape index: {}]
  %s11 = inlined_call_operand.vmem [shape: f32[256,64], index: 11, kind: input, shape index: {}]
  %s12 = inlined_call_operand.vmem [shape: f32[1,64], index: 12, kind: input, shape index: {}]
  %s13 = inlined_call_operand.hbm [shape: f32[2,4,64], index: 13, kind: output, shape index: {}]
  %s14 = sld [smem:[#allocation0]]
  $region85: #{pc_transformer_proj_forward.11} parent=0
    _
  %s16 = ssub.s32 1, %s14
  %s17 = scalar_select 0, %s16, %s14
  $region1: #{pc_transformer_proj_forward.11} parent=0
    #allocation2 [shape = 'u8[4096]{0}', space=vmem, size = 0x1000, scoped, tag = 'output window, operand 0']
    #allocation3 [shape = 's32[2]{0}', space=sflag, size = 0x8, scoped, tag = 'scoped memory for pc_transformer_proj_forward.11']
    %18 = vsyncpa [#allocation3], 0
    %s19 = scalar_lea.sflag [#allocation3], 1
    %20 = vsyncpa %s19, 0
    loop: start=0, step=1, limit=4
    $region2: #{pc_transformer_proj_forward.11} parent=1 // loop_pre_header
      _
    $region3: #{pc_transformer_proj_forward.11} parent=1 // loop_header
      %s22 = sphi 0, %s26
      %p23 = scmp.ge.s32.totalorder %s22, 4
      %s32 = sphi 0, %s34
      %s35 = sphi 0, %s32
      %s36 = sphi 0, %s35
      %s52 = sphi 0, %s36
      %s58 = sphi 0, %s60
      %s61 = sphi 0, %s58
      %s62 = sphi 0, %s61
      %s78 = sphi 0, %s62
      %s84 = sphi 0, %s86
      %s87 = sphi 0, %s84
      %s88 = sphi 0, %s87
      %s104 = sphi 0, %s88
      %s108 = sphi 0, %s108
      %s110 = sphi 0, %s108
      %s111 = sphi 0, %s110
      %s125 = sphi 0, %s111
      %s129 = sphi 0, %s129
      %s131 = sphi 0, %s129
      %s132 = sphi 0, %s131
      %s146 = sphi 0, %s132
      %s150 = sphi 0, %s150
      %s152 = sphi 0, %s150
      %s153 = sphi 0, %s152
      %s167 = sphi 0, %s153
      %s171 = sphi 0, %s171
      %s173 = sphi 0, %s171
      %s174 = sphi 0, %s173
      %s188 = sphi 0, %s174
      %s192 = sphi 0, %s192
      %s194 = sphi 0, %s192
      %s195 = sphi 0, %s194
      %s209 = sphi 0, %s195
      %s213 = sphi 0, %s213
      %s215 = sphi 0, %s213
      %s216 = sphi 0, %s215
      %s230 = sphi 0, %s216
      %s234 = sphi 0, %s234
      %s236 = sphi 0, %s234
      %s237 = sphi 0, %s236
      %s251 = sphi 0, %s237
      %s255 = sphi 0, %s255
      %s257 = sphi 0, %s255
      %s258 = sphi 0, %s257
      %s272 = sphi 0, %s258
      %s276 = sphi 0, %s276
      %s278 = sphi 0, %s276
      %s279 = sphi 0, %s278
      %s293 = sphi 0, %s279
      %s297 = sphi 0, %s297
      %s299 = sphi 0, %s297
      %s300 = sphi 0, %s299
      %s314 = sphi 0, %s300
      %s320 = sphi 0, %s322
      %s323 = sphi 0, %s320
      %s324 = sphi 0, %s323
      %s340 = sphi 0, %s324
    $region4: #{pc_transformer_proj_forward.11} parent=1 // loop_header_branch
      %25 = sbr.rel (%p23) target = $region8
    $region5: #{pc_transformer_proj_forward.11} parent=1 // loop_body
      %s27 = ssub.s32 %s22, 1
      %s28 = ssub.s32 %s22, 2
      %s29 = sadd.s32 %s22, 1
      %s30 = ssub.s32 %s22, %s29
      %p31 = scmp.eq.s32.totalorder %s30, 0
      %s33 = sadd.s32 %s32, 1
      %s34 = scalar_select %p31, %s32, %s33
      %p37 = pneg %p31
      %p38 = scmp.eq.s32.totalorder %s22, 1
      %p39 = por %p37, %p38
      %p40 = scmp.ne.s32.totalorder %s32, %s35
      %p41 = scmp.eq.s32.totalorder %s22, 0
      %p42 = por %p40, %p41
      %p43 = scmp.ne.s32.totalorder %s32, %s35
      %p44 = scmp.eq.s32.totalorder %s27, 1
      %p45 = por %p43, %p44
      %p46 = scmp.ne.s32.totalorder %s35, %s36
      %p47 = scmp.eq.s32.totalorder %s27, 0
      %p48 = por %p46, %p47
      %p49 = scmp.ne.s32.totalorder %s35, %s36
      %p50 = scmp.eq.s32.totalorder %s28, 1
      %p51 = por %p49, %p50
      %p53 = scmp.ne.s32.totalorder %s36, %s52
      %p54 = scmp.eq.s32.totalorder %s28, 0
      %p55 = por %p53, %p54
      %s56 = ssub.s32 %s22, %s29
      %p57 = scmp.eq.s32.totalorder %s56, 0
      %s59 = sadd.s32 %s58, 1
      %s60 = scalar_select %p57, %s58, %s59
      %p63 = pneg %p57
      %p64 = scmp.eq.s32.totalorder %s22, 1
      %p65 = por %p63, %p64
      %p66 = scmp.ne.s32.totalorder %s58, %s61
      %p67 = scmp.eq.s32.totalorder %s22, 0
      %p68 = por %p66, %p67
      %p69 = scmp.ne.s32.totalorder %s58, %s61
      %p70 = scmp.eq.s32.totalorder %s27, 1
      %p71 = por %p69, %p70
      %p72 = scmp.ne.s32.totalorder %s61, %s62
      %p73 = scmp.eq.s32.totalorder %s27, 0
      %p74 = por %p72, %p73
      %p75 = scmp.ne.s32.totalorder %s61, %s62
      %p76 = scmp.eq.s32.totalorder %s28, 1
      %p77 = por %p75, %p76
      %p79 = scmp.ne.s32.totalorder %s62, %s78
      %p80 = scmp.eq.s32.totalorder %s28, 0
      %p81 = por %p79, %p80
      %s82 = ssub.s32 %s22, %s29
      %p83 = scmp.eq.s32.totalorder %s82, 0
      %s85 = sadd.s32 %s84, 1
      %s86 = scalar_select %p83, %s84, %s85
      %p89 = pneg %p83
      %p90 = scmp.eq.s32.totalorder %s22, 1
      %p91 = por %p89, %p90
      %p92 = scmp.ne.s32.totalorder %s84, %s87
      %p93 = scmp.eq.s32.totalorder %s22, 0
      %p94 = por %p92, %p93
      %p95 = scmp.ne.s32.totalorder %s84, %s87
      %p96 = scmp.eq.s32.totalorder %s27, 1
      %p97 = por %p95, %p96
      %p98 = scmp.ne.s32.totalorder %s87, %s88
      %p99 = scmp.eq.s32.totalorder %s27, 0
      %p100 = por %p98, %p99
      %p101 = scmp.ne.s32.totalorder %s87, %s88
      %p102 = scmp.eq.s32.totalorder %s28, 1
      %p103 = por %p101, %p102
      %p105 = scmp.ne.s32.totalorder %s88, %s104
      %p106 = scmp.eq.s32.totalorder %s28, 0
      %p107 = por %p105, %p106
      %s109 = sadd.s32 %s108, 1
      %p112 = scmp.eq.s32.totalorder %s22, 1
      %p113 = scmp.ne.s32.totalorder %s108, %s110
      %p114 = scmp.eq.s32.totalorder %s22, 0
      %p115 = por %p113, %p114
      %p116 = scmp.ne.s32.totalorder %s108, %s110
      %p117 = scmp.eq.s32.totalorder %s27, 1
      %p118 = por %p116, %p117
      %p119 = scmp.ne.s32.totalorder %s110, %s111
      %p120 = scmp.eq.s32.totalorder %s27, 0
      %p121 = por %p119, %p120
      %p122 = scmp.ne.s32.totalorder %s110, %s111
      %p123 = scmp.eq.s32.totalorder %s28, 1
      %p124 = por %p122, %p123
      %p126 = scmp.ne.s32.totalorder %s111, %s125
      %p127 = scmp.eq.s32.totalorder %s28, 0
      %p128 = por %p126, %p127
      %s130 = sadd.s32 %s129, 1
      %p133 = scmp.eq.s32.totalorder %s22, 1
      %p134 = scmp.ne.s32.totalorder %s129, %s131
      %p135 = scmp.eq.s32.totalorder %s22, 0
      %p136 = por %p134, %p135
      %p137 = scmp.ne.s32.totalorder %s129, %s131
      %p138 = scmp.eq.s32.totalorder %s27, 1
      %p139 = por %p137, %p138
      %p140 = scmp.ne.s32.totalorder %s131, %s132
      %p141 = scmp.eq.s32.totalorder %s27, 0
      %p142 = por %p140, %p141
      %p143 = scmp.ne.s32.totalorder %s131, %s132
      %p144 = scmp.eq.s32.totalorder %s28, 1
      %p145 = por %p143, %p144
      %p147 = scmp.ne.s32.totalorder %s132, %s146
      %p148 = scmp.eq.s32.totalorder %s28, 0
      %p149 = por %p147, %p148
      %s151 = sadd.s32 %s150, 1
      %p154 = scmp.eq.s32.totalorder %s22, 1
      %p155 = scmp.ne.s32.totalorder %s150, %s152
      %p156 = scmp.eq.s32.totalorder %s22, 0
      %p157 = por %p155, %p156
      %p158 = scmp.ne.s32.totalorder %s150, %s152
      %p159 = scmp.eq.s32.totalorder %s27, 1
      %p160 = por %p158, %p159
      %p161 = scmp.ne.s32.totalorder %s152, %s153
      %p162 = scmp.eq.s32.totalorder %s27, 0
      %p163 = por %p161, %p162
      %p164 = scmp.ne.s32.totalorder %s152, %s153
      %p165 = scmp.eq.s32.totalorder %s28, 1
      %p166 = por %p164, %p165
      %p168 = scmp.ne.s32.totalorder %s153, %s167
      %p169 = scmp.eq.s32.totalorder %s28, 0
      %p170 = por %p168, %p169
      %s172 = sadd.s32 %s171, 1
      %p175 = scmp.eq.s32.totalorder %s22, 1
      %p176 = scmp.ne.s32.totalorder %s171, %s173
      %p177 = scmp.eq.s32.totalorder %s22, 0
      %p178 = por %p176, %p177
      %p179 = scmp.ne.s32.totalorder %s171, %s173
      %p180 = scmp.eq.s32.totalorder %s27, 1
      %p181 = por %p179, %p180
      %p182 = scmp.ne.s32.totalorder %s173, %s174
      %p183 = scmp.eq.s32.totalorder %s27, 0
      %p184 = por %p182, %p183
      %p185 = scmp.ne.s32.totalorder %s173, %s174
      %p186 = scmp.eq.s32.totalorder %s28, 1
      %p187 = por %p185, %p186
      %p189 = scmp.ne.s32.totalorder %s174, %s188
      %p190 = scmp.eq.s32.totalorder %s28, 0
      %p191 = por %p189, %p190
      %s193 = sadd.s32 %s192, 1
      %p196 = scmp.eq.s32.totalorder %s22, 1
      %p197 = scmp.ne.s32.totalorder %s192, %s194
      %p198 = scmp.eq.s32.totalorder %s22, 0
      %p199 = por %p197, %p198
      %p200 = scmp.ne.s32.totalorder %s192, %s194
      %p201 = scmp.eq.s32.totalorder %s27, 1
      %p202 = por %p200, %p201
      %p203 = scmp.ne.s32.totalorder %s194, %s195
      %p204 = scmp.eq.s32.totalorder %s27, 0
      %p205 = por %p203, %p204
      %p206 = scmp.ne.s32.totalorder %s194, %s195
      %p207 = scmp.eq.s32.totalorder %s28, 1
      %p208 = por %p206, %p207
      %p210 = scmp.ne.s32.totalorder %s195, %s209
      %p211 = scmp.eq.s32.totalorder %s28, 0
      %p212 = por %p210, %p211
      %s214 = sadd.s32 %s213, 1
      %p217 = scmp.eq.s32.totalorder %s22, 1
      %p218 = scmp.ne.s32.totalorder %s213, %s215
      %p219 = scmp.eq.s32.totalorder %s22, 0
      %p220 = por %p218, %p219
      %p221 = scmp.ne.s32.totalorder %s213, %s215
      %p222 = scmp.eq.s32.totalorder %s27, 1
      %p223 = por %p221, %p222
      %p224 = scmp.ne.s32.totalorder %s215, %s216
      %p225 = scmp.eq.s32.totalorder %s27, 0
      %p226 = por %p224, %p225
      %p227 = scmp.ne.s32.totalorder %s215, %s216
      %p228 = scmp.eq.s32.totalorder %s28, 1
      %p229 = por %p227, %p228
      %p231 = scmp.ne.s32.totalorder %s216, %s230
      %p232 = scmp.eq.s32.totalorder %s28, 0
      %p233 = por %p231, %p232
      %s235 = sadd.s32 %s234, 1
      %p238 = scmp.eq.s32.totalorder %s22, 1
      %p239 = scmp.ne.s32.totalorder %s234, %s236
      %p240 = scmp.eq.s32.totalorder %s22, 0
      %p241 = por %p239, %p240
      %p242 = scmp.ne.s32.totalorder %s234, %s236
      %p243 = scmp.eq.s32.totalorder %s27, 1
      %p244 = por %p242, %p243
      %p245 = scmp.ne.s32.totalorder %s236, %s237
      %p246 = scmp.eq.s32.totalorder %s27, 0
      %p247 = por %p245, %p246
      %p248 = scmp.ne.s32.totalorder %s236, %s237
      %p249 = scmp.eq.s32.totalorder %s28, 1
      %p250 = por %p248, %p249
      %p252 = scmp.ne.s32.totalorder %s237, %s251
      %p253 = scmp.eq.s32.totalorder %s28, 0
      %p254 = por %p252, %p253
      %s256 = sadd.s32 %s255, 1
      %p259 = scmp.eq.s32.totalorder %s22, 1
      %p260 = scmp.ne.s32.totalorder %s255, %s257
      %p261 = scmp.eq.s32.totalorder %s22, 0
      %p262 = por %p260, %p261
      %p263 = scmp.ne.s32.totalorder %s255, %s257
      %p264 = scmp.eq.s32.totalorder %s27, 1
      %p265 = por %p263, %p264
      %p266 = scmp.ne.s32.totalorder %s257, %s258
      %p267 = scmp.eq.s32.totalorder %s27, 0
      %p268 = por %p266, %p267
      %p269 = scmp.ne.s32.totalorder %s257, %s258
      %p270 = scmp.eq.s32.totalorder %s28, 1
      %p271 = por %p269, %p270
      %p273 = scmp.ne.s32.totalorder %s258, %s272
      %p274 = scmp.eq.s32.totalorder %s28, 0
      %p275 = por %p273, %p274
      %s277 = sadd.s32 %s276, 1
      %p280 = scmp.eq.s32.totalorder %s22, 1
      %p281 = scmp.ne.s32.totalorder %s276, %s278
      %p282 = scmp.eq.s32.totalorder %s22, 0
      %p283 = por %p281, %p282
      %p284 = scmp.ne.s32.totalorder %s276, %s278
      %p285 = scmp.eq.s32.totalorder %s27, 1
      %p286 = por %p284, %p285
      %p287 = scmp.ne.s32.totalorder %s278, %s279
      %p288 = scmp.eq.s32.totalorder %s27, 0
      %p289 = por %p287, %p288
      %p290 = scmp.ne.s32.totalorder %s278, %s279
      %p291 = scmp.eq.s32.totalorder %s28, 1
      %p292 = por %p290, %p291
      %p294 = scmp.ne.s32.totalorder %s279, %s293
      %p295 = scmp.eq.s32.totalorder %s28, 0
      %p296 = por %p294, %p295
      %s298 = sadd.s32 %s297, 1
      %p301 = scmp.eq.s32.totalorder %s22, 1
      %p302 = scmp.ne.s32.totalorder %s297, %s299
      %p303 = scmp.eq.s32.totalorder %s22, 0
      %p304 = por %p302, %p303
      %p305 = scmp.ne.s32.totalorder %s297, %s299
      %p306 = scmp.eq.s32.totalorder %s27, 1
      %p307 = por %p305, %p306
      %p308 = scmp.ne.s32.totalorder %s299, %s300
      %p309 = scmp.eq.s32.totalorder %s27, 0
      %p310 = por %p308, %p309
      %p311 = scmp.ne.s32.totalorder %s299, %s300
      %p312 = scmp.eq.s32.totalorder %s28, 1
      %p313 = por %p311, %p312
      %p315 = scmp.ne.s32.totalorder %s300, %s314
      %p316 = scmp.eq.s32.totalorder %s28, 0
      %p317 = por %p315, %p316
      %s318 = ssub.s32 %s22, %s29
      %p319 = scmp.eq.s32.totalorder %s318, 0
      %s321 = sadd.s32 %s320, 1
      %s322 = scalar_select %p319, %s320, %s321
      %p325 = pneg %p319
      %p326 = scmp.eq.s32.totalorder %s22, 1
      %p327 = por %p325, %p326
      %p328 = scmp.ne.s32.totalorder %s320, %s323
      %p329 = scmp.eq.s32.totalorder %s22, 0
      %p330 = por %p328, %p329
      %p331 = scmp.ne.s32.totalorder %s320, %s323
      %p332 = scmp.eq.s32.totalorder %s27, 1
      %p333 = por %p331, %p332
      %p334 = scmp.ne.s32.totalorder %s323, %s324
      %p335 = scmp.eq.s32.totalorder %s27, 0
      %p336 = por %p334, %p335
      %p337 = scmp.ne.s32.totalorder %s323, %s324
      %p338 = scmp.eq.s32.totalorder %s28, 1
      %p339 = por %p337, %p338
      %p341 = scmp.ne.s32.totalorder %s324, %s340
      %p342 = scmp.eq.s32.totalorder %s28, 0
      %p343 = por %p341, %p342
      %p344 = scmp.le.s32.totalorder 1, %s22
      %p345 = scmp.lt.s32.totalorder %s22, 3
      %p346 = pnand %p344, %p345
      %p347 = pneg %p346
      // Predicated region
      $region9: #{pc_transformer_proj_forward.11} parent=5 // pred_check
        _
      $region10: #{pc_transformer_proj_forward.11} parent=5 // pred_check_branch
        %349 = sbr.rel (%p346) target = $region12
      $region11: #{pc_transformer_proj_forward.11} parent=5 // pred_region
        %s350 = ssub.s32 %s22, 1
        // Predicated region
        $region13: #{pc_transformer_proj_forward.11} parent=11 // pred_check
          %p351 = pneg %p121
        $region14: #{pc_transformer_proj_forward.11} parent=11 // pred_check_branch
          %353 = sbr.rel (%p351) target = $region16
        $region15: #{pc_transformer_proj_forward.11} parent=11 // pred_region
          _
        $region16: #{pc_transformer_proj_forward.11} parent=11 // pred_fallthru
          _
        // Predicated region
        $region17: #{pc_transformer_proj_forward.11} parent=11 // pred_check
          %p354 = pneg %p142
        $region18: #{pc_transformer_proj_forward.11} parent=11 // pred_check_branch
          %356 = sbr.rel (%p354) target = $region20
        $region19: #{pc_transformer_proj_forward.11} parent=11 // pred_region
          _
        $region20: #{pc_transformer_proj_forward.11} parent=11 // pred_fallthru
          _
        // Predicated region
        $region21: #{pc_transformer_proj_forward.11} parent=11 // pred_check
          %p357 = pneg %p163
        $region22: #{pc_transformer_proj_forward.11} parent=11 // pred_check_branch
          %359 = sbr.rel (%p357) target = $region24
        $region23: #{pc_transformer_proj_forward.11} parent=11 // pred_region
          _
        $region24: #{pc_transformer_proj_forward.11} parent=11 // pred_fallthru
          _
        // Predicated region
        $region25: #{pc_transformer_proj_forward.11} parent=11 // pred_check
          %p360 = pneg %p184
        $region26: #{pc_transformer_proj_forward.11} parent=11 // pred_check_branch
          %362 = sbr.rel (%p360) target = $region28
        $region27: #{pc_transformer_proj_forward.11} parent=11 // pred_region
          _
        $region28: #{pc_transformer_proj_forward.11} parent=11 // pred_fallthru
          _
        // Predicated region
        $region29: #{pc_transformer_proj_forward.11} parent=11 // pred_check
          %p363 = pneg %p205
        $region30: #{pc_transformer_proj_forward.11} parent=11 // pred_check_branch
          %365 = sbr.rel (%p363) target = $region32
        $region31: #{pc_transformer_proj_forward.11} parent=11 // pred_region
          _
        $region32: #{pc_transformer_proj_forward.11} parent=11 // pred_fallthru
          _
        // Predicated region
        $region33: #{pc_transformer_proj_forward.11} parent=11 // pred_check
          %p366 = pneg %p226
        $region34: #{pc_transformer_proj_forward.11} parent=11 // pred_check_branch
          %368 = sbr.rel (%p366) target = $region36
        $region35: #{pc_transformer_proj_forward.11} parent=11 // pred_region
          _
        $region36: #{pc_transformer_proj_forward.11} parent=11 // pred_fallthru
          _
        // Predicated region
        $region37: #{pc_transformer_proj_forward.11} parent=11 // pred_check
          %p369 = pneg %p247
        $region38: #{pc_transformer_proj_forward.11} parent=11 // pred_check_branch
          %371 = sbr.rel (%p369) target = $region40
        $region39: #{pc_transformer_proj_forward.11} parent=11 // pred_region
          _
        $region40: #{pc_transformer_proj_forward.11} parent=11 // pred_fallthru
          _
        // Predicated region
        $region41: #{pc_transformer_proj_forward.11} parent=11 // pred_check
          %p372 = pneg %p268
        $region42: #{pc_transformer_proj_forward.11} parent=11 // pred_check_branch
          %374 = sbr.rel (%p372) target = $region44
        $region43: #{pc_transformer_proj_forward.11} parent=11 // pred_region
          _
        $region44: #{pc_transformer_proj_forward.11} parent=11 // pred_fallthru
          _
        // Predicated region
        $region45: #{pc_transformer_proj_forward.11} parent=11 // pred_check
          %p375 = pneg %p289
        $region46: #{pc_transformer_proj_forward.11} parent=11 // pred_check_branch
          %377 = sbr.rel (%p375) target = $region48
        $region47: #{pc_transformer_proj_forward.11} parent=11 // pred_region
          _
        $region48: #{pc_transformer_proj_forward.11} parent=11 // pred_fallthru
          _
        // Predicated region
        $region49: #{pc_transformer_proj_forward.11} parent=11 // pred_check
          %p378 = pneg %p310
        $region50: #{pc_transformer_proj_forward.11} parent=11 // pred_check_branch
          %380 = sbr.rel (%p378) target = $region52
        $region51: #{pc_transformer_proj_forward.11} parent=11 // pred_region
          _
        $region52: #{pc_transformer_proj_forward.11} parent=11 // pred_fallthru
          _
      $region12: #{pc_transformer_proj_forward.11} parent=5 // pred_fallthru
        _
      %p381 = scmp.lt.s32.totalorder %s22, 2
      // Predicated region
      $region53: #{pc_transformer_proj_forward.11} parent=5 // pred_check
        %p382 = pneg %p381
      $region54: #{pc_transformer_proj_forward.11} parent=5 // pred_check_branch
        %384 = sbr.rel (%p382) target = $region56
      $region55: #{pc_transformer_proj_forward.11} parent=5 // pred_region
        // Predicated region
        $region57: #{pc_transformer_proj_forward.11} parent=55 // pred_check
          %p385 = pneg %p42
        $region58: #{pc_transformer_proj_forward.11} parent=55 // pred_check_branch
          %387 = sbr.rel (%p385) target = $region60
        $region59: #{pc_transformer_proj_forward.11} parent=55 // pred_region
          %p388 = scmp.lt.s32.totalorder %s22, 1
          %s389 = scalar_select %p388, %s22, 1
          %s390 = smul.addr %s389, 2
          %s391 = smul.addr %s390, 8
          %s392 = scalar_lea.vmem %s0, %s391
        $region60: #{pc_transformer_proj_forward.11} parent=55 // pred_fallthru
          _
        // Predicated region
        $region61: #{pc_transformer_proj_forward.11} parent=55 // pred_check
          %p393 = pneg %p68
        $region62: #{pc_transformer_proj_forward.11} parent=55 // pred_check_branch
          %395 = sbr.rel (%p393) target = $region64
        $region63: #{pc_transformer_proj_forward.11} parent=55 // pred_region
          %p396 = scmp.lt.s32.totalorder %s22, 1
          %s397 = scalar_select %p396, %s22, 1
          %s398 = smul.addr %s397, 4
          %s399 = scalar_lea.vmem %s1, %s398
        $region64: #{pc_transformer_proj_forward.11} parent=55 // pred_fallthru
          _
        // Predicated region
        $region65: #{pc_transformer_proj_forward.11} parent=55 // pred_check
          %p400 = pneg %p94
        $region66: #{pc_transformer_proj_forward.11} parent=55 // pred_check_branch
          %402 = sbr.rel (%p400) target = $region68
        $region67: #{pc_transformer_proj_forward.11} parent=55 // pred_region
          %p403 = scmp.lt.s32.totalorder %s22, 1
          %s404 = scalar_select %p403, %s22, 1
          %s405 = scalar_lea.vmem %s2, %s404
        $region68: #{pc_transformer_proj_forward.11} parent=55 // pred_fallthru
          _
      $region56: #{pc_transformer_proj_forward.11} parent=5 // pred_fallthru
        _
      %p406 = scmp.le.s32.totalorder 1, %s22
      %p407 = scmp.lt.s32.totalorder %s22, 3
      %p408 = pnand %p406, %p407
      %p409 = pneg %p408
      // Predicated region
      $region69: #{pc_transformer_proj_forward.11} parent=5 // pred_check
        _
      $region70: #{pc_transformer_proj_forward.11} parent=5 // pred_check_branch
        %411 = sbr.rel (%p408) target = $region72
      $region71: #{pc_transformer_proj_forward.11} parent=5 // pred_region
        %s412 = ssub.s32 %s22, 1
        %p413 = scmp.lt.s32.totalorder %s27, 1
        %s414 = scalar_select %p413, %s27, 1
        %s415 = smul.addr %s414, 2
        %s416 = smul.addr %s415, 8
        %s417 = scalar_lea.vmem %s0, %s416
        %p418 = pneg %p48
        %p419 = pneg %p45
        %p420 = scmp.lt.s32.totalorder %s27, 1
        %s421 = scalar_select %p420, %s27, 1
        %s422 = smul.addr %s421, 4
        %s423 = scalar_lea.vmem %s1, %s422
        %p424 = pneg %p74
        %p425 = pneg %p71
        %p426 = scmp.lt.s32.totalorder %s27, 1
        %s427 = scalar_select %p426, %s27, 1
        %s428 = scalar_lea.vmem %s2, %s427
        %p429 = pneg %p100
        %p430 = pneg %p97
        %p431 = pneg %p121
        %p432 = pneg %p118
        %p433 = pneg %p142
        %p434 = pneg %p139
        %p435 = pneg %p163
        %p436 = pneg %p160
        %p437 = pneg %p184
        %p438 = pneg %p181
        %p439 = pneg %p205
        %p440 = pneg %p202
        %p441 = pneg %p226
        %p442 = pneg %p223
        %p443 = pneg %p247
        %p444 = pneg %p244
        %p445 = pneg %p268
        %p446 = pneg %p265
        %p447 = pneg %p289
        %p448 = pneg %p286
        %p449 = pneg %p310
        %p450 = pneg %p307
        %p451 = pneg %p336
        %p452 = pneg %p333
        %s453 = sand.u32 %s323, 1
        %s454 = scalar_lea.sflag [#allocation3], %s453
        %s455 = sand.u32 %s323, 1
        %s456 = smul.addr %s455, 4
        %s457 = scalar_lea.vmem [#allocation2], %s456
        %p458 = scmp.lt.s32.totalorder %s27, 1
        %s459 = scalar_select %p458, %s27, 1
        %s460 = smul.addr %s459, 2
        %s461 = smul.addr %s460, 8
        %s462 = scalar_lea.vmem %s0, %s461
        %p463 = scmp.lt.s32.totalorder %s27, 1
        %s464 = scalar_select %p463, %s27, 1
        %s465 = smul.addr %s464, 4
        %s466 = scalar_lea.vmem %s1, %s465
        %p467 = scmp.lt.s32.totalorder %s27, 1
        %s468 = scalar_select %p467, %s27, 1
        %s469 = scalar_lea.vmem %s2, %s468
        %v471 = vld [vmem:[%s3] sm:$0xff]
        %v472 = vld [vmem:[%s3 + $0x8] sm:$0x3]
        %v473 = vld [vmem:[%s462] sm:$0xff]
        %v474 = vld [vmem:[%s462 + $0x8] sm:$0x3]
        %v475 = vld [vmem:[%s466] sm:$0xf]
        %v476 = vld [vmem:[%s469] sm:$0x1]
        %v477 = vlaneseq
        %v478 = vshrl.u32 %v477, 7
        %v479 = vadd.s32 %v478, 8
        %vm480 = vcmp.ge.s32.totalorder %v478, 1
        %vm481 = vcmp.ge.s32.totalorder %v479, 1
        %vm482 = vcmp.le.s32.totalorder %v478, 8
        %vm483 = vcmp.le.s32.totalorder %v479, 8
        %vm484 = vmand %vm480, %vm482
        %vm485 = vmand %vm481, %vm483
        %vm486 = vcmask 523264
        %v487 = vsel %vm486, %v473, 0.0
        %488 = vadd.xlane.f32.xlu0 %v487
        %v489 = vpop.xlane.xlu0 %488
        %vm490 = vcmask 517120
        %v491 = vsel %vm490, %v474, 0.0
        %492 = vadd.xlane.f32.xlu0 %v491
        %v493 = vpop.xlane.xlu0 %492
        %v494 = vrcp.pop 64.0
        %v495 = vmul.f32 64.0, %v494
        %v496 = vsub.f32 1.0, %v495
        %v497 = vmul.f32 %v494, %v496
        %v498 = vadd.f32 %v494, %v497
        %vm499 = vweird.f32 %v494
        %v500 = vsel %vm499, %v494, %v498
        %v501 = vmul.f32 %v489, %v500
        %v502 = vmul.f32 %v493, %v500
        %v503 = vsub.f32 %v473, %v501
        %v504 = vsub.f32 %v474, %v502
        %v505 = vmul.f32 %v503, %v503
        %v506 = vmul.f32 %v504, %v504
        %v507 = vsel %vm486, %v505, 0.0
        %508 = vadd.xlane.f32.xlu0 %v507
        %v509 = vpop.xlane.xlu0 %508
        %v510 = vsel %vm490, %v506, 0.0
        %511 = vadd.xlane.f32.xlu0 %v510
        %v512 = vpop.xlane.xlu0 %511
        %v513 = vmul.f32 %v509, %v500
        %v514 = vmul.f32 %v512, %v500
        %v515 = vadd.f32 %v513, 1e-05
        %v516 = vadd.f32 %v514, 1e-05
        %v517 = vrsqrt.pop %v515
        %v518 = vmul.f32 %v517, %v515
        %v519 = vmul.f32 %v518, %v517
        %v520 = vmul.f32 0.5, %v519
        %v521 = vsub.f32 1.5, %v520
        %v522 = vmul.f32 %v517, %v521
        %vm523 = vweird.f32 %v515
        %vm524 = vweird.f32 %v517
        %vm525 = vmor %vm523, %vm524
        %v526 = vsel %vm525, %v517, %v522
        %v527 = vrsqrt.pop %v516
        %v528 = vmul.f32 %v527, %v516
        %v529 = vmul.f32 %v528, %v527
        %v530 = vmul.f32 0.5, %v529
        %v531 = vsub.f32 1.5, %v530
        %v532 = vmul.f32 %v527, %v531
        %vm533 = vweird.f32 %v516
        %vm534 = vweird.f32 %v527
        %vm535 = vmor %vm533, %vm534
        %v536 = vsel %vm535, %v527, %v532
        %v537 = vmul.f32 %v503, %v526
        %v538 = vmul.f32 %v504, %v536
        %v539 = vperm.slane %v471, 0
        %v540 = vmul.f32 %v537, %v539
        %v541 = vmul.f32 %v538, %v539
        %v542 = vperm.slane %v471, 1
        %v543 = vadd.f32 %v540, %v542
        %v544 = vadd.f32 %v541, %v542
        %v545 = vsel %vm484, 1, 0
        %v546 = vsel %vm485, 1, 0
        %vm547 = vcmp.eq.s32.totalorder %v545, 1
        %vm548 = vcmp.eq.s32.totalorder %v546, 1
        %v549 = vsel %vm547, %v543, 0.0
        %v550 = vsel %vm548, %v544, 0.0
        %v551 = vlaneseq
        %v552 = vand.u32 %v551, 127
        %v553 = vmul.u32 %v478, 2
        %vm554 = vcmp.eq.s32.totalorder %v552, %v553
        %v555 = vsel %vm554, 1, 0
        %v556 = vcvt.s32.f32 %v555
        %v557 = vld [vmem:[%s6] sm:$0x7]
        %v558 = vld [vmem:[%s4] sm:$0x7]
        %v559 = vperm.slane %v558, 0
        %v560 = vmul.f32 %v549, %v559
        %v561 = vperm.slane %v558, 1
        %v562 = vmul.f32 %v549, %v561
        %v563 = vmul.f32 %v550, %v561
        %vm566 = vcmask 1046528
        %v567 = vrot.slane %v562, 1
        %v568 = vrot.slane %v563, 1
        %v569 = vsel %vm566, %v567, %v568
        %v571 = vadd.f32 %v560, %v569
        %v572 = vperm.slane %v558, 2
        %v573 = vmul.f32 %v549, %v572
        %v574 = vmul.f32 %v550, %v572
        %vm577 = vcmask 1045504
        %v578 = vrot.slane %v573, 2
        %v579 = vrot.slane %v574, 2
        %v580 = vsel %vm577, %v578, %v579
        %v582 = vadd.f32 %v571, %v580
        %vm583 = vcmask 64512
        %v585 = vsel %vm583, %v556, 0
        %587 = vmatpush.msra.mxu0 0.0
        %588 = vmatpush.msra.mxu0 0.0
        %589 = vmatpush.msra.mxu0 0.0
        %590 = vmatpush.msra.mxu0 0.0
        %591 = vmatpush.msra.mxu0 0.0
        %592 = vmatpush.msra.mxu0 0.0
        %593 = vmatpush.msra.mxu0 0.0
        %594 = vmatpush.msra.mxu0 0.0
        %595 = vmatpush.msra.mxu0 0.0
        %596 = vmatpush.msra.mxu0 0.0
        %597 = vmatpush.msra.mxu0 0.0
        %598 = vmatpush.msra.mxu0 0.0
        %599 = vmatpush.msra.mxu0 0.0
        %600 = vmatpush.msra.mxu0 0.0
        %601 = vmatpush.msra.mxu0 0.0
        %602 = vmatpush.msra.mxu0 %v582
        %603 = vmatmul.f32.gmra.mxu0 %v585
        %v604 = vpop.f32.mrf.mxu0
        %v605 = vadd.f32 0.0, %v604
        %606 = vdwg.mxu0
        %608 = vset.pattern.permute.xlu0 0
        %609 = vperm.xlu0 %608, %v475
        %v610 = vpop.permute.xlu0 %609
        %v612 = vmul.f32 %v605, %v610
        %vm613 = vcmask 519168
        %v614 = vsel %vm613, %v612, 0.0
        %615 = vadd.xlane.f32.xlu0 %v614
        %v616 = vpop.xlane.xlu0 %615
        %v617 = vmul.f32 %v616, %v500
        %v618 = vsub.f32 %v612, %v617
        %v619 = vmul.f32 %v618, %v618
        %v620 = vsel %vm613, %v619, 0.0
        %621 = vadd.xlane.f32.xlu0 %v620
        %v622 = vpop.xlane.xlu0 %621
        %v623 = vmul.f32 %v622, %v500
        %v624 = vadd.f32 %v623, 1e-05
        %v625 = vrsqrt.pop %v624
        %v626 = vmul.f32 %v625, %v624
        %v627 = vmul.f32 %v626, %v625
        %v628 = vmul.f32 0.5, %v627
        %v629 = vsub.f32 1.5, %v628
        %v630 = vmul.f32 %v625, %v629
        %vm631 = vweird.f32 %v624
        %vm632 = vweird.f32 %v625
        %vm633 = vmor %vm631, %vm632
        %v634 = vsel %vm633, %v625, %v630
        %v635 = vmul.f32 %v618, %v634
        %v636 = vperm.slane %v471, 2
        %v637 = vmul.f32 %v635, %v636
        %v638 = vperm.slane %v471, 3
        %v639 = vadd.f32 %v637, %v638
        %v640 = vpack.c.bf16 %v639, %v639
        %v641 = vld [vmem:[%s5] sm:$0xff]
        %v642 = vld [vmem:[%s5 + $0x8] sm:$0xff]
        %v643 = vld [vmem:[%s5 + $0x10] sm:$0xff]
        %v644 = vld [vmem:[%s5 + $0x18] sm:$0xff]
        %v645 = vld [vmem:[%s5 + $0x20] sm:$0xff]
        %v646 = vld [vmem:[%s5 + $0x28] sm:$0xff]
        %v647 = vld [vmem:[%s5 + $0x30] sm:$0xff]
        %v648 = vld [vmem:[%s5 + $0x38] sm:$0xff]
        %v649 = vpack.c.bf16 %v642, %v641
        %v650 = vpack.c.bf16 %v644, %v643
        %v651 = vpack.c.bf16 %v646, %v645
        %v652 = vpack.c.bf16 %v648, %v647
        %v653 = vperm.slane %v557, 0
        %v655 = vsel %vm486, %v640, 0
        %657 = vmatpush.bf16.msra.mxu0 0
        %658 = vmatpush.bf16.msra.mxu0 0
        %659 = vmatpush.bf16.msra.mxu0 0
        %660 = vmatpush.bf16.msra.mxu0 0
        %661 = vmatpush.bf16.msra.mxu0 %v652
        %662 = vmatpush.bf16.msra.mxu0 %v651
        %663 = vmatpush.bf16.msra.mxu0 %v650
        %664 = vmatpush.bf16.msra.mxu0 %v649
        %665 = vmatmul.bf16.gmra.mxu0 %v655
        %v666 = vpop.f32.mrf.mxu0
        %v667 = vadd.f32 %v653, %v666
        %v668 = vpop.f32.mrf.mxu0
        %669 = vdwg.mxu0
        %s670 = scalar_lea.vmem %s4, 4
        %v671 = vld [vmem:[%s670] sm:$0x7]
        %v672 = vperm.slane %v671, 0
        %v673 = vmul.f32 %v549, %v672
        %v674 = vperm.slane %v671, 1
        %v675 = vmul.f32 %v549, %v674
        %v676 = vmul.f32 %v550, %v674
        %v679 = vrot.slane %v675, 1
        %v680 = vrot.slane %v676, 1
        %v681 = vsel %vm566, %v679, %v680
        %v683 = vadd.f32 %v673, %v681
        %v684 = vperm.slane %v671, 2
        %v685 = vmul.f32 %v549, %v684
        %v686 = vmul.f32 %v550, %v684
        %v689 = vrot.slane %v685, 2
        %v690 = vrot.slane %v686, 2
        %v691 = vsel %vm577, %v689, %v690
        %v693 = vadd.f32 %v683, %v691
        %694 = vmatpush.msra.mxu0 0.0
        %695 = vmatpush.msra.mxu0 0.0
        %696 = vmatpush.msra.mxu0 0.0
        %697 = vmatpush.msra.mxu0 0.0
        %698 = vmatpush.msra.mxu0 0.0
        %699 = vmatpush.msra.mxu0 0.0
        %700 = vmatpush.msra.mxu0 0.0
        %701 = vmatpush.msra.mxu0 0.0
        %702 = vmatpush.msra.mxu0 0.0
        %703 = vmatpush.msra.mxu0 0.0
        %704 = vmatpush.msra.mxu0 0.0
        %705 = vmatpush.msra.mxu0 0.0
        %706 = vmatpush.msra.mxu0 0.0
        %707 = vmatpush.msra.mxu0 0.0
        %708 = vmatpush.msra.mxu0 0.0
        %709 = vmatpush.msra.mxu0 %v693
        %710 = vmatmul.f32.gmra.mxu0 %v585
        %v711 = vpop.f32.mrf.mxu0
        %v712 = vadd.f32 0.0, %v711
        %713 = vdwg.mxu0
        %v714 = vmul.f32 %v712, %v610
        %v715 = vsel %vm613, %v714, 0.0
        %716 = vadd.xlane.f32.xlu0 %v715
        %v717 = vpop.xlane.xlu0 %716
        %v718 = vmul.f32 %v717, %v500
        %v719 = vsub.f32 %v714, %v718
        %v720 = vmul.f32 %v719, %v719
        %v721 = vsel %vm613, %v720, 0.0
        %722 = vadd.xlane.f32.xlu0 %v721
        %v723 = vpop.xlane.xlu0 %722
        %v724 = vmul.f32 %v723, %v500
        %v725 = vadd.f32 %v724, 1e-05
        %v726 = vrsqrt.pop %v725
        %v727 = vmul.f32 %v726, %v725
        %v728 = vmul.f32 %v727, %v726
        %v729 = vmul.f32 0.5, %v728
        %v730 = vsub.f32 1.5, %v729
        %v731 = vmul.f32 %v726, %v730
        %vm732 = vweird.f32 %v725
        %vm733 = vweird.f32 %v726
        %vm734 = vmor %vm732, %vm733
        %v735 = vsel %vm734, %v726, %v731
        %v736 = vmul.f32 %v719, %v735
        %v737 = vperm.slane %v471, 4
        %v738 = vmul.f32 %v736, %v737
        %v739 = vperm.slane %v471, 5
        %v740 = vadd.f32 %v738, %v739
        %v741 = vpack.c.bf16 %v740, %v740
        %s742 = scalar_lea.vmem %s5, 64
        %v743 = vld [vmem:[%s742] sm:$0xff]
        %v744 = vld [vmem:[%s742 + $0x8] sm:$0xff]
        %v745 = vld [vmem:[%s742 + $0x10] sm:$0xff]
        %v746 = vld [vmem:[%s742 + $0x18] sm:$0xff]
        %v747 = vld [vmem:[%s742 + $0x20] sm:$0xff]
        %v748 = vld [vmem:[%s742 + $0x28] sm:$0xff]
        %v749 = vld [vmem:[%s742 + $0x30] sm:$0xff]
        %v750 = vld [vmem:[%s742 + $0x38] sm:$0xff]
        %v751 = vpack.c.bf16 %v744, %v743
        %v752 = vpack.c.bf16 %v746, %v745
        %v753 = vpack.c.bf16 %v748, %v747
        %v754 = vpack.c.bf16 %v750, %v749
        %v755 = vperm.slane %v557, 1
        %v757 = vsel %vm486, %v741, 0
        %759 = vmatpush.bf16.msra.mxu0 0
        %760 = vmatpush.bf16.msra.mxu0 0
        %761 = vmatpush.bf16.msra.mxu0 0
        %762 = vmatpush.bf16.msra.mxu0 0
        %763 = vmatpush.bf16.msra.mxu0 %v754
        %764 = vmatpush.bf16.msra.mxu0 %v753
        %765 = vmatpush.bf16.msra.mxu0 %v752
        %766 = vmatpush.bf16.msra.mxu0 %v751
        %767 = vmatmul.bf16.gmra.mxu0 %v757
        %v768 = vpop.f32.mrf.mxu0
        %v769 = vadd.f32 %v755, %v768
        %v770 = vpop.f32.mrf.mxu0
        %771 = vdwg.mxu0
        %s772 = scalar_lea.vmem %s4, 8
        %v773 = vld [vmem:[%s772] sm:$0x7]
        %v774 = vperm.slane %v773, 0
        %v775 = vmul.f32 %v549, %v774
        %v776 = vperm.slane %v773, 1
        %v777 = vmul.f32 %v549, %v776
        %v778 = vmul.f32 %v550, %v776
        %v781 = vrot.slane %v777, 1
        %v782 = vrot.slane %v778, 1
        %v783 = vsel %vm566, %v781, %v782
        %v785 = vadd.f32 %v775, %v783
        %v786 = vperm.slane %v773, 2
        %v787 = vmul.f32 %v549, %v786
        %v788 = vmul.f32 %v550, %v786
        %v791 = vrot.slane %v787, 2
        %v792 = vrot.slane %v788, 2
        %v793 = vsel %vm577, %v791, %v792
        %v795 = vadd.f32 %v785, %v793
        %796 = vmatpush.msra.mxu0 0.0
        %797 = vmatpush.msra.mxu0 0.0
        %798 = vmatpush.msra.mxu0 0.0
        %799 = vmatpush.msra.mxu0 0.0
        %800 = vmatpush.msra.mxu0 0.0
        %801 = vmatpush.msra.mxu0 0.0
        %802 = vmatpush.msra.mxu0 0.0
        %803 = vmatpush.msra.mxu0 0.0
        %804 = vmatpush.msra.mxu0 0.0
        %805 = vmatpush.msra.mxu0 0.0
        %806 = vmatpush.msra.mxu0 0.0
        %807 = vmatpush.msra.mxu0 0.0
        %808 = vmatpush.msra.mxu0 0.0
        %809 = vmatpush.msra.mxu0 0.0
        %810 = vmatpush.msra.mxu0 0.0
        %811 = vmatpush.msra.mxu0 %v795
        %812 = vmatmul.f32.gmra.mxu0 %v585
        %v813 = vpop.f32.mrf.mxu0
        %v814 = vadd.f32 0.0, %v813
        %815 = vdwg.mxu0
        %v816 = vmul.f32 %v814, %v610
        %v817 = vsel %vm613, %v816, 0.0
        %818 = vadd.xlane.f32.xlu0 %v817
        %v819 = vpop.xlane.xlu0 %818
        %v820 = vmul.f32 %v819, %v500
        %v821 = vsub.f32 %v816, %v820
        %v822 = vmul.f32 %v821, %v821
        %v823 = vsel %vm613, %v822, 0.0
        %824 = vadd.xlane.f32.xlu0 %v823
        %v825 = vpop.xlane.xlu0 %824
        %v826 = vmul.f32 %v825, %v500
        %v827 = vadd.f32 %v826, 1e-05
        %v828 = vrsqrt.pop %v827
        %v829 = vmul.f32 %v828, %v827
        %v830 = vmul.f32 %v829, %v828
        %v831 = vmul.f32 0.5, %v830
        %v832 = vsub.f32 1.5, %v831
        %v833 = vmul.f32 %v828, %v832
        %vm834 = vweird.f32 %v827
        %vm835 = vweird.f32 %v828
        %vm836 = vmor %vm834, %vm835
        %v837 = vsel %vm836, %v828, %v833
        %v838 = vmul.f32 %v821, %v837
        %v839 = vperm.slane %v471, 6
        %v840 = vmul.f32 %v838, %v839
        %v841 = vperm.slane %v471, 7
        %v842 = vadd.f32 %v840, %v841
        %v843 = vpack.c.bf16 %v842, %v842
        %s844 = scalar_lea.vmem %s5, 128
        %v845 = vld [vmem:[%s844] sm:$0xff]
        %v846 = vld [vmem:[%s844 + $0x8] sm:$0xff]
        %v847 = vld [vmem:[%s844 + $0x10] sm:$0xff]
        %v848 = vld [vmem:[%s844 + $0x18] sm:$0xff]
        %v849 = vld [vmem:[%s844 + $0x20] sm:$0xff]
        %v850 = vld [vmem:[%s844 + $0x28] sm:$0xff]
        %v851 = vld [vmem:[%s844 + $0x30] sm:$0xff]
        %v852 = vld [vmem:[%s844 + $0x38] sm:$0xff]
        %v853 = vpack.c.bf16 %v846, %v845
        %v854 = vpack.c.bf16 %v848, %v847
        %v855 = vpack.c.bf16 %v850, %v849
        %v856 = vpack.c.bf16 %v852, %v851
        %v857 = vperm.slane %v557, 2
        %v859 = vsel %vm486, %v843, 0
        %861 = vmatpush.bf16.msra.mxu0 0
        %862 = vmatpush.bf16.msra.mxu0 0
        %863 = vmatpush.bf16.msra.mxu0 0
        %864 = vmatpush.bf16.msra.mxu0 0
        %865 = vmatpush.bf16.msra.mxu0 %v856
        %866 = vmatpush.bf16.msra.mxu0 %v855
        %867 = vmatpush.bf16.msra.mxu0 %v854
        %868 = vmatpush.bf16.msra.mxu0 %v853
        %869 = vmatmul.bf16.gmra.mxu0 %v859
        %v870 = vpop.f32.mrf.mxu0
        %v871 = vadd.f32 %v857, %v870
        %v872 = vpop.f32.mrf.mxu0
        %873 = vdwg.mxu0
        %v874 = vmul.f32 %v667, 0.25
        %v875 = vpack.c.bf16 %v874, %v874
        %v876 = vpack.c.bf16 %v769, %v769
        %v877 = vpack.c.bf16 %v871, %v871
        %vm878 = vcmask 130048
        %v880 = vsel %vm878, %v875, 0
        %v883 = vsel %vm878, %v876, 0
        %885 = vmatpush.bf16.xpose.msra.mxu0 0
        %886 = vmatpush.bf16.xpose.msra.mxu0 0
        %887 = vmatpush.bf16.xpose.msra.mxu0 0
        %888 = vmatpush.bf16.xpose.msra.mxu0 0
        %889 = vmatpush.bf16.xpose.msra.mxu0 0
        %890 = vmatpush.bf16.xpose.msra.mxu0 0
        %891 = vmatpush.bf16.xpose.msra.mxu0 0
        %892 = vmatpush.bf16.xpose.msra.mxu0 %v883
        %893 = vmatmul.bf16.gmra.mxu0 %v880
        %v894 = vpop.f32.mrf.mxu0
        %v895 = vadd.f32 0.0, %v894
        %v896 = vpop.f32.mrf.mxu0
        %897 = vdwg.mxu0
        %vm898 = vcmp.gt.f32.partialorder %v476, 0.0
        %v899 = vsel %vm898, 1, 0
        %v900 = vperm.slane %v899, 0
        %vm901 = vcmp.eq.s32.totalorder %v900, 1
        %v902 = vsel %vm901, %v895, -1e+30
        %vm903 = vcmask 27648
        %v904 = vsel %vm903, %v902, -inf
        %905 = vmax.xlane.f32.xlu0 %v904
        %v906 = vpop.xlane.xlu0 %905
        %v907 = vsub.f32 %v902, %v906
        %v908 = vmul.f32 %v907, 1.442695
        %v909 = vpow.pop %v908
        %v910 = vsel %vm903, %v909, 0.0
        %911 = vadd.xlane.f32.xlu0 %v910
        %v912 = vpop.xlane.xlu0 %911
        %v913 = vrcp.pop %v912
        %v914 = vmul.f32 %v909, %v913
        %v915 = vpack.c.bf16 %v914, %v914
        %vm916 = vcmask 31744
        %v918 = vsel %vm916, %v915, 0
        %vm920 = vcmask 1041408
        %v922 = vsel %vm920, %v877, 0
        %924 = vmatpush.bf16.msra.mxu0 0
        %925 = vmatpush.bf16.msra.mxu0 0
        %926 = vmatpush.bf16.msra.mxu0 0
        %927 = vmatpush.bf16.msra.mxu0 0
        %928 = vmatpush.bf16.msra.mxu0 0
        %929 = vmatpush.bf16.msra.mxu0 0
        %930 = vmatpush.bf16.msra.mxu0 0
        %931 = vmatpush.bf16.msra.mxu0 %v922
        %932 = vmatmul.bf16.gmra.mxu0 %v918
        %v933 = vpop.f32.mrf.mxu0
        %v934 = vadd.f32 0.0, %v933
        %v935 = vpop.f32.mrf.mxu0
        %936 = vdwg.mxu0
        %938 = vrot.lane.b32.xlu0 %v875, 112
        %v939 = vpop.permute.xlu0 %938
        %941 = vrot.lane.b32.xlu0 %v876, 112
        %v942 = vpop.permute.xlu0 %941
        %v944 = vsel %vm878, %v939, 0
        %v947 = vsel %vm878, %v942, 0
        %949 = vmatpush.bf16.xpose.msra.mxu0 0
        %950 = vmatpush.bf16.xpose.msra.mxu0 0
        %951 = vmatpush.bf16.xpose.msra.mxu0 0
        %952 = vmatpush.bf16.xpose.msra.mxu0 0
        %953 = vmatpush.bf16.xpose.msra.mxu0 0
        %954 = vmatpush.bf16.xpose.msra.mxu0 0
        %955 = vmatpush.bf16.xpose.msra.mxu0 0
        %956 = vmatpush.bf16.xpose.msra.mxu0 %v947
        %957 = vmatmul.bf16.gmra.mxu0 %v944
        %v958 = vpop.f32.mrf.mxu0
        %v959 = vadd.f32 0.0, %v958
        %v960 = vpop.f32.mrf.mxu0
        %961 = vdwg.mxu0
        %v962 = vsel %vm901, %v959, -1e+30
        %v963 = vsel %vm903, %v962, -inf
        %964 = vmax.xlane.f32.xlu0 %v963
        %v965 = vpop.xlane.xlu0 %964
        %v966 = vsub.f32 %v962, %v965
        %v967 = vmul.f32 %v966, 1.442695
        %v968 = vpow.pop %v967
        %v969 = vsel %vm903, %v968, 0.0
        %970 = vadd.xlane.f32.xlu0 %v969
        %v971 = vpop.xlane.xlu0 %970
        %v972 = vrcp.pop %v971
        %v973 = vmul.f32 %v968, %v972
        %v974 = vpack.c.bf16 %v973, %v973
        %976 = vrot.lane.b32.xlu0 %v877, 112
        %v977 = vpop.permute.xlu0 %976
        %v979 = vsel %vm916, %v974, 0
        %v982 = vsel %vm920, %v977, 0
        %984 = vmatpush.bf16.msra.mxu0 0
        %985 = vmatpush.bf16.msra.mxu0 0
        %986 = vmatpush.bf16.msra.mxu0 0
        %987 = vmatpush.bf16.msra.mxu0 0
        %988 = vmatpush.bf16.msra.mxu0 0
        %989 = vmatpush.bf16.msra.mxu0 0
        %990 = vmatpush.bf16.msra.mxu0 0
        %991 = vmatpush.bf16.msra.mxu0 %v982
        %992 = vmatmul.bf16.gmra.mxu0 %v979
        %v993 = vpop.f32.mrf.mxu0
        %v994 = vadd.f32 0.0, %v993
        %v995 = vpop.f32.mrf.mxu0
        %996 = vdwg.mxu0
        %997 = vrot.lane.b32.xlu0 %v875, 96
        %v998 = vpop.permute.xlu0 %997
        %999 = vrot.lane.b32.xlu0 %v876, 96
        %v1000 = vpop.permute.xlu0 %999
        %v1002 = vsel %vm878, %v998, 0
        %v1005 = vsel %vm878, %v1000, 0
        %1007 = vmatpush.bf16.xpose.msra.mxu0 0
        %1008 = vmatpush.bf16.xpose.msra.mxu0 0
        %1009 = vmatpush.bf16.xpose.msra.mxu0 0
        %1010 = vmatpush.bf16.xpose.msra.mxu0 0
        %1011 = vmatpush.bf16.xpose.msra.mxu0 0
        %1012 = vmatpush.bf16.xpose.msra.mxu0 0
        %1013 = vmatpush.bf16.xpose.msra.mxu0 0
        %1014 = vmatpush.bf16.xpose.msra.mxu0 %v1005
        %1015 = vmatmul.bf16.gmra.mxu0 %v1002
        %v1016 = vpop.f32.mrf.mxu0
        %v1017 = vadd.f32 0.0, %v1016
        %v1018 = vpop.f32.mrf.mxu0
        %1019 = vdwg.mxu0
        %v1020 = vsel %vm901, %v1017, -1e+30
        %v1021 = vsel %vm903, %v1020, -inf
        %1022 = vmax.xlane.f32.xlu0 %v1021
        %v1023 = vpop.xlane.xlu0 %1022
        %v1024 = vsub.f32 %v1020, %v1023
        %v1025 = vmul.f32 %v1024, 1.442695
        %v1026 = vpow.pop %v1025
        %v1027 = vsel %vm903, %v1026, 0.0
        %1028 = vadd.xlane.f32.xlu0 %v1027
        %v1029 = vpop.xlane.xlu0 %1028
        %v1030 = vrcp.pop %v1029
        %v1031 = vmul.f32 %v1026, %v1030
        %v1032 = vpack.c.bf16 %v1031, %v1031
        %1033 = vrot.lane.b32.xlu0 %v877, 96
        %v1034 = vpop.permute.xlu0 %1033
        %v1036 = vsel %vm916, %v1032, 0
        %v1039 = vsel %vm920, %v1034, 0
        %1041 = vmatpush.bf16.msra.mxu0 0
        %1042 = vmatpush.bf16.msra.mxu0 0
        %1043 = vmatpush.bf16.msra.mxu0 0
        %1044 = vmatpush.bf16.msra.mxu0 0
        %1045 = vmatpush.bf16.msra.mxu0 0
        %1046 = vmatpush.bf16.msra.mxu0 0
        %1047 = vmatpush.bf16.msra.mxu0 0
        %1048 = vmatpush.bf16.msra.mxu0 %v1039
        %1049 = vmatmul.bf16.gmra.mxu0 %v1036
        %v1050 = vpop.f32.mrf.mxu0
        %v1051 = vadd.f32 0.0, %v1050
        %v1052 = vpop.f32.mrf.mxu0
        %1053 = vdwg.mxu0
        %1054 = vrot.lane.b32.xlu0 %v875, 80
        %v1055 = vpop.permute.xlu0 %1054
        %1056 = vrot.lane.b32.xlu0 %v876, 80
        %v1057 = vpop.permute.xlu0 %1056
        %v1059 = vsel %vm878, %v1055, 0
        %v1062 = vsel %vm878, %v1057, 0
        %1064 = vmatpush.bf16.xpose.msra.mxu0 0
        %1065 = vmatpush.bf16.xpose.msra.mxu0 0
        %1066 = vmatpush.bf16.xpose.msra.mxu0 0
        %1067 = vmatpush.bf16.xpose.msra.mxu0 0
        %1068 = vmatpush.bf16.xpose.msra.mxu0 0
        %1069 = vmatpush.bf16.xpose.msra.mxu0 0
        %1070 = vmatpush.bf16.xpose.msra.mxu0 0
        %1071 = vmatpush.bf16.xpose.msra.mxu0 %v1062
        %1072 = vmatmul.bf16.gmra.mxu0 %v1059
        %v1073 = vpop.f32.mrf.mxu0
        %v1074 = vadd.f32 0.0, %v1073
        %v1075 = vpop.f32.mrf.mxu0
        %1076 = vdwg.mxu0
        %v1077 = vsel %vm901, %v1074, -1e+30
        %v1078 = vsel %vm903, %v1077, -inf
        %1079 = vmax.xlane.f32.xlu0 %v1078
        %v1080 = vpop.xlane.xlu0 %1079
        %v1081 = vsub.f32 %v1077, %v1080
        %v1082 = vmul.f32 %v1081, 1.442695
        %v1083 = vpow.pop %v1082
        %v1084 = vsel %vm903, %v1083, 0.0
        %1085 = vadd.xlane.f32.xlu0 %v1084
        %v1086 = vpop.xlane.xlu0 %1085
        %v1087 = vrcp.pop %v1086
        %v1088 = vmul.f32 %v1083, %v1087
        %v1089 = vpack.c.bf16 %v1088, %v1088
        %1090 = vrot.lane.b32.xlu0 %v877, 80
        %v1091 = vpop.permute.xlu0 %1090
        %v1093 = vsel %vm916, %v1089, 0
        %v1096 = vsel %vm920, %v1091, 0
        %1098 = vmatpush.bf16.msra.mxu0 0
        %1099 = vmatpush.bf16.msra.mxu0 0
        %1100 = vmatpush.bf16.msra.mxu0 0
        %1101 = vmatpush.bf16.msra.mxu0 0
        %1102 = vmatpush.bf16.msra.mxu0 0
        %1103 = vmatpush.bf16.msra.mxu0 0
        %1104 = vmatpush.bf16.msra.mxu0 0
        %1105 = vmatpush.bf16.msra.mxu0 %v1096
        %1106 = vmatmul.bf16.gmra.mxu0 %v1093
        %v1107 = vpop.f32.mrf.mxu0
        %v1108 = vadd.f32 0.0, %v1107
        %v1109 = vpop.f32.mrf.mxu0
        %1110 = vdwg.mxu0
        %1112 = vrot.lane.b32.xlu0 %v994, 16
        %v1113 = vpop.permute.xlu0 %1112
        %1116 = vrot.lane.b32.xlu0 %v1051, 32
        %v1117 = vpop.permute.xlu0 %1116
        %1120 = vrot.lane.b32.xlu0 %v1108, 48
        %v1121 = vpop.permute.xlu0 %1120
        %v1123 = vsel %vm878, %v934, %v1113
        %vm1124 = vcmask 261120
        %v1125 = vsel %vm1124, %v1123, %v1117
        %vm1126 = vcmask 392192
        %v1127 = vsel %vm1126, %v1125, %v1121
        %v1128 = vpack.c.bf16 %v1127, %v1127
        %v1129 = vld [vmem:[%s7] sm:$0xff]
        %v1130 = vld [vmem:[%s7 + $0x8] sm:$0xff]
        %v1131 = vld [vmem:[%s7 + $0x10] sm:$0xff]
        %v1132 = vld [vmem:[%s7 + $0x18] sm:$0xff]
        %v1133 = vld [vmem:[%s7 + $0x20] sm:$0xff]
        %v1134 = vld [vmem:[%s7 + $0x28] sm:$0xff]
        %v1135 = vld [vmem:[%s7 + $0x30] sm:$0xff]
        %v1136 = vld [vmem:[%s7 + $0x38] sm:$0xff]
        %v1137 = vpack.c.bf16 %v1130, %v1129
        %v1138 = vpack.c.bf16 %v1132, %v1131
        %v1139 = vpack.c.bf16 %v1134, %v1133
        %v1140 = vpack.c.bf16 %v1136, %v1135
        %v1141 = vld [vmem:[%s8] sm:$0x1]
        %v1143 = vperm.slane %v1141, 0
        %v1146 = vsel %vm486, %v1128, 0
        %1148 = vmatpush.bf16.msra.mxu0 0
        %1149 = vmatpush.bf16.msra.mxu0 0
        %1150 = vmatpush.bf16.msra.mxu0 0
        %1151 = vmatpush.bf16.msra.mxu0 0
        %1152 = vmatpush.bf16.msra.mxu0 %v1140
        %1153 = vmatpush.bf16.msra.mxu0 %v1139
        %1154 = vmatpush.bf16.msra.mxu0 %v1138
        %1155 = vmatpush.bf16.msra.mxu0 %v1137
        %1156 = vmatmul.bf16.gmra.mxu0 %v1146
        %v1157 = vpop.f32.mrf.mxu0
        %v1158 = vadd.f32 %v1143, %v1157
        %v1159 = vpop.f32.mrf.mxu0
        %1160 = vdwg.mxu0
        %v1161 = vmul.f32 %v1158, %v610
        %v1162 = vsel %vm547, %v473, -1e+30
        %v1163 = vsel %vm548, %v474, -1e+30
        %v1166 = vrot.slane %v1162, 1
        %v1167 = vrot.slane %v1163, 1
        %v1168 = vsel %vm566, %v1166, %v1167
        %v1170 = vmax.f32 %v1162, %v1168
        %v1171 = vrot.slane %v1162, 2
        %v1172 = vrot.slane %v1163, 2
        %v1173 = vsel %vm577, %v1171, %v1172
        %v1175 = vmax.f32 %v1170, %v1173
        %1176 = vmatpush.msra.mxu0 0.0
        %1177 = vmatpush.msra.mxu0 0.0
        %1178 = vmatpush.msra.mxu0 0.0
        %1179 = vmatpush.msra.mxu0 0.0
        %1180 = vmatpush.msra.mxu0 0.0
        %1181 = vmatpush.msra.mxu0 0.0
        %1182 = vmatpush.msra.mxu0 0.0
        %1183 = vmatpush.msra.mxu0 0.0
        %1184 = vmatpush.msra.mxu0 0.0
        %1185 = vmatpush.msra.mxu0 0.0
        %1186 = vmatpush.msra.mxu0 0.0
        %1187 = vmatpush.msra.mxu0 0.0
        %1188 = vmatpush.msra.mxu0 0.0
        %1189 = vmatpush.msra.mxu0 0.0
        %1190 = vmatpush.msra.mxu0 0.0
        %1191 = vmatpush.msra.mxu0 %v1175
        %1192 = vmatmul.f32.gmra.mxu0 %v585
        %v1193 = vpop.f32.mrf.mxu0
        %v1194 = vadd.f32 0.0, %v1193
        %1195 = vdwg.mxu0
        %v1196 = vmul.f32 %v1194, %v610
        %v1197 = vadd.f32 %v1196, %v1161
        %v1198 = vsel %vm613, %v1197, 0.0
        %1199 = vadd.xlane.f32.xlu0 %v1198
        %v1200 = vpop.xlane.xlu0 %1199
        %v1201 = vmul.f32 %v1200, %v500
        %v1202 = vsub.f32 %v1197, %v1201
        %v1203 = vmul.f32 %v1202, %v1202
        %v1204 = vsel %vm613, %v1203, 0.0
        %1205 = vadd.xlane.f32.xlu0 %v1204
        %v1206 = vpop.xlane.xlu0 %1205
        %v1207 = vmul.f32 %v1206, %v500
        %v1208 = vadd.f32 %v1207, 1e-05
        %v1209 = vrsqrt.pop %v1208
        %v1210 = vmul.f32 %v1209, %v1208
        %v1211 = vmul.f32 %v1210, %v1209
        %v1212 = vmul.f32 0.5, %v1211
        %v1213 = vsub.f32 1.5, %v1212
        %v1214 = vmul.f32 %v1209, %v1213
        %vm1215 = vweird.f32 %v1208
        %vm1216 = vweird.f32 %v1209
        %vm1217 = vmor %vm1215, %vm1216
        %v1218 = vsel %vm1217, %v1209, %v1214
        %v1219 = vmul.f32 %v1202, %v1218
        %v1220 = vperm.slane %v472, 0
        %v1221 = vmul.f32 %v1219, %v1220
        %v1222 = vperm.slane %v472, 1
        %v1223 = vadd.f32 %v1221, %v1222
        %v1224 = vpack.c.bf16 %v1223, %v1223
        %v1225 = vld [vmem:[%s9] sm:$0xff]
        %v1226 = vld [vmem:[%s9 + $0x8] sm:$0xff]
        %v1227 = vld [vmem:[%s9 + $0x10] sm:$0xff]
        %v1228 = vld [vmem:[%s9 + $0x18] sm:$0xff]
        %v1229 = vld [vmem:[%s9 + $0x20] sm:$0xff]
        %v1230 = vld [vmem:[%s9 + $0x28] sm:$0xff]
        %v1231 = vld [vmem:[%s9 + $0x30] sm:$0xff]
        %v1232 = vld [vmem:[%s9 + $0x38] sm:$0xff]
        %v1233 = vld [vmem:[%s9 + $0x40] sm:$0xff]
        %v1234 = vld [vmem:[%s9 + $0x48] sm:$0xff]
        %v1235 = vld [vmem:[%s9 + $0x50] sm:$0xff]
        %v1236 = vld [vmem:[%s9 + $0x58] sm:$0xff]
        %v1237 = vld [vmem:[%s9 + $0x60] sm:$0xff]
        %v1238 = vld [vmem:[%s9 + $0x68] sm:$0xff]
        %v1239 = vld [vmem:[%s9 + $0x70] sm:$0xff]
        %v1240 = vld [vmem:[%s9 + $0x78] sm:$0xff]
        %v1241 = vpack.c.bf16 %v1227, %v1225
        %v1242 = vpack.c.bf16 %v1228, %v1226
        %v1243 = vpack.c.bf16 %v1231, %v1229
        %v1244 = vpack.c.bf16 %v1232, %v1230
        %v1245 = vpack.c.bf16 %v1235, %v1233
        %v1246 = vpack.c.bf16 %v1236, %v1234
        %v1247 = vpack.c.bf16 %v1239, %v1237
        %v1248 = vpack.c.bf16 %v1240, %v1238
        %v1249 = vld [vmem:[%s10] sm:$0x3]
        %v1251 = vperm.slane %v1249, 0
        %v1252 = vperm.slane %v1249, 1
        %v1256 = vsel %vm486, %v1224, 0
        %1258 = vmatpush.bf16.msra.mxu0 0
        %1259 = vmatpush.bf16.msra.mxu0 0
        %1260 = vmatpush.bf16.msra.mxu0 0
        %1261 = vmatpush.bf16.msra.mxu0 0
        %1262 = vmatpush.bf16.msra.mxu0 %v1247
        %1263 = vmatpush.bf16.msra.mxu0 %v1245
        %1264 = vmatpush.bf16.msra.mxu0 %v1243
        %1265 = vmatpush.bf16.msra.mxu0 %v1241
        %1266 = vmatmul.bf16.gmra.mxu0 %v1256
        %v1267 = vpop.f32.mrf.mxu0
        %v1268 = vadd.f32 %v1251, %v1267
        %v1269 = vpop.f32.mrf.mxu0
        %1270 = vdwg.mxu0
        %1271 = vmatpush.bf16.msra.mxu0 0
        %1272 = vmatpush.bf16.msra.mxu0 0
        %1273 = vmatpush.bf16.msra.mxu0 0
        %1274 = vmatpush.bf16.msra.mxu0 0
        %1275 = vmatpush.bf16.msra.mxu0 %v1248
        %1276 = vmatpush.bf16.msra.mxu0 %v1246
        %1277 = vmatpush.bf16.msra.mxu0 %v1244
        %1278 = vmatpush.bf16.msra.mxu0 %v1242
        %1279 = vmatmul.bf16.gmra.mxu0 %v1256
        %v1280 = vpop.f32.mrf.mxu0
        %v1281 = vadd.f32 %v1252, %v1280
        %v1282 = vpop.f32.mrf.mxu0
        %1283 = vdwg.mxu0
        %v1284 = vmul.f32 %v1268, 0.5
        %v1285 = vmul.f32 %v1281, 0.5
        %v1286 = vmul.f32 %v1268, 0.044715
        %v1287 = vmul.f32 %v1281, 0.044715
        %v1288 = vmul.f32 %v1286, %v1268
        %v1289 = vmul.f32 %v1287, %v1281
        %v1290 = vmul.f32 %v1288, %v1268
        %v1291 = vmul.f32 %v1289, %v1281
        %v1292 = vadd.f32 %v1268, %v1290
        %v1293 = vadd.f32 %v1281, %v1291
        %v1294 = vmul.f32 %v1292, 0.7978846
        %v1295 = vmul.f32 %v1293, 0.7978846
        %v1296 = vtanh.pop %v1294
        %v1297 = vtanh.pop %v1295
        %v1298 = vadd.f32 %v1296, 1.0
        %v1299 = vadd.f32 %v1297, 1.0
        %v1300 = vmul.f32 %v1284, %v1298
        %v1301 = vmul.f32 %v1285, %v1299
        %v1302 = vpack.c.bf16 %v1300, %v1300
        %v1303 = vpack.c.bf16 %v1301, %v1301
        %v1304 = vld [vmem:[%s11] sm:$0xff]
        %v1305 = vld [vmem:[%s11 + $0x8] sm:$0xff]
        %v1306 = vld [vmem:[%s11 + $0x10] sm:$0xff]
        %v1307 = vld [vmem:[%s11 + $0x18] sm:$0xff]
        %v1308 = vld [vmem:[%s11 + $0x20] sm:$0xff]
        %v1309 = vld [vmem:[%s11 + $0x28] sm:$0xff]
        %v1310 = vld [vmem:[%s11 + $0x30] sm:$0xff]
        %v1311 = vld [vmem:[%s11 + $0x38] sm:$0xff]
        %v1312 = vld [vmem:[%s11 + $0x40] sm:$0xff]
        %v1313 = vld [vmem:[%s11 + $0x48] sm:$0xff]
        %v1314 = vld [vmem:[%s11 + $0x50] sm:$0xff]
        %v1315 = vld [vmem:[%s11 + $0x58] sm:$0xff]
        %v1316 = vld [vmem:[%s11 + $0x60] sm:$0xff]
        %v1317 = vld [vmem:[%s11 + $0x68] sm:$0xff]
        %v1318 = vld [vmem:[%s11 + $0x70] sm:$0xff]
        %v1319 = vld [vmem:[%s11 + $0x78] sm:$0xff]
        %v1320 = vld [vmem:[%s11 + $0x80] sm:$0xff]
        %v1321 = vld [vmem:[%s11 + $0x88] sm:$0xff]
        %v1322 = vld [vmem:[%s11 + $0x90] sm:$0xff]
        %v1323 = vld [vmem:[%s11 + $0x98] sm:$0xff]
        %v1324 = vld [vmem:[%s11 + $0xa0] sm:$0xff]
        %v1325 = vld [vmem:[%s11 + $0xa8] sm:$0xff]
        %v1326 = vld [vmem:[%s11 + $0xb0] sm:$0xff]
        %v1327 = vld [vmem:[%s11 + $0xb8] sm:$0xff]
        %v1328 = vld [vmem:[%s11 + $0xc0] sm:$0xff]
        %v1329 = vld [vmem:[%s11 + $0xc8] sm:$0xff]
        %v1330 = vld [vmem:[%s11 + $0xd0] sm:$0xff]
        %v1331 = vld [vmem:[%s11 + $0xd8] sm:$0xff]
        %v1332 = vld [vmem:[%s11 + $0xe0] sm:$0xff]
        %v1333 = vld [vmem:[%s11 + $0xe8] sm:$0xff]
        %v1334 = vld [vmem:[%s11 + $0xf0] sm:$0xff]
        %v1335 = vld [vmem:[%s11 + $0xf8] sm:$0xff]
        %v1336 = vpack.c.bf16 %v1305, %v1304
        %v1337 = vpack.c.bf16 %v1307, %v1306
        %v1338 = vpack.c.bf16 %v1309, %v1308
        %v1339 = vpack.c.bf16 %v1311, %v1310
        %v1340 = vpack.c.bf16 %v1313, %v1312
        %v1341 = vpack.c.bf16 %v1315, %v1314
        %v1342 = vpack.c.bf16 %v1317, %v1316
        %v1343 = vpack.c.bf16 %v1319, %v1318
        %v1344 = vpack.c.bf16 %v1321, %v1320
        %v1345 = vpack.c.bf16 %v1323, %v1322
        %v1346 = vpack.c.bf16 %v1325, %v1324
        %v1347 = vpack.c.bf16 %v1327, %v1326
        %v1348 = vpack.c.bf16 %v1329, %v1328
        %v1349 = vpack.c.bf16 %v1331, %v1330
        %v1350 = vpack.c.bf16 %v1333, %v1332
        %v1351 = vpack.c.bf16 %v1335, %v1334
        %v1352 = vld [vmem:[%s12] sm:$0x1]
        %v1354 = vperm.slane %v1352, 0
        %1356 = vmatpush.bf16.msra.mxu0 %v1343
        %1357 = vmatpush.bf16.msra.mxu0 %v1342
        %1358 = vmatpush.bf16.msra.mxu0 %v1341
        %1359 = vmatpush.bf16.msra.mxu0 %v1340
        %1360 = vmatpush.bf16.msra.mxu0 %v1339
        %1361 = vmatpush.bf16.msra.mxu0 %v1338
        %1362 = vmatpush.bf16.msra.mxu0 %v1337
        %1363 = vmatpush.bf16.msra.mxu0 %v1336
        %1364 = vmatmul.bf16.gmra.mxu0 %v1302
        %v1365 = vpop.f32.mrf.mxu0
        %v1366 = vadd.f32 %v1354, %v1365
        %v1367 = vpop.f32.mrf.mxu0
        %1368 = vdwg.mxu0
        %1369 = vmatpush.bf16.msra.mxu0 %v1351
        %1370 = vmatpush.bf16.msra.mxu0 %v1350
        %1371 = vmatpush.bf16.msra.mxu0 %v1349
        %1372 = vmatpush.bf16.msra.mxu0 %v1348
        %1373 = vmatpush.bf16.msra.mxu0 %v1347
        %1374 = vmatpush.bf16.msra.mxu0 %v1346
        %1375 = vmatpush.bf16.msra.mxu0 %v1345
        %1376 = vmatpush.bf16.msra.mxu0 %v1344
        %1377 = vmatmul.bf16.gmra.mxu0 %v1303
        %v1378 = vpop.f32.mrf.mxu0
        %v1379 = vadd.f32 %v1366, %v1378
        %v1380 = vpop.f32.mrf.mxu0
        %1381 = vdwg.mxu0
        %v1382 = vmul.f32 %v1379, %v610
        %v1383 = vadd.f32 %v1197, %v1382
        %1384 = vst.msk [vmem:[%s457] sm:$0xf] %vm613, %v1383
        %s1385 = sand.u32 %s323, 1
        %s1386 = scalar_lea.sflag [#allocation3], %s1385
        %s1387 = sand.u32 %s323, 1
        %s1388 = smul.addr %s1387, 4
        %s1389 = scalar_lea.vmem [#allocation2], %s1388
        // Predicated region
        $region73: #{pc_transformer_proj_forward.11} parent=71 // pred_check
          %p1390 = pneg %p333
        $region74: #{pc_transformer_proj_forward.11} parent=71 // pred_check_branch
          %1392 = sbr.rel (%p1390) target = $region76
        $region75: #{pc_transformer_proj_forward.11} parent=71 // pred_region
          %1394 = vsyncadd %s1386, 0
          %s1395 = smul.addr %s27, 4
          %s1396 = scalar_lea.hbm %s13, %s1395
          %s1398 = sshll.u32 %s1389, 4
          %s1399 = int_to_ptr.vmem [resolvable:$true] %s1398
          %s1400 = sshll.u32 %s1396, 4
          %s1401 = int_to_ptr.hbm [resolvable:$true] %s1400
          %1403 = dma.vmem_to_hbm [thread:$0]  %s1399, 64, %s1401, %s1386
        $region76: #{pc_transformer_proj_forward.11} parent=71 // pred_fallthru
          _
      $region72: #{pc_transformer_proj_forward.11} parent=5 // pred_fallthru
        _
      %p1404 = scmp.le.s32.totalorder 2, %s22
      // Predicated region
      $region77: #{pc_transformer_proj_forward.11} parent=5 // pred_check
        %p1405 = pneg %p1404
      $region78: #{pc_transformer_proj_forward.11} parent=5 // pred_check_branch
        %1407 = sbr.rel (%p1405) target = $region80
      $region79: #{pc_transformer_proj_forward.11} parent=5 // pred_region
        %s1408 = ssub.s32 %s22, 2
        // Predicated region
        $region81: #{pc_transformer_proj_forward.11} parent=79 // pred_check
          %p1409 = pneg %p339
        $region82: #{pc_transformer_proj_forward.11} parent=79 // pred_check_branch
          %1411 = sbr.rel (%p1409) target = $region84
        $region83: #{pc_transformer_proj_forward.11} parent=79 // pred_region
          %s1412 = sand.u32 %s324, 1
          %s1413 = scalar_lea.sflag [#allocation3], %s1412
          %s1414 = sand.u32 %s324, 1
          %s1415 = smul.addr %s1414, 4
          %s1416 = scalar_lea.vmem [#allocation2], %s1415
          %1418 = dma.done %s1413, 64
        $region84: #{pc_transformer_proj_forward.11} parent=79 // pred_fallthru
          _
      $region80: #{pc_transformer_proj_forward.11} parent=5 // pred_fallthru
        _
    $region6: #{pc_transformer_proj_forward.11} parent=1 // loop_footer
      %s26 = sadd.s32 1, %s22
    $region7: #{pc_transformer_proj_forward.11} parent=1 // loop_footer_branch
      %21 = sbr.rel target = $region3
    $region8: #{pc_transformer_proj_forward.11} parent=1 // loop_exit
      _
    %1419 = vsyncpa [#allocation3], 1
    %s1420 = scalar_lea.sflag [#allocation3], 1
    %1421 = vsyncpa %s1420, 1

</llo_original>
